<compile_context>
chip_gen: v5e
topology: v5e:2x2
jax: 0.10.0
libtpu: 0.0.40
codegen_flags: <defaults>
</compile_context>

<pallas_src>
import functools

import jax
import jax.numpy as jnp
import numpy as np
from jax import lax
from jax.experimental import pallas as pl
from jax.experimental.pallas import tpu as pltpu


def _ft_fused_kernel(x_ref, w0_ref, b0_ref, w1_ref, b1_ref, w2_ref, b2_ref,
                     o_ref, xp0, a1p, a2p, *, H, W):
    """Fused 3-layer conv3x3 + folded-BN bias + LeakyReLU for one batch elem.

    x_ref  : (1, H, W, C0)       input tile (NHWC)
    w0_ref : (3, 3, C0, C1)      BN-folded weights, per-tap matmul path
    w1_ref : (3, 3*C1, C2)       BN-folded weights, dx taps concatenated on K
    w2_ref : (3, 3, C2)          BN-folded weights for Cout==1 (VPU reduce)
    bK_ref : folded biases       (1,C1), (1,C2), (1,1)
    o_ref  : (1, 1, H, W)        NCHW output block (no padding, no post-slice)
    xp0    : (H+2, W+2, C0) VMEM zero-halo padded layer-0 input
    a1p    : (H+2, W+2, C1) VMEM zero-halo padded layer-0 output
    a2p    : (H+2, W+2, C2) VMEM zero-halo padded layer-1 output
    """
    strip = 8 if H % 8 == 0 else H
    # TODO(synk): add a remainder-strip path for large H not divisible by 8
    # (strip=H makes the live accumulator (H, W, Cout) and would spill vregs).

    def leaky(y):
        return jnp.where(y > 0, y, jnp.float32(0.01) * y)

    def zero_halo(buf, c):
        # Interior is fully overwritten every grid step -> zero only the halo.
        zrow = jnp.zeros((1, W + 2, c), jnp.float32)
        zcol = jnp.zeros((H + 2, 1, c), jnp.float32)
        buf[0:1, :, :] = zrow
        buf[H + 1:H + 2, :, :] = zrow
        buf[:, 0:1, :] = zcol
        buf[:, W + 1:W + 2, :] = zcol

    def conv_taps(src_ref, w_ref, b_ref, cout, store):
        # Per-tap matmuls (K = Cin). One aligned row load per (strip, dy);
        # dx windows are in-register slices of that value.
        b = b_ref[0]                                         # (Cout,)
        for r0 in range(0, H, strip):
            acc = jnp.zeros((strip, W, cout), jnp.float32)
            for dy in range(3):
                rows = src_ref[r0 + dy:r0 + dy + strip, :, :]   # aligned load
                for dx in range(3):
                    acc = acc + lax.dot_general(
                        rows[:, dx:dx + W, :], w_ref[dy, dx],
                        (((2,), (0,)), ((), ())),
                        preferred_element_type=jnp.float32)
            store(r0, leaky(acc + b))

    def conv_fused_k(src_ref, w_ref, b_ref, cout, store):
        # dx taps concatenated along the contraction dim (K = 3*Cin): 3
        # matmuls per strip instead of 9, fewer acc+=dot VPU adds, better use
        # of the 256-deep MXU on v6e/v7x.  Cin==128 so the lane concat is
        # 128-aligned.
        b = b_ref[0]                                         # (Cout,)
        for r0 in range(0, H, strip):
            acc = jnp.zeros((strip, W, cout), jnp.float32)
            for dy in range(3):
                rows = src_ref[r0 + dy:r0 + dy + strip, :, :]   # aligned load
                lhs = jnp.concatenate(
                    [rows[:, dx:dx + W, :] for dx in range(3)], axis=-1)
                acc = acc + lax.dot_general(
                    lhs, w_ref[dy], (((2,), (0,)), ((), ())),
                    preferred_element_type=jnp.float32)
            store(r0, leaky(acc + b))

    def conv_out(src_ref, w_ref, b_ref):
        # Cout == 1: a matmul would use 1/256 of the MXU output width and need
        # a 128x-padded lane-dense store; a VPU multiply + lane reduction gives
        # (strip, W) directly, stored straight into the NCHW output block.
        for r0 in range(0, H, strip):
            acc = jnp.zeros((strip, W), jnp.float32)
            for dy in range(3):
                rows = src_ref[r0 + dy:r0 + dy + strip, :, :]   # aligned load
                for dx in range(3):
                    acc = acc + jnp.sum(
                        rows[:, dx:dx + W, :] * w_ref[dy, dx], axis=-1)
            y = leaky(acc + b_ref[...])                       # (strip, W)
            o_ref[0, 0, r0:r0 + strip, :] = y.astype(o_ref.dtype)

    # ---- halos only; interiors are rewritten below -------------------------
    zero_halo(xp0, xp0.shape[-1])
    zero_halo(a1p, a1p.shape[-1])
    zero_halo(a2p, a2p.shape[-1])

    # ---- layer 0: Cin=48 -> 128 ---------------------------------------------
    xp0[1:H + 1, 1:W + 1, :] = x_ref[0]

    def store_l0(r0, y):
        a1p[r0 + 1:r0 + 1 + strip, 1:W + 1, :] = y

    conv_taps(xp0, w0_ref, b0_ref, w0_ref.shape[-1], store_l0)

    # ---- layer 1: Cin=128 -> 64 (K-fused taps) ------------------------------
    def store_l1(r0, y):
        a2p[r0 + 1:r0 + 1 + strip, 1:W + 1, :] = y

    conv_fused_k(a1p, w1_ref, b1_ref, w1_ref.shape[-1], store_l1)

    # ---- layer 2: Cin=64 -> 1, written directly as NCHW --------------------
    conv_out(a2p, w2_ref, b2_ref)


def ft_generator_fused(x_nhwc, w0, b0, w1, b1, w2, b2):
    """x_nhwc: (N,H,W,C0) f32. Returns (N,1,H,W) f32 (NCHW, out_channels=1)."""
    N, H, W, C0 = x_nhwc.shape
    C1 = w0.shape[-1]
    C2 = w1.shape[-1]
    flops = 2 * N * H * W * 9 * (C0 * C1 + C1 * C2 + C2 * 1)
    bytes_accessed = 4 * (x_nhwc.size + N * H * W + w0.size + b0.size
                          + w1.size + b1.size + w2.size + b2.size)
    kernel = functools.partial(_ft_fused_kernel, H=H, W=W)
    return pl.pallas_call(
        kernel,
        out_shape=jax.ShapeDtypeStruct((N, 1, H, W), jnp.float32),
        grid=(N,),
        in_specs=[
            pl.BlockSpec((1, H, W, C0), lambda n: (n, 0, 0, 0)),
            pl.BlockSpec((3, 3, C0, C1), lambda n: (0, 0, 0, 0)),
            pl.BlockSpec((1, C1), lambda n: (0, 0)),
            pl.BlockSpec((3, 3 * C1, C2), lambda n: (0, 0, 0)),
            pl.BlockSpec((1, C2), lambda n: (0, 0)),
            pl.BlockSpec((3, 3, C2), lambda n: (0, 0, 0)),
            pl.BlockSpec((1, 1), lambda n: (0, 0)),
        ],
        out_specs=pl.BlockSpec((1, 1, H, W), lambda n: (n, 0, 0, 0)),
        scratch_shapes=[
            pltpu.VMEM((H + 2, W + 2, C0), jnp.float32),
            pltpu.VMEM((H + 2, W + 2, C1), jnp.float32),
            pltpu.VMEM((H + 2, W + 2, C2), jnp.float32),
        ],
        compiler_params=pltpu.CompilerParams(
            dimension_semantics=("parallel",)),
        cost_estimate=pl.CostEstimate(flops=flops, transcendentals=0,
                                      bytes_accessed=bytes_accessed),
    )(x_nhwc, w0, b0, w1, b1, w2, b2)


def _fold_bn(conv_b, gamma, beta, mean, var, eps=1e-4):
    scale = gamma / jnp.sqrt(var + eps)
    bias = (conv_b - mean) * scale + beta
    return scale, bias


def init_ft_generator_params(key, in_channels=48, out_channels=1):
    """Deterministic synthetic params, mirroring FTGenerator.__init__ shapes."""
    chans = [in_channels, 128, 64, out_channels]
    params = []
    for li in range(3):
        cin, cout = chans[li], chans[li + 1]
        key, kw, kb, kg, kbe, km, kv = jax.random.split(key, 7)
        w_oihw = 0.05 * jax.random.normal(kw, (cout, cin, 3, 3), jnp.float32)
        w_hwio = jnp.transpose(w_oihw, (2, 3, 1, 0))
        conv_b = 0.05 * jax.random.normal(kb, (cout,), jnp.float32)
        gamma = 1.0 + 0.1 * jax.random.normal(kg, (cout,), jnp.float32)
        beta = 0.1 * jax.random.normal(kbe, (cout,), jnp.float32)
        mean = 0.1 * jax.random.normal(km, (cout,), jnp.float32)
        var = jax.random.uniform(kv, (cout,), jnp.float32, 0.5, 1.5)
        params.append(dict(w_hwio=w_hwio, conv_b=conv_b, gamma=gamma,
                           beta=beta, mean=mean, var=var))
    return params


def prepare_fused_args(params):
    """Fold BN into conv weights/bias and reshape for the fused kernel.

    layer 0: (3, 3, C0, C1)  HWIO, per-tap matmul path
    layer 1: (3, 3*C1, C2)   dx taps concatenated along the contraction dim
    layer 2: (3, 3, C2)      Cout==1 squeezed; used by the VPU-reduce path
    """
    assert len(params) == 3
    out = []
    for li, p in enumerate(params):
        scale, bias = _fold_bn(p["conv_b"], p["gamma"], p["beta"],
                               p["mean"], p["var"], eps=1e-4)
        w = p["w_hwio"] * scale[None, None, None, :]          # (3,3,Cin,Cout)
        if li == 1:
            kh, kw_, cin, cout = w.shape
            w = w.reshape(kh, kw_ * cin, cout)                # (3, 3*Cin, Cout)
            b = bias.reshape(1, -1)
        elif li == 2:
            # TODO(synk): general out_channels > 1 final layer (module default
            # is 1); would switch back to the matmul path with a lane-dense N.
            assert w.shape[-1] == 1
            w = w[..., 0]                                     # (3, 3, Cin)
            b = bias.reshape(1, 1)
        else:
            b = bias.reshape(1, -1)
        out.extend([w.astype(jnp.float32), b.astype(jnp.float32)])
    return out


@jax.jit
def ft_generator_forward_nhwc(x_nhwc, w0, b0, w1, b1, w2, b2):
    """NHWC entry point (preferred: no layout op outside the kernel)."""
    return ft_generator_fused(x_nhwc, w0, b0, w1, b1, w2, b2)


@jax.jit
def ft_generator_forward_nchw(x_nchw, w0, b0, w1, b1, w2, b2):
    """PyTorch-layout entry point. One NCHW->NHWC transpose is the only op
    outside the fused kernel; the kernel emits NCHW (N,1,H,W) directly."""
    x_nhwc = jnp.transpose(x_nchw, (0, 2, 3, 1))
    return ft_generator_fused(x_nhwc, w0, b0, w1, b1, w2, b2)


def _reference_layer_nhwc(x_nhwc, p):
    """Pure-JAX reference of one conv + BN(eval) + LeakyReLU layer (NHWC)."""
    y = lax.conv_general_dilated(
        x_nhwc, p["w_hwio"], window_strides=(1, 1), padding="SAME",
        dimension_numbers=("NHWC", "HWIO", "NHWC"))
    y = y + p["conv_b"]
    y = (y - p["mean"]) / jnp.sqrt(p["var"] + 1e-4) * p["gamma"] + p["beta"]
    return jnp.where(y > 0, y, 0.01 * y)


if __name__ == "__main__":
    key = jax.random.PRNGKey(0)
    kx, kp = jax.random.split(key)

    N, C, H, W = 2, 48, 16, 16                  # small shapes, in_channels=48
    x_nchw = jax.random.normal(kx, (N, C, H, W), jnp.float32)

    params = init_ft_generator_params(kp, in_channels=C, out_channels=1)
    fused_args = prepare_fused_args(params)

    out_nchw = ft_generator_forward_nchw(x_nchw, *fused_args)
    out_nchw = jax.block_until_ready(out_nchw)

    # Correctness check against a pure-JAX reference (unfolded params, f32).
    ref = jnp.transpose(x_nchw, (0, 2, 3, 1))
    for p in params:
        ref = _reference_layer_nhwc(ref, p)
    ref_nchw = jax.block_until_ready(jnp.transpose(ref, (0, 3, 1, 2)))

    assert out_nchw.shape == (N, 1, H, W)
    np.testing.assert_allclose(np.asarray(out_nchw), np.asarray(ref_nchw),
                               rtol=1e-3, atol=1e-3)
    print("KERNEL_OK")
</pallas_src>

<mosaic_0001>
module attributes {stable_mosaic.version = 11 : i64} {
  func.func @_ft_fused_kernel(%arg0: i32, %arg1: memref<1x16x16x48xf32, #tpu.memory_space<vmem>>, %arg2: memref<3x3x48x128xf32, #tpu.memory_space<vmem>>, %arg3: memref<1x128xf32, #tpu.memory_space<vmem>>, %arg4: memref<3x384x64xf32, #tpu.memory_space<vmem>>, %arg5: memref<1x64xf32, #tpu.memory_space<vmem>>, %arg6: memref<3x3x64xf32, #tpu.memory_space<vmem>>, %arg7: memref<1x1xf32, #tpu.memory_space<vmem>>, %arg8: memref<1x1x16x16xf32, #tpu.memory_space<vmem>>, %arg9: memref<18x18x48xf32, #tpu.memory_space<vmem>>, %arg10: memref<18x18x128xf32, #tpu.memory_space<vmem>>, %arg11: memref<18x18x64xf32, #tpu.memory_space<vmem>>) attributes {dimension_semantics = [#tpu.dimension_semantics<parallel>], iteration_bounds = array<i64: 2>, scalar_prefetch = 0 : i64, scratch_operands = 3 : i64, tpu.core_type = #tpu.core_type<tc>, window_params = [{transform_indices = @transform_0, window_bounds = array<i64: 1, 16, 16, 48>}, {pipeline_mode = #tpu.pipeline_mode<synchronous>, transform_indices = @transform_1, window_bounds = array<i64: 3, 3, 48, 128>}, {pipeline_mode = #tpu.pipeline_mode<synchronous>, transform_indices = @transform_2, window_bounds = array<i64: 1, 128>}, {pipeline_mode = #tpu.pipeline_mode<synchronous>, transform_indices = @transform_3, window_bounds = array<i64: 3, 384, 64>}, {pipeline_mode = #tpu.pipeline_mode<synchronous>, transform_indices = @transform_4, window_bounds = array<i64: 1, 64>}, {pipeline_mode = #tpu.pipeline_mode<synchronous>, transform_indices = @transform_5, window_bounds = array<i64: 3, 3, 64>}, {pipeline_mode = #tpu.pipeline_mode<synchronous>, transform_indices = @transform_6, window_bounds = array<i64: 1, 1>}, {transform_indices = @transform_7, window_bounds = array<i64: 1, 1, 16, 16>}]} {
    %cst = arith.constant 0.000000e+00 : f32
    %0 = vector.broadcast %cst : f32 to vector<1x18x48xf32>
    %cst_0 = arith.constant 0.000000e+00 : f32
    %1 = vector.broadcast %cst_0 : f32 to vector<18x1x48xf32>
    %c0 = arith.constant 0 : index
    %c0_1 = arith.constant 0 : index
    %c0_2 = arith.constant 0 : index
    %2 = vector.load %arg9[%c0, %c0_1, %c0_2] : memref<18x18x48xf32, #tpu.memory_space<vmem>>, vector<1x18x48xf32>
    tpu.vector_store %arg9[%c0, %c0_1, %c0_2], %0 {strides = array<i32>} : memref<18x18x48xf32, #tpu.memory_space<vmem>>, vector<1x18x48xf32>,
    %c17 = arith.constant 17 : index
    %c0_3 = arith.constant 0 : index
    %c0_4 = arith.constant 0 : index
    %3 = vector.load %arg9[%c17, %c0_3, %c0_4] : memref<18x18x48xf32, #tpu.memory_space<vmem>>, vector<1x18x48xf32>
    tpu.vector_store %arg9[%c17, %c0_3, %c0_4], %0 {strides = array<i32>} : memref<18x18x48xf32, #tpu.memory_space<vmem>>, vector<1x18x48xf32>,
    %c0_5 = arith.constant 0 : index
    %c0_6 = arith.constant 0 : index
    %c0_7 = arith.constant 0 : index
    %4 = vector.load %arg9[%c0_5, %c0_6, %c0_7] : memref<18x18x48xf32, #tpu.memory_space<vmem>>, vector<18x1x48xf32>
    tpu.vector_store %arg9[%c0_5, %c0_6, %c0_7], %1 {strides = array<i32>} : memref<18x18x48xf32, #tpu.memory_space<vmem>>, vector<18x1x48xf32>,
    %c0_8 = arith.constant 0 : index
    %c17_9 = arith.constant 17 : index
    %c0_10 = arith.constant 0 : index
    %5 = vector.load %arg9[%c0_8, %c17_9, %c0_10] : memref<18x18x48xf32, #tpu.memory_space<vmem>>, vector<18x1x48xf32>
    tpu.vector_store %arg9[%c0_8, %c17_9, %c0_10], %1 {strides = array<i32>} : memref<18x18x48xf32, #tpu.memory_space<vmem>>, vector<18x1x48xf32>,
    %cst_11 = arith.constant 0.000000e+00 : f32
    %6 = vector.broadcast %cst_11 : f32 to vector<1x18x128xf32>
    %cst_12 = arith.constant 0.000000e+00 : f32
    %7 = vector.broadcast %cst_12 : f32 to vector<18x1x128xf32>
    %c0_13 = arith.constant 0 : index
    %c0_14 = arith.constant 0 : index
    %c0_15 = arith.constant 0 : index
    %8 = vector.load %arg10[%c0_13, %c0_14, %c0_15] : memref<18x18x128xf32, #tpu.memory_space<vmem>>, vector<1x18x128xf32>
    tpu.vector_store %arg10[%c0_13, %c0_14, %c0_15], %6 {strides = array<i32>} : memref<18x18x128xf32, #tpu.memory_space<vmem>>, vector<1x18x128xf32>,
    %c17_16 = arith.constant 17 : index
    %c0_17 = arith.constant 0 : index
    %c0_18 = arith.constant 0 : index
    %9 = vector.load %arg10[%c17_16, %c0_17, %c0_18] : memref<18x18x128xf32, #tpu.memory_space<vmem>>, vector<1x18x128xf32>
    tpu.vector_store %arg10[%c17_16, %c0_17, %c0_18], %6 {strides = array<i32>} : memref<18x18x128xf32, #tpu.memory_space<vmem>>, vector<1x18x128xf32>,
    %c0_19 = arith.constant 0 : index
    %c0_20 = arith.constant 0 : index
    %c0_21 = arith.constant 0 : index
    %10 = vector.load %arg10[%c0_19, %c0_20, %c0_21] : memref<18x18x128xf32, #tpu.memory_space<vmem>>, vector<18x1x128xf32>
    tpu.vector_store %arg10[%c0_19, %c0_20, %c0_21], %7 {strides = array<i32>} : memref<18x18x128xf32, #tpu.memory_space<vmem>>, vector<18x1x128xf32>,
    %c0_22 = arith.constant 0 : index
    %c17_23 = arith.constant 17 : index
    %c0_24 = arith.constant 0 : index
    %11 = vector.load %arg10[%c0_22, %c17_23, %c0_24] : memref<18x18x128xf32, #tpu.memory_space<vmem>>, vector<18x1x128xf32>
    tpu.vector_store %arg10[%c0_22, %c17_23, %c0_24], %7 {strides = array<i32>} : memref<18x18x128xf32, #tpu.memory_space<vmem>>, vector<18x1x128xf32>,
    %cst_25 = arith.constant 0.000000e+00 : f32
    %12 = vector.broadcast %cst_25 : f32 to vector<1x18x64xf32>
    %cst_26 = arith.constant 0.000000e+00 : f32
    %13 = vector.broadcast %cst_26 : f32 to vector<18x1x64xf32>
    %c0_27 = arith.constant 0 : index
    %c0_28 = arith.constant 0 : index
    %c0_29 = arith.constant 0 : index
    %14 = vector.load %arg11[%c0_27, %c0_28, %c0_29] : memref<18x18x64xf32, #tpu.memory_space<vmem>>, vector<1x18x64xf32>
    tpu.vector_store %arg11[%c0_27, %c0_28, %c0_29], %12 {strides = array<i32>} : memref<18x18x64xf32, #tpu.memory_space<vmem>>, vector<1x18x64xf32>,
    %c17_30 = arith.constant 17 : index
    %c0_31 = arith.constant 0 : index
    %c0_32 = arith.constant 0 : index
    %15 = vector.load %arg11[%c17_30, %c0_31, %c0_32] : memref<18x18x64xf32, #tpu.memory_space<vmem>>, vector<1x18x64xf32>
    tpu.vector_store %arg11[%c17_30, %c0_31, %c0_32], %12 {strides = array<i32>} : memref<18x18x64xf32, #tpu.memory_space<vmem>>, vector<1x18x64xf32>,
    %c0_33 = arith.constant 0 : index
    %c0_34 = arith.constant 0 : index
    %c0_35 = arith.constant 0 : index
    %16 = vector.load %arg11[%c0_33, %c0_34, %c0_35] : memref<18x18x64xf32, #tpu.memory_space<vmem>>, vector<18x1x64xf32>
    tpu.vector_store %arg11[%c0_33, %c0_34, %c0_35], %13 {strides = array<i32>} : memref<18x18x64xf32, #tpu.memory_space<vmem>>, vector<18x1x64xf32>,
    %c0_36 = arith.constant 0 : index
    %c17_37 = arith.constant 17 : index
    %c0_38 = arith.constant 0 : index
    %17 = vector.load %arg11[%c0_36, %c17_37, %c0_38] : memref<18x18x64xf32, #tpu.memory_space<vmem>>, vector<18x1x64xf32>
    tpu.vector_store %arg11[%c0_36, %c17_37, %c0_38], %13 {strides = array<i32>} : memref<18x18x64xf32, #tpu.memory_space<vmem>>, vector<18x1x64xf32>,
    %c0_39 = arith.constant 0 : index
    %c0_40 = arith.constant 0 : index
    %c0_41 = arith.constant 0 : index
    %c0_42 = arith.constant 0 : index
    %18 = vector.load %arg1[%c0_39, %c0_40, %c0_41, %c0_42] : memref<1x16x16x48xf32, #tpu.memory_space<vmem>>, vector<1x16x16x48xf32>
    %19 = vector.shape_cast %18 : vector<1x16x16x48xf32> to vector<16x16x48xf32>
    %c1 = arith.constant 1 : index
    %c1_43 = arith.constant 1 : index
    %c0_44 = arith.constant 0 : index
    %20 = vector.load %arg9[%c1, %c1_43, %c0_44] : memref<18x18x48xf32, #tpu.memory_space<vmem>>, vector<16x16x48xf32>
    tpu.vector_store %arg9[%c1, %c1_43, %c0_44], %19 {strides = array<i32>} : memref<18x18x48xf32, #tpu.memory_space<vmem>>, vector<16x16x48xf32>,
    %c0_45 = arith.constant 0 : index
    %c0_46 = arith.constant 0 : index
    %21 = vector.load %arg3[%c0_45, %c0_46] : memref<1x128xf32, #tpu.memory_space<vmem>>, vector<1x128xf32>
    %22 = vector.shape_cast %21 : vector<1x128xf32> to vector<128xf32>
    %cst_47 = arith.constant 0.000000e+00 : f32
    %23 = vector.broadcast %cst_47 : f32 to vector<8x16x128xf32>
    %c0_48 = arith.constant 0 : index
    %c0_49 = arith.constant 0 : index
    %c0_50 = arith.constant 0 : index
    %24 = vector.load %arg9[%c0_48, %c0_49, %c0_50] : memref<18x18x48xf32, #tpu.memory_space<vmem>>, vector<8x18x48xf32>
    %25 = vector.extract_strided_slice %24 {offsets = [0, 0, 0], sizes = [8, 16, 48], strides = [1, 1, 1]} : vector<8x18x48xf32> to vector<8x16x48xf32>
    %c0_51 = arith.constant 0 : index
    %c0_52 = arith.constant 0 : index
    %c0_53 = arith.constant 0 : index
    %c0_54 = arith.constant 0 : index
    %26 = vector.load %arg2[%c0_51, %c0_52, %c0_53, %c0_54] : memref<3x3x48x128xf32, #tpu.memory_space<vmem>>, vector<1x1x48x128xf32>
    %27 = vector.shape_cast %26 : vector<1x1x48x128xf32> to vector<48x128xf32>
    %cst_55 = arith.constant dense<0.000000e+00> : vector<8x16x128xf32>
    %28 = tpu.matmul %25, %27, %cst_55 {dimension_numbers = #tpu.dot_dimension_numbers<[2], [0], [0, 1], [1], [0, 0, 0, 1, 1, 1], [], []>} : vector<8x16x48xf32>, vector<48x128xf32>, vector<8x16x128xf32> -> vector<8x16x128xf32>
    %29 = arith.addf %23, %28 : vector<8x16x128xf32>
    %30 = vector.extract_strided_slice %24 {offsets = [0, 1, 0], sizes = [8, 16, 48], strides = [1, 1, 1]} : vector<8x18x48xf32> to vector<8x16x48xf32>
    %c0_56 = arith.constant 0 : index
    %c1_57 = arith.constant 1 : index
    %c0_58 = arith.constant 0 : index
    %c0_59 = arith.constant 0 : index
    %31 = vector.load %arg2[%c0_56, %c1_57, %c0_58, %c0_59] : memref<3x3x48x128xf32, #tpu.memory_space<vmem>>, vector<1x1x48x128xf32>
    %32 = vector.shape_cast %31 : vector<1x1x48x128xf32> to vector<48x128xf32>
    %cst_60 = arith.constant dense<0.000000e+00> : vector<8x16x128xf32>
    %33 = tpu.matmul %30, %32, %cst_60 {dimension_numbers = #tpu.dot_dimension_numbers<[2], [0], [0, 1], [1], [0, 0, 0, 1, 1, 1], [], []>} : vector<8x16x48xf32>, vector<48x128xf32>, vector<8x16x128xf32> -> vector<8x16x128xf32>
    %34 = arith.addf %29, %33 : vector<8x16x128xf32>
    %35 = vector.extract_strided_slice %24 {offsets = [0, 2, 0], sizes = [8, 16, 48], strides = [1, 1, 1]} : vector<8x18x48xf32> to vector<8x16x48xf32>
    %c0_61 = arith.constant 0 : index
    %c2 = arith.constant 2 : index
    %c0_62 = arith.constant 0 : index
    %c0_63 = arith.constant 0 : index
    %36 = vector.load %arg2[%c0_61, %c2, %c0_62, %c0_63] : memref<3x3x48x128xf32, #tpu.memory_space<vmem>>, vector<1x1x48x128xf32>
    %37 = vector.shape_cast %36 : vector<1x1x48x128xf32> to vector<48x128xf32>
    %cst_64 = arith.constant dense<0.000000e+00> : vector<8x16x128xf32>
    %38 = tpu.matmul %35, %37, %cst_64 {dimension_numbers = #tpu.dot_dimension_numbers<[2], [0], [0, 1], [1], [0, 0, 0, 1, 1, 1], [], []>} : vector<8x16x48xf32>, vector<48x128xf32>, vector<8x16x128xf32> -> vector<8x16x128xf32>
    %39 = arith.addf %34, %38 : vector<8x16x128xf32>
    %c1_65 = arith.constant 1 : index
    %c0_66 = arith.constant 0 : index
    %c0_67 = arith.constant 0 : index
    %40 = vector.load %arg9[%c1_65, %c0_66, %c0_67] : memref<18x18x48xf32, #tpu.memory_space<vmem>>, vector<8x18x48xf32>
    %41 = vector.extract_strided_slice %40 {offsets = [0, 0, 0], sizes = [8, 16, 48], strides = [1, 1, 1]} : vector<8x18x48xf32> to vector<8x16x48xf32>
    %c1_68 = arith.constant 1 : index
    %c0_69 = arith.constant 0 : index
    %c0_70 = arith.constant 0 : index
    %c0_71 = arith.constant 0 : index
    %42 = vector.load %arg2[%c1_68, %c0_69, %c0_70, %c0_71] : memref<3x3x48x128xf32, #tpu.memory_space<vmem>>, vector<1x1x48x128xf32>
    %43 = vector.shape_cast %42 : vector<1x1x48x128xf32> to vector<48x128xf32>
    %cst_72 = arith.constant dense<0.000000e+00> : vector<8x16x128xf32>
    %44 = tpu.matmul %41, %43, %cst_72 {dimension_numbers = #tpu.dot_dimension_numbers<[2], [0], [0, 1], [1], [0, 0, 0, 1, 1, 1], [], []>} : vector<8x16x48xf32>, vector<48x128xf32>, vector<8x16x128xf32> -> vector<8x16x128xf32>
    %45 = arith.addf %39, %44 : vector<8x16x128xf32>
    %46 = vector.extract_strided_slice %40 {offsets = [0, 1, 0], sizes = [8, 16, 48], strides = [1, 1, 1]} : vector<8x18x48xf32> to vector<8x16x48xf32>
    %c1_73 = arith.constant 1 : index
    %c1_74 = arith.constant 1 : index
    %c0_75 = arith.constant 0 : index
    %c0_76 = arith.constant 0 : index
    %47 = vector.load %arg2[%c1_73, %c1_74, %c0_75, %c0_76] : memref<3x3x48x128xf32, #tpu.memory_space<vmem>>, vector<1x1x48x128xf32>
    %48 = vector.shape_cast %47 : vector<1x1x48x128xf32> to vector<48x128xf32>
    %cst_77 = arith.constant dense<0.000000e+00> : vector<8x16x128xf32>
    %49 = tpu.matmul %46, %48, %cst_77 {dimension_numbers = #tpu.dot_dimension_numbers<[2], [0], [0, 1], [1], [0, 0, 0, 1, 1, 1], [], []>} : vector<8x16x48xf32>, vector<48x128xf32>, vector<8x16x128xf32> -> vector<8x16x128xf32>
    %50 = arith.addf %45, %49 : vector<8x16x128xf32>
    %51 = vector.extract_strided_slice %40 {offsets = [0, 2, 0], sizes = [8, 16, 48], strides = [1, 1, 1]} : vector<8x18x48xf32> to vector<8x16x48xf32>
    %c1_78 = arith.constant 1 : index
    %c2_79 = arith.constant 2 : index
    %c0_80 = arith.constant 0 : index
    %c0_81 = arith.constant 0 : index
    %52 = vector.load %arg2[%c1_78, %c2_79, %c0_80, %c0_81] : memref<3x3x48x128xf32, #tpu.memory_space<vmem>>, vector<1x1x48x128xf32>
    %53 = vector.shape_cast %52 : vector<1x1x48x128xf32> to vector<48x128xf32>
    %cst_82 = arith.constant dense<0.000000e+00> : vector<8x16x128xf32>
    %54 = tpu.matmul %51, %53, %cst_82 {dimension_numbers = #tpu.dot_dimension_numbers<[2], [0], [0, 1], [1], [0, 0, 0, 1, 1, 1], [], []>} : vector<8x16x48xf32>, vector<48x128xf32>, vector<8x16x128xf32> -> vector<8x16x128xf32>
    %55 = arith.addf %50, %54 : vector<8x16x128xf32>
    %c2_83 = arith.constant 2 : index
    %c0_84 = arith.constant 0 : index
    %c0_85 = arith.constant 0 : index
    %56 = vector.load %arg9[%c2_83, %c0_84, %c0_85] : memref<18x18x48xf32, #tpu.memory_space<vmem>>, vector<8x18x48xf32>
    %57 = vector.extract_strided_slice %56 {offsets = [0, 0, 0], sizes = [8, 16, 48], strides = [1, 1, 1]} : vector<8x18x48xf32> to vector<8x16x48xf32>
    %c2_86 = arith.constant 2 : index
    %c0_87 = arith.constant 0 : index
    %c0_88 = arith.constant 0 : index
    %c0_89 = arith.constant 0 : index
    %58 = vector.load %arg2[%c2_86, %c0_87, %c0_88, %c0_89] : memref<3x3x48x128xf32, #tpu.memory_space<vmem>>, vector<1x1x48x128xf32>
    %59 = vector.shape_cast %58 : vector<1x1x48x128xf32> to vector<48x128xf32>
    %cst_90 = arith.constant dense<0.000000e+00> : vector<8x16x128xf32>
    %60 = tpu.matmul %57, %59, %cst_90 {dimension_numbers = #tpu.dot_dimension_numbers<[2], [0], [0, 1], [1], [0, 0, 0, 1, 1, 1], [], []>} : vector<8x16x48xf32>, vector<48x128xf32>, vector<8x16x128xf32> -> vector<8x16x128xf32>
    %61 = arith.addf %55, %60 : vector<8x16x128xf32>
    %62 = vector.extract_strided_slice %56 {offsets = [0, 1, 0], sizes = [8, 16, 48], strides = [1, 1, 1]} : vector<8x18x48xf32> to vector<8x16x48xf32>
    %c2_91 = arith.constant 2 : index
    %c1_92 = arith.constant 1 : index
    %c0_93 = arith.constant 0 : index
    %c0_94 = arith.constant 0 : index
    %63 = vector.load %arg2[%c2_91, %c1_92, %c0_93, %c0_94] : memref<3x3x48x128xf32, #tpu.memory_space<vmem>>, vector<1x1x48x128xf32>
    %64 = vector.shape_cast %63 : vector<1x1x48x128xf32> to vector<48x128xf32>
    %cst_95 = arith.constant dense<0.000000e+00> : vector<8x16x128xf32>
    %65 = tpu.matmul %62, %64, %cst_95 {dimension_numbers = #tpu.dot_dimension_numbers<[2], [0], [0, 1], [1], [0, 0, 0, 1, 1, 1], [], []>} : vector<8x16x48xf32>, vector<48x128xf32>, vector<8x16x128xf32> -> vector<8x16x128xf32>
    %66 = arith.addf %61, %65 : vector<8x16x128xf32>
    %67 = vector.extract_strided_slice %56 {offsets = [0, 2, 0], sizes = [8, 16, 48], strides = [1, 1, 1]} : vector<8x18x48xf32> to vector<8x16x48xf32>
    %c2_96 = arith.constant 2 : index
    %c2_97 = arith.constant 2 : index
    %c0_98 = arith.constant 0 : index
    %c0_99 = arith.constant 0 : index
    %68 = vector.load %arg2[%c2_96, %c2_97, %c0_98, %c0_99] : memref<3x3x48x128xf32, #tpu.memory_space<vmem>>, vector<1x1x48x128xf32>
    %69 = vector.shape_cast %68 : vector<1x1x48x128xf32> to vector<48x128xf32>
    %cst_100 = arith.constant dense<0.000000e+00> : vector<8x16x128xf32>
    %70 = tpu.matmul %67, %69, %cst_100 {dimension_numbers = #tpu.dot_dimension_numbers<[2], [0], [0, 1], [1], [0, 0, 0, 1, 1, 1], [], []>} : vector<8x16x48xf32>, vector<48x128xf32>, vector<8x16x128xf32> -> vector<8x16x128xf32>
    %71 = arith.addf %66, %70 : vector<8x16x128xf32>
    %72 = vector.shape_cast %22 : vector<128xf32> to vector<1x1x128xf32>
    %73 = vector.broadcast %72 : vector<1x1x128xf32> to vector<8x16x128xf32>
    %74 = arith.addf %71, %73 : vector<8x16x128xf32>
    %cst_101 = arith.constant 0.000000e+00 : f32
    %75 = vector.broadcast %cst_101 : f32 to vector<8x16x128xf32>
    %76 = arith.cmpf ogt, %74, %75 : vector<8x16x128xf32>
    %cst_102 = arith.constant 0.00999999977 : f32
    %77 = vector.broadcast %cst_102 : f32 to vector<8x16x128xf32>
    %78 = arith.mulf %77, %74 : vector<8x16x128xf32>
    %79 = arith.select %76, %74, %78 : vector<8x16x128xi1>, vector<8x16x128xf32>
    %c1_103 = arith.constant 1 : index
    %c1_104 = arith.constant 1 : index
    %c0_105 = arith.constant 0 : index
    %80 = vector.load %arg10[%c1_103, %c1_104, %c0_105] : memref<18x18x128xf32, #tpu.memory_space<vmem>>, vector<8x16x128xf32>
    tpu.vector_store %arg10[%c1_103, %c1_104, %c0_105], %79 {strides = array<i32>} : memref<18x18x128xf32, #tpu.memory_space<vmem>>, vector<8x16x128xf32>,
    %cst_106 = arith.constant 0.000000e+00 : f32
    %81 = vector.broadcast %cst_106 : f32 to vector<8x16x128xf32>
    %c8 = arith.constant 8 : index
    %c0_107 = arith.constant 0 : index
    %c0_108 = arith.constant 0 : index
    %82 = vector.load %arg9[%c8, %c0_107, %c0_108] : memref<18x18x48xf32, #tpu.memory_space<vmem>>, vector<8x18x48xf32>
    %83 = vector.extract_strided_slice %82 {offsets = [0, 0, 0], sizes = [8, 16, 48], strides = [1, 1, 1]} : vector<8x18x48xf32> to vector<8x16x48xf32>
    %c0_109 = arith.constant 0 : index
    %c0_110 = arith.constant 0 : index
    %c0_111 = arith.constant 0 : index
    %c0_112 = arith.constant 0 : index
    %84 = vector.load %arg2[%c0_109, %c0_110, %c0_111, %c0_112] : memref<3x3x48x128xf32, #tpu.memory_space<vmem>>, vector<1x1x48x128xf32>
    %85 = vector.shape_cast %84 : vector<1x1x48x128xf32> to vector<48x128xf32>
    %cst_113 = arith.constant dense<0.000000e+00> : vector<8x16x128xf32>
    %86 = tpu.matmul %83, %85, %cst_113 {dimension_numbers = #tpu.dot_dimension_numbers<[2], [0], [0, 1], [1], [0, 0, 0, 1, 1, 1], [], []>} : vector<8x16x48xf32>, vector<48x128xf32>, vector<8x16x128xf32> -> vector<8x16x128xf32>
    %87 = arith.addf %81, %86 : vector<8x16x128xf32>
    %88 = vector.extract_strided_slice %82 {offsets = [0, 1, 0], sizes = [8, 16, 48], strides = [1, 1, 1]} : vector<8x18x48xf32> to vector<8x16x48xf32>
    %c0_114 = arith.constant 0 : index
    %c1_115 = arith.constant 1 : index
    %c0_116 = arith.constant 0 : index
    %c0_117 = arith.constant 0 : index
    %89 = vector.load %arg2[%c0_114, %c1_115, %c0_116, %c0_117] : memref<3x3x48x128xf32, #tpu.memory_space<vmem>>, vector<1x1x48x128xf32>
    %90 = vector.shape_cast %89 : vector<1x1x48x128xf32> to vector<48x128xf32>
    %cst_118 = arith.constant dense<0.000000e+00> : vector<8x16x128xf32>
    %91 = tpu.matmul %88, %90, %cst_118 {dimension_numbers = #tpu.dot_dimension_numbers<[2], [0], [0, 1], [1], [0, 0, 0, 1, 1, 1], [], []>} : vector<8x16x48xf32>, vector<48x128xf32>, vector<8x16x128xf32> -> vector<8x16x128xf32>
    %92 = arith.addf %87, %91 : vector<8x16x128xf32>
    %93 = vector.extract_strided_slice %82 {offsets = [0, 2, 0], sizes = [8, 16, 48], strides = [1, 1, 1]} : vector<8x18x48xf32> to vector<8x16x48xf32>
    %c0_119 = arith.constant 0 : index
    %c2_120 = arith.constant 2 : index
    %c0_121 = arith.constant 0 : index
    %c0_122 = arith.constant 0 : index
    %94 = vector.load %arg2[%c0_119, %c2_120, %c0_121, %c0_122] : memref<3x3x48x128xf32, #tpu.memory_space<vmem>>, vector<1x1x48x128xf32>
    %95 = vector.shape_cast %94 : vector<1x1x48x128xf32> to vector<48x128xf32>
    %cst_123 = arith.constant dense<0.000000e+00> : vector<8x16x128xf32>
    %96 = tpu.matmul %93, %95, %cst_123 {dimension_numbers = #tpu.dot_dimension_numbers<[2], [0], [0, 1], [1], [0, 0, 0, 1, 1, 1], [], []>} : vector<8x16x48xf32>, vector<48x128xf32>, vector<8x16x128xf32> -> vector<8x16x128xf32>
    %97 = arith.addf %92, %96 : vector<8x16x128xf32>
    %c9 = arith.constant 9 : index
    %c0_124 = arith.constant 0 : index
    %c0_125 = arith.constant 0 : index
    %98 = vector.load %arg9[%c9, %c0_124, %c0_125] : memref<18x18x48xf32, #tpu.memory_space<vmem>>, vector<8x18x48xf32>
    %99 = vector.extract_strided_slice %98 {offsets = [0, 0, 0], sizes = [8, 16, 48], strides = [1, 1, 1]} : vector<8x18x48xf32> to vector<8x16x48xf32>
    %c1_126 = arith.constant 1 : index
    %c0_127 = arith.constant 0 : index
    %c0_128 = arith.constant 0 : index
    %c0_129 = arith.constant 0 : index
    %100 = vector.load %arg2[%c1_126, %c0_127, %c0_128, %c0_129] : memref<3x3x48x128xf32, #tpu.memory_space<vmem>>, vector<1x1x48x128xf32>
    %101 = vector.shape_cast %100 : vector<1x1x48x128xf32> to vector<48x128xf32>
    %cst_130 = arith.constant dense<0.000000e+00> : vector<8x16x128xf32>
    %102 = tpu.matmul %99, %101, %cst_130 {dimension_numbers = #tpu.dot_dimension_numbers<[2], [0], [0, 1], [1], [0, 0, 0, 1, 1, 1], [], []>} : vector<8x16x48xf32>, vector<48x128xf32>, vector<8x16x128xf32> -> vector<8x16x128xf32>
    %103 = arith.addf %97, %102 : vector<8x16x128xf32>
    %104 = vector.extract_strided_slice %98 {offsets = [0, 1, 0], sizes = [8, 16, 48], strides = [1, 1, 1]} : vector<8x18x48xf32> to vector<8x16x48xf32>
    %c1_131 = arith.constant 1 : index
    %c1_132 = arith.constant 1 : index
    %c0_133 = arith.constant 0 : index
    %c0_134 = arith.constant 0 : index
    %105 = vector.load %arg2[%c1_131, %c1_132, %c0_133, %c0_134] : memref<3x3x48x128xf32, #tpu.memory_space<vmem>>, vector<1x1x48x128xf32>
    %106 = vector.shape_cast %105 : vector<1x1x48x128xf32> to vector<48x128xf32>
    %cst_135 = arith.constant dense<0.000000e+00> : vector<8x16x128xf32>
    %107 = tpu.matmul %104, %106, %cst_135 {dimension_numbers = #tpu.dot_dimension_numbers<[2], [0], [0, 1], [1], [0, 0, 0, 1, 1, 1], [], []>} : vector<8x16x48xf32>, vector<48x128xf32>, vector<8x16x128xf32> -> vector<8x16x128xf32>
    %108 = arith.addf %103, %107 : vector<8x16x128xf32>
    %109 = vector.extract_strided_slice %98 {offsets = [0, 2, 0], sizes = [8, 16, 48], strides = [1, 1, 1]} : vector<8x18x48xf32> to vector<8x16x48xf32>
    %c1_136 = arith.constant 1 : index
    %c2_137 = arith.constant 2 : index
    %c0_138 = arith.constant 0 : index
    %c0_139 = arith.constant 0 : index
    %110 = vector.load %arg2[%c1_136, %c2_137, %c0_138, %c0_139] : memref<3x3x48x128xf32, #tpu.memory_space<vmem>>, vector<1x1x48x128xf32>
    %111 = vector.shape_cast %110 : vector<1x1x48x128xf32> to vector<48x128xf32>
    %cst_140 = arith.constant dense<0.000000e+00> : vector<8x16x128xf32>
    %112 = tpu.matmul %109, %111, %cst_140 {dimension_numbers = #tpu.dot_dimension_numbers<[2], [0], [0, 1], [1], [0, 0, 0, 1, 1, 1], [], []>} : vector<8x16x48xf32>, vector<48x128xf32>, vector<8x16x128xf32> -> vector<8x16x128xf32>
    %113 = arith.addf %108, %112 : vector<8x16x128xf32>
    %c10 = arith.constant 10 : index
    %c0_141 = arith.constant 0 : index
    %c0_142 = arith.constant 0 : index
    %114 = vector.load %arg9[%c10, %c0_141, %c0_142] : memref<18x18x48xf32, #tpu.memory_space<vmem>>, vector<8x18x48xf32>
    %115 = vector.extract_strided_slice %114 {offsets = [0, 0, 0], sizes = [8, 16, 48], strides = [1, 1, 1]} : vector<8x18x48xf32> to vector<8x16x48xf32>
    %c2_143 = arith.constant 2 : index
    %c0_144 = arith.constant 0 : index
    %c0_145 = arith.constant 0 : index
    %c0_146 = arith.constant 0 : index
    %116 = vector.load %arg2[%c2_143, %c0_144, %c0_145, %c0_146] : memref<3x3x48x128xf32, #tpu.memory_space<vmem>>, vector<1x1x48x128xf32>
    %117 = vector.shape_cast %116 : vector<1x1x48x128xf32> to vector<48x128xf32>
    %cst_147 = arith.constant dense<0.000000e+00> : vector<8x16x128xf32>
    %118 = tpu.matmul %115, %117, %cst_147 {dimension_numbers = #tpu.dot_dimension_numbers<[2], [0], [0, 1], [1], [0, 0, 0, 1, 1, 1], [], []>} : vector<8x16x48xf32>, vector<48x128xf32>, vector<8x16x128xf32> -> vector<8x16x128xf32>
    %119 = arith.addf %113, %118 : vector<8x16x128xf32>
    %120 = vector.extract_strided_slice %114 {offsets = [0, 1, 0], sizes = [8, 16, 48], strides = [1, 1, 1]} : vector<8x18x48xf32> to vector<8x16x48xf32>
    %c2_148 = arith.constant 2 : index
    %c1_149 = arith.constant 1 : index
    %c0_150 = arith.constant 0 : index
    %c0_151 = arith.constant 0 : index
    %121 = vector.load %arg2[%c2_148, %c1_149, %c0_150, %c0_151] : memref<3x3x48x128xf32, #tpu.memory_space<vmem>>, vector<1x1x48x128xf32>
    %122 = vector.shape_cast %121 : vector<1x1x48x128xf32> to vector<48x128xf32>
    %cst_152 = arith.constant dense<0.000000e+00> : vector<8x16x128xf32>
    %123 = tpu.matmul %120, %122, %cst_152 {dimension_numbers = #tpu.dot_dimension_numbers<[2], [0], [0, 1], [1], [0, 0, 0, 1, 1, 1], [], []>} : vector<8x16x48xf32>, vector<48x128xf32>, vector<8x16x128xf32> -> vector<8x16x128xf32>
    %124 = arith.addf %119, %123 : vector<8x16x128xf32>
    %125 = vector.extract_strided_slice %114 {offsets = [0, 2, 0], sizes = [8, 16, 48], strides = [1, 1, 1]} : vector<8x18x48xf32> to vector<8x16x48xf32>
    %c2_153 = arith.constant 2 : index
    %c2_154 = arith.constant 2 : index
    %c0_155 = arith.constant 0 : index
    %c0_156 = arith.constant 0 : index
    %126 = vector.load %arg2[%c2_153, %c2_154, %c0_155, %c0_156] : memref<3x3x48x128xf32, #tpu.memory_space<vmem>>, vector<1x1x48x128xf32>
    %127 = vector.shape_cast %126 : vector<1x1x48x128xf32> to vector<48x128xf32>
    %cst_157 = arith.constant dense<0.000000e+00> : vector<8x16x128xf32>
    %128 = tpu.matmul %125, %127, %cst_157 {dimension_numbers = #tpu.dot_dimension_numbers<[2], [0], [0, 1], [1], [0, 0, 0, 1, 1, 1], [], []>} : vector<8x16x48xf32>, vector<48x128xf32>, vector<8x16x128xf32> -> vector<8x16x128xf32>
    %129 = arith.addf %124, %128 : vector<8x16x128xf32>
    %130 = vector.shape_cast %22 : vector<128xf32> to vector<1x1x128xf32>
    %131 = vector.broadcast %130 : vector<1x1x128xf32> to vector<8x16x128xf32>
    %132 = arith.addf %129, %131 : vector<8x16x128xf32>
    %cst_158 = arith.constant 0.000000e+00 : f32
    %133 = vector.broadcast %cst_158 : f32 to vector<8x16x128xf32>
    %134 = arith.cmpf ogt, %132, %133 : vector<8x16x128xf32>
    %cst_159 = arith.constant 0.00999999977 : f32
    %135 = vector.broadcast %cst_159 : f32 to vector<8x16x128xf32>
    %136 = arith.mulf %135, %132 : vector<8x16x128xf32>
    %137 = arith.select %134, %132, %136 : vector<8x16x128xi1>, vector<8x16x128xf32>
    %c9_160 = arith.constant 9 : index
    %c1_161 = arith.constant 1 : index
    %c0_162 = arith.constant 0 : index
    %138 = vector.load %arg10[%c9_160, %c1_161, %c0_162] : memref<18x18x128xf32, #tpu.memory_space<vmem>>, vector<8x16x128xf32>
    tpu.vector_store %arg10[%c9_160, %c1_161, %c0_162], %137 {strides = array<i32>} : memref<18x18x128xf32, #tpu.memory_space<vmem>>, vector<8x16x128xf32>,
    %c0_163 = arith.constant 0 : index
    %c0_164 = arith.constant 0 : index
    %139 = vector.load %arg5[%c0_163, %c0_164] : memref<1x64xf32, #tpu.memory_space<vmem>>, vector<1x64xf32>
    %140 = vector.shape_cast %139 : vector<1x64xf32> to vector<64xf32>
    %cst_165 = arith.constant 0.000000e+00 : f32
    %141 = vector.broadcast %cst_165 : f32 to vector<8x16x64xf32>
    %c0_166 = arith.constant 0 : index
    %c0_167 = arith.constant 0 : index
    %c0_168 = arith.constant 0 : index
    %142 = vector.load %arg10[%c0_166, %c0_167, %c0_168] : memref<18x18x128xf32, #tpu.memory_space<vmem>>, vector<8x18x128xf32>
    %143 = vector.extract_strided_slice %142 {offsets = [0, 0, 0], sizes = [8, 16, 128], strides = [1, 1, 1]} : vector<8x18x128xf32> to vector<8x16x128xf32>
    %144 = vector.extract_strided_slice %142 {offsets = [0, 1, 0], sizes = [8, 16, 128], strides = [1, 1, 1]} : vector<8x18x128xf32> to vector<8x16x128xf32>
    %145 = vector.extract_strided_slice %142 {offsets = [0, 2, 0], sizes = [8, 16, 128], strides = [1, 1, 1]} : vector<8x18x128xf32> to vector<8x16x128xf32>
    %146 = tpu.concatenate %143, %144, %145 in 2 : vector<8x16x128xf32>, vector<8x16x128xf32>, vector<8x16x128xf32> -> vector<8x16x384xf32>
    %c0_169 = arith.constant 0 : index
    %c0_170 = arith.constant 0 : index
    %c0_171 = arith.constant 0 : index
    %147 = vector.load %arg4[%c0_169, %c0_170, %c0_171] : memref<3x384x64xf32, #tpu.memory_space<vmem>>, vector<1x384x64xf32>
    %148 = vector.shape_cast %147 : vector<1x384x64xf32> to vector<384x64xf32>
    %cst_172 = arith.constant dense<0.000000e+00> : vector<8x16x64xf32>
    %149 = tpu.matmul %146, %148, %cst_172 {dimension_numbers = #tpu.dot_dimension_numbers<[2], [0], [0, 1], [1], [0, 0, 0, 1, 1, 1], [], []>} : vector<8x16x384xf32>, vector<384x64xf32>, vector<8x16x64xf32> -> vector<8x16x64xf32>
    %150 = arith.addf %141, %149 : vector<8x16x64xf32>
    %c1_173 = arith.constant 1 : index
    %c0_174 = arith.constant 0 : index
    %c0_175 = arith.constant 0 : index
    %151 = vector.load %arg10[%c1_173, %c0_174, %c0_175] : memref<18x18x128xf32, #tpu.memory_space<vmem>>, vector<8x18x128xf32>
    %152 = vector.extract_strided_slice %151 {offsets = [0, 0, 0], sizes = [8, 16, 128], strides = [1, 1, 1]} : vector<8x18x128xf32> to vector<8x16x128xf32>
    %153 = vector.extract_strided_slice %151 {offsets = [0, 1, 0], sizes = [8, 16, 128], strides = [1, 1, 1]} : vector<8x18x128xf32> to vector<8x16x128xf32>
    %154 = vector.extract_strided_slice %151 {offsets = [0, 2, 0], sizes = [8, 16, 128], strides = [1, 1, 1]} : vector<8x18x128xf32> to vector<8x16x128xf32>
    %155 = tpu.concatenate %152, %153, %154 in 2 : vector<8x16x128xf32>, vector<8x16x128xf32>, vector<8x16x128xf32> -> vector<8x16x384xf32>
    %c1_176 = arith.constant 1 : index
    %c0_177 = arith.constant 0 : index
    %c0_178 = arith.constant 0 : index
    %156 = vector.load %arg4[%c1_176, %c0_177, %c0_178] : memref<3x384x64xf32, #tpu.memory_space<vmem>>, vector<1x384x64xf32>
    %157 = vector.shape_cast %156 : vector<1x384x64xf32> to vector<384x64xf32>
    %cst_179 = arith.constant dense<0.000000e+00> : vector<8x16x64xf32>
    %158 = tpu.matmul %155, %157, %cst_179 {dimension_numbers = #tpu.dot_dimension_numbers<[2], [0], [0, 1], [1], [0, 0, 0, 1, 1, 1], [], []>} : vector<8x16x384xf32>, vector<384x64xf32>, vector<8x16x64xf32> -> vector<8x16x64xf32>
    %159 = arith.addf %150, %158 : vector<8x16x64xf32>
    %c2_180 = arith.constant 2 : index
    %c0_181 = arith.constant 0 : index
    %c0_182 = arith.constant 0 : index
    %160 = vector.load %arg10[%c2_180, %c0_181, %c0_182] : memref<18x18x128xf32, #tpu.memory_space<vmem>>, vector<8x18x128xf32>
    %161 = vector.extract_strided_slice %160 {offsets = [0, 0, 0], sizes = [8, 16, 128], strides = [1, 1, 1]} : vector<8x18x128xf32> to vector<8x16x128xf32>
    %162 = vector.extract_strided_slice %160 {offsets = [0, 1, 0], sizes = [8, 16, 128], strides = [1, 1, 1]} : vector<8x18x128xf32> to vector<8x16x128xf32>
    %163 = vector.extract_strided_slice %160 {offsets = [0, 2, 0], sizes = [8, 16, 128], strides = [1, 1, 1]} : vector<8x18x128xf32> to vector<8x16x128xf32>
    %164 = tpu.concatenate %161, %162, %163 in 2 : vector<8x16x128xf32>, vector<8x16x128xf32>, vector<8x16x128xf32> -> vector<8x16x384xf32>
    %c2_183 = arith.constant 2 : index
    %c0_184 = arith.constant 0 : index
    %c0_185 = arith.constant 0 : index
    %165 = vector.load %arg4[%c2_183, %c0_184, %c0_185] : memref<3x384x64xf32, #tpu.memory_space<vmem>>, vector<1x384x64xf32>
    %166 = vector.shape_cast %165 : vector<1x384x64xf32> to vector<384x64xf32>
    %cst_186 = arith.constant dense<0.000000e+00> : vector<8x16x64xf32>
    %167 = tpu.matmul %164, %166, %cst_186 {dimension_numbers = #tpu.dot_dimension_numbers<[2], [0], [0, 1], [1], [0, 0, 0, 1, 1, 1], [], []>} : vector<8x16x384xf32>, vector<384x64xf32>, vector<8x16x64xf32> -> vector<8x16x64xf32>
    %168 = arith.addf %159, %167 : vector<8x16x64xf32>
    %169 = vector.shape_cast %140 : vector<64xf32> to vector<1x1x64xf32>
    %170 = vector.broadcast %169 : vector<1x1x64xf32> to vector<8x16x64xf32>
    %171 = arith.addf %168, %170 : vector<8x16x64xf32>
    %cst_187 = arith.constant 0.000000e+00 : f32
    %172 = vector.broadcast %cst_187 : f32 to vector<8x16x64xf32>
    %173 = arith.cmpf ogt, %171, %172 : vector<8x16x64xf32>
    %cst_188 = arith.constant 0.00999999977 : f32
    %174 = vector.broadcast %cst_188 : f32 to vector<8x16x64xf32>
    %175 = arith.mulf %174, %171 : vector<8x16x64xf32>
    %176 = arith.select %173, %171, %175 : vector<8x16x64xi1>, vector<8x16x64xf32>
    %c1_189 = arith.constant 1 : index
    %c1_190 = arith.constant 1 : index
    %c0_191 = arith.constant 0 : index
    %177 = vector.load %arg11[%c1_189, %c1_190, %c0_191] : memref<18x18x64xf32, #tpu.memory_space<vmem>>, vector<8x16x64xf32>
    tpu.vector_store %arg11[%c1_189, %c1_190, %c0_191], %176 {strides = array<i32>} : memref<18x18x64xf32, #tpu.memory_space<vmem>>, vector<8x16x64xf32>,
    %cst_192 = arith.constant 0.000000e+00 : f32
    %178 = vector.broadcast %cst_192 : f32 to vector<8x16x64xf32>
    %c8_193 = arith.constant 8 : index
    %c0_194 = arith.constant 0 : index
    %c0_195 = arith.constant 0 : index
    %179 = vector.load %arg10[%c8_193, %c0_194, %c0_195] : memref<18x18x128xf32, #tpu.memory_space<vmem>>, vector<8x18x128xf32>
    %180 = vector.extract_strided_slice %179 {offsets = [0, 0, 0], sizes = [8, 16, 128], strides = [1, 1, 1]} : vector<8x18x128xf32> to vector<8x16x128xf32>
    %181 = vector.extract_strided_slice %179 {offsets = [0, 1, 0], sizes = [8, 16, 128], strides = [1, 1, 1]} : vector<8x18x128xf32> to vector<8x16x128xf32>
    %182 = vector.extract_strided_slice %179 {offsets = [0, 2, 0], sizes = [8, 16, 128], strides = [1, 1, 1]} : vector<8x18x128xf32> to vector<8x16x128xf32>
    %183 = tpu.concatenate %180, %181, %182 in 2 : vector<8x16x128xf32>, vector<8x16x128xf32>, vector<8x16x128xf32> -> vector<8x16x384xf32>
    %c0_196 = arith.constant 0 : index
    %c0_197 = arith.constant 0 : index
    %c0_198 = arith.constant 0 : index
    %184 = vector.load %arg4[%c0_196, %c0_197, %c0_198] : memref<3x384x64xf32, #tpu.memory_space<vmem>>, vector<1x384x64xf32>
    %185 = vector.shape_cast %184 : vector<1x384x64xf32> to vector<384x64xf32>
    %cst_199 = arith.constant dense<0.000000e+00> : vector<8x16x64xf32>
    %186 = tpu.matmul %183, %185, %cst_199 {dimension_numbers = #tpu.dot_dimension_numbers<[2], [0], [0, 1], [1], [0, 0, 0, 1, 1, 1], [], []>} : vector<8x16x384xf32>, vector<384x64xf32>, vector<8x16x64xf32> -> vector<8x16x64xf32>
    %187 = arith.addf %178, %186 : vector<8x16x64xf32>
    %c9_200 = arith.constant 9 : index
    %c0_201 = arith.constant 0 : index
    %c0_202 = arith.constant 0 : index
    %188 = vector.load %arg10[%c9_200, %c0_201, %c0_202] : memref<18x18x128xf32, #tpu.memory_space<vmem>>, vector<8x18x128xf32>
    %189 = vector.extract_strided_slice %188 {offsets = [0, 0, 0], sizes = [8, 16, 128], strides = [1, 1, 1]} : vector<8x18x128xf32> to vector<8x16x128xf32>
    %190 = vector.extract_strided_slice %188 {offsets = [0, 1, 0], sizes = [8, 16, 128], strides = [1, 1, 1]} : vector<8x18x128xf32> to vector<8x16x128xf32>
    %191 = vector.extract_strided_slice %188 {offsets = [0, 2, 0], sizes = [8, 16, 128], strides = [1, 1, 1]} : vector<8x18x128xf32> to vector<8x16x128xf32>
    %192 = tpu.concatenate %189, %190, %191 in 2 : vector<8x16x128xf32>, vector<8x16x128xf32>, vector<8x16x128xf32> -> vector<8x16x384xf32>
    %c1_203 = arith.constant 1 : index
    %c0_204 = arith.constant 0 : index
    %c0_205 = arith.constant 0 : index
    %193 = vector.load %arg4[%c1_203, %c0_204, %c0_205] : memref<3x384x64xf32, #tpu.memory_space<vmem>>, vector<1x384x64xf32>
    %194 = vector.shape_cast %193 : vector<1x384x64xf32> to vector<384x64xf32>
    %cst_206 = arith.constant dense<0.000000e+00> : vector<8x16x64xf32>
    %195 = tpu.matmul %192, %194, %cst_206 {dimension_numbers = #tpu.dot_dimension_numbers<[2], [0], [0, 1], [1], [0, 0, 0, 1, 1, 1], [], []>} : vector<8x16x384xf32>, vector<384x64xf32>, vector<8x16x64xf32> -> vector<8x16x64xf32>
    %196 = arith.addf %187, %195 : vector<8x16x64xf32>
    %c10_207 = arith.constant 10 : index
    %c0_208 = arith.constant 0 : index
    %c0_209 = arith.constant 0 : index
    %197 = vector.load %arg10[%c10_207, %c0_208, %c0_209] : memref<18x18x128xf32, #tpu.memory_space<vmem>>, vector<8x18x128xf32>
    %198 = vector.extract_strided_slice %197 {offsets = [0, 0, 0], sizes = [8, 16, 128], strides = [1, 1, 1]} : vector<8x18x128xf32> to vector<8x16x128xf32>
    %199 = vector.extract_strided_slice %197 {offsets = [0, 1, 0], sizes = [8, 16, 128], strides = [1, 1, 1]} : vector<8x18x128xf32> to vector<8x16x128xf32>
    %200 = vector.extract_strided_slice %197 {offsets = [0, 2, 0], sizes = [8, 16, 128], strides = [1, 1, 1]} : vector<8x18x128xf32> to vector<8x16x128xf32>
    %201 = tpu.concatenate %198, %199, %200 in 2 : vector<8x16x128xf32>, vector<8x16x128xf32>, vector<8x16x128xf32> -> vector<8x16x384xf32>
    %c2_210 = arith.constant 2 : index
    %c0_211 = arith.constant 0 : index
    %c0_212 = arith.constant 0 : index
    %202 = vector.load %arg4[%c2_210, %c0_211, %c0_212] : memref<3x384x64xf32, #tpu.memory_space<vmem>>, vector<1x384x64xf32>
    %203 = vector.shape_cast %202 : vector<1x384x64xf32> to vector<384x64xf32>
    %cst_213 = arith.constant dense<0.000000e+00> : vector<8x16x64xf32>
    %204 = tpu.matmul %201, %203, %cst_213 {dimension_numbers = #tpu.dot_dimension_numbers<[2], [0], [0, 1], [1], [0, 0, 0, 1, 1, 1], [], []>} : vector<8x16x384xf32>, vector<384x64xf32>, vector<8x16x64xf32> -> vector<8x16x64xf32>
    %205 = arith.addf %196, %204 : vector<8x16x64xf32>
    %206 = vector.shape_cast %140 : vector<64xf32> to vector<1x1x64xf32>
    %207 = vector.broadcast %206 : vector<1x1x64xf32> to vector<8x16x64xf32>
    %208 = arith.addf %205, %207 : vector<8x16x64xf32>
    %cst_214 = arith.constant 0.000000e+00 : f32
    %209 = vector.broadcast %cst_214 : f32 to vector<8x16x64xf32>
    %210 = arith.cmpf ogt, %208, %209 : vector<8x16x64xf32>
    %cst_215 = arith.constant 0.00999999977 : f32
    %211 = vector.broadcast %cst_215 : f32 to vector<8x16x64xf32>
    %212 = arith.mulf %211, %208 : vector<8x16x64xf32>
    %213 = arith.select %210, %208, %212 : vector<8x16x64xi1>, vector<8x16x64xf32>
    %c9_216 = arith.constant 9 : index
    %c1_217 = arith.constant 1 : index
    %c0_218 = arith.constant 0 : index
    %214 = vector.load %arg11[%c9_216, %c1_217, %c0_218] : memref<18x18x64xf32, #tpu.memory_space<vmem>>, vector<8x16x64xf32>
    tpu.vector_store %arg11[%c9_216, %c1_217, %c0_218], %213 {strides = array<i32>} : memref<18x18x64xf32, #tpu.memory_space<vmem>>, vector<8x16x64xf32>,
    %cst_219 = arith.constant 0.000000e+00 : f32
    %215 = vector.broadcast %cst_219 : f32 to vector<8x16xf32>
    %c0_220 = arith.constant 0 : index
    %c0_221 = arith.constant 0 : index
    %c0_222 = arith.constant 0 : index
    %216 = vector.load %arg11[%c0_220, %c0_221, %c0_222] : memref<18x18x64xf32, #tpu.memory_space<vmem>>, vector<8x18x64xf32>
    %217 = vector.extract_strided_slice %216 {offsets = [0, 0, 0], sizes = [8, 16, 64], strides = [1, 1, 1]} : vector<8x18x64xf32> to vector<8x16x64xf32>
    %c0_223 = arith.constant 0 : index
    %c0_224 = arith.constant 0 : index
    %c0_225 = arith.constant 0 : index
    %218 = vector.load %arg6[%c0_223, %c0_224, %c0_225] : memref<3x3x64xf32, #tpu.memory_space<vmem>>, vector<1x1x64xf32>
    %219 = vector.shape_cast %218 : vector<1x1x64xf32> to vector<64xf32>
    %220 = vector.shape_cast %219 : vector<64xf32> to vector<1x1x64xf32>
    %221 = vector.broadcast %220 : vector<1x1x64xf32> to vector<8x16x64xf32>
    %222 = arith.mulf %217, %221 : vector<8x16x64xf32>
    %cst_226 = arith.constant dense<0.000000e+00> : vector<8x16xf32>
    %223 = vector.multi_reduction <add>, %222, %cst_226 [2] : vector<8x16x64xf32> to vector<8x16xf32>
    %224 = arith.addf %215, %223 : vector<8x16xf32>
    %225 = vector.extract_strided_slice %216 {offsets = [0, 1, 0], sizes = [8, 16, 64], strides = [1, 1, 1]} : vector<8x18x64xf32> to vector<8x16x64xf32>
    %c0_227 = arith.constant 0 : index
    %c1_228 = arith.constant 1 : index
    %c0_229 = arith.constant 0 : index
    %226 = vector.load %arg6[%c0_227, %c1_228, %c0_229] : memref<3x3x64xf32, #tpu.memory_space<vmem>>, vector<1x1x64xf32>
    %227 = vector.shape_cast %226 : vector<1x1x64xf32> to vector<64xf32>
    %228 = vector.shape_cast %227 : vector<64xf32> to vector<1x1x64xf32>
    %229 = vector.broadcast %228 : vector<1x1x64xf32> to vector<8x16x64xf32>
    %230 = arith.mulf %225, %229 : vector<8x16x64xf32>
    %cst_230 = arith.constant dense<0.000000e+00> : vector<8x16xf32>
    %231 = vector.multi_reduction <add>, %230, %cst_230 [2] : vector<8x16x64xf32> to vector<8x16xf32>
    %232 = arith.addf %224, %231 : vector<8x16xf32>
    %233 = vector.extract_strided_slice %216 {offsets = [0, 2, 0], sizes = [8, 16, 64], strides = [1, 1, 1]} : vector<8x18x64xf32> to vector<8x16x64xf32>
    %c0_231 = arith.constant 0 : index
    %c2_232 = arith.constant 2 : index
    %c0_233 = arith.constant 0 : index
    %234 = vector.load %arg6[%c0_231, %c2_232, %c0_233] : memref<3x3x64xf32, #tpu.memory_space<vmem>>, vector<1x1x64xf32>
    %235 = vector.shape_cast %234 : vector<1x1x64xf32> to vector<64xf32>
    %236 = vector.shape_cast %235 : vector<64xf32> to vector<1x1x64xf32>
    %237 = vector.broadcast %236 : vector<1x1x64xf32> to vector<8x16x64xf32>
    %238 = arith.mulf %233, %237 : vector<8x16x64xf32>
    %cst_234 = arith.constant dense<0.000000e+00> : vector<8x16xf32>
    %239 = vector.multi_reduction <add>, %238, %cst_234 [2] : vector<8x16x64xf32> to vector<8x16xf32>
    %240 = arith.addf %232, %239 : vector<8x16xf32>
    %c1_235 = arith.constant 1 : index
    %c0_236 = arith.constant 0 : index
    %c0_237 = arith.constant 0 : index
    %241 = vector.load %arg11[%c1_235, %c0_236, %c0_237] : memref<18x18x64xf32, #tpu.memory_space<vmem>>, vector<8x18x64xf32>
    %242 = vector.extract_strided_slice %241 {offsets = [0, 0, 0], sizes = [8, 16, 64], strides = [1, 1, 1]} : vector<8x18x64xf32> to vector<8x16x64xf32>
    %c1_238 = arith.constant 1 : index
    %c0_239 = arith.constant 0 : index
    %c0_240 = arith.constant 0 : index
    %243 = vector.load %arg6[%c1_238, %c0_239, %c0_240] : memref<3x3x64xf32, #tpu.memory_space<vmem>>, vector<1x1x64xf32>
    %244 = vector.shape_cast %243 : vector<1x1x64xf32> to vector<64xf32>
    %245 = vector.shape_cast %244 : vector<64xf32> to vector<1x1x64xf32>
    %246 = vector.broadcast %245 : vector<1x1x64xf32> to vector<8x16x64xf32>
    %247 = arith.mulf %242, %246 : vector<8x16x64xf32>
    %cst_241 = arith.constant dense<0.000000e+00> : vector<8x16xf32>
    %248 = vector.multi_reduction <add>, %247, %cst_241 [2] : vector<8x16x64xf32> to vector<8x16xf32>
    %249 = arith.addf %240, %248 : vector<8x16xf32>
    %250 = vector.extract_strided_slice %241 {offsets = [0, 1, 0], sizes = [8, 16, 64], strides = [1, 1, 1]} : vector<8x18x64xf32> to vector<8x16x64xf32>
    %c1_242 = arith.constant 1 : index
    %c1_243 = arith.constant 1 : index
    %c0_244 = arith.constant 0 : index
    %251 = vector.load %arg6[%c1_242, %c1_243, %c0_244] : memref<3x3x64xf32, #tpu.memory_space<vmem>>, vector<1x1x64xf32>
    %252 = vector.shape_cast %251 : vector<1x1x64xf32> to vector<64xf32>
    %253 = vector.shape_cast %252 : vector<64xf32> to vector<1x1x64xf32>
    %254 = vector.broadcast %253 : vector<1x1x64xf32> to vector<8x16x64xf32>
    %255 = arith.mulf %250, %254 : vector<8x16x64xf32>
    %cst_245 = arith.constant dense<0.000000e+00> : vector<8x16xf32>
    %256 = vector.multi_reduction <add>, %255, %cst_245 [2] : vector<8x16x64xf32> to vector<8x16xf32>
    %257 = arith.addf %249, %256 : vector<8x16xf32>
    %258 = vector.extract_strided_slice %241 {offsets = [0, 2, 0], sizes = [8, 16, 64], strides = [1, 1, 1]} : vector<8x18x64xf32> to vector<8x16x64xf32>
    %c1_246 = arith.constant 1 : index
    %c2_247 = arith.constant 2 : index
    %c0_248 = arith.constant 0 : index
    %259 = vector.load %arg6[%c1_246, %c2_247, %c0_248] : memref<3x3x64xf32, #tpu.memory_space<vmem>>, vector<1x1x64xf32>
    %260 = vector.shape_cast %259 : vector<1x1x64xf32> to vector<64xf32>
    %261 = vector.shape_cast %260 : vector<64xf32> to vector<1x1x64xf32>
    %262 = vector.broadcast %261 : vector<1x1x64xf32> to vector<8x16x64xf32>
    %263 = arith.mulf %258, %262 : vector<8x16x64xf32>
    %cst_249 = arith.constant dense<0.000000e+00> : vector<8x16xf32>
    %264 = vector.multi_reduction <add>, %263, %cst_249 [2] : vector<8x16x64xf32> to vector<8x16xf32>
    %265 = arith.addf %257, %264 : vector<8x16xf32>
    %c2_250 = arith.constant 2 : index
    %c0_251 = arith.constant 0 : index
    %c0_252 = arith.constant 0 : index
    %266 = vector.load %arg11[%c2_250, %c0_251, %c0_252] : memref<18x18x64xf32, #tpu.memory_space<vmem>>, vector<8x18x64xf32>
    %267 = vector.extract_strided_slice %266 {offsets = [0, 0, 0], sizes = [8, 16, 64], strides = [1, 1, 1]} : vector<8x18x64xf32> to vector<8x16x64xf32>
    %c2_253 = arith.constant 2 : index
    %c0_254 = arith.constant 0 : index
    %c0_255 = arith.constant 0 : index
    %268 = vector.load %arg6[%c2_253, %c0_254, %c0_255] : memref<3x3x64xf32, #tpu.memory_space<vmem>>, vector<1x1x64xf32>
    %269 = vector.shape_cast %268 : vector<1x1x64xf32> to vector<64xf32>
    %270 = vector.shape_cast %269 : vector<64xf32> to vector<1x1x64xf32>
    %271 = vector.broadcast %270 : vector<1x1x64xf32> to vector<8x16x64xf32>
    %272 = arith.mulf %267, %271 : vector<8x16x64xf32>
    %cst_256 = arith.constant dense<0.000000e+00> : vector<8x16xf32>
    %273 = vector.multi_reduction <add>, %272, %cst_256 [2] : vector<8x16x64xf32> to vector<8x16xf32>
    %274 = arith.addf %265, %273 : vector<8x16xf32>
    %275 = vector.extract_strided_slice %266 {offsets = [0, 1, 0], sizes = [8, 16, 64], strides = [1, 1, 1]} : vector<8x18x64xf32> to vector<8x16x64xf32>
    %c2_257 = arith.constant 2 : index
    %c1_258 = arith.constant 1 : index
    %c0_259 = arith.constant 0 : index
    %276 = vector.load %arg6[%c2_257, %c1_258, %c0_259] : memref<3x3x64xf32, #tpu.memory_space<vmem>>, vector<1x1x64xf32>
    %277 = vector.shape_cast %276 : vector<1x1x64xf32> to vector<64xf32>
    %278 = vector.shape_cast %277 : vector<64xf32> to vector<1x1x64xf32>
    %279 = vector.broadcast %278 : vector<1x1x64xf32> to vector<8x16x64xf32>
    %280 = arith.mulf %275, %279 : vector<8x16x64xf32>
    %cst_260 = arith.constant dense<0.000000e+00> : vector<8x16xf32>
    %281 = vector.multi_reduction <add>, %280, %cst_260 [2] : vector<8x16x64xf32> to vector<8x16xf32>
    %282 = arith.addf %274, %281 : vector<8x16xf32>
    %283 = vector.extract_strided_slice %266 {offsets = [0, 2, 0], sizes = [8, 16, 64], strides = [1, 1, 1]} : vector<8x18x64xf32> to vector<8x16x64xf32>
    %c2_261 = arith.constant 2 : index
    %c2_262 = arith.constant 2 : index
    %c0_263 = arith.constant 0 : index
    %284 = vector.load %arg6[%c2_261, %c2_262, %c0_263] : memref<3x3x64xf32, #tpu.memory_space<vmem>>, vector<1x1x64xf32>
    %285 = vector.shape_cast %284 : vector<1x1x64xf32> to vector<64xf32>
    %286 = vector.shape_cast %285 : vector<64xf32> to vector<1x1x64xf32>
    %287 = vector.broadcast %286 : vector<1x1x64xf32> to vector<8x16x64xf32>
    %288 = arith.mulf %283, %287 : vector<8x16x64xf32>
    %cst_264 = arith.constant dense<0.000000e+00> : vector<8x16xf32>
    %289 = vector.multi_reduction <add>, %288, %cst_264 [2] : vector<8x16x64xf32> to vector<8x16xf32>
    %290 = arith.addf %282, %289 : vector<8x16xf32>
    %c0_265 = arith.constant 0 : index
    %c0_266 = arith.constant 0 : index
    %291 = vector.load %arg7[%c0_265, %c0_266] : memref<1x1xf32, #tpu.memory_space<vmem>>, vector<1x1xf32>
    %292 = vector.broadcast %291 : vector<1x1xf32> to vector<8x16xf32>
    %293 = arith.addf %290, %292 : vector<8x16xf32>
    %cst_267 = arith.constant 0.000000e+00 : f32
    %294 = vector.broadcast %cst_267 : f32 to vector<8x16xf32>
    %295 = arith.cmpf ogt, %293, %294 : vector<8x16xf32>
    %cst_268 = arith.constant 0.00999999977 : f32
    %296 = vector.broadcast %cst_268 : f32 to vector<8x16xf32>
    %297 = arith.mulf %296, %293 : vector<8x16xf32>
    %298 = arith.select %295, %293, %297 : vector<8x16xi1>, vector<8x16xf32>
    %c0_269 = arith.constant 0 : index
    %c0_270 = arith.constant 0 : index
    %c0_271 = arith.constant 0 : index
    %c0_272 = arith.constant 0 : index
    %299 = vector.load %arg8[%c0_269, %c0_270, %c0_271, %c0_272] : memref<1x1x16x16xf32, #tpu.memory_space<vmem>>, vector<1x1x8x16xf32>
    %300 = vector.shape_cast %299 : vector<1x1x8x16xf32> to vector<8x16xf32>
    %301 = vector.shape_cast %298 : vector<8x16xf32> to vector<1x1x8x16xf32>
    tpu.vector_store %arg8[%c0_269, %c0_270, %c0_271, %c0_272], %301 {strides = array<i32>} : memref<1x1x16x16xf32, #tpu.memory_space<vmem>>, vector<1x1x8x16xf32>,
    %cst_273 = arith.constant 0.000000e+00 : f32
    %302 = vector.broadcast %cst_273 : f32 to vector<8x16xf32>
    %c8_274 = arith.constant 8 : index
    %c0_275 = arith.constant 0 : index
    %c0_276 = arith.constant 0 : index
    %303 = vector.load %arg11[%c8_274, %c0_275, %c0_276] : memref<18x18x64xf32, #tpu.memory_space<vmem>>, vector<8x18x64xf32>
    %304 = vector.extract_strided_slice %303 {offsets = [0, 0, 0], sizes = [8, 16, 64], strides = [1, 1, 1]} : vector<8x18x64xf32> to vector<8x16x64xf32>
    %c0_277 = arith.constant 0 : index
    %c0_278 = arith.constant 0 : index
    %c0_279 = arith.constant 0 : index
    %305 = vector.load %arg6[%c0_277, %c0_278, %c0_279] : memref<3x3x64xf32, #tpu.memory_space<vmem>>, vector<1x1x64xf32>
    %306 = vector.shape_cast %305 : vector<1x1x64xf32> to vector<64xf32>
    %307 = vector.shape_cast %306 : vector<64xf32> to vector<1x1x64xf32>
    %308 = vector.broadcast %307 : vector<1x1x64xf32> to vector<8x16x64xf32>
    %309 = arith.mulf %304, %308 : vector<8x16x64xf32>
    %cst_280 = arith.constant dense<0.000000e+00> : vector<8x16xf32>
    %310 = vector.multi_reduction <add>, %309, %cst_280 [2] : vector<8x16x64xf32> to vector<8x16xf32>
    %311 = arith.addf %302, %310 : vector<8x16xf32>
    %312 = vector.extract_strided_slice %303 {offsets = [0, 1, 0], sizes = [8, 16, 64], strides = [1, 1, 1]} : vector<8x18x64xf32> to vector<8x16x64xf32>
    %c0_281 = arith.constant 0 : index
    %c1_282 = arith.constant 1 : index
    %c0_283 = arith.constant 0 : index
    %313 = vector.load %arg6[%c0_281, %c1_282, %c0_283] : memref<3x3x64xf32, #tpu.memory_space<vmem>>, vector<1x1x64xf32>
    %314 = vector.shape_cast %313 : vector<1x1x64xf32> to vector<64xf32>
    %315 = vector.shape_cast %314 : vector<64xf32> to vector<1x1x64xf32>
    %316 = vector.broadcast %315 : vector<1x1x64xf32> to vector<8x16x64xf32>
    %317 = arith.mulf %312, %316 : vector<8x16x64xf32>
    %cst_284 = arith.constant dense<0.000000e+00> : vector<8x16xf32>
    %318 = vector.multi_reduction <add>, %317, %cst_284 [2] : vector<8x16x64xf32> to vector<8x16xf32>
    %319 = arith.addf %311, %318 : vector<8x16xf32>
    %320 = vector.extract_strided_slice %303 {offsets = [0, 2, 0], sizes = [8, 16, 64], strides = [1, 1, 1]} : vector<8x18x64xf32> to vector<8x16x64xf32>
    %c0_285 = arith.constant 0 : index
    %c2_286 = arith.constant 2 : index
    %c0_287 = arith.constant 0 : index
    %321 = vector.load %arg6[%c0_285, %c2_286, %c0_287] : memref<3x3x64xf32, #tpu.memory_space<vmem>>, vector<1x1x64xf32>
    %322 = vector.shape_cast %321 : vector<1x1x64xf32> to vector<64xf32>
    %323 = vector.shape_cast %322 : vector<64xf32> to vector<1x1x64xf32>
    %324 = vector.broadcast %323 : vector<1x1x64xf32> to vector<8x16x64xf32>
    %325 = arith.mulf %320, %324 : vector<8x16x64xf32>
    %cst_288 = arith.constant dense<0.000000e+00> : vector<8x16xf32>
    %326 = vector.multi_reduction <add>, %325, %cst_288 [2] : vector<8x16x64xf32> to vector<8x16xf32>
    %327 = arith.addf %319, %326 : vector<8x16xf32>
    %c9_289 = arith.constant 9 : index
    %c0_290 = arith.constant 0 : index
    %c0_291 = arith.constant 0 : index
    %328 = vector.load %arg11[%c9_289, %c0_290, %c0_291] : memref<18x18x64xf32, #tpu.memory_space<vmem>>, vector<8x18x64xf32>
    %329 = vector.extract_strided_slice %328 {offsets = [0, 0, 0], sizes = [8, 16, 64], strides = [1, 1, 1]} : vector<8x18x64xf32> to vector<8x16x64xf32>
    %c1_292 = arith.constant 1 : index
    %c0_293 = arith.constant 0 : index
    %c0_294 = arith.constant 0 : index
    %330 = vector.load %arg6[%c1_292, %c0_293, %c0_294] : memref<3x3x64xf32, #tpu.memory_space<vmem>>, vector<1x1x64xf32>
    %331 = vector.shape_cast %330 : vector<1x1x64xf32> to vector<64xf32>
    %332 = vector.shape_cast %331 : vector<64xf32> to vector<1x1x64xf32>
    %333 = vector.broadcast %332 : vector<1x1x64xf32> to vector<8x16x64xf32>
    %334 = arith.mulf %329, %333 : vector<8x16x64xf32>
    %cst_295 = arith.constant dense<0.000000e+00> : vector<8x16xf32>
    %335 = vector.multi_reduction <add>, %334, %cst_295 [2] : vector<8x16x64xf32> to vector<8x16xf32>
    %336 = arith.addf %327, %335 : vector<8x16xf32>
    %337 = vector.extract_strided_slice %328 {offsets = [0, 1, 0], sizes = [8, 16, 64], strides = [1, 1, 1]} : vector<8x18x64xf32> to vector<8x16x64xf32>
    %c1_296 = arith.constant 1 : index
    %c1_297 = arith.constant 1 : index
    %c0_298 = arith.constant 0 : index
    %338 = vector.load %arg6[%c1_296, %c1_297, %c0_298] : memref<3x3x64xf32, #tpu.memory_space<vmem>>, vector<1x1x64xf32>
    %339 = vector.shape_cast %338 : vector<1x1x64xf32> to vector<64xf32>
    %340 = vector.shape_cast %339 : vector<64xf32> to vector<1x1x64xf32>
    %341 = vector.broadcast %340 : vector<1x1x64xf32> to vector<8x16x64xf32>
    %342 = arith.mulf %337, %341 : vector<8x16x64xf32>
    %cst_299 = arith.constant dense<0.000000e+00> : vector<8x16xf32>
    %343 = vector.multi_reduction <add>, %342, %cst_299 [2] : vector<8x16x64xf32> to vector<8x16xf32>
    %344 = arith.addf %336, %343 : vector<8x16xf32>
    %345 = vector.extract_strided_slice %328 {offsets = [0, 2, 0], sizes = [8, 16, 64], strides = [1, 1, 1]} : vector<8x18x64xf32> to vector<8x16x64xf32>
    %c1_300 = arith.constant 1 : index
    %c2_301 = arith.constant 2 : index
    %c0_302 = arith.constant 0 : index
    %346 = vector.load %arg6[%c1_300, %c2_301, %c0_302] : memref<3x3x64xf32, #tpu.memory_space<vmem>>, vector<1x1x64xf32>
    %347 = vector.shape_cast %346 : vector<1x1x64xf32> to vector<64xf32>
    %348 = vector.shape_cast %347 : vector<64xf32> to vector<1x1x64xf32>
    %349 = vector.broadcast %348 : vector<1x1x64xf32> to vector<8x16x64xf32>
    %350 = arith.mulf %345, %349 : vector<8x16x64xf32>
    %cst_303 = arith.constant dense<0.000000e+00> : vector<8x16xf32>
    %351 = vector.multi_reduction <add>, %350, %cst_303 [2] : vector<8x16x64xf32> to vector<8x16xf32>
    %352 = arith.addf %344, %351 : vector<8x16xf32>
    %c10_304 = arith.constant 10 : index
    %c0_305 = arith.constant 0 : index
    %c0_306 = arith.constant 0 : index
    %353 = vector.load %arg11[%c10_304, %c0_305, %c0_306] : memref<18x18x64xf32, #tpu.memory_space<vmem>>, vector<8x18x64xf32>
    %354 = vector.extract_strided_slice %353 {offsets = [0, 0, 0], sizes = [8, 16, 64], strides = [1, 1, 1]} : vector<8x18x64xf32> to vector<8x16x64xf32>
    %c2_307 = arith.constant 2 : index
    %c0_308 = arith.constant 0 : index
    %c0_309 = arith.constant 0 : index
    %355 = vector.load %arg6[%c2_307, %c0_308, %c0_309] : memref<3x3x64xf32, #tpu.memory_space<vmem>>, vector<1x1x64xf32>
    %356 = vector.shape_cast %355 : vector<1x1x64xf32> to vector<64xf32>
    %357 = vector.shape_cast %356 : vector<64xf32> to vector<1x1x64xf32>
    %358 = vector.broadcast %357 : vector<1x1x64xf32> to vector<8x16x64xf32>
    %359 = arith.mulf %354, %358 : vector<8x16x64xf32>
    %cst_310 = arith.constant dense<0.000000e+00> : vector<8x16xf32>
    %360 = vector.multi_reduction <add>, %359, %cst_310 [2] : vector<8x16x64xf32> to vector<8x16xf32>
    %361 = arith.addf %352, %360 : vector<8x16xf32>
    %362 = vector.extract_strided_slice %353 {offsets = [0, 1, 0], sizes = [8, 16, 64], strides = [1, 1, 1]} : vector<8x18x64xf32> to vector<8x16x64xf32>
    %c2_311 = arith.constant 2 : index
    %c1_312 = arith.constant 1 : index
    %c0_313 = arith.constant 0 : index
    %363 = vector.load %arg6[%c2_311, %c1_312, %c0_313] : memref<3x3x64xf32, #tpu.memory_space<vmem>>, vector<1x1x64xf32>
    %364 = vector.shape_cast %363 : vector<1x1x64xf32> to vector<64xf32>
    %365 = vector.shape_cast %364 : vector<64xf32> to vector<1x1x64xf32>
    %366 = vector.broadcast %365 : vector<1x1x64xf32> to vector<8x16x64xf32>
    %367 = arith.mulf %362, %366 : vector<8x16x64xf32>
    %cst_314 = arith.constant dense<0.000000e+00> : vector<8x16xf32>
    %368 = vector.multi_reduction <add>, %367, %cst_314 [2] : vector<8x16x64xf32> to vector<8x16xf32>
    %369 = arith.addf %361, %368 : vector<8x16xf32>
    %370 = vector.extract_strided_slice %353 {offsets = [0, 2, 0], sizes = [8, 16, 64], strides = [1, 1, 1]} : vector<8x18x64xf32> to vector<8x16x64xf32>
    %c2_315 = arith.constant 2 : index
    %c2_316 = arith.constant 2 : index
    %c0_317 = arith.constant 0 : index
    %371 = vector.load %arg6[%c2_315, %c2_316, %c0_317] : memref<3x3x64xf32, #tpu.memory_space<vmem>>, vector<1x1x64xf32>
    %372 = vector.shape_cast %371 : vector<1x1x64xf32> to vector<64xf32>
    %373 = vector.shape_cast %372 : vector<64xf32> to vector<1x1x64xf32>
    %374 = vector.broadcast %373 : vector<1x1x64xf32> to vector<8x16x64xf32>
    %375 = arith.mulf %370, %374 : vector<8x16x64xf32>
    %cst_318 = arith.constant dense<0.000000e+00> : vector<8x16xf32>
    %376 = vector.multi_reduction <add>, %375, %cst_318 [2] : vector<8x16x64xf32> to vector<8x16xf32>
    %377 = arith.addf %369, %376 : vector<8x16xf32>
    %c0_319 = arith.constant 0 : index
    %c0_320 = arith.constant 0 : index
    %378 = vector.load %arg7[%c0_319, %c0_320] : memref<1x1xf32, #tpu.memory_space<vmem>>, vector<1x1xf32>
    %379 = vector.broadcast %378 : vector<1x1xf32> to vector<8x16xf32>
    %380 = arith.addf %377, %379 : vector<8x16xf32>
    %cst_321 = arith.constant 0.000000e+00 : f32
    %381 = vector.broadcast %cst_321 : f32 to vector<8x16xf32>
    %382 = arith.cmpf ogt, %380, %381 : vector<8x16xf32>
    %cst_322 = arith.constant 0.00999999977 : f32
    %383 = vector.broadcast %cst_322 : f32 to vector<8x16xf32>
    %384 = arith.mulf %383, %380 : vector<8x16xf32>
    %385 = arith.select %382, %380, %384 : vector<8x16xi1>, vector<8x16xf32>
    %c0_323 = arith.constant 0 : index
    %c0_324 = arith.constant 0 : index
    %c8_325 = arith.constant 8 : index
    %c0_326 = arith.constant 0 : index
    %386 = vector.load %arg8[%c0_323, %c0_324, %c8_325, %c0_326] : memref<1x1x16x16xf32, #tpu.memory_space<vmem>>, vector<1x1x8x16xf32>
    %387 = vector.shape_cast %386 : vector<1x1x8x16xf32> to vector<8x16xf32>
    %388 = vector.shape_cast %385 : vector<8x16xf32> to vector<1x1x8x16xf32>
    tpu.vector_store %arg8[%c0_323, %c0_324, %c8_325, %c0_326], %388 {strides = array<i32>} : memref<1x1x16x16xf32, #tpu.memory_space<vmem>>, vector<1x1x8x16xf32>,
    return
  }
  func.func @transform_0(%arg0: i32) -> (i32, i32, i32, i32) {
    %c0_i32 = arith.constant 0 : i32
    %c0_i32_0 = arith.constant 0 : i32
    %c0_i32_1 = arith.constant 0 : i32
    %c0_i32_2 = arith.constant 0 : i32
    return %arg0, %c0_i32, %c0_i32_0, %c0_i32_1 : i32, i32, i32, i32
  }
  func.func @transform_1(%arg0: i32) -> (i32, i32, i32, i32) {
    %c0_i32 = arith.constant 0 : i32
    %c0_i32_0 = arith.constant 0 : i32
    %c0_i32_1 = arith.constant 0 : i32
    %c0_i32_2 = arith.constant 0 : i32
    %c0_i32_3 = arith.constant 0 : i32
    return %c0_i32, %c0_i32_0, %c0_i32_1, %c0_i32_2 : i32, i32, i32, i32
  }
  func.func @transform_2(%arg0: i32) -> (i32, i32) {
    %c0_i32 = arith.constant 0 : i32
    %c0_i32_0 = arith.constant 0 : i32
    %c0_i32_1 = arith.constant 0 : i32
    return %c0_i32, %c0_i32_0 : i32, i32
  }
  func.func @transform_3(%arg0: i32) -> (i32, i32, i32) {
    %c0_i32 = arith.constant 0 : i32
    %c0_i32_0 = arith.constant 0 : i32
    %c0_i32_1 = arith.constant 0 : i32
    %c0_i32_2 = arith.constant 0 : i32
    return %c0_i32, %c0_i32_0, %c0_i32_1 : i32, i32, i32
  }
  func.func @transform_4(%arg0: i32) -> (i32, i32) {
    %c0_i32 = arith.constant 0 : i32
    %c0_i32_0 = arith.constant 0 : i32
    %c0_i32_1 = arith.constant 0 : i32
    return %c0_i32, %c0_i32_0 : i32, i32
  }
  func.func @transform_5(%arg0: i32) -> (i32, i32, i32) {
    %c0_i32 = arith.constant 0 : i32
    %c0_i32_0 = arith.constant 0 : i32
    %c0_i32_1 = arith.constant 0 : i32
    %c0_i32_2 = arith.constant 0 : i32
    return %c0_i32, %c0_i32_0, %c0_i32_1 : i32, i32, i32
  }
  func.func @transform_6(%arg0: i32) -> (i32, i32) {
    %c0_i32 = arith.constant 0 : i32
    %c0_i32_0 = arith.constant 0 : i32
    %c0_i32_1 = arith.constant 0 : i32
    return %c0_i32, %c0_i32_0 : i32, i32
  }
  func.func @transform_7(%arg0: i32) -> (i32, i32, i32, i32) {
    %c0_i32 = arith.constant 0 : i32
    %c0_i32_0 = arith.constant 0 : i32
    %c0_i32_1 = arith.constant 0 : i32
    %c0_i32_2 = arith.constant 0 : i32
    return %arg0, %c0_i32, %c0_i32_0, %c0_i32_1 : i32, i32, i32, i32
  }
}

</mosaic_0001>

<llo_original>
// kernel: ft_generator_forward_nchw.1
$region0: #{ft_generator_forward_nchw.1}
  #allocation0 [shape = 'u32[]', space=smem, size = 0x4, offset = 0x4, fixed_abs, tag = 'smem constant byte address 0x4 - core index']
  #allocation1 [shape = 'u32[72,128]{1,0:T(1,128)}', space=vmem, size = 0x9000, scoped, tag = 'internal scratch']
  #allocation2 [shape = 'f32[18,18,48]{2,1,0:T(8,128)}', space=vmem, size = 0x36000, scoped, tag = 'scratch operand']
  #allocation3 [shape = 'f32[18,18,128]{2,1,0:T(8,128)}', space=vmem, size = 0x36000, scoped, tag = 'scratch operand']
  #allocation4 [shape = 'f32[18,18,64]{2,1,0:T(8,128)}', space=vmem, size = 0x36000, scoped, tag = 'scratch operand']
  #allocation5 [shape = 'f32[1,1]{1,0:T(1,128)S(1)}', space=vmem, size = 0x200, scoped, tag = 'scoped memory for ft_generator_forward_nchw.1']
  %s0 = inlined_call_operand.vmem [shape: f32[2,16,16,48], index: 0, kind: input, shape index: {}]
  %s1 = inlined_call_operand.vmem [shape: f32[3,3,48,128], index: 1, kind: input, shape index: {}]
  %s2 = inlined_call_operand.vmem [shape: f32[1,128], index: 2, kind: input, shape index: {}]
  %s3 = inlined_call_operand.vmem [shape: f32[3,384,64], index: 3, kind: input, shape index: {}]
  %s4 = inlined_call_operand.vmem [shape: f32[1,64], index: 4, kind: input, shape index: {}]
  %s5 = inlined_call_operand.vmem [shape: f32[3,3,64], index: 5, kind: input, shape index: {}]
  %s6 = inlined_call_operand.<no memory space> [shape: f32[1,1], index: 6, kind: input, shape index: {}]
  %s7 = inlined_call_operand.hbm [shape: f32[2,1,16,16], index: 7, kind: output, shape index: {}]
  %s8 = sld [smem:[#allocation0]]
  $region61: #{ft_generator_forward_nchw.1} parent=0
    _
  %s10 = ssub.s32 1, %s8
  %s11 = scalar_select 0, %s10, %s8
  %v12 = vstv %s6
  %13 = vst [vmem:[#allocation5] sm:$0x1] %v12
  $region1: #{ft_generator_forward_nchw.1} parent=0
    #allocation6 [shape = 'u8[16384]{0}', space=vmem, size = 0x4000, scoped, tag = 'output window, operand 0']
    #allocation7 [shape = 's32[2]{0}', space=sflag, size = 0x8, scoped, tag = 'scoped memory for ft_generator_forward_nchw.1']
    %14 = vsyncpa [#allocation7], 0
    %s15 = scalar_lea.sflag [#allocation7], 1
    %16 = vsyncpa %s15, 0
    loop: start=0, step=1, limit=4
    $region2: #{ft_generator_forward_nchw.1} parent=1 // loop_pre_header
      _
    $region3: #{ft_generator_forward_nchw.1} parent=1 // loop_header
      %s18 = sphi 0, %s22
      %p19 = scmp.ge.s32.totalorder %s18, 4
      %s28 = sphi 0, %s30
      %s31 = sphi 0, %s28
      %s32 = sphi 0, %s31
      %s48 = sphi 0, %s32
      %s52 = sphi 0, %s52
      %s54 = sphi 0, %s52
      %s55 = sphi 0, %s54
      %s69 = sphi 0, %s55
      %s73 = sphi 0, %s73
      %s75 = sphi 0, %s73
      %s76 = sphi 0, %s75
      %s90 = sphi 0, %s76
      %s94 = sphi 0, %s94
      %s96 = sphi 0, %s94
      %s97 = sphi 0, %s96
      %s111 = sphi 0, %s97
      %s115 = sphi 0, %s115
      %s117 = sphi 0, %s115
      %s118 = sphi 0, %s117
      %s132 = sphi 0, %s118
      %s136 = sphi 0, %s136
      %s138 = sphi 0, %s136
      %s139 = sphi 0, %s138
      %s153 = sphi 0, %s139
      %s157 = sphi 0, %s157
      %s159 = sphi 0, %s157
      %s160 = sphi 0, %s159
      %s174 = sphi 0, %s160
      %s180 = sphi 0, %s182
      %s183 = sphi 0, %s180
      %s184 = sphi 0, %s183
      %s200 = sphi 0, %s184
    $region4: #{ft_generator_forward_nchw.1} parent=1 // loop_header_branch
      %21 = sbr.rel (%p19) target = $region8
    $region5: #{ft_generator_forward_nchw.1} parent=1 // loop_body
      %s23 = ssub.s32 %s18, 1
      %s24 = ssub.s32 %s18, 2
      %s25 = sadd.s32 %s18, 1
      %s26 = ssub.s32 %s18, %s25
      %p27 = scmp.eq.s32.totalorder %s26, 0
      %s29 = sadd.s32 %s28, 1
      %s30 = scalar_select %p27, %s28, %s29
      %p33 = pneg %p27
      %p34 = scmp.eq.s32.totalorder %s18, 1
      %p35 = por %p33, %p34
      %p36 = scmp.ne.s32.totalorder %s28, %s31
      %p37 = scmp.eq.s32.totalorder %s18, 0
      %p38 = por %p36, %p37
      %p39 = scmp.ne.s32.totalorder %s28, %s31
      %p40 = scmp.eq.s32.totalorder %s23, 1
      %p41 = por %p39, %p40
      %p42 = scmp.ne.s32.totalorder %s31, %s32
      %p43 = scmp.eq.s32.totalorder %s23, 0
      %p44 = por %p42, %p43
      %p45 = scmp.ne.s32.totalorder %s31, %s32
      %p46 = scmp.eq.s32.totalorder %s24, 1
      %p47 = por %p45, %p46
      %p49 = scmp.ne.s32.totalorder %s32, %s48
      %p50 = scmp.eq.s32.totalorder %s24, 0
      %p51 = por %p49, %p50
      %s53 = sadd.s32 %s52, 1
      %p56 = scmp.eq.s32.totalorder %s18, 1
      %p57 = scmp.ne.s32.totalorder %s52, %s54
      %p58 = scmp.eq.s32.totalorder %s18, 0
      %p59 = por %p57, %p58
      %p60 = scmp.ne.s32.totalorder %s52, %s54
      %p61 = scmp.eq.s32.totalorder %s23, 1
      %p62 = por %p60, %p61
      %p63 = scmp.ne.s32.totalorder %s54, %s55
      %p64 = scmp.eq.s32.totalorder %s23, 0
      %p65 = por %p63, %p64
      %p66 = scmp.ne.s32.totalorder %s54, %s55
      %p67 = scmp.eq.s32.totalorder %s24, 1
      %p68 = por %p66, %p67
      %p70 = scmp.ne.s32.totalorder %s55, %s69
      %p71 = scmp.eq.s32.totalorder %s24, 0
      %p72 = por %p70, %p71
      %s74 = sadd.s32 %s73, 1
      %p77 = scmp.eq.s32.totalorder %s18, 1
      %p78 = scmp.ne.s32.totalorder %s73, %s75
      %p79 = scmp.eq.s32.totalorder %s18, 0
      %p80 = por %p78, %p79
      %p81 = scmp.ne.s32.totalorder %s73, %s75
      %p82 = scmp.eq.s32.totalorder %s23, 1
      %p83 = por %p81, %p82
      %p84 = scmp.ne.s32.totalorder %s75, %s76
      %p85 = scmp.eq.s32.totalorder %s23, 0
      %p86 = por %p84, %p85
      %p87 = scmp.ne.s32.totalorder %s75, %s76
      %p88 = scmp.eq.s32.totalorder %s24, 1
      %p89 = por %p87, %p88
      %p91 = scmp.ne.s32.totalorder %s76, %s90
      %p92 = scmp.eq.s32.totalorder %s24, 0
      %p93 = por %p91, %p92
      %s95 = sadd.s32 %s94, 1
      %p98 = scmp.eq.s32.totalorder %s18, 1
      %p99 = scmp.ne.s32.totalorder %s94, %s96
      %p100 = scmp.eq.s32.totalorder %s18, 0
      %p101 = por %p99, %p100
      %p102 = scmp.ne.s32.totalorder %s94, %s96
      %p103 = scmp.eq.s32.totalorder %s23, 1
      %p104 = por %p102, %p103
      %p105 = scmp.ne.s32.totalorder %s96, %s97
      %p106 = scmp.eq.s32.totalorder %s23, 0
      %p107 = por %p105, %p106
      %p108 = scmp.ne.s32.totalorder %s96, %s97
      %p109 = scmp.eq.s32.totalorder %s24, 1
      %p110 = por %p108, %p109
      %p112 = scmp.ne.s32.totalorder %s97, %s111
      %p113 = scmp.eq.s32.totalorder %s24, 0
      %p114 = por %p112, %p113
      %s116 = sadd.s32 %s115, 1
      %p119 = scmp.eq.s32.totalorder %s18, 1
      %p120 = scmp.ne.s32.totalorder %s115, %s117
      %p121 = scmp.eq.s32.totalorder %s18, 0
      %p122 = por %p120, %p121
      %p123 = scmp.ne.s32.totalorder %s115, %s117
      %p124 = scmp.eq.s32.totalorder %s23, 1
      %p125 = por %p123, %p124
      %p126 = scmp.ne.s32.totalorder %s117, %s118
      %p127 = scmp.eq.s32.totalorder %s23, 0
      %p128 = por %p126, %p127
      %p129 = scmp.ne.s32.totalorder %s117, %s118
      %p130 = scmp.eq.s32.totalorder %s24, 1
      %p131 = por %p129, %p130
      %p133 = scmp.ne.s32.totalorder %s118, %s132
      %p134 = scmp.eq.s32.totalorder %s24, 0
      %p135 = por %p133, %p134
      %s137 = sadd.s32 %s136, 1
      %p140 = scmp.eq.s32.totalorder %s18, 1
      %p141 = scmp.ne.s32.totalorder %s136, %s138
      %p142 = scmp.eq.s32.totalorder %s18, 0
      %p143 = por %p141, %p142
      %p144 = scmp.ne.s32.totalorder %s136, %s138
      %p145 = scmp.eq.s32.totalorder %s23, 1
      %p146 = por %p144, %p145
      %p147 = scmp.ne.s32.totalorder %s138, %s139
      %p148 = scmp.eq.s32.totalorder %s23, 0
      %p149 = por %p147, %p148
      %p150 = scmp.ne.s32.totalorder %s138, %s139
      %p151 = scmp.eq.s32.totalorder %s24, 1
      %p152 = por %p150, %p151
      %p154 = scmp.ne.s32.totalorder %s139, %s153
      %p155 = scmp.eq.s32.totalorder %s24, 0
      %p156 = por %p154, %p155
      %s158 = sadd.s32 %s157, 1
      %p161 = scmp.eq.s32.totalorder %s18, 1
      %p162 = scmp.ne.s32.totalorder %s157, %s159
      %p163 = scmp.eq.s32.totalorder %s18, 0
      %p164 = por %p162, %p163
      %p165 = scmp.ne.s32.totalorder %s157, %s159
      %p166 = scmp.eq.s32.totalorder %s23, 1
      %p167 = por %p165, %p166
      %p168 = scmp.ne.s32.totalorder %s159, %s160
      %p169 = scmp.eq.s32.totalorder %s23, 0
      %p170 = por %p168, %p169
      %p171 = scmp.ne.s32.totalorder %s159, %s160
      %p172 = scmp.eq.s32.totalorder %s24, 1
      %p173 = por %p171, %p172
      %p175 = scmp.ne.s32.totalorder %s160, %s174
      %p176 = scmp.eq.s32.totalorder %s24, 0
      %p177 = por %p175, %p176
      %s178 = ssub.s32 %s18, %s25
      %p179 = scmp.eq.s32.totalorder %s178, 0
      %s181 = sadd.s32 %s180, 1
      %s182 = scalar_select %p179, %s180, %s181
      %p185 = pneg %p179
      %p186 = scmp.eq.s32.totalorder %s18, 1
      %p187 = por %p185, %p186
      %p188 = scmp.ne.s32.totalorder %s180, %s183
      %p189 = scmp.eq.s32.totalorder %s18, 0
      %p190 = por %p188, %p189
      %p191 = scmp.ne.s32.totalorder %s180, %s183
      %p192 = scmp.eq.s32.totalorder %s23, 1
      %p193 = por %p191, %p192
      %p194 = scmp.ne.s32.totalorder %s183, %s184
      %p195 = scmp.eq.s32.totalorder %s23, 0
      %p196 = por %p194, %p195
      %p197 = scmp.ne.s32.totalorder %s183, %s184
      %p198 = scmp.eq.s32.totalorder %s24, 1
      %p199 = por %p197, %p198
      %p201 = scmp.ne.s32.totalorder %s184, %s200
      %p202 = scmp.eq.s32.totalorder %s24, 0
      %p203 = por %p201, %p202
      %p204 = scmp.le.s32.totalorder 1, %s18
      %p205 = scmp.lt.s32.totalorder %s18, 3
      %p206 = pnand %p204, %p205
      %p207 = pneg %p206
      // Predicated region
      $region9: #{ft_generator_forward_nchw.1} parent=5 // pred_check
        _
      $region10: #{ft_generator_forward_nchw.1} parent=5 // pred_check_branch
        %209 = sbr.rel (%p206) target = $region12
      $region11: #{ft_generator_forward_nchw.1} parent=5 // pred_region
        %s210 = ssub.s32 %s18, 1
        // Predicated region
        $region13: #{ft_generator_forward_nchw.1} parent=11 // pred_check
          %p211 = pneg %p65
        $region14: #{ft_generator_forward_nchw.1} parent=11 // pred_check_branch
          %213 = sbr.rel (%p211) target = $region16
        $region15: #{ft_generator_forward_nchw.1} parent=11 // pred_region
          _
        $region16: #{ft_generator_forward_nchw.1} parent=11 // pred_fallthru
          _
        // Predicated region
        $region17: #{ft_generator_forward_nchw.1} parent=11 // pred_check
          %p214 = pneg %p86
        $region18: #{ft_generator_forward_nchw.1} parent=11 // pred_check_branch
          %216 = sbr.rel (%p214) target = $region20
        $region19: #{ft_generator_forward_nchw.1} parent=11 // pred_region
          _
        $region20: #{ft_generator_forward_nchw.1} parent=11 // pred_fallthru
          _
        // Predicated region
        $region21: #{ft_generator_forward_nchw.1} parent=11 // pred_check
          %p217 = pneg %p107
        $region22: #{ft_generator_forward_nchw.1} parent=11 // pred_check_branch
          %219 = sbr.rel (%p217) target = $region24
        $region23: #{ft_generator_forward_nchw.1} parent=11 // pred_region
          _
        $region24: #{ft_generator_forward_nchw.1} parent=11 // pred_fallthru
          _
        // Predicated region
        $region25: #{ft_generator_forward_nchw.1} parent=11 // pred_check
          %p220 = pneg %p128
        $region26: #{ft_generator_forward_nchw.1} parent=11 // pred_check_branch
          %222 = sbr.rel (%p220) target = $region28
        $region27: #{ft_generator_forward_nchw.1} parent=11 // pred_region
          _
        $region28: #{ft_generator_forward_nchw.1} parent=11 // pred_fallthru
          _
        // Predicated region
        $region29: #{ft_generator_forward_nchw.1} parent=11 // pred_check
          %p223 = pneg %p149
        $region30: #{ft_generator_forward_nchw.1} parent=11 // pred_check_branch
          %225 = sbr.rel (%p223) target = $region32
        $region31: #{ft_generator_forward_nchw.1} parent=11 // pred_region
          _
        $region32: #{ft_generator_forward_nchw.1} parent=11 // pred_fallthru
          _
        // Predicated region
        $region33: #{ft_generator_forward_nchw.1} parent=11 // pred_check
          %p226 = pneg %p170
        $region34: #{ft_generator_forward_nchw.1} parent=11 // pred_check_branch
          %228 = sbr.rel (%p226) target = $region36
        $region35: #{ft_generator_forward_nchw.1} parent=11 // pred_region
          _
        $region36: #{ft_generator_forward_nchw.1} parent=11 // pred_fallthru
          _
      $region12: #{ft_generator_forward_nchw.1} parent=5 // pred_fallthru
        _
      %p229 = scmp.lt.s32.totalorder %s18, 2
      // Predicated region
      $region37: #{ft_generator_forward_nchw.1} parent=5 // pred_check
        %p230 = pneg %p229
      $region38: #{ft_generator_forward_nchw.1} parent=5 // pred_check_branch
        %232 = sbr.rel (%p230) target = $region40
      $region39: #{ft_generator_forward_nchw.1} parent=5 // pred_region
        // Predicated region
        $region41: #{ft_generator_forward_nchw.1} parent=39 // pred_check
          %p233 = pneg %p38
        $region42: #{ft_generator_forward_nchw.1} parent=39 // pred_check_branch
          %235 = sbr.rel (%p233) target = $region44
        $region43: #{ft_generator_forward_nchw.1} parent=39 // pred_region
          %p236 = scmp.lt.s32.totalorder %s18, 1
          %s237 = scalar_select %p236, %s18, 1
          %s238 = smul.addr %s237, 32
          %s239 = smul.addr %s238, 8
          %s240 = scalar_lea.vmem %s0, %s239
        $region44: #{ft_generator_forward_nchw.1} parent=39 // pred_fallthru
          _
      $region40: #{ft_generator_forward_nchw.1} parent=5 // pred_fallthru
        _
      %p241 = scmp.le.s32.totalorder 1, %s18
      %p242 = scmp.lt.s32.totalorder %s18, 3
      %p243 = pnand %p241, %p242
      %p244 = pneg %p243
      // Predicated region
      $region45: #{ft_generator_forward_nchw.1} parent=5 // pred_check
        _
      $region46: #{ft_generator_forward_nchw.1} parent=5 // pred_check_branch
        %246 = sbr.rel (%p243) target = $region48
      $region47: #{ft_generator_forward_nchw.1} parent=5 // pred_region
        %s247 = ssub.s32 %s18, 1
        %p248 = scmp.lt.s32.totalorder %s23, 1
        %s249 = scalar_select %p248, %s23, 1
        %s250 = smul.addr %s249, 32
        %s251 = smul.addr %s250, 8
        %s252 = scalar_lea.vmem %s0, %s251
        %p253 = pneg %p44
        %p254 = pneg %p41
        %p255 = pneg %p65
        %p256 = pneg %p62
        %p257 = pneg %p86
        %p258 = pneg %p83
        %p259 = pneg %p107
        %p260 = pneg %p104
        %p261 = pneg %p128
        %p262 = pneg %p125
        %p263 = pneg %p149
        %p264 = pneg %p146
        %p265 = pneg %p170
        %p266 = pneg %p167
        %p267 = pneg %p196
        %p268 = pneg %p193
        %s269 = sand.u32 %s183, 1
        %s270 = scalar_lea.sflag [#allocation7], %s269
        %s271 = sand.u32 %s183, 1
        %s272 = smul.addr %s271, 16
        %s273 = scalar_lea.vmem [#allocation6], %s272
        %p274 = scmp.lt.s32.totalorder %s23, 1
        %s275 = scalar_select %p274, %s23, 1
        %s276 = smul.addr %s275, 32
        %s277 = smul.addr %s276, 8
        %s278 = scalar_lea.vmem %s0, %s277
        %vm279 = vcmask 392192
        %280 = vst.msk [vmem:[#allocation2] sm:$0xff] %vm279, 0.0
        %281 = vst.msk [vmem:[#allocation2 + $0x8] sm:$0xff] %vm279, 0.0
        %vm282 = vcmask 386048
        %283 = vst.msk [vmem:[#allocation2 + $0x10] sm:$0x3] %vm282, 0.0
        %s284 = scalar_lea.vmem [#allocation2], 408
        %285 = vst.msk [vmem:[%s284] sm:$0xff] %vm279, 0.0
        %286 = vst.msk [vmem:[%s284 + $0x8] sm:$0xff] %vm279, 0.0
        %287 = vst.msk [vmem:[%s284 + $0x10] sm:$0x3] %vm282, 0.0
        %vm288 = vcmask 385024
        %289 = vst.msk [vmem:[#allocation2] sm:$0x1] %vm288, 0.0
        %290 = vst.msk [vmem:[#allocation2 + $0x18] sm:$0x1] %vm288, 0.0
        %291 = vst.msk [vmem:[#allocation2 + $0x30] sm:$0x1] %vm288, 0.0
        %292 = vst.msk [vmem:[#allocation2 + $0x48] sm:$0x1] %vm288, 0.0
        %293 = vst.msk [vmem:[#allocation2 + $0x60] sm:$0x1] %vm288, 0.0
        %294 = vst.msk [vmem:[#allocation2 + $0x78] sm:$0x1] %vm288, 0.0
        %295 = vst.msk [vmem:[#allocation2 + $0x90] sm:$0x1] %vm288, 0.0
        %296 = vst.msk [vmem:[#allocation2 + $0xa8] sm:$0x1] %vm288, 0.0
        %297 = vst.msk [vmem:[#allocation2 + $0xc0] sm:$0x1] %vm288, 0.0
        %298 = vst.msk [vmem:[#allocation2 + $0xd8] sm:$0x1] %vm288, 0.0
        %299 = vst.msk [vmem:[#allocation2 + $0xf0] sm:$0x1] %vm288, 0.0
        %300 = vst.msk [vmem:[#allocation2 + $0x108] sm:$0x1] %vm288, 0.0
        %301 = vst.msk [vmem:[#allocation2 + $0x120] sm:$0x1] %vm288, 0.0
        %302 = vst.msk [vmem:[#allocation2 + $0x138] sm:$0x1] %vm288, 0.0
        %303 = vst.msk [vmem:[#allocation2 + $0x150] sm:$0x1] %vm288, 0.0
        %304 = vst.msk [vmem:[#allocation2 + $0x168] sm:$0x1] %vm288, 0.0
        %305 = vst.msk [vmem:[#allocation2 + $0x180] sm:$0x1] %vm288, 0.0
        %306 = vst.msk [vmem:[#allocation2 + $0x198] sm:$0x1] %vm288, 0.0
        %307 = vst.msk [vmem:[#allocation2 + $0x11] sm:$0x1] %vm288, 0.0
        %308 = vst.msk [vmem:[#allocation2 + $0x29] sm:$0x1] %vm288, 0.0
        %309 = vst.msk [vmem:[#allocation2 + $0x41] sm:$0x1] %vm288, 0.0
        %310 = vst.msk [vmem:[#allocation2 + $0x59] sm:$0x1] %vm288, 0.0
        %311 = vst.msk [vmem:[#allocation2 + $0x71] sm:$0x1] %vm288, 0.0
        %312 = vst.msk [vmem:[#allocation2 + $0x89] sm:$0x1] %vm288, 0.0
        %313 = vst.msk [vmem:[#allocation2 + $0xa1] sm:$0x1] %vm288, 0.0
        %314 = vst.msk [vmem:[#allocation2 + $0xb9] sm:$0x1] %vm288, 0.0
        %315 = vst.msk [vmem:[#allocation2 + $0xd1] sm:$0x1] %vm288, 0.0
        %316 = vst.msk [vmem:[#allocation2 + $0xe9] sm:$0x1] %vm288, 0.0
        %317 = vst.msk [vmem:[#allocation2 + $0x101] sm:$0x1] %vm288, 0.0
        %318 = vst.msk [vmem:[#allocation2 + $0x119] sm:$0x1] %vm288, 0.0
        %319 = vst.msk [vmem:[#allocation2 + $0x131] sm:$0x1] %vm288, 0.0
        %320 = vst.msk [vmem:[#allocation2 + $0x149] sm:$0x1] %vm288, 0.0
        %321 = vst.msk [vmem:[#allocation2 + $0x161] sm:$0x1] %vm288, 0.0
        %322 = vst.msk [vmem:[#allocation2 + $0x179] sm:$0x1] %vm288, 0.0
        %323 = vst.msk [vmem:[#allocation2 + $0x191] sm:$0x1] %vm288, 0.0
        %324 = vst.msk [vmem:[#allocation2 + $0x1a9] sm:$0x1] %vm288, 0.0
        %325 = vst [vmem:[#allocation3] sm:$0xff] 0.0
        %326 = vst [vmem:[#allocation3 + $0x8] sm:$0xff] 0.0
        %327 = vst [vmem:[#allocation3 + $0x10] sm:$0x3] 0.0
        %s328 = scalar_lea.vmem [#allocation3], 408
        %329 = vst [vmem:[%s328] sm:$0xff] 0.0
        %330 = vst [vmem:[%s328 + $0x8] sm:$0xff] 0.0
        %331 = vst [vmem:[%s328 + $0x10] sm:$0x3] 0.0
        %332 = vst [vmem:[#allocation3] sm:$0x1] 0.0
        %333 = vst [vmem:[#allocation3 + $0x18] sm:$0x1] 0.0
        %334 = vst [vmem:[#allocation3 + $0x30] sm:$0x1] 0.0
        %335 = vst [vmem:[#allocation3 + $0x48] sm:$0x1] 0.0
        %336 = vst [vmem:[#allocation3 + $0x60] sm:$0x1] 0.0
        %337 = vst [vmem:[#allocation3 + $0x78] sm:$0x1] 0.0
        %338 = vst [vmem:[#allocation3 + $0x90] sm:$0x1] 0.0
        %339 = vst [vmem:[#allocation3 + $0xa8] sm:$0x1] 0.0
        %340 = vst [vmem:[#allocation3 + $0xc0] sm:$0x1] 0.0
        %341 = vst [vmem:[#allocation3 + $0xd8] sm:$0x1] 0.0
        %342 = vst [vmem:[#allocation3 + $0xf0] sm:$0x1] 0.0
        %343 = vst [vmem:[#allocation3 + $0x108] sm:$0x1] 0.0
        %344 = vst [vmem:[#allocation3 + $0x120] sm:$0x1] 0.0
        %345 = vst [vmem:[#allocation3 + $0x138] sm:$0x1] 0.0
        %346 = vst [vmem:[#allocation3 + $0x150] sm:$0x1] 0.0
        %347 = vst [vmem:[#allocation3 + $0x168] sm:$0x1] 0.0
        %348 = vst [vmem:[#allocation3 + $0x180] sm:$0x1] 0.0
        %349 = vst [vmem:[#allocation3 + $0x198] sm:$0x1] 0.0
        %350 = vst [vmem:[#allocation3 + $0x11] sm:$0x1] 0.0
        %351 = vst [vmem:[#allocation3 + $0x29] sm:$0x1] 0.0
        %352 = vst [vmem:[#allocation3 + $0x41] sm:$0x1] 0.0
        %353 = vst [vmem:[#allocation3 + $0x59] sm:$0x1] 0.0
        %354 = vst [vmem:[#allocation3 + $0x71] sm:$0x1] 0.0
        %355 = vst [vmem:[#allocation3 + $0x89] sm:$0x1] 0.0
        %356 = vst [vmem:[#allocation3 + $0xa1] sm:$0x1] 0.0
        %357 = vst [vmem:[#allocation3 + $0xb9] sm:$0x1] 0.0
        %358 = vst [vmem:[#allocation3 + $0xd1] sm:$0x1] 0.0
        %359 = vst [vmem:[#allocation3 + $0xe9] sm:$0x1] 0.0
        %360 = vst [vmem:[#allocation3 + $0x101] sm:$0x1] 0.0
        %361 = vst [vmem:[#allocation3 + $0x119] sm:$0x1] 0.0
        %362 = vst [vmem:[#allocation3 + $0x131] sm:$0x1] 0.0
        %363 = vst [vmem:[#allocation3 + $0x149] sm:$0x1] 0.0
        %364 = vst [vmem:[#allocation3 + $0x161] sm:$0x1] 0.0
        %365 = vst [vmem:[#allocation3 + $0x179] sm:$0x1] 0.0
        %366 = vst [vmem:[#allocation3 + $0x191] sm:$0x1] 0.0
        %367 = vst [vmem:[#allocation3 + $0x1a9] sm:$0x1] 0.0
        %vm368 = vcmask 523264
        %369 = vst.msk [vmem:[#allocation4] sm:$0xff] %vm368, 0.0
        %370 = vst.msk [vmem:[#allocation4 + $0x8] sm:$0xff] %vm368, 0.0
        %vm371 = vcmask 517120
        %372 = vst.msk [vmem:[#allocation4 + $0x10] sm:$0x3] %vm371, 0.0
        %s373 = scalar_lea.vmem [#allocation4], 408
        %374 = vst.msk [vmem:[%s373] sm:$0xff] %vm368, 0.0
        %375 = vst.msk [vmem:[%s373 + $0x8] sm:$0xff] %vm368, 0.0
        %376 = vst.msk [vmem:[%s373 + $0x10] sm:$0x3] %vm371, 0.0
        %vm377 = vcmask 516096
        %378 = vst.msk [vmem:[#allocation4] sm:$0x1] %vm377, 0.0
        %379 = vst.msk [vmem:[#allocation4 + $0x18] sm:$0x1] %vm377, 0.0
        %380 = vst.msk [vmem:[#allocation4 + $0x30] sm:$0x1] %vm377, 0.0
        %381 = vst.msk [vmem:[#allocation4 + $0x48] sm:$0x1] %vm377, 0.0
        %382 = vst.msk [vmem:[#allocation4 + $0x60] sm:$0x1] %vm377, 0.0
        %383 = vst.msk [vmem:[#allocation4 + $0x78] sm:$0x1] %vm377, 0.0
        %384 = vst.msk [vmem:[#allocation4 + $0x90] sm:$0x1] %vm377, 0.0
        %385 = vst.msk [vmem:[#allocation4 + $0xa8] sm:$0x1] %vm377, 0.0
        %386 = vst.msk [vmem:[#allocation4 + $0xc0] sm:$0x1] %vm377, 0.0
        %387 = vst.msk [vmem:[#allocation4 + $0xd8] sm:$0x1] %vm377, 0.0
        %388 = vst.msk [vmem:[#allocation4 + $0xf0] sm:$0x1] %vm377, 0.0
        %389 = vst.msk [vmem:[#allocation4 + $0x108] sm:$0x1] %vm377, 0.0
        %390 = vst.msk [vmem:[#allocation4 + $0x120] sm:$0x1] %vm377, 0.0
        %391 = vst.msk [vmem:[#allocation4 + $0x138] sm:$0x1] %vm377, 0.0
        %392 = vst.msk [vmem:[#allocation4 + $0x150] sm:$0x1] %vm377, 0.0
        %393 = vst.msk [vmem:[#allocation4 + $0x168] sm:$0x1] %vm377, 0.0
        %394 = vst.msk [vmem:[#allocation4 + $0x180] sm:$0x1] %vm377, 0.0
        %395 = vst.msk [vmem:[#allocation4 + $0x198] sm:$0x1] %vm377, 0.0
        %396 = vst.msk [vmem:[#allocation4 + $0x11] sm:$0x1] %vm377, 0.0
        %397 = vst.msk [vmem:[#allocation4 + $0x29] sm:$0x1] %vm377, 0.0
        %398 = vst.msk [vmem:[#allocation4 + $0x41] sm:$0x1] %vm377, 0.0
        %399 = vst.msk [vmem:[#allocation4 + $0x59] sm:$0x1] %vm377, 0.0
        %400 = vst.msk [vmem:[#allocation4 + $0x71] sm:$0x1] %vm377, 0.0
        %401 = vst.msk [vmem:[#allocation4 + $0x89] sm:$0x1] %vm377, 0.0
        %402 = vst.msk [vmem:[#allocation4 + $0xa1] sm:$0x1] %vm377, 0.0
        %403 = vst.msk [vmem:[#allocation4 + $0xb9] sm:$0x1] %vm377, 0.0
        %404 = vst.msk [vmem:[#allocation4 + $0xd1] sm:$0x1] %vm377, 0.0
        %405 = vst.msk [vmem:[#allocation4 + $0xe9] sm:$0x1] %vm377, 0.0
        %406 = vst.msk [vmem:[#allocation4 + $0x101] sm:$0x1] %vm377, 0.0
        %407 = vst.msk [vmem:[#allocation4 + $0x119] sm:$0x1] %vm377, 0.0
        %408 = vst.msk [vmem:[#allocation4 + $0x131] sm:$0x1] %vm377, 0.0
        %409 = vst.msk [vmem:[#allocation4 + $0x149] sm:$0x1] %vm377, 0.0
        %410 = vst.msk [vmem:[#allocation4 + $0x161] sm:$0x1] %vm377, 0.0
        %411 = vst.msk [vmem:[#allocation4 + $0x179] sm:$0x1] %vm377, 0.0
        %412 = vst.msk [vmem:[#allocation4 + $0x191] sm:$0x1] %vm377, 0.0
        %413 = vst.msk [vmem:[#allocation4 + $0x1a9] sm:$0x1] %vm377, 0.0
        %v414 = vld [vmem:[%s278] sm:$0xff]
        %v415 = vld [vmem:[%s278 + $0x8] sm:$0xff]
        %v416 = vld [vmem:[%s278 + $0x10] sm:$0xff]
        %v417 = vld [vmem:[%s278 + $0x18] sm:$0xff]
        %v418 = vld [vmem:[%s278 + $0x20] sm:$0xff]
        %v419 = vld [vmem:[%s278 + $0x28] sm:$0xff]
        %v420 = vld [vmem:[%s278 + $0x30] sm:$0xff]
        %v421 = vld [vmem:[%s278 + $0x38] sm:$0xff]
        %v422 = vld [vmem:[%s278 + $0x40] sm:$0xff]
        %v423 = vld [vmem:[%s278 + $0x48] sm:$0xff]
        %v424 = vld [vmem:[%s278 + $0x50] sm:$0xff]
        %v425 = vld [vmem:[%s278 + $0x58] sm:$0xff]
        %v426 = vld [vmem:[%s278 + $0x60] sm:$0xff]
        %v427 = vld [vmem:[%s278 + $0x68] sm:$0xff]
        %v428 = vld [vmem:[%s278 + $0x70] sm:$0xff]
        %v429 = vld [vmem:[%s278 + $0x78] sm:$0xff]
        %v430 = vld [vmem:[%s278 + $0x80] sm:$0xff]
        %v431 = vld [vmem:[%s278 + $0x88] sm:$0xff]
        %v432 = vld [vmem:[%s278 + $0x90] sm:$0xff]
        %v433 = vld [vmem:[%s278 + $0x98] sm:$0xff]
        %v434 = vld [vmem:[%s278 + $0xa0] sm:$0xff]
        %v435 = vld [vmem:[%s278 + $0xa8] sm:$0xff]
        %v436 = vld [vmem:[%s278 + $0xb0] sm:$0xff]
        %v437 = vld [vmem:[%s278 + $0xb8] sm:$0xff]
        %v438 = vld [vmem:[%s278 + $0xc0] sm:$0xff]
        %v439 = vld [vmem:[%s278 + $0xc8] sm:$0xff]
        %v440 = vld [vmem:[%s278 + $0xd0] sm:$0xff]
        %v441 = vld [vmem:[%s278 + $0xd8] sm:$0xff]
        %v442 = vld [vmem:[%s278 + $0xe0] sm:$0xff]
        %v443 = vld [vmem:[%s278 + $0xe8] sm:$0xff]
        %v444 = vld [vmem:[%s278 + $0xf0] sm:$0xff]
        %v445 = vld [vmem:[%s278 + $0xf8] sm:$0xff]
        %s446 = scalar_lea.vmem [#allocation2], 24
        %447 = vst.msk [vmem:[%s446 + $0x1] sm:$0xff] %vm279, %v414
        %448 = vst.msk [vmem:[%s446 + $0x9] sm:$0xff] %vm279, %v415
        %449 = vst.msk [vmem:[%s446 + $0x19] sm:$0xff] %vm279, %v416
        %450 = vst.msk [vmem:[%s446 + $0x21] sm:$0xff] %vm279, %v417
        %451 = vst.msk [vmem:[%s446 + $0x31] sm:$0xff] %vm279, %v418
        %452 = vst.msk [vmem:[%s446 + $0x39] sm:$0xff] %vm279, %v419
        %453 = vst.msk [vmem:[%s446 + $0x49] sm:$0xff] %vm279, %v420
        %454 = vst.msk [vmem:[%s446 + $0x51] sm:$0xff] %vm279, %v421
        %455 = vst.msk [vmem:[%s446 + $0x61] sm:$0xff] %vm279, %v422
        %456 = vst.msk [vmem:[%s446 + $0x69] sm:$0xff] %vm279, %v423
        %457 = vst.msk [vmem:[%s446 + $0x79] sm:$0xff] %vm279, %v424
        %458 = vst.msk [vmem:[%s446 + $0x81] sm:$0xff] %vm279, %v425
        %459 = vst.msk [vmem:[%s446 + $0x91] sm:$0xff] %vm279, %v426
        %460 = vst.msk [vmem:[%s446 + $0x99] sm:$0xff] %vm279, %v427
        %461 = vst.msk [vmem:[%s446 + $0xa9] sm:$0xff] %vm279, %v428
        %462 = vst.msk [vmem:[%s446 + $0xb1] sm:$0xff] %vm279, %v429
        %463 = vst.msk [vmem:[%s446 + $0xc1] sm:$0xff] %vm279, %v430
        %464 = vst.msk [vmem:[%s446 + $0xc9] sm:$0xff] %vm279, %v431
        %465 = vst.msk [vmem:[%s446 + $0xd9] sm:$0xff] %vm279, %v432
        %466 = vst.msk [vmem:[%s446 + $0xe1] sm:$0xff] %vm279, %v433
        %467 = vst.msk [vmem:[%s446 + $0xf1] sm:$0xff] %vm279, %v434
        %468 = vst.msk [vmem:[%s446 + $0xf9] sm:$0xff] %vm279, %v435
        %469 = vst.msk [vmem:[%s446 + $0x109] sm:$0xff] %vm279, %v436
        %470 = vst.msk [vmem:[%s446 + $0x111] sm:$0xff] %vm279, %v437
        %471 = vst.msk [vmem:[%s446 + $0x121] sm:$0xff] %vm279, %v438
        %472 = vst.msk [vmem:[%s446 + $0x129] sm:$0xff] %vm279, %v439
        %473 = vst.msk [vmem:[%s446 + $0x139] sm:$0xff] %vm279, %v440
        %474 = vst.msk [vmem:[%s446 + $0x141] sm:$0xff] %vm279, %v441
        %475 = vst.msk [vmem:[%s446 + $0x151] sm:$0xff] %vm279, %v442
        %476 = vst.msk [vmem:[%s446 + $0x159] sm:$0xff] %vm279, %v443
        %477 = vst.msk [vmem:[%s446 + $0x169] sm:$0xff] %vm279, %v444
        %478 = vst.msk [vmem:[%s446 + $0x171] sm:$0xff] %vm279, %v445
        %v479 = vld [vmem:[%s2] sm:$0x1]
        %v480 = vld [vmem:[#allocation2] sm:$0xff]
        %v481 = vld [vmem:[#allocation2 + $0x8] sm:$0xff]
        %v482 = vld [vmem:[#allocation2 + $0x10] sm:$0x3]
        %v483 = vld [vmem:[#allocation2 + $0x18] sm:$0xff]
        %v484 = vld [vmem:[#allocation2 + $0x20] sm:$0xff]
        %v485 = vld [vmem:[#allocation2 + $0x28] sm:$0x3]
        %v486 = vld [vmem:[#allocation2 + $0x30] sm:$0xff]
        %v487 = vld [vmem:[#allocation2 + $0x38] sm:$0xff]
        %v488 = vld [vmem:[#allocation2 + $0x40] sm:$0x3]
        %v489 = vld [vmem:[#allocation2 + $0x48] sm:$0xff]
        %v490 = vld [vmem:[#allocation2 + $0x50] sm:$0xff]
        %v491 = vld [vmem:[#allocation2 + $0x58] sm:$0x3]
        %v492 = vld [vmem:[#allocation2 + $0x60] sm:$0xff]
        %v493 = vld [vmem:[#allocation2 + $0x68] sm:$0xff]
        %v494 = vld [vmem:[#allocation2 + $0x70] sm:$0x3]
        %v495 = vld [vmem:[#allocation2 + $0x78] sm:$0xff]
        %v496 = vld [vmem:[#allocation2 + $0x80] sm:$0xff]
        %v497 = vld [vmem:[#allocation2 + $0x88] sm:$0x3]
        %v498 = vld [vmem:[#allocation2 + $0x90] sm:$0xff]
        %v499 = vld [vmem:[#allocation2 + $0x98] sm:$0xff]
        %v500 = vld [vmem:[#allocation2 + $0xa0] sm:$0x3]
        %v501 = vld [vmem:[#allocation2 + $0xa8] sm:$0xff]
        %v502 = vld [vmem:[#allocation2 + $0xb0] sm:$0xff]
        %v503 = vld [vmem:[#allocation2 + $0xb8] sm:$0x3]
        %v504 = vld [vmem:[%s1] sm:$0xff]
        %v505 = vld [vmem:[%s1 + $0x8] sm:$0xff]
        %v506 = vld [vmem:[%s1 + $0x10] sm:$0xff]
        %v507 = vld [vmem:[%s1 + $0x18] sm:$0xff]
        %v508 = vld [vmem:[%s1 + $0x20] sm:$0xff]
        %v509 = vld [vmem:[%s1 + $0x28] sm:$0xff]
        %s510 = scalar_lea.vmem %s1, 48
        %v511 = vld [vmem:[%s510] sm:$0xff]
        %v512 = vld [vmem:[%s510 + $0x8] sm:$0xff]
        %v513 = vld [vmem:[%s510 + $0x10] sm:$0xff]
        %v514 = vld [vmem:[%s510 + $0x18] sm:$0xff]
        %v515 = vld [vmem:[%s510 + $0x20] sm:$0xff]
        %v516 = vld [vmem:[%s510 + $0x28] sm:$0xff]
        %vm541 = vcmask 1046528
        %v542 = vrot.slane %v480, 1
        %v543 = vrot.slane %v481, 1
        %v544 = vsel %vm541, %v542, %v543
        %v545 = vrot.slane %v482, 1
        %v546 = vsel %vm541, %v543, %v545
        %v547 = vrot.slane %v483, 1
        %v548 = vrot.slane %v484, 1
        %v549 = vsel %vm541, %v547, %v548
        %v550 = vrot.slane %v485, 1
        %v551 = vsel %vm541, %v548, %v550
        %v552 = vrot.slane %v486, 1
        %v553 = vrot.slane %v487, 1
        %v554 = vsel %vm541, %v552, %v553
        %v555 = vrot.slane %v488, 1
        %v556 = vsel %vm541, %v553, %v555
        %v557 = vrot.slane %v489, 1
        %v558 = vrot.slane %v490, 1
        %v559 = vsel %vm541, %v557, %v558
        %v560 = vrot.slane %v491, 1
        %v561 = vsel %vm541, %v558, %v560
        %v562 = vrot.slane %v492, 1
        %v563 = vrot.slane %v493, 1
        %v564 = vsel %vm541, %v562, %v563
        %v565 = vrot.slane %v494, 1
        %v566 = vsel %vm541, %v563, %v565
        %v567 = vrot.slane %v495, 1
        %v568 = vrot.slane %v496, 1
        %v569 = vsel %vm541, %v567, %v568
        %v570 = vrot.slane %v497, 1
        %v571 = vsel %vm541, %v568, %v570
        %v572 = vrot.slane %v498, 1
        %v573 = vrot.slane %v499, 1
        %v574 = vsel %vm541, %v572, %v573
        %v575 = vrot.slane %v500, 1
        %v576 = vsel %vm541, %v573, %v575
        %v577 = vrot.slane %v501, 1
        %v578 = vrot.slane %v502, 1
        %v579 = vsel %vm541, %v577, %v578
        %v580 = vrot.slane %v503, 1
        %v581 = vsel %vm541, %v578, %v580
        %v582 = vsel %vm279, %v544, 0
        %v584 = vsel %vm279, %v546, 0
        %v586 = vsel %vm279, %v549, 0
        %v588 = vsel %vm279, %v551, 0
        %v590 = vsel %vm279, %v554, 0
        %v592 = vsel %vm279, %v556, 0
        %v594 = vsel %vm279, %v559, 0
        %v596 = vsel %vm279, %v561, 0
        %v598 = vsel %vm279, %v564, 0
        %v600 = vsel %vm279, %v566, 0
        %v602 = vsel %vm279, %v569, 0
        %v604 = vsel %vm279, %v571, 0
        %v606 = vsel %vm279, %v574, 0
        %v608 = vsel %vm279, %v576, 0
        %v610 = vsel %vm279, %v579, 0
        %v612 = vsel %vm279, %v581, 0
        %614 = vmatpush.msra.mxu0 0.0
        %615 = vmatpush.msra.mxu0 0.0
        %616 = vmatpush.msra.mxu0 0.0
        %617 = vmatpush.msra.mxu0 0.0
        %618 = vmatpush.msra.mxu0 0.0
        %619 = vmatpush.msra.mxu0 0.0
        %620 = vmatpush.msra.mxu0 0.0
        %621 = vmatpush.msra.mxu0 0.0
        %622 = vmatpush.msra.mxu0 0.0
        %623 = vmatpush.msra.mxu0 0.0
        %624 = vmatpush.msra.mxu0 %v516
        %625 = vmatpush.msra.mxu0 %v515
        %626 = vmatpush.msra.mxu0 %v514
        %627 = vmatpush.msra.mxu0 %v513
        %628 = vmatpush.msra.mxu0 %v512
        %629 = vmatpush.msra.mxu0 %v511
        %630 = vmatmul.f32.gmra.mxu0 %v582
        %v631 = vpop.f32.mrf.mxu0
        %v632 = vadd.f32 0.0, %v631
        %633 = vmatmul.f32.gmra.mxu0 %v584
        %v634 = vpop.f32.mrf.mxu0
        %v635 = vadd.f32 0.0, %v634
        %636 = vmatmul.f32.gmra.mxu0 %v586
        %v637 = vpop.f32.mrf.mxu0
        %v638 = vadd.f32 0.0, %v637
        %639 = vmatmul.f32.gmra.mxu0 %v588
        %v640 = vpop.f32.mrf.mxu0
        %v641 = vadd.f32 0.0, %v640
        %642 = vmatmul.f32.gmra.mxu0 %v590
        %v643 = vpop.f32.mrf.mxu0
        %v644 = vadd.f32 0.0, %v643
        %645 = vmatmul.f32.gmra.mxu0 %v592
        %v646 = vpop.f32.mrf.mxu0
        %v647 = vadd.f32 0.0, %v646
        %648 = vmatmul.f32.gmra.mxu0 %v594
        %v649 = vpop.f32.mrf.mxu0
        %v650 = vadd.f32 0.0, %v649
        %651 = vmatmul.f32.gmra.mxu0 %v596
        %v652 = vpop.f32.mrf.mxu0
        %v653 = vadd.f32 0.0, %v652
        %654 = vmatmul.f32.gmra.mxu0 %v598
        %v655 = vpop.f32.mrf.mxu0
        %v656 = vadd.f32 0.0, %v655
        %657 = vmatmul.f32.gmra.mxu0 %v600
        %v658 = vpop.f32.mrf.mxu0
        %v659 = vadd.f32 0.0, %v658
        %660 = vmatmul.f32.gmra.mxu0 %v602
        %v661 = vpop.f32.mrf.mxu0
        %v662 = vadd.f32 0.0, %v661
        %663 = vmatmul.f32.gmra.mxu0 %v604
        %v664 = vpop.f32.mrf.mxu0
        %v665 = vadd.f32 0.0, %v664
        %666 = vmatmul.f32.gmra.mxu0 %v606
        %v667 = vpop.f32.mrf.mxu0
        %v668 = vadd.f32 0.0, %v667
        %669 = vmatmul.f32.gmra.mxu0 %v608
        %v670 = vpop.f32.mrf.mxu0
        %v671 = vadd.f32 0.0, %v670
        %672 = vmatmul.f32.gmra.mxu0 %v610
        %v673 = vpop.f32.mrf.mxu0
        %v674 = vadd.f32 0.0, %v673
        %675 = vmatmul.f32.gmra.mxu0 %v612
        %v676 = vpop.f32.mrf.mxu0
        %v677 = vadd.f32 0.0, %v676
        %678 = vdwg.mxu0
        %v679 = vsel %vm279, %v480, 0
        %v681 = vsel %vm279, %v481, 0
        %v683 = vsel %vm279, %v483, 0
        %v685 = vsel %vm279, %v484, 0
        %v687 = vsel %vm279, %v486, 0
        %v689 = vsel %vm279, %v487, 0
        %v691 = vsel %vm279, %v489, 0
        %v693 = vsel %vm279, %v490, 0
        %v695 = vsel %vm279, %v492, 0
        %v697 = vsel %vm279, %v493, 0
        %v699 = vsel %vm279, %v495, 0
        %v701 = vsel %vm279, %v496, 0
        %v703 = vsel %vm279, %v498, 0
        %v705 = vsel %vm279, %v499, 0
        %v707 = vsel %vm279, %v501, 0
        %v709 = vsel %vm279, %v502, 0
        %711 = vmatpush.msra.mxu0 0.0
        %712 = vmatpush.msra.mxu0 0.0
        %713 = vmatpush.msra.mxu0 0.0
        %714 = vmatpush.msra.mxu0 0.0
        %715 = vmatpush.msra.mxu0 0.0
        %716 = vmatpush.msra.mxu0 0.0
        %717 = vmatpush.msra.mxu0 0.0
        %718 = vmatpush.msra.mxu0 0.0
        %719 = vmatpush.msra.mxu0 0.0
        %720 = vmatpush.msra.mxu0 0.0
        %721 = vmatpush.msra.mxu0 %v509
        %722 = vmatpush.msra.mxu0 %v508
        %723 = vmatpush.msra.mxu0 %v507
        %724 = vmatpush.msra.mxu0 %v506
        %725 = vmatpush.msra.mxu0 %v505
        %726 = vmatpush.msra.mxu0 %v504
        %727 = vmatmul.f32.gmra.mxu0 %v679
        %v728 = vpop.f32.mrf.mxu0
        %v729 = vadd.f32 %v632, %v728
        %730 = vmatmul.f32.gmra.mxu0 %v681
        %v731 = vpop.f32.mrf.mxu0
        %v732 = vadd.f32 %v635, %v731
        %733 = vmatmul.f32.gmra.mxu0 %v683
        %v734 = vpop.f32.mrf.mxu0
        %v735 = vadd.f32 %v638, %v734
        %736 = vmatmul.f32.gmra.mxu0 %v685
        %v737 = vpop.f32.mrf.mxu0
        %v738 = vadd.f32 %v641, %v737
        %739 = vmatmul.f32.gmra.mxu0 %v687
        %v740 = vpop.f32.mrf.mxu0
        %v741 = vadd.f32 %v644, %v740
        %742 = vmatmul.f32.gmra.mxu0 %v689
        %v743 = vpop.f32.mrf.mxu0
        %v744 = vadd.f32 %v647, %v743
        %745 = vmatmul.f32.gmra.mxu0 %v691
        %v746 = vpop.f32.mrf.mxu0
        %v747 = vadd.f32 %v650, %v746
        %748 = vmatmul.f32.gmra.mxu0 %v693
        %v749 = vpop.f32.mrf.mxu0
        %v750 = vadd.f32 %v653, %v749
        %751 = vmatmul.f32.gmra.mxu0 %v695
        %v752 = vpop.f32.mrf.mxu0
        %v753 = vadd.f32 %v656, %v752
        %754 = vmatmul.f32.gmra.mxu0 %v697
        %v755 = vpop.f32.mrf.mxu0
        %v756 = vadd.f32 %v659, %v755
        %757 = vmatmul.f32.gmra.mxu0 %v699
        %v758 = vpop.f32.mrf.mxu0
        %v759 = vadd.f32 %v662, %v758
        %760 = vmatmul.f32.gmra.mxu0 %v701
        %v761 = vpop.f32.mrf.mxu0
        %v762 = vadd.f32 %v665, %v761
        %763 = vmatmul.f32.gmra.mxu0 %v703
        %v764 = vpop.f32.mrf.mxu0
        %v765 = vadd.f32 %v668, %v764
        %766 = vmatmul.f32.gmra.mxu0 %v705
        %v767 = vpop.f32.mrf.mxu0
        %v768 = vadd.f32 %v671, %v767
        %769 = vmatmul.f32.gmra.mxu0 %v707
        %v770 = vpop.f32.mrf.mxu0
        %v771 = vadd.f32 %v674, %v770
        %772 = vmatmul.f32.gmra.mxu0 %v709
        %v773 = vpop.f32.mrf.mxu0
        %v774 = vadd.f32 %v677, %v773
        %775 = vdwg.mxu0
        %s776 = scalar_lea.vmem %s1, 96
        %v777 = vld [vmem:[%s776] sm:$0xff]
        %v778 = vld [vmem:[%s776 + $0x8] sm:$0xff]
        %v779 = vld [vmem:[%s776 + $0x10] sm:$0xff]
        %v780 = vld [vmem:[%s776 + $0x18] sm:$0xff]
        %v781 = vld [vmem:[%s776 + $0x20] sm:$0xff]
        %v782 = vld [vmem:[%s776 + $0x28] sm:$0xff]
        %vm783 = vcmask 1045504
        %v784 = vrot.slane %v480, 2
        %v785 = vrot.slane %v481, 2
        %v786 = vsel %vm783, %v784, %v785
        %v787 = vrot.slane %v482, 2
        %v788 = vsel %vm783, %v785, %v787
        %v789 = vrot.slane %v483, 2
        %v790 = vrot.slane %v484, 2
        %v791 = vsel %vm783, %v789, %v790
        %v792 = vrot.slane %v485, 2
        %v793 = vsel %vm783, %v790, %v792
        %v794 = vrot.slane %v486, 2
        %v795 = vrot.slane %v487, 2
        %v796 = vsel %vm783, %v794, %v795
        %v797 = vrot.slane %v488, 2
        %v798 = vsel %vm783, %v795, %v797
        %v799 = vrot.slane %v489, 2
        %v800 = vrot.slane %v490, 2
        %v801 = vsel %vm783, %v799, %v800
        %v802 = vrot.slane %v491, 2
        %v803 = vsel %vm783, %v800, %v802
        %v804 = vrot.slane %v492, 2
        %v805 = vrot.slane %v493, 2
        %v806 = vsel %vm783, %v804, %v805
        %v807 = vrot.slane %v494, 2
        %v808 = vsel %vm783, %v805, %v807
        %v809 = vrot.slane %v495, 2
        %v810 = vrot.slane %v496, 2
        %v811 = vsel %vm783, %v809, %v810
        %v812 = vrot.slane %v497, 2
        %v813 = vsel %vm783, %v810, %v812
        %v814 = vrot.slane %v498, 2
        %v815 = vrot.slane %v499, 2
        %v816 = vsel %vm783, %v814, %v815
        %v817 = vrot.slane %v500, 2
        %v818 = vsel %vm783, %v815, %v817
        %v819 = vrot.slane %v501, 2
        %v820 = vrot.slane %v502, 2
        %v821 = vsel %vm783, %v819, %v820
        %v822 = vrot.slane %v503, 2
        %v823 = vsel %vm783, %v820, %v822
        %v824 = vsel %vm279, %v786, 0
        %v826 = vsel %vm279, %v788, 0
        %v828 = vsel %vm279, %v791, 0
        %v830 = vsel %vm279, %v793, 0
        %v832 = vsel %vm279, %v796, 0
        %v834 = vsel %vm279, %v798, 0
        %v836 = vsel %vm279, %v801, 0
        %v838 = vsel %vm279, %v803, 0
        %v840 = vsel %vm279, %v806, 0
        %v842 = vsel %vm279, %v808, 0
        %v844 = vsel %vm279, %v811, 0
        %v846 = vsel %vm279, %v813, 0
        %v848 = vsel %vm279, %v816, 0
        %v850 = vsel %vm279, %v818, 0
        %v852 = vsel %vm279, %v821, 0
        %v854 = vsel %vm279, %v823, 0
        %856 = vmatpush.msra.mxu0 0.0
        %857 = vmatpush.msra.mxu0 0.0
        %858 = vmatpush.msra.mxu0 0.0
        %859 = vmatpush.msra.mxu0 0.0
        %860 = vmatpush.msra.mxu0 0.0
        %861 = vmatpush.msra.mxu0 0.0
        %862 = vmatpush.msra.mxu0 0.0
        %863 = vmatpush.msra.mxu0 0.0
        %864 = vmatpush.msra.mxu0 0.0
        %865 = vmatpush.msra.mxu0 0.0
        %866 = vmatpush.msra.mxu0 %v782
        %867 = vmatpush.msra.mxu0 %v781
        %868 = vmatpush.msra.mxu0 %v780
        %869 = vmatpush.msra.mxu0 %v779
        %870 = vmatpush.msra.mxu0 %v778
        %871 = vmatpush.msra.mxu0 %v777
        %872 = vmatmul.f32.gmra.mxu0 %v824
        %v873 = vpop.f32.mrf.mxu0
        %v874 = vadd.f32 0.0, %v873
        %875 = vmatmul.f32.gmra.mxu0 %v826
        %v876 = vpop.f32.mrf.mxu0
        %v877 = vadd.f32 0.0, %v876
        %878 = vmatmul.f32.gmra.mxu0 %v828
        %v879 = vpop.f32.mrf.mxu0
        %v880 = vadd.f32 0.0, %v879
        %881 = vmatmul.f32.gmra.mxu0 %v830
        %v882 = vpop.f32.mrf.mxu0
        %v883 = vadd.f32 0.0, %v882
        %884 = vmatmul.f32.gmra.mxu0 %v832
        %v885 = vpop.f32.mrf.mxu0
        %v886 = vadd.f32 0.0, %v885
        %887 = vmatmul.f32.gmra.mxu0 %v834
        %v888 = vpop.f32.mrf.mxu0
        %v889 = vadd.f32 0.0, %v888
        %890 = vmatmul.f32.gmra.mxu0 %v836
        %v891 = vpop.f32.mrf.mxu0
        %v892 = vadd.f32 0.0, %v891
        %893 = vmatmul.f32.gmra.mxu0 %v838
        %v894 = vpop.f32.mrf.mxu0
        %v895 = vadd.f32 0.0, %v894
        %896 = vmatmul.f32.gmra.mxu0 %v840
        %v897 = vpop.f32.mrf.mxu0
        %v898 = vadd.f32 0.0, %v897
        %899 = vmatmul.f32.gmra.mxu0 %v842
        %v900 = vpop.f32.mrf.mxu0
        %v901 = vadd.f32 0.0, %v900
        %902 = vmatmul.f32.gmra.mxu0 %v844
        %v903 = vpop.f32.mrf.mxu0
        %v904 = vadd.f32 0.0, %v903
        %905 = vmatmul.f32.gmra.mxu0 %v846
        %v906 = vpop.f32.mrf.mxu0
        %v907 = vadd.f32 0.0, %v906
        %908 = vmatmul.f32.gmra.mxu0 %v848
        %v909 = vpop.f32.mrf.mxu0
        %v910 = vadd.f32 0.0, %v909
        %911 = vmatmul.f32.gmra.mxu0 %v850
        %v912 = vpop.f32.mrf.mxu0
        %v913 = vadd.f32 0.0, %v912
        %914 = vmatmul.f32.gmra.mxu0 %v852
        %v915 = vpop.f32.mrf.mxu0
        %v916 = vadd.f32 0.0, %v915
        %917 = vmatmul.f32.gmra.mxu0 %v854
        %v918 = vpop.f32.mrf.mxu0
        %v919 = vadd.f32 0.0, %v918
        %920 = vdwg.mxu0
        %v921 = vadd.f32 %v729, %v874
        %v922 = vadd.f32 %v732, %v877
        %v923 = vadd.f32 %v735, %v880
        %v924 = vadd.f32 %v738, %v883
        %v925 = vadd.f32 %v741, %v886
        %v926 = vadd.f32 %v744, %v889
        %v927 = vadd.f32 %v747, %v892
        %v928 = vadd.f32 %v750, %v895
        %v929 = vadd.f32 %v753, %v898
        %v930 = vadd.f32 %v756, %v901
        %v931 = vadd.f32 %v759, %v904
        %v932 = vadd.f32 %v762, %v907
        %v933 = vadd.f32 %v765, %v910
        %v934 = vadd.f32 %v768, %v913
        %v935 = vadd.f32 %v771, %v916
        %v936 = vadd.f32 %v774, %v919
        %v937 = vld [vmem:[%s446] sm:$0xff]
        %v938 = vld [vmem:[%s446 + $0x8] sm:$0xff]
        %v939 = vld [vmem:[%s446 + $0x10] sm:$0x3]
        %v940 = vld [vmem:[%s446 + $0x18] sm:$0xff]
        %v941 = vld [vmem:[%s446 + $0x20] sm:$0xff]
        %v942 = vld [vmem:[%s446 + $0x28] sm:$0x3]
        %v943 = vld [vmem:[%s446 + $0x30] sm:$0xff]
        %v944 = vld [vmem:[%s446 + $0x38] sm:$0xff]
        %v945 = vld [vmem:[%s446 + $0x40] sm:$0x3]
        %v946 = vld [vmem:[%s446 + $0x48] sm:$0xff]
        %v947 = vld [vmem:[%s446 + $0x50] sm:$0xff]
        %v948 = vld [vmem:[%s446 + $0x58] sm:$0x3]
        %v949 = vld [vmem:[%s446 + $0x60] sm:$0xff]
        %v950 = vld [vmem:[%s446 + $0x68] sm:$0xff]
        %v951 = vld [vmem:[%s446 + $0x70] sm:$0x3]
        %v952 = vld [vmem:[%s446 + $0x78] sm:$0xff]
        %v953 = vld [vmem:[%s446 + $0x80] sm:$0xff]
        %v954 = vld [vmem:[%s446 + $0x88] sm:$0x3]
        %v955 = vld [vmem:[%s446 + $0x90] sm:$0xff]
        %v956 = vld [vmem:[%s446 + $0x98] sm:$0xff]
        %v957 = vld [vmem:[%s446 + $0xa0] sm:$0x3]
        %v958 = vld [vmem:[%s446 + $0xa8] sm:$0xff]
        %v959 = vld [vmem:[%s446 + $0xb0] sm:$0xff]
        %v960 = vld [vmem:[%s446 + $0xb8] sm:$0x3]
        %s961 = scalar_lea.vmem %s1, 144
        %v962 = vld [vmem:[%s961] sm:$0xff]
        %v963 = vld [vmem:[%s961 + $0x8] sm:$0xff]
        %v964 = vld [vmem:[%s961 + $0x10] sm:$0xff]
        %v965 = vld [vmem:[%s961 + $0x18] sm:$0xff]
        %v966 = vld [vmem:[%s961 + $0x20] sm:$0xff]
        %v967 = vld [vmem:[%s961 + $0x28] sm:$0xff]
        %v969 = vsel %vm279, %v937, 0
        %v972 = vsel %vm279, %v938, 0
        %v975 = vsel %vm279, %v940, 0
        %v978 = vsel %vm279, %v941, 0
        %v981 = vsel %vm279, %v943, 0
        %v984 = vsel %vm279, %v944, 0
        %v987 = vsel %vm279, %v946, 0
        %v990 = vsel %vm279, %v947, 0
        %v993 = vsel %vm279, %v949, 0
        %v996 = vsel %vm279, %v950, 0
        %v999 = vsel %vm279, %v952, 0
        %v1002 = vsel %vm279, %v953, 0
        %v1005 = vsel %vm279, %v955, 0
        %v1008 = vsel %vm279, %v956, 0
        %v1011 = vsel %vm279, %v958, 0
        %v1014 = vsel %vm279, %v959, 0
        %1016 = vmatpush.msra.mxu0 0.0
        %1017 = vmatpush.msra.mxu0 0.0
        %1018 = vmatpush.msra.mxu0 0.0
        %1019 = vmatpush.msra.mxu0 0.0
        %1020 = vmatpush.msra.mxu0 0.0
        %1021 = vmatpush.msra.mxu0 0.0
        %1022 = vmatpush.msra.mxu0 0.0
        %1023 = vmatpush.msra.mxu0 0.0
        %1024 = vmatpush.msra.mxu0 0.0
        %1025 = vmatpush.msra.mxu0 0.0
        %1026 = vmatpush.msra.mxu0 %v967
        %1027 = vmatpush.msra.mxu0 %v966
        %1028 = vmatpush.msra.mxu0 %v965
        %1029 = vmatpush.msra.mxu0 %v964
        %1030 = vmatpush.msra.mxu0 %v963
        %1031 = vmatpush.msra.mxu0 %v962
        %1032 = vmatmul.f32.gmra.mxu0 %v969
        %v1033 = vpop.f32.mrf.mxu0
        %v1034 = vadd.f32 0.0, %v1033
        %1035 = vmatmul.f32.gmra.mxu0 %v972
        %v1036 = vpop.f32.mrf.mxu0
        %v1037 = vadd.f32 0.0, %v1036
        %1038 = vmatmul.f32.gmra.mxu0 %v975
        %v1039 = vpop.f32.mrf.mxu0
        %v1040 = vadd.f32 0.0, %v1039
        %1041 = vmatmul.f32.gmra.mxu0 %v978
        %v1042 = vpop.f32.mrf.mxu0
        %v1043 = vadd.f32 0.0, %v1042
        %1044 = vmatmul.f32.gmra.mxu0 %v981
        %v1045 = vpop.f32.mrf.mxu0
        %v1046 = vadd.f32 0.0, %v1045
        %1047 = vmatmul.f32.gmra.mxu0 %v984
        %v1048 = vpop.f32.mrf.mxu0
        %v1049 = vadd.f32 0.0, %v1048
        %1050 = vmatmul.f32.gmra.mxu0 %v987
        %v1051 = vpop.f32.mrf.mxu0
        %v1052 = vadd.f32 0.0, %v1051
        %1053 = vmatmul.f32.gmra.mxu0 %v990
        %v1054 = vpop.f32.mrf.mxu0
        %v1055 = vadd.f32 0.0, %v1054
        %1056 = vmatmul.f32.gmra.mxu0 %v993
        %v1057 = vpop.f32.mrf.mxu0
        %v1058 = vadd.f32 0.0, %v1057
        %1059 = vmatmul.f32.gmra.mxu0 %v996
        %v1060 = vpop.f32.mrf.mxu0
        %v1061 = vadd.f32 0.0, %v1060
        %1062 = vmatmul.f32.gmra.mxu0 %v999
        %v1063 = vpop.f32.mrf.mxu0
        %v1064 = vadd.f32 0.0, %v1063
        %1065 = vmatmul.f32.gmra.mxu0 %v1002
        %v1066 = vpop.f32.mrf.mxu0
        %v1067 = vadd.f32 0.0, %v1066
        %1068 = vmatmul.f32.gmra.mxu0 %v1005
        %v1069 = vpop.f32.mrf.mxu0
        %v1070 = vadd.f32 0.0, %v1069
        %1071 = vmatmul.f32.gmra.mxu0 %v1008
        %v1072 = vpop.f32.mrf.mxu0
        %v1073 = vadd.f32 0.0, %v1072
        %1074 = vmatmul.f32.gmra.mxu0 %v1011
        %v1075 = vpop.f32.mrf.mxu0
        %v1076 = vadd.f32 0.0, %v1075
        %1077 = vmatmul.f32.gmra.mxu0 %v1014
        %v1078 = vpop.f32.mrf.mxu0
        %v1079 = vadd.f32 0.0, %v1078
        %1080 = vdwg.mxu0
        %v1081 = vadd.f32 %v921, %v1034
        %v1082 = vadd.f32 %v922, %v1037
        %v1083 = vadd.f32 %v923, %v1040
        %v1084 = vadd.f32 %v924, %v1043
        %v1085 = vadd.f32 %v925, %v1046
        %v1086 = vadd.f32 %v926, %v1049
        %v1087 = vadd.f32 %v927, %v1052
        %v1088 = vadd.f32 %v928, %v1055
        %v1089 = vadd.f32 %v929, %v1058
        %v1090 = vadd.f32 %v930, %v1061
        %v1091 = vadd.f32 %v931, %v1064
        %v1092 = vadd.f32 %v932, %v1067
        %v1093 = vadd.f32 %v933, %v1070
        %v1094 = vadd.f32 %v934, %v1073
        %v1095 = vadd.f32 %v935, %v1076
        %v1096 = vadd.f32 %v936, %v1079
        %s1097 = scalar_lea.vmem %s1, 192
        %v1098 = vld [vmem:[%s1097] sm:$0xff]
        %v1099 = vld [vmem:[%s1097 + $0x8] sm:$0xff]
        %v1100 = vld [vmem:[%s1097 + $0x10] sm:$0xff]
        %v1101 = vld [vmem:[%s1097 + $0x18] sm:$0xff]
        %v1102 = vld [vmem:[%s1097 + $0x20] sm:$0xff]
        %v1103 = vld [vmem:[%s1097 + $0x28] sm:$0xff]
        %v1112 = vrot.slane %v937, 1
        %v1113 = vrot.slane %v938, 1
        %v1114 = vsel %vm541, %v1112, %v1113
        %v1115 = vrot.slane %v939, 1
        %v1116 = vsel %vm541, %v1113, %v1115
        %v1117 = vrot.slane %v940, 1
        %v1118 = vrot.slane %v941, 1
        %v1119 = vsel %vm541, %v1117, %v1118
        %v1120 = vrot.slane %v942, 1
        %v1121 = vsel %vm541, %v1118, %v1120
        %v1122 = vrot.slane %v943, 1
        %v1123 = vrot.slane %v944, 1
        %v1124 = vsel %vm541, %v1122, %v1123
        %v1125 = vrot.slane %v945, 1
        %v1126 = vsel %vm541, %v1123, %v1125
        %v1127 = vrot.slane %v946, 1
        %v1128 = vrot.slane %v947, 1
        %v1129 = vsel %vm541, %v1127, %v1128
        %v1130 = vrot.slane %v948, 1
        %v1131 = vsel %vm541, %v1128, %v1130
        %v1132 = vrot.slane %v949, 1
        %v1133 = vrot.slane %v950, 1
        %v1134 = vsel %vm541, %v1132, %v1133
        %v1135 = vrot.slane %v951, 1
        %v1136 = vsel %vm541, %v1133, %v1135
        %v1137 = vrot.slane %v952, 1
        %v1138 = vrot.slane %v953, 1
        %v1139 = vsel %vm541, %v1137, %v1138
        %v1140 = vrot.slane %v954, 1
        %v1141 = vsel %vm541, %v1138, %v1140
        %v1142 = vrot.slane %v955, 1
        %v1143 = vrot.slane %v956, 1
        %v1144 = vsel %vm541, %v1142, %v1143
        %v1145 = vrot.slane %v957, 1
        %v1146 = vsel %vm541, %v1143, %v1145
        %v1147 = vrot.slane %v958, 1
        %v1148 = vrot.slane %v959, 1
        %v1149 = vsel %vm541, %v1147, %v1148
        %v1150 = vrot.slane %v960, 1
        %v1151 = vsel %vm541, %v1148, %v1150
        %v1152 = vsel %vm279, %v1114, 0
        %v1154 = vsel %vm279, %v1116, 0
        %v1156 = vsel %vm279, %v1119, 0
        %v1158 = vsel %vm279, %v1121, 0
        %v1160 = vsel %vm279, %v1124, 0
        %v1162 = vsel %vm279, %v1126, 0
        %v1164 = vsel %vm279, %v1129, 0
        %v1166 = vsel %vm279, %v1131, 0
        %v1168 = vsel %vm279, %v1134, 0
        %v1170 = vsel %vm279, %v1136, 0
        %v1172 = vsel %vm279, %v1139, 0
        %v1174 = vsel %vm279, %v1141, 0
        %v1176 = vsel %vm279, %v1144, 0
        %v1178 = vsel %vm279, %v1146, 0
        %v1180 = vsel %vm279, %v1149, 0
        %v1182 = vsel %vm279, %v1151, 0
        %1184 = vmatpush.msra.mxu0 0.0
        %1185 = vmatpush.msra.mxu0 0.0
        %1186 = vmatpush.msra.mxu0 0.0
        %1187 = vmatpush.msra.mxu0 0.0
        %1188 = vmatpush.msra.mxu0 0.0
        %1189 = vmatpush.msra.mxu0 0.0
        %1190 = vmatpush.msra.mxu0 0.0
        %1191 = vmatpush.msra.mxu0 0.0
        %1192 = vmatpush.msra.mxu0 0.0
        %1193 = vmatpush.msra.mxu0 0.0
        %1194 = vmatpush.msra.mxu0 %v1103
        %1195 = vmatpush.msra.mxu0 %v1102
        %1196 = vmatpush.msra.mxu0 %v1101
        %1197 = vmatpush.msra.mxu0 %v1100
        %1198 = vmatpush.msra.mxu0 %v1099
        %1199 = vmatpush.msra.mxu0 %v1098
        %1200 = vmatmul.f32.gmra.mxu0 %v1152
        %v1201 = vpop.f32.mrf.mxu0
        %v1202 = vadd.f32 0.0, %v1201
        %1203 = vmatmul.f32.gmra.mxu0 %v1154
        %v1204 = vpop.f32.mrf.mxu0
        %v1205 = vadd.f32 0.0, %v1204
        %1206 = vmatmul.f32.gmra.mxu0 %v1156
        %v1207 = vpop.f32.mrf.mxu0
        %v1208 = vadd.f32 0.0, %v1207
        %1209 = vmatmul.f32.gmra.mxu0 %v1158
        %v1210 = vpop.f32.mrf.mxu0
        %v1211 = vadd.f32 0.0, %v1210
        %1212 = vmatmul.f32.gmra.mxu0 %v1160
        %v1213 = vpop.f32.mrf.mxu0
        %v1214 = vadd.f32 0.0, %v1213
        %1215 = vmatmul.f32.gmra.mxu0 %v1162
        %v1216 = vpop.f32.mrf.mxu0
        %v1217 = vadd.f32 0.0, %v1216
        %1218 = vmatmul.f32.gmra.mxu0 %v1164
        %v1219 = vpop.f32.mrf.mxu0
        %v1220 = vadd.f32 0.0, %v1219
        %1221 = vmatmul.f32.gmra.mxu0 %v1166
        %v1222 = vpop.f32.mrf.mxu0
        %v1223 = vadd.f32 0.0, %v1222
        %1224 = vmatmul.f32.gmra.mxu0 %v1168
        %v1225 = vpop.f32.mrf.mxu0
        %v1226 = vadd.f32 0.0, %v1225
        %1227 = vmatmul.f32.gmra.mxu0 %v1170
        %v1228 = vpop.f32.mrf.mxu0
        %v1229 = vadd.f32 0.0, %v1228
        %1230 = vmatmul.f32.gmra.mxu0 %v1172
        %v1231 = vpop.f32.mrf.mxu0
        %v1232 = vadd.f32 0.0, %v1231
        %1233 = vmatmul.f32.gmra.mxu0 %v1174
        %v1234 = vpop.f32.mrf.mxu0
        %v1235 = vadd.f32 0.0, %v1234
        %1236 = vmatmul.f32.gmra.mxu0 %v1176
        %v1237 = vpop.f32.mrf.mxu0
        %v1238 = vadd.f32 0.0, %v1237
        %1239 = vmatmul.f32.gmra.mxu0 %v1178
        %v1240 = vpop.f32.mrf.mxu0
        %v1241 = vadd.f32 0.0, %v1240
        %1242 = vmatmul.f32.gmra.mxu0 %v1180
        %v1243 = vpop.f32.mrf.mxu0
        %v1244 = vadd.f32 0.0, %v1243
        %1245 = vmatmul.f32.gmra.mxu0 %v1182
        %v1246 = vpop.f32.mrf.mxu0
        %v1247 = vadd.f32 0.0, %v1246
        %1248 = vdwg.mxu0
        %v1249 = vadd.f32 %v1081, %v1202
        %v1250 = vadd.f32 %v1082, %v1205
        %v1251 = vadd.f32 %v1083, %v1208
        %v1252 = vadd.f32 %v1084, %v1211
        %v1253 = vadd.f32 %v1085, %v1214
        %v1254 = vadd.f32 %v1086, %v1217
        %v1255 = vadd.f32 %v1087, %v1220
        %v1256 = vadd.f32 %v1088, %v1223
        %v1257 = vadd.f32 %v1089, %v1226
        %v1258 = vadd.f32 %v1090, %v1229
        %v1259 = vadd.f32 %v1091, %v1232
        %v1260 = vadd.f32 %v1092, %v1235
        %v1261 = vadd.f32 %v1093, %v1238
        %v1262 = vadd.f32 %v1094, %v1241
        %v1263 = vadd.f32 %v1095, %v1244
        %v1264 = vadd.f32 %v1096, %v1247
        %s1265 = scalar_lea.vmem %s1, 240
        %v1266 = vld [vmem:[%s1265] sm:$0xff]
        %v1267 = vld [vmem:[%s1265 + $0x8] sm:$0xff]
        %v1268 = vld [vmem:[%s1265 + $0x10] sm:$0xff]
        %v1269 = vld [vmem:[%s1265 + $0x18] sm:$0xff]
        %v1270 = vld [vmem:[%s1265 + $0x20] sm:$0xff]
        %v1271 = vld [vmem:[%s1265 + $0x28] sm:$0xff]
        %v1272 = vrot.slane %v937, 2
        %v1273 = vrot.slane %v938, 2
        %v1274 = vsel %vm783, %v1272, %v1273
        %v1275 = vrot.slane %v939, 2
        %v1276 = vsel %vm783, %v1273, %v1275
        %v1277 = vrot.slane %v940, 2
        %v1278 = vrot.slane %v941, 2
        %v1279 = vsel %vm783, %v1277, %v1278
        %v1280 = vrot.slane %v942, 2
        %v1281 = vsel %vm783, %v1278, %v1280
        %v1282 = vrot.slane %v943, 2
        %v1283 = vrot.slane %v944, 2
        %v1284 = vsel %vm783, %v1282, %v1283
        %v1285 = vrot.slane %v945, 2
        %v1286 = vsel %vm783, %v1283, %v1285
        %v1287 = vrot.slane %v946, 2
        %v1288 = vrot.slane %v947, 2
        %v1289 = vsel %vm783, %v1287, %v1288
        %v1290 = vrot.slane %v948, 2
        %v1291 = vsel %vm783, %v1288, %v1290
        %v1292 = vrot.slane %v949, 2
        %v1293 = vrot.slane %v950, 2
        %v1294 = vsel %vm783, %v1292, %v1293
        %v1295 = vrot.slane %v951, 2
        %v1296 = vsel %vm783, %v1293, %v1295
        %v1297 = vrot.slane %v952, 2
        %v1298 = vrot.slane %v953, 2
        %v1299 = vsel %vm783, %v1297, %v1298
        %v1300 = vrot.slane %v954, 2
        %v1301 = vsel %vm783, %v1298, %v1300
        %v1302 = vrot.slane %v955, 2
        %v1303 = vrot.slane %v956, 2
        %v1304 = vsel %vm783, %v1302, %v1303
        %v1305 = vrot.slane %v957, 2
        %v1306 = vsel %vm783, %v1303, %v1305
        %v1307 = vrot.slane %v958, 2
        %v1308 = vrot.slane %v959, 2
        %v1309 = vsel %vm783, %v1307, %v1308
        %v1310 = vrot.slane %v960, 2
        %v1311 = vsel %vm783, %v1308, %v1310
        %v1312 = vsel %vm279, %v1274, 0
        %v1314 = vsel %vm279, %v1276, 0
        %v1316 = vsel %vm279, %v1279, 0
        %v1318 = vsel %vm279, %v1281, 0
        %v1320 = vsel %vm279, %v1284, 0
        %v1322 = vsel %vm279, %v1286, 0
        %v1324 = vsel %vm279, %v1289, 0
        %v1326 = vsel %vm279, %v1291, 0
        %v1328 = vsel %vm279, %v1294, 0
        %v1330 = vsel %vm279, %v1296, 0
        %v1332 = vsel %vm279, %v1299, 0
        %v1334 = vsel %vm279, %v1301, 0
        %v1336 = vsel %vm279, %v1304, 0
        %v1338 = vsel %vm279, %v1306, 0
        %v1340 = vsel %vm279, %v1309, 0
        %v1342 = vsel %vm279, %v1311, 0
        %1344 = vmatpush.msra.mxu0 0.0
        %1345 = vmatpush.msra.mxu0 0.0
        %1346 = vmatpush.msra.mxu0 0.0
        %1347 = vmatpush.msra.mxu0 0.0
        %1348 = vmatpush.msra.mxu0 0.0
        %1349 = vmatpush.msra.mxu0 0.0
        %1350 = vmatpush.msra.mxu0 0.0
        %1351 = vmatpush.msra.mxu0 0.0
        %1352 = vmatpush.msra.mxu0 0.0
        %1353 = vmatpush.msra.mxu0 0.0
        %1354 = vmatpush.msra.mxu0 %v1271
        %1355 = vmatpush.msra.mxu0 %v1270
        %1356 = vmatpush.msra.mxu0 %v1269
        %1357 = vmatpush.msra.mxu0 %v1268
        %1358 = vmatpush.msra.mxu0 %v1267
        %1359 = vmatpush.msra.mxu0 %v1266
        %1360 = vmatmul.f32.gmra.mxu0 %v1312
        %v1361 = vpop.f32.mrf.mxu0
        %v1362 = vadd.f32 0.0, %v1361
        %1363 = vmatmul.f32.gmra.mxu0 %v1314
        %v1364 = vpop.f32.mrf.mxu0
        %v1365 = vadd.f32 0.0, %v1364
        %1366 = vmatmul.f32.gmra.mxu0 %v1316
        %v1367 = vpop.f32.mrf.mxu0
        %v1368 = vadd.f32 0.0, %v1367
        %1369 = vmatmul.f32.gmra.mxu0 %v1318
        %v1370 = vpop.f32.mrf.mxu0
        %v1371 = vadd.f32 0.0, %v1370
        %1372 = vmatmul.f32.gmra.mxu0 %v1320
        %v1373 = vpop.f32.mrf.mxu0
        %v1374 = vadd.f32 0.0, %v1373
        %1375 = vmatmul.f32.gmra.mxu0 %v1322
        %v1376 = vpop.f32.mrf.mxu0
        %v1377 = vadd.f32 0.0, %v1376
        %1378 = vmatmul.f32.gmra.mxu0 %v1324
        %v1379 = vpop.f32.mrf.mxu0
        %v1380 = vadd.f32 0.0, %v1379
        %1381 = vmatmul.f32.gmra.mxu0 %v1326
        %v1382 = vpop.f32.mrf.mxu0
        %v1383 = vadd.f32 0.0, %v1382
        %1384 = vmatmul.f32.gmra.mxu0 %v1328
        %v1385 = vpop.f32.mrf.mxu0
        %v1386 = vadd.f32 0.0, %v1385
        %1387 = vmatmul.f32.gmra.mxu0 %v1330
        %v1388 = vpop.f32.mrf.mxu0
        %v1389 = vadd.f32 0.0, %v1388
        %1390 = vmatmul.f32.gmra.mxu0 %v1332
        %v1391 = vpop.f32.mrf.mxu0
        %v1392 = vadd.f32 0.0, %v1391
        %1393 = vmatmul.f32.gmra.mxu0 %v1334
        %v1394 = vpop.f32.mrf.mxu0
        %v1395 = vadd.f32 0.0, %v1394
        %1396 = vmatmul.f32.gmra.mxu0 %v1336
        %v1397 = vpop.f32.mrf.mxu0
        %v1398 = vadd.f32 0.0, %v1397
        %1399 = vmatmul.f32.gmra.mxu0 %v1338
        %v1400 = vpop.f32.mrf.mxu0
        %v1401 = vadd.f32 0.0, %v1400
        %1402 = vmatmul.f32.gmra.mxu0 %v1340
        %v1403 = vpop.f32.mrf.mxu0
        %v1404 = vadd.f32 0.0, %v1403
        %1405 = vmatmul.f32.gmra.mxu0 %v1342
        %v1406 = vpop.f32.mrf.mxu0
        %v1407 = vadd.f32 0.0, %v1406
        %1408 = vdwg.mxu0
        %v1409 = vadd.f32 %v1249, %v1362
        %v1410 = vadd.f32 %v1250, %v1365
        %v1411 = vadd.f32 %v1251, %v1368
        %v1412 = vadd.f32 %v1252, %v1371
        %v1413 = vadd.f32 %v1253, %v1374
        %v1414 = vadd.f32 %v1254, %v1377
        %v1415 = vadd.f32 %v1255, %v1380
        %v1416 = vadd.f32 %v1256, %v1383
        %v1417 = vadd.f32 %v1257, %v1386
        %v1418 = vadd.f32 %v1258, %v1389
        %v1419 = vadd.f32 %v1259, %v1392
        %v1420 = vadd.f32 %v1260, %v1395
        %v1421 = vadd.f32 %v1261, %v1398
        %v1422 = vadd.f32 %v1262, %v1401
        %v1423 = vadd.f32 %v1263, %v1404
        %v1424 = vadd.f32 %v1264, %v1407
        %s1425 = scalar_lea.vmem [#allocation2], 48
        %v1426 = vld [vmem:[%s1425] sm:$0xff]
        %v1427 = vld [vmem:[%s1425 + $0x8] sm:$0xff]
        %v1428 = vld [vmem:[%s1425 + $0x10] sm:$0x3]
        %v1429 = vld [vmem:[%s1425 + $0x18] sm:$0xff]
        %v1430 = vld [vmem:[%s1425 + $0x20] sm:$0xff]
        %v1431 = vld [vmem:[%s1425 + $0x28] sm:$0x3]
        %v1432 = vld [vmem:[%s1425 + $0x30] sm:$0xff]
        %v1433 = vld [vmem:[%s1425 + $0x38] sm:$0xff]
        %v1434 = vld [vmem:[%s1425 + $0x40] sm:$0x3]
        %v1435 = vld [vmem:[%s1425 + $0x48] sm:$0xff]
        %v1436 = vld [vmem:[%s1425 + $0x50] sm:$0xff]
        %v1437 = vld [vmem:[%s1425 + $0x58] sm:$0x3]
        %v1438 = vld [vmem:[%s1425 + $0x60] sm:$0xff]
        %v1439 = vld [vmem:[%s1425 + $0x68] sm:$0xff]
        %v1440 = vld [vmem:[%s1425 + $0x70] sm:$0x3]
        %v1441 = vld [vmem:[%s1425 + $0x78] sm:$0xff]
        %v1442 = vld [vmem:[%s1425 + $0x80] sm:$0xff]
        %v1443 = vld [vmem:[%s1425 + $0x88] sm:$0x3]
        %v1444 = vld [vmem:[%s1425 + $0x90] sm:$0xff]
        %v1445 = vld [vmem:[%s1425 + $0x98] sm:$0xff]
        %v1446 = vld [vmem:[%s1425 + $0xa0] sm:$0x3]
        %v1447 = vld [vmem:[%s1425 + $0xa8] sm:$0xff]
        %v1448 = vld [vmem:[%s1425 + $0xb0] sm:$0xff]
        %v1449 = vld [vmem:[%s1425 + $0xb8] sm:$0x3]
        %s1450 = scalar_lea.vmem %s1, 288
        %v1451 = vld [vmem:[%s1450] sm:$0xff]
        %v1452 = vld [vmem:[%s1450 + $0x8] sm:$0xff]
        %v1453 = vld [vmem:[%s1450 + $0x10] sm:$0xff]
        %v1454 = vld [vmem:[%s1450 + $0x18] sm:$0xff]
        %v1455 = vld [vmem:[%s1450 + $0x20] sm:$0xff]
        %v1456 = vld [vmem:[%s1450 + $0x28] sm:$0xff]
        %v1458 = vsel %vm279, %v1426, 0
        %v1461 = vsel %vm279, %v1427, 0
        %v1464 = vsel %vm279, %v1429, 0
        %v1467 = vsel %vm279, %v1430, 0
        %v1470 = vsel %vm279, %v1432, 0
        %v1473 = vsel %vm279, %v1433, 0
        %v1476 = vsel %vm279, %v1435, 0
        %v1479 = vsel %vm279, %v1436, 0
        %v1482 = vsel %vm279, %v1438, 0
        %v1485 = vsel %vm279, %v1439, 0
        %v1488 = vsel %vm279, %v1441, 0
        %v1491 = vsel %vm279, %v1442, 0
        %v1494 = vsel %vm279, %v1444, 0
        %v1497 = vsel %vm279, %v1445, 0
        %v1500 = vsel %vm279, %v1447, 0
        %v1503 = vsel %vm279, %v1448, 0
        %1505 = vmatpush.msra.mxu0 0.0
        %1506 = vmatpush.msra.mxu0 0.0
        %1507 = vmatpush.msra.mxu0 0.0
        %1508 = vmatpush.msra.mxu0 0.0
        %1509 = vmatpush.msra.mxu0 0.0
        %1510 = vmatpush.msra.mxu0 0.0
        %1511 = vmatpush.msra.mxu0 0.0
        %1512 = vmatpush.msra.mxu0 0.0
        %1513 = vmatpush.msra.mxu0 0.0
        %1514 = vmatpush.msra.mxu0 0.0
        %1515 = vmatpush.msra.mxu0 %v1456
        %1516 = vmatpush.msra.mxu0 %v1455
        %1517 = vmatpush.msra.mxu0 %v1454
        %1518 = vmatpush.msra.mxu0 %v1453
        %1519 = vmatpush.msra.mxu0 %v1452
        %1520 = vmatpush.msra.mxu0 %v1451
        %1521 = vmatmul.f32.gmra.mxu0 %v1458
        %v1522 = vpop.f32.mrf.mxu0
        %v1523 = vadd.f32 0.0, %v1522
        %1524 = vmatmul.f32.gmra.mxu0 %v1461
        %v1525 = vpop.f32.mrf.mxu0
        %v1526 = vadd.f32 0.0, %v1525
        %1527 = vmatmul.f32.gmra.mxu0 %v1464
        %v1528 = vpop.f32.mrf.mxu0
        %v1529 = vadd.f32 0.0, %v1528
        %1530 = vmatmul.f32.gmra.mxu0 %v1467
        %v1531 = vpop.f32.mrf.mxu0
        %v1532 = vadd.f32 0.0, %v1531
        %1533 = vmatmul.f32.gmra.mxu0 %v1470
        %v1534 = vpop.f32.mrf.mxu0
        %v1535 = vadd.f32 0.0, %v1534
        %1536 = vmatmul.f32.gmra.mxu0 %v1473
        %v1537 = vpop.f32.mrf.mxu0
        %v1538 = vadd.f32 0.0, %v1537
        %1539 = vmatmul.f32.gmra.mxu0 %v1476
        %v1540 = vpop.f32.mrf.mxu0
        %v1541 = vadd.f32 0.0, %v1540
        %1542 = vmatmul.f32.gmra.mxu0 %v1479
        %v1543 = vpop.f32.mrf.mxu0
        %v1544 = vadd.f32 0.0, %v1543
        %1545 = vmatmul.f32.gmra.mxu0 %v1482
        %v1546 = vpop.f32.mrf.mxu0
        %v1547 = vadd.f32 0.0, %v1546
        %1548 = vmatmul.f32.gmra.mxu0 %v1485
        %v1549 = vpop.f32.mrf.mxu0
        %v1550 = vadd.f32 0.0, %v1549
        %1551 = vmatmul.f32.gmra.mxu0 %v1488
        %v1552 = vpop.f32.mrf.mxu0
        %v1553 = vadd.f32 0.0, %v1552
        %1554 = vmatmul.f32.gmra.mxu0 %v1491
        %v1555 = vpop.f32.mrf.mxu0
        %v1556 = vadd.f32 0.0, %v1555
        %1557 = vmatmul.f32.gmra.mxu0 %v1494
        %v1558 = vpop.f32.mrf.mxu0
        %v1559 = vadd.f32 0.0, %v1558
        %1560 = vmatmul.f32.gmra.mxu0 %v1497
        %v1561 = vpop.f32.mrf.mxu0
        %v1562 = vadd.f32 0.0, %v1561
        %1563 = vmatmul.f32.gmra.mxu0 %v1500
        %v1564 = vpop.f32.mrf.mxu0
        %v1565 = vadd.f32 0.0, %v1564
        %1566 = vmatmul.f32.gmra.mxu0 %v1503
        %v1567 = vpop.f32.mrf.mxu0
        %v1568 = vadd.f32 0.0, %v1567
        %1569 = vdwg.mxu0
        %v1570 = vadd.f32 %v1409, %v1523
        %v1571 = vadd.f32 %v1410, %v1526
        %v1572 = vadd.f32 %v1411, %v1529
        %v1573 = vadd.f32 %v1412, %v1532
        %v1574 = vadd.f32 %v1413, %v1535
        %v1575 = vadd.f32 %v1414, %v1538
        %v1576 = vadd.f32 %v1415, %v1541
        %v1577 = vadd.f32 %v1416, %v1544
        %v1578 = vadd.f32 %v1417, %v1547
        %v1579 = vadd.f32 %v1418, %v1550
        %v1580 = vadd.f32 %v1419, %v1553
        %v1581 = vadd.f32 %v1420, %v1556
        %v1582 = vadd.f32 %v1421, %v1559
        %v1583 = vadd.f32 %v1422, %v1562
        %v1584 = vadd.f32 %v1423, %v1565
        %v1585 = vadd.f32 %v1424, %v1568
        %s1586 = scalar_lea.vmem %s1, 336
        %v1587 = vld [vmem:[%s1586] sm:$0xff]
        %v1588 = vld [vmem:[%s1586 + $0x8] sm:$0xff]
        %v1589 = vld [vmem:[%s1586 + $0x10] sm:$0xff]
        %v1590 = vld [vmem:[%s1586 + $0x18] sm:$0xff]
        %v1591 = vld [vmem:[%s1586 + $0x20] sm:$0xff]
        %v1592 = vld [vmem:[%s1586 + $0x28] sm:$0xff]
        %v1601 = vrot.slane %v1426, 1
        %v1602 = vrot.slane %v1427, 1
        %v1603 = vsel %vm541, %v1601, %v1602
        %v1604 = vrot.slane %v1428, 1
        %v1605 = vsel %vm541, %v1602, %v1604
        %v1606 = vrot.slane %v1429, 1
        %v1607 = vrot.slane %v1430, 1
        %v1608 = vsel %vm541, %v1606, %v1607
        %v1609 = vrot.slane %v1431, 1
        %v1610 = vsel %vm541, %v1607, %v1609
        %v1611 = vrot.slane %v1432, 1
        %v1612 = vrot.slane %v1433, 1
        %v1613 = vsel %vm541, %v1611, %v1612
        %v1614 = vrot.slane %v1434, 1
        %v1615 = vsel %vm541, %v1612, %v1614
        %v1616 = vrot.slane %v1435, 1
        %v1617 = vrot.slane %v1436, 1
        %v1618 = vsel %vm541, %v1616, %v1617
        %v1619 = vrot.slane %v1437, 1
        %v1620 = vsel %vm541, %v1617, %v1619
        %v1621 = vrot.slane %v1438, 1
        %v1622 = vrot.slane %v1439, 1
        %v1623 = vsel %vm541, %v1621, %v1622
        %v1624 = vrot.slane %v1440, 1
        %v1625 = vsel %vm541, %v1622, %v1624
        %v1626 = vrot.slane %v1441, 1
        %v1627 = vrot.slane %v1442, 1
        %v1628 = vsel %vm541, %v1626, %v1627
        %v1629 = vrot.slane %v1443, 1
        %v1630 = vsel %vm541, %v1627, %v1629
        %v1631 = vrot.slane %v1444, 1
        %v1632 = vrot.slane %v1445, 1
        %v1633 = vsel %vm541, %v1631, %v1632
        %v1634 = vrot.slane %v1446, 1
        %v1635 = vsel %vm541, %v1632, %v1634
        %v1636 = vrot.slane %v1447, 1
        %v1637 = vrot.slane %v1448, 1
        %v1638 = vsel %vm541, %v1636, %v1637
        %v1639 = vrot.slane %v1449, 1
        %v1640 = vsel %vm541, %v1637, %v1639
        %v1641 = vsel %vm279, %v1603, 0
        %v1643 = vsel %vm279, %v1605, 0
        %v1645 = vsel %vm279, %v1608, 0
        %v1647 = vsel %vm279, %v1610, 0
        %v1649 = vsel %vm279, %v1613, 0
        %v1651 = vsel %vm279, %v1615, 0
        %v1653 = vsel %vm279, %v1618, 0
        %v1655 = vsel %vm279, %v1620, 0
        %v1657 = vsel %vm279, %v1623, 0
        %v1659 = vsel %vm279, %v1625, 0
        %v1661 = vsel %vm279, %v1628, 0
        %v1663 = vsel %vm279, %v1630, 0
        %v1665 = vsel %vm279, %v1633, 0
        %v1667 = vsel %vm279, %v1635, 0
        %v1669 = vsel %vm279, %v1638, 0
        %v1671 = vsel %vm279, %v1640, 0
        %1673 = vmatpush.msra.mxu0 0.0
        %1674 = vmatpush.msra.mxu0 0.0
        %1675 = vmatpush.msra.mxu0 0.0
        %1676 = vmatpush.msra.mxu0 0.0
        %1677 = vmatpush.msra.mxu0 0.0
        %1678 = vmatpush.msra.mxu0 0.0
        %1679 = vmatpush.msra.mxu0 0.0
        %1680 = vmatpush.msra.mxu0 0.0
        %1681 = vmatpush.msra.mxu0 0.0
        %1682 = vmatpush.msra.mxu0 0.0
        %1683 = vmatpush.msra.mxu0 %v1592
        %1684 = vmatpush.msra.mxu0 %v1591
        %1685 = vmatpush.msra.mxu0 %v1590
        %1686 = vmatpush.msra.mxu0 %v1589
        %1687 = vmatpush.msra.mxu0 %v1588
        %1688 = vmatpush.msra.mxu0 %v1587
        %1689 = vmatmul.f32.gmra.mxu0 %v1641
        %v1690 = vpop.f32.mrf.mxu0
        %v1691 = vadd.f32 0.0, %v1690
        %1692 = vmatmul.f32.gmra.mxu0 %v1643
        %v1693 = vpop.f32.mrf.mxu0
        %v1694 = vadd.f32 0.0, %v1693
        %1695 = vmatmul.f32.gmra.mxu0 %v1645
        %v1696 = vpop.f32.mrf.mxu0
        %v1697 = vadd.f32 0.0, %v1696
        %1698 = vmatmul.f32.gmra.mxu0 %v1647
        %v1699 = vpop.f32.mrf.mxu0
        %v1700 = vadd.f32 0.0, %v1699
        %1701 = vmatmul.f32.gmra.mxu0 %v1649
        %v1702 = vpop.f32.mrf.mxu0
        %v1703 = vadd.f32 0.0, %v1702
        %1704 = vmatmul.f32.gmra.mxu0 %v1651
        %v1705 = vpop.f32.mrf.mxu0
        %v1706 = vadd.f32 0.0, %v1705
        %1707 = vmatmul.f32.gmra.mxu0 %v1653
        %v1708 = vpop.f32.mrf.mxu0
        %v1709 = vadd.f32 0.0, %v1708
        %1710 = vmatmul.f32.gmra.mxu0 %v1655
        %v1711 = vpop.f32.mrf.mxu0
        %v1712 = vadd.f32 0.0, %v1711
        %1713 = vmatmul.f32.gmra.mxu0 %v1657
        %v1714 = vpop.f32.mrf.mxu0
        %v1715 = vadd.f32 0.0, %v1714
        %1716 = vmatmul.f32.gmra.mxu0 %v1659
        %v1717 = vpop.f32.mrf.mxu0
        %v1718 = vadd.f32 0.0, %v1717
        %1719 = vmatmul.f32.gmra.mxu0 %v1661
        %v1720 = vpop.f32.mrf.mxu0
        %v1721 = vadd.f32 0.0, %v1720
        %1722 = vmatmul.f32.gmra.mxu0 %v1663
        %v1723 = vpop.f32.mrf.mxu0
        %v1724 = vadd.f32 0.0, %v1723
        %1725 = vmatmul.f32.gmra.mxu0 %v1665
        %v1726 = vpop.f32.mrf.mxu0
        %v1727 = vadd.f32 0.0, %v1726
        %1728 = vmatmul.f32.gmra.mxu0 %v1667
        %v1729 = vpop.f32.mrf.mxu0
        %v1730 = vadd.f32 0.0, %v1729
        %1731 = vmatmul.f32.gmra.mxu0 %v1669
        %v1732 = vpop.f32.mrf.mxu0
        %v1733 = vadd.f32 0.0, %v1732
        %1734 = vmatmul.f32.gmra.mxu0 %v1671
        %v1735 = vpop.f32.mrf.mxu0
        %v1736 = vadd.f32 0.0, %v1735
        %1737 = vdwg.mxu0
        %v1738 = vadd.f32 %v1570, %v1691
        %v1739 = vadd.f32 %v1571, %v1694
        %v1740 = vadd.f32 %v1572, %v1697
        %v1741 = vadd.f32 %v1573, %v1700
        %v1742 = vadd.f32 %v1574, %v1703
        %v1743 = vadd.f32 %v1575, %v1706
        %v1744 = vadd.f32 %v1576, %v1709
        %v1745 = vadd.f32 %v1577, %v1712
        %v1746 = vadd.f32 %v1578, %v1715
        %v1747 = vadd.f32 %v1579, %v1718
        %v1748 = vadd.f32 %v1580, %v1721
        %v1749 = vadd.f32 %v1581, %v1724
        %v1750 = vadd.f32 %v1582, %v1727
        %v1751 = vadd.f32 %v1583, %v1730
        %v1752 = vadd.f32 %v1584, %v1733
        %v1753 = vadd.f32 %v1585, %v1736
        %s1754 = scalar_lea.vmem %s1, 384
        %v1755 = vld [vmem:[%s1754] sm:$0xff]
        %v1756 = vld [vmem:[%s1754 + $0x8] sm:$0xff]
        %v1757 = vld [vmem:[%s1754 + $0x10] sm:$0xff]
        %v1758 = vld [vmem:[%s1754 + $0x18] sm:$0xff]
        %v1759 = vld [vmem:[%s1754 + $0x20] sm:$0xff]
        %v1760 = vld [vmem:[%s1754 + $0x28] sm:$0xff]
        %v1761 = vrot.slane %v1426, 2
        %v1762 = vrot.slane %v1427, 2
        %v1763 = vsel %vm783, %v1761, %v1762
        %v1764 = vrot.slane %v1428, 2
        %v1765 = vsel %vm783, %v1762, %v1764
        %v1766 = vrot.slane %v1429, 2
        %v1767 = vrot.slane %v1430, 2
        %v1768 = vsel %vm783, %v1766, %v1767
        %v1769 = vrot.slane %v1431, 2
        %v1770 = vsel %vm783, %v1767, %v1769
        %v1771 = vrot.slane %v1432, 2
        %v1772 = vrot.slane %v1433, 2
        %v1773 = vsel %vm783, %v1771, %v1772
        %v1774 = vrot.slane %v1434, 2
        %v1775 = vsel %vm783, %v1772, %v1774
        %v1776 = vrot.slane %v1435, 2
        %v1777 = vrot.slane %v1436, 2
        %v1778 = vsel %vm783, %v1776, %v1777
        %v1779 = vrot.slane %v1437, 2
        %v1780 = vsel %vm783, %v1777, %v1779
        %v1781 = vrot.slane %v1438, 2
        %v1782 = vrot.slane %v1439, 2
        %v1783 = vsel %vm783, %v1781, %v1782
        %v1784 = vrot.slane %v1440, 2
        %v1785 = vsel %vm783, %v1782, %v1784
        %v1786 = vrot.slane %v1441, 2
        %v1787 = vrot.slane %v1442, 2
        %v1788 = vsel %vm783, %v1786, %v1787
        %v1789 = vrot.slane %v1443, 2
        %v1790 = vsel %vm783, %v1787, %v1789
        %v1791 = vrot.slane %v1444, 2
        %v1792 = vrot.slane %v1445, 2
        %v1793 = vsel %vm783, %v1791, %v1792
        %v1794 = vrot.slane %v1446, 2
        %v1795 = vsel %vm783, %v1792, %v1794
        %v1796 = vrot.slane %v1447, 2
        %v1797 = vrot.slane %v1448, 2
        %v1798 = vsel %vm783, %v1796, %v1797
        %v1799 = vrot.slane %v1449, 2
        %v1800 = vsel %vm783, %v1797, %v1799
        %v1801 = vsel %vm279, %v1763, 0
        %v1803 = vsel %vm279, %v1765, 0
        %v1805 = vsel %vm279, %v1768, 0
        %v1807 = vsel %vm279, %v1770, 0
        %v1809 = vsel %vm279, %v1773, 0
        %v1811 = vsel %vm279, %v1775, 0
        %v1813 = vsel %vm279, %v1778, 0
        %v1815 = vsel %vm279, %v1780, 0
        %v1817 = vsel %vm279, %v1783, 0
        %v1819 = vsel %vm279, %v1785, 0
        %v1821 = vsel %vm279, %v1788, 0
        %v1823 = vsel %vm279, %v1790, 0
        %v1825 = vsel %vm279, %v1793, 0
        %v1827 = vsel %vm279, %v1795, 0
        %v1829 = vsel %vm279, %v1798, 0
        %v1831 = vsel %vm279, %v1800, 0
        %1833 = vmatpush.msra.mxu0 0.0
        %1834 = vmatpush.msra.mxu0 0.0
        %1835 = vmatpush.msra.mxu0 0.0
        %1836 = vmatpush.msra.mxu0 0.0
        %1837 = vmatpush.msra.mxu0 0.0
        %1838 = vmatpush.msra.mxu0 0.0
        %1839 = vmatpush.msra.mxu0 0.0
        %1840 = vmatpush.msra.mxu0 0.0
        %1841 = vmatpush.msra.mxu0 0.0
        %1842 = vmatpush.msra.mxu0 0.0
        %1843 = vmatpush.msra.mxu0 %v1760
        %1844 = vmatpush.msra.mxu0 %v1759
        %1845 = vmatpush.msra.mxu0 %v1758
        %1846 = vmatpush.msra.mxu0 %v1757
        %1847 = vmatpush.msra.mxu0 %v1756
        %1848 = vmatpush.msra.mxu0 %v1755
        %1849 = vmatmul.f32.gmra.mxu0 %v1801
        %v1850 = vpop.f32.mrf.mxu0
        %v1851 = vadd.f32 0.0, %v1850
        %1852 = vmatmul.f32.gmra.mxu0 %v1803
        %v1853 = vpop.f32.mrf.mxu0
        %v1854 = vadd.f32 0.0, %v1853
        %1855 = vmatmul.f32.gmra.mxu0 %v1805
        %v1856 = vpop.f32.mrf.mxu0
        %v1857 = vadd.f32 0.0, %v1856
        %1858 = vmatmul.f32.gmra.mxu0 %v1807
        %v1859 = vpop.f32.mrf.mxu0
        %v1860 = vadd.f32 0.0, %v1859
        %1861 = vmatmul.f32.gmra.mxu0 %v1809
        %v1862 = vpop.f32.mrf.mxu0
        %v1863 = vadd.f32 0.0, %v1862
        %1864 = vmatmul.f32.gmra.mxu0 %v1811
        %v1865 = vpop.f32.mrf.mxu0
        %v1866 = vadd.f32 0.0, %v1865
        %1867 = vmatmul.f32.gmra.mxu0 %v1813
        %v1868 = vpop.f32.mrf.mxu0
        %v1869 = vadd.f32 0.0, %v1868
        %1870 = vmatmul.f32.gmra.mxu0 %v1815
        %v1871 = vpop.f32.mrf.mxu0
        %v1872 = vadd.f32 0.0, %v1871
        %1873 = vmatmul.f32.gmra.mxu0 %v1817
        %v1874 = vpop.f32.mrf.mxu0
        %v1875 = vadd.f32 0.0, %v1874
        %1876 = vmatmul.f32.gmra.mxu0 %v1819
        %v1877 = vpop.f32.mrf.mxu0
        %v1878 = vadd.f32 0.0, %v1877
        %1879 = vmatmul.f32.gmra.mxu0 %v1821
        %v1880 = vpop.f32.mrf.mxu0
        %v1881 = vadd.f32 0.0, %v1880
        %1882 = vmatmul.f32.gmra.mxu0 %v1823
        %v1883 = vpop.f32.mrf.mxu0
        %v1884 = vadd.f32 0.0, %v1883
        %1885 = vmatmul.f32.gmra.mxu0 %v1825
        %v1886 = vpop.f32.mrf.mxu0
        %v1887 = vadd.f32 0.0, %v1886
        %1888 = vmatmul.f32.gmra.mxu0 %v1827
        %v1889 = vpop.f32.mrf.mxu0
        %v1890 = vadd.f32 0.0, %v1889
        %1891 = vmatmul.f32.gmra.mxu0 %v1829
        %v1892 = vpop.f32.mrf.mxu0
        %v1893 = vadd.f32 0.0, %v1892
        %1894 = vmatmul.f32.gmra.mxu0 %v1831
        %v1895 = vpop.f32.mrf.mxu0
        %v1896 = vadd.f32 0.0, %v1895
        %1897 = vdwg.mxu0
        %v1898 = vadd.f32 %v1738, %v1851
        %v1899 = vadd.f32 %v1739, %v1854
        %v1900 = vadd.f32 %v1740, %v1857
        %v1901 = vadd.f32 %v1741, %v1860
        %v1902 = vadd.f32 %v1742, %v1863
        %v1903 = vadd.f32 %v1743, %v1866
        %v1904 = vadd.f32 %v1744, %v1869
        %v1905 = vadd.f32 %v1745, %v1872
        %v1906 = vadd.f32 %v1746, %v1875
        %v1907 = vadd.f32 %v1747, %v1878
        %v1908 = vadd.f32 %v1748, %v1881
        %v1909 = vadd.f32 %v1749, %v1884
        %v1910 = vadd.f32 %v1750, %v1887
        %v1911 = vadd.f32 %v1751, %v1890
        %v1912 = vadd.f32 %v1752, %v1893
        %v1913 = vadd.f32 %v1753, %v1896
        %v1915 = vperm.slane %v479, 0
        %v1917 = vadd.f32 %v1898, %v1915
        %v1918 = vadd.f32 %v1899, %v1915
        %v1919 = vadd.f32 %v1900, %v1915
        %v1920 = vadd.f32 %v1901, %v1915
        %v1921 = vadd.f32 %v1902, %v1915
        %v1922 = vadd.f32 %v1903, %v1915
        %v1923 = vadd.f32 %v1904, %v1915
        %v1924 = vadd.f32 %v1905, %v1915
        %v1925 = vadd.f32 %v1906, %v1915
        %v1926 = vadd.f32 %v1907, %v1915
        %v1927 = vadd.f32 %v1908, %v1915
        %v1928 = vadd.f32 %v1909, %v1915
        %v1929 = vadd.f32 %v1910, %v1915
        %v1930 = vadd.f32 %v1911, %v1915
        %v1931 = vadd.f32 %v1912, %v1915
        %v1932 = vadd.f32 %v1913, %v1915
        %vm1933 = vcmp.gt.f32.partialorder %v1917, 0.0
        %vm1934 = vcmp.gt.f32.partialorder %v1918, 0.0
        %vm1935 = vcmp.gt.f32.partialorder %v1919, 0.0
        %vm1936 = vcmp.gt.f32.partialorder %v1920, 0.0
        %vm1937 = vcmp.gt.f32.partialorder %v1921, 0.0
        %vm1938 = vcmp.gt.f32.partialorder %v1922, 0.0
        %vm1939 = vcmp.gt.f32.partialorder %v1923, 0.0
        %vm1940 = vcmp.gt.f32.partialorder %v1924, 0.0
        %vm1941 = vcmp.gt.f32.partialorder %v1925, 0.0
        %vm1942 = vcmp.gt.f32.partialorder %v1926, 0.0
        %vm1943 = vcmp.gt.f32.partialorder %v1927, 0.0
        %vm1944 = vcmp.gt.f32.partialorder %v1928, 0.0
        %vm1945 = vcmp.gt.f32.partialorder %v1929, 0.0
        %vm1946 = vcmp.gt.f32.partialorder %v1930, 0.0
        %vm1947 = vcmp.gt.f32.partialorder %v1931, 0.0
        %vm1948 = vcmp.gt.f32.partialorder %v1932, 0.0
        %v1949 = vmul.f32 %v1917, 0.01
        %v1950 = vmul.f32 %v1918, 0.01
        %v1951 = vmul.f32 %v1919, 0.01
        %v1952 = vmul.f32 %v1920, 0.01
        %v1953 = vmul.f32 %v1921, 0.01
        %v1954 = vmul.f32 %v1922, 0.01
        %v1955 = vmul.f32 %v1923, 0.01
        %v1956 = vmul.f32 %v1924, 0.01
        %v1957 = vmul.f32 %v1925, 0.01
        %v1958 = vmul.f32 %v1926, 0.01
        %v1959 = vmul.f32 %v1927, 0.01
        %v1960 = vmul.f32 %v1928, 0.01
        %v1961 = vmul.f32 %v1929, 0.01
        %v1962 = vmul.f32 %v1930, 0.01
        %v1963 = vmul.f32 %v1931, 0.01
        %v1964 = vmul.f32 %v1932, 0.01
        %v1965 = vsel %vm1933, %v1917, %v1949
        %v1966 = vsel %vm1934, %v1918, %v1950
        %v1967 = vsel %vm1935, %v1919, %v1951
        %v1968 = vsel %vm1936, %v1920, %v1952
        %v1969 = vsel %vm1937, %v1921, %v1953
        %v1970 = vsel %vm1938, %v1922, %v1954
        %v1971 = vsel %vm1939, %v1923, %v1955
        %v1972 = vsel %vm1940, %v1924, %v1956
        %v1973 = vsel %vm1941, %v1925, %v1957
        %v1974 = vsel %vm1942, %v1926, %v1958
        %v1975 = vsel %vm1943, %v1927, %v1959
        %v1976 = vsel %vm1944, %v1928, %v1960
        %v1977 = vsel %vm1945, %v1929, %v1961
        %v1978 = vsel %vm1946, %v1930, %v1962
        %v1979 = vsel %vm1947, %v1931, %v1963
        %v1980 = vsel %vm1948, %v1932, %v1964
        %s1981 = scalar_lea.vmem [#allocation3], 24
        %1982 = vst [vmem:[%s1981 + $0x1] sm:$0xff] %v1965
        %1983 = vst [vmem:[%s1981 + $0x9] sm:$0xff] %v1966
        %1984 = vst [vmem:[%s1981 + $0x19] sm:$0xff] %v1967
        %1985 = vst [vmem:[%s1981 + $0x21] sm:$0xff] %v1968
        %1986 = vst [vmem:[%s1981 + $0x31] sm:$0xff] %v1969
        %1987 = vst [vmem:[%s1981 + $0x39] sm:$0xff] %v1970
        %1988 = vst [vmem:[%s1981 + $0x49] sm:$0xff] %v1971
        %1989 = vst [vmem:[%s1981 + $0x51] sm:$0xff] %v1972
        %1990 = vst [vmem:[%s1981 + $0x61] sm:$0xff] %v1973
        %1991 = vst [vmem:[%s1981 + $0x69] sm:$0xff] %v1974
        %1992 = vst [vmem:[%s1981 + $0x79] sm:$0xff] %v1975
        %1993 = vst [vmem:[%s1981 + $0x81] sm:$0xff] %v1976
        %1994 = vst [vmem:[%s1981 + $0x91] sm:$0xff] %v1977
        %1995 = vst [vmem:[%s1981 + $0x99] sm:$0xff] %v1978
        %1996 = vst [vmem:[%s1981 + $0xa9] sm:$0xff] %v1979
        %1997 = vst [vmem:[%s1981 + $0xb1] sm:$0xff] %v1980
        %s1998 = scalar_lea.vmem [#allocation2], 192
        %v1999 = vld [vmem:[%s1998] sm:$0xff]
        %v2000 = vld [vmem:[%s1998 + $0x8] sm:$0xff]
        %v2001 = vld [vmem:[%s1998 + $0x10] sm:$0x3]
        %v2002 = vld [vmem:[%s1998 + $0x18] sm:$0xff]
        %v2003 = vld [vmem:[%s1998 + $0x20] sm:$0xff]
        %v2004 = vld [vmem:[%s1998 + $0x28] sm:$0x3]
        %v2005 = vld [vmem:[%s1998 + $0x30] sm:$0xff]
        %v2006 = vld [vmem:[%s1998 + $0x38] sm:$0xff]
        %v2007 = vld [vmem:[%s1998 + $0x40] sm:$0x3]
        %v2008 = vld [vmem:[%s1998 + $0x48] sm:$0xff]
        %v2009 = vld [vmem:[%s1998 + $0x50] sm:$0xff]
        %v2010 = vld [vmem:[%s1998 + $0x58] sm:$0x3]
        %v2011 = vld [vmem:[%s1998 + $0x60] sm:$0xff]
        %v2012 = vld [vmem:[%s1998 + $0x68] sm:$0xff]
        %v2013 = vld [vmem:[%s1998 + $0x70] sm:$0x3]
        %v2014 = vld [vmem:[%s1998 + $0x78] sm:$0xff]
        %v2015 = vld [vmem:[%s1998 + $0x80] sm:$0xff]
        %v2016 = vld [vmem:[%s1998 + $0x88] sm:$0x3]
        %v2017 = vld [vmem:[%s1998 + $0x90] sm:$0xff]
        %v2018 = vld [vmem:[%s1998 + $0x98] sm:$0xff]
        %v2019 = vld [vmem:[%s1998 + $0xa0] sm:$0x3]
        %v2020 = vld [vmem:[%s1998 + $0xa8] sm:$0xff]
        %v2021 = vld [vmem:[%s1998 + $0xb0] sm:$0xff]
        %v2022 = vld [vmem:[%s1998 + $0xb8] sm:$0x3]
        %v2023 = vld [vmem:[%s1] sm:$0xff]
        %v2024 = vld [vmem:[%s1 + $0x8] sm:$0xff]
        %v2025 = vld [vmem:[%s1 + $0x10] sm:$0xff]
        %v2026 = vld [vmem:[%s1 + $0x18] sm:$0xff]
        %v2027 = vld [vmem:[%s1 + $0x20] sm:$0xff]
        %v2028 = vld [vmem:[%s1 + $0x28] sm:$0xff]
        %v2029 = vld [vmem:[%s510] sm:$0xff]
        %v2030 = vld [vmem:[%s510 + $0x8] sm:$0xff]
        %v2031 = vld [vmem:[%s510 + $0x10] sm:$0xff]
        %v2032 = vld [vmem:[%s510 + $0x18] sm:$0xff]
        %v2033 = vld [vmem:[%s510 + $0x20] sm:$0xff]
        %v2034 = vld [vmem:[%s510 + $0x28] sm:$0xff]
        %v2059 = vrot.slane %v1999, 1
        %v2060 = vrot.slane %v2000, 1
        %v2061 = vsel %vm541, %v2059, %v2060
        %v2062 = vrot.slane %v2001, 1
        %v2063 = vsel %vm541, %v2060, %v2062
        %v2064 = vrot.slane %v2002, 1
        %v2065 = vrot.slane %v2003, 1
        %v2066 = vsel %vm541, %v2064, %v2065
        %v2067 = vrot.slane %v2004, 1
        %v2068 = vsel %vm541, %v2065, %v2067
        %v2069 = vrot.slane %v2005, 1
        %v2070 = vrot.slane %v2006, 1
        %v2071 = vsel %vm541, %v2069, %v2070
        %v2072 = vrot.slane %v2007, 1
        %v2073 = vsel %vm541, %v2070, %v2072
        %v2074 = vrot.slane %v2008, 1
        %v2075 = vrot.slane %v2009, 1
        %v2076 = vsel %vm541, %v2074, %v2075
        %v2077 = vrot.slane %v2010, 1
        %v2078 = vsel %vm541, %v2075, %v2077
        %v2079 = vrot.slane %v2011, 1
        %v2080 = vrot.slane %v2012, 1
        %v2081 = vsel %vm541, %v2079, %v2080
        %v2082 = vrot.slane %v2013, 1
        %v2083 = vsel %vm541, %v2080, %v2082
        %v2084 = vrot.slane %v2014, 1
        %v2085 = vrot.slane %v2015, 1
        %v2086 = vsel %vm541, %v2084, %v2085
        %v2087 = vrot.slane %v2016, 1
        %v2088 = vsel %vm541, %v2085, %v2087
        %v2089 = vrot.slane %v2017, 1
        %v2090 = vrot.slane %v2018, 1
        %v2091 = vsel %vm541, %v2089, %v2090
        %v2092 = vrot.slane %v2019, 1
        %v2093 = vsel %vm541, %v2090, %v2092
        %v2094 = vrot.slane %v2020, 1
        %v2095 = vrot.slane %v2021, 1
        %v2096 = vsel %vm541, %v2094, %v2095
        %v2097 = vrot.slane %v2022, 1
        %v2098 = vsel %vm541, %v2095, %v2097
        %v2099 = vsel %vm279, %v2061, 0
        %v2101 = vsel %vm279, %v2063, 0
        %v2103 = vsel %vm279, %v2066, 0
        %v2105 = vsel %vm279, %v2068, 0
        %v2107 = vsel %vm279, %v2071, 0
        %v2109 = vsel %vm279, %v2073, 0
        %v2111 = vsel %vm279, %v2076, 0
        %v2113 = vsel %vm279, %v2078, 0
        %v2115 = vsel %vm279, %v2081, 0
        %v2117 = vsel %vm279, %v2083, 0
        %v2119 = vsel %vm279, %v2086, 0
        %v2121 = vsel %vm279, %v2088, 0
        %v2123 = vsel %vm279, %v2091, 0
        %v2125 = vsel %vm279, %v2093, 0
        %v2127 = vsel %vm279, %v2096, 0
        %v2129 = vsel %vm279, %v2098, 0
        %2131 = vmatpush.msra.mxu0 0.0
        %2132 = vmatpush.msra.mxu0 0.0
        %2133 = vmatpush.msra.mxu0 0.0
        %2134 = vmatpush.msra.mxu0 0.0
        %2135 = vmatpush.msra.mxu0 0.0
        %2136 = vmatpush.msra.mxu0 0.0
        %2137 = vmatpush.msra.mxu0 0.0
        %2138 = vmatpush.msra.mxu0 0.0
        %2139 = vmatpush.msra.mxu0 0.0
        %2140 = vmatpush.msra.mxu0 0.0
        %2141 = vmatpush.msra.mxu0 %v2034
        %2142 = vmatpush.msra.mxu0 %v2033
        %2143 = vmatpush.msra.mxu0 %v2032
        %2144 = vmatpush.msra.mxu0 %v2031
        %2145 = vmatpush.msra.mxu0 %v2030
        %2146 = vmatpush.msra.mxu0 %v2029
        %2147 = vmatmul.f32.gmra.mxu0 %v2099
        %v2148 = vpop.f32.mrf.mxu0
        %v2149 = vadd.f32 0.0, %v2148
        %2150 = vmatmul.f32.gmra.mxu0 %v2101
        %v2151 = vpop.f32.mrf.mxu0
        %v2152 = vadd.f32 0.0, %v2151
        %2153 = vmatmul.f32.gmra.mxu0 %v2103
        %v2154 = vpop.f32.mrf.mxu0
        %v2155 = vadd.f32 0.0, %v2154
        %2156 = vmatmul.f32.gmra.mxu0 %v2105
        %v2157 = vpop.f32.mrf.mxu0
        %v2158 = vadd.f32 0.0, %v2157
        %2159 = vmatmul.f32.gmra.mxu0 %v2107
        %v2160 = vpop.f32.mrf.mxu0
        %v2161 = vadd.f32 0.0, %v2160
        %2162 = vmatmul.f32.gmra.mxu0 %v2109
        %v2163 = vpop.f32.mrf.mxu0
        %v2164 = vadd.f32 0.0, %v2163
        %2165 = vmatmul.f32.gmra.mxu0 %v2111
        %v2166 = vpop.f32.mrf.mxu0
        %v2167 = vadd.f32 0.0, %v2166
        %2168 = vmatmul.f32.gmra.mxu0 %v2113
        %v2169 = vpop.f32.mrf.mxu0
        %v2170 = vadd.f32 0.0, %v2169
        %2171 = vmatmul.f32.gmra.mxu0 %v2115
        %v2172 = vpop.f32.mrf.mxu0
        %v2173 = vadd.f32 0.0, %v2172
        %2174 = vmatmul.f32.gmra.mxu0 %v2117
        %v2175 = vpop.f32.mrf.mxu0
        %v2176 = vadd.f32 0.0, %v2175
        %2177 = vmatmul.f32.gmra.mxu0 %v2119
        %v2178 = vpop.f32.mrf.mxu0
        %v2179 = vadd.f32 0.0, %v2178
        %2180 = vmatmul.f32.gmra.mxu0 %v2121
        %v2181 = vpop.f32.mrf.mxu0
        %v2182 = vadd.f32 0.0, %v2181
        %2183 = vmatmul.f32.gmra.mxu0 %v2123
        %v2184 = vpop.f32.mrf.mxu0
        %v2185 = vadd.f32 0.0, %v2184
        %2186 = vmatmul.f32.gmra.mxu0 %v2125
        %v2187 = vpop.f32.mrf.mxu0
        %v2188 = vadd.f32 0.0, %v2187
        %2189 = vmatmul.f32.gmra.mxu0 %v2127
        %v2190 = vpop.f32.mrf.mxu0
        %v2191 = vadd.f32 0.0, %v2190
        %2192 = vmatmul.f32.gmra.mxu0 %v2129
        %v2193 = vpop.f32.mrf.mxu0
        %v2194 = vadd.f32 0.0, %v2193
        %2195 = vdwg.mxu0
        %v2196 = vsel %vm279, %v1999, 0
        %v2198 = vsel %vm279, %v2000, 0
        %v2200 = vsel %vm279, %v2002, 0
        %v2202 = vsel %vm279, %v2003, 0
        %v2204 = vsel %vm279, %v2005, 0
        %v2206 = vsel %vm279, %v2006, 0
        %v2208 = vsel %vm279, %v2008, 0
        %v2210 = vsel %vm279, %v2009, 0
        %v2212 = vsel %vm279, %v2011, 0
        %v2214 = vsel %vm279, %v2012, 0
        %v2216 = vsel %vm279, %v2014, 0
        %v2218 = vsel %vm279, %v2015, 0
        %v2220 = vsel %vm279, %v2017, 0
        %v2222 = vsel %vm279, %v2018, 0
        %v2224 = vsel %vm279, %v2020, 0
        %v2226 = vsel %vm279, %v2021, 0
        %2228 = vmatpush.msra.mxu0 0.0
        %2229 = vmatpush.msra.mxu0 0.0
        %2230 = vmatpush.msra.mxu0 0.0
        %2231 = vmatpush.msra.mxu0 0.0
        %2232 = vmatpush.msra.mxu0 0.0
        %2233 = vmatpush.msra.mxu0 0.0
        %2234 = vmatpush.msra.mxu0 0.0
        %2235 = vmatpush.msra.mxu0 0.0
        %2236 = vmatpush.msra.mxu0 0.0
        %2237 = vmatpush.msra.mxu0 0.0
        %2238 = vmatpush.msra.mxu0 %v2028
        %2239 = vmatpush.msra.mxu0 %v2027
        %2240 = vmatpush.msra.mxu0 %v2026
        %2241 = vmatpush.msra.mxu0 %v2025
        %2242 = vmatpush.msra.mxu0 %v2024
        %2243 = vmatpush.msra.mxu0 %v2023
        %2244 = vmatmul.f32.gmra.mxu0 %v2196
        %v2245 = vpop.f32.mrf.mxu0
        %v2246 = vadd.f32 %v2149, %v2245
        %2247 = vmatmul.f32.gmra.mxu0 %v2198
        %v2248 = vpop.f32.mrf.mxu0
        %v2249 = vadd.f32 %v2152, %v2248
        %2250 = vmatmul.f32.gmra.mxu0 %v2200
        %v2251 = vpop.f32.mrf.mxu0
        %v2252 = vadd.f32 %v2155, %v2251
        %2253 = vmatmul.f32.gmra.mxu0 %v2202
        %v2254 = vpop.f32.mrf.mxu0
        %v2255 = vadd.f32 %v2158, %v2254
        %2256 = vmatmul.f32.gmra.mxu0 %v2204
        %v2257 = vpop.f32.mrf.mxu0
        %v2258 = vadd.f32 %v2161, %v2257
        %2259 = vmatmul.f32.gmra.mxu0 %v2206
        %v2260 = vpop.f32.mrf.mxu0
        %v2261 = vadd.f32 %v2164, %v2260
        %2262 = vmatmul.f32.gmra.mxu0 %v2208
        %v2263 = vpop.f32.mrf.mxu0
        %v2264 = vadd.f32 %v2167, %v2263
        %2265 = vmatmul.f32.gmra.mxu0 %v2210
        %v2266 = vpop.f32.mrf.mxu0
        %v2267 = vadd.f32 %v2170, %v2266
        %2268 = vmatmul.f32.gmra.mxu0 %v2212
        %v2269 = vpop.f32.mrf.mxu0
        %v2270 = vadd.f32 %v2173, %v2269
        %2271 = vmatmul.f32.gmra.mxu0 %v2214
        %v2272 = vpop.f32.mrf.mxu0
        %v2273 = vadd.f32 %v2176, %v2272
        %2274 = vmatmul.f32.gmra.mxu0 %v2216
        %v2275 = vpop.f32.mrf.mxu0
        %v2276 = vadd.f32 %v2179, %v2275
        %2277 = vmatmul.f32.gmra.mxu0 %v2218
        %v2278 = vpop.f32.mrf.mxu0
        %v2279 = vadd.f32 %v2182, %v2278
        %2280 = vmatmul.f32.gmra.mxu0 %v2220
        %v2281 = vpop.f32.mrf.mxu0
        %v2282 = vadd.f32 %v2185, %v2281
        %2283 = vmatmul.f32.gmra.mxu0 %v2222
        %v2284 = vpop.f32.mrf.mxu0
        %v2285 = vadd.f32 %v2188, %v2284
        %2286 = vmatmul.f32.gmra.mxu0 %v2224
        %v2287 = vpop.f32.mrf.mxu0
        %v2288 = vadd.f32 %v2191, %v2287
        %2289 = vmatmul.f32.gmra.mxu0 %v2226
        %v2290 = vpop.f32.mrf.mxu0
        %v2291 = vadd.f32 %v2194, %v2290
        %2292 = vdwg.mxu0
        %v2293 = vld [vmem:[%s776] sm:$0xff]
        %v2294 = vld [vmem:[%s776 + $0x8] sm:$0xff]
        %v2295 = vld [vmem:[%s776 + $0x10] sm:$0xff]
        %v2296 = vld [vmem:[%s776 + $0x18] sm:$0xff]
        %v2297 = vld [vmem:[%s776 + $0x20] sm:$0xff]
        %v2298 = vld [vmem:[%s776 + $0x28] sm:$0xff]
        %v2299 = vrot.slane %v1999, 2
        %v2300 = vrot.slane %v2000, 2
        %v2301 = vsel %vm783, %v2299, %v2300
        %v2302 = vrot.slane %v2001, 2
        %v2303 = vsel %vm783, %v2300, %v2302
        %v2304 = vrot.slane %v2002, 2
        %v2305 = vrot.slane %v2003, 2
        %v2306 = vsel %vm783, %v2304, %v2305
        %v2307 = vrot.slane %v2004, 2
        %v2308 = vsel %vm783, %v2305, %v2307
        %v2309 = vrot.slane %v2005, 2
        %v2310 = vrot.slane %v2006, 2
        %v2311 = vsel %vm783, %v2309, %v2310
        %v2312 = vrot.slane %v2007, 2
        %v2313 = vsel %vm783, %v2310, %v2312
        %v2314 = vrot.slane %v2008, 2
        %v2315 = vrot.slane %v2009, 2
        %v2316 = vsel %vm783, %v2314, %v2315
        %v2317 = vrot.slane %v2010, 2
        %v2318 = vsel %vm783, %v2315, %v2317
        %v2319 = vrot.slane %v2011, 2
        %v2320 = vrot.slane %v2012, 2
        %v2321 = vsel %vm783, %v2319, %v2320
        %v2322 = vrot.slane %v2013, 2
        %v2323 = vsel %vm783, %v2320, %v2322
        %v2324 = vrot.slane %v2014, 2
        %v2325 = vrot.slane %v2015, 2
        %v2326 = vsel %vm783, %v2324, %v2325
        %v2327 = vrot.slane %v2016, 2
        %v2328 = vsel %vm783, %v2325, %v2327
        %v2329 = vrot.slane %v2017, 2
        %v2330 = vrot.slane %v2018, 2
        %v2331 = vsel %vm783, %v2329, %v2330
        %v2332 = vrot.slane %v2019, 2
        %v2333 = vsel %vm783, %v2330, %v2332
        %v2334 = vrot.slane %v2020, 2
        %v2335 = vrot.slane %v2021, 2
        %v2336 = vsel %vm783, %v2334, %v2335
        %v2337 = vrot.slane %v2022, 2
        %v2338 = vsel %vm783, %v2335, %v2337
        %v2339 = vsel %vm279, %v2301, 0
        %v2341 = vsel %vm279, %v2303, 0
        %v2343 = vsel %vm279, %v2306, 0
        %v2345 = vsel %vm279, %v2308, 0
        %v2347 = vsel %vm279, %v2311, 0
        %v2349 = vsel %vm279, %v2313, 0
        %v2351 = vsel %vm279, %v2316, 0
        %v2353 = vsel %vm279, %v2318, 0
        %v2355 = vsel %vm279, %v2321, 0
        %v2357 = vsel %vm279, %v2323, 0
        %v2359 = vsel %vm279, %v2326, 0
        %v2361 = vsel %vm279, %v2328, 0
        %v2363 = vsel %vm279, %v2331, 0
        %v2365 = vsel %vm279, %v2333, 0
        %v2367 = vsel %vm279, %v2336, 0
        %v2369 = vsel %vm279, %v2338, 0
        %2371 = vmatpush.msra.mxu0 0.0
        %2372 = vmatpush.msra.mxu0 0.0
        %2373 = vmatpush.msra.mxu0 0.0
        %2374 = vmatpush.msra.mxu0 0.0
        %2375 = vmatpush.msra.mxu0 0.0
        %2376 = vmatpush.msra.mxu0 0.0
        %2377 = vmatpush.msra.mxu0 0.0
        %2378 = vmatpush.msra.mxu0 0.0
        %2379 = vmatpush.msra.mxu0 0.0
        %2380 = vmatpush.msra.mxu0 0.0
        %2381 = vmatpush.msra.mxu0 %v2298
        %2382 = vmatpush.msra.mxu0 %v2297
        %2383 = vmatpush.msra.mxu0 %v2296
        %2384 = vmatpush.msra.mxu0 %v2295
        %2385 = vmatpush.msra.mxu0 %v2294
        %2386 = vmatpush.msra.mxu0 %v2293
        %2387 = vmatmul.f32.gmra.mxu0 %v2339
        %v2388 = vpop.f32.mrf.mxu0
        %v2389 = vadd.f32 0.0, %v2388
        %2390 = vmatmul.f32.gmra.mxu0 %v2341
        %v2391 = vpop.f32.mrf.mxu0
        %v2392 = vadd.f32 0.0, %v2391
        %2393 = vmatmul.f32.gmra.mxu0 %v2343
        %v2394 = vpop.f32.mrf.mxu0
        %v2395 = vadd.f32 0.0, %v2394
        %2396 = vmatmul.f32.gmra.mxu0 %v2345
        %v2397 = vpop.f32.mrf.mxu0
        %v2398 = vadd.f32 0.0, %v2397
        %2399 = vmatmul.f32.gmra.mxu0 %v2347
        %v2400 = vpop.f32.mrf.mxu0
        %v2401 = vadd.f32 0.0, %v2400
        %2402 = vmatmul.f32.gmra.mxu0 %v2349
        %v2403 = vpop.f32.mrf.mxu0
        %v2404 = vadd.f32 0.0, %v2403
        %2405 = vmatmul.f32.gmra.mxu0 %v2351
        %v2406 = vpop.f32.mrf.mxu0
        %v2407 = vadd.f32 0.0, %v2406
        %2408 = vmatmul.f32.gmra.mxu0 %v2353
        %v2409 = vpop.f32.mrf.mxu0
        %v2410 = vadd.f32 0.0, %v2409
        %2411 = vmatmul.f32.gmra.mxu0 %v2355
        %v2412 = vpop.f32.mrf.mxu0
        %v2413 = vadd.f32 0.0, %v2412
        %2414 = vmatmul.f32.gmra.mxu0 %v2357
        %v2415 = vpop.f32.mrf.mxu0
        %v2416 = vadd.f32 0.0, %v2415
        %2417 = vmatmul.f32.gmra.mxu0 %v2359
        %v2418 = vpop.f32.mrf.mxu0
        %v2419 = vadd.f32 0.0, %v2418
        %2420 = vmatmul.f32.gmra.mxu0 %v2361
        %v2421 = vpop.f32.mrf.mxu0
        %v2422 = vadd.f32 0.0, %v2421
        %2423 = vmatmul.f32.gmra.mxu0 %v2363
        %v2424 = vpop.f32.mrf.mxu0
        %v2425 = vadd.f32 0.0, %v2424
        %2426 = vmatmul.f32.gmra.mxu0 %v2365
        %v2427 = vpop.f32.mrf.mxu0
        %v2428 = vadd.f32 0.0, %v2427
        %2429 = vmatmul.f32.gmra.mxu0 %v2367
        %v2430 = vpop.f32.mrf.mxu0
        %v2431 = vadd.f32 0.0, %v2430
        %2432 = vmatmul.f32.gmra.mxu0 %v2369
        %v2433 = vpop.f32.mrf.mxu0
        %v2434 = vadd.f32 0.0, %v2433
        %2435 = vdwg.mxu0
        %v2436 = vadd.f32 %v2246, %v2389
        %v2437 = vadd.f32 %v2249, %v2392
        %v2438 = vadd.f32 %v2252, %v2395
        %v2439 = vadd.f32 %v2255, %v2398
        %v2440 = vadd.f32 %v2258, %v2401
        %v2441 = vadd.f32 %v2261, %v2404
        %v2442 = vadd.f32 %v2264, %v2407
        %v2443 = vadd.f32 %v2267, %v2410
        %v2444 = vadd.f32 %v2270, %v2413
        %v2445 = vadd.f32 %v2273, %v2416
        %v2446 = vadd.f32 %v2276, %v2419
        %v2447 = vadd.f32 %v2279, %v2422
        %v2448 = vadd.f32 %v2282, %v2425
        %v2449 = vadd.f32 %v2285, %v2428
        %v2450 = vadd.f32 %v2288, %v2431
        %v2451 = vadd.f32 %v2291, %v2434
        %s2452 = scalar_lea.vmem [#allocation2], 216
        %v2453 = vld [vmem:[%s2452] sm:$0xff]
        %v2454 = vld [vmem:[%s2452 + $0x8] sm:$0xff]
        %v2455 = vld [vmem:[%s2452 + $0x10] sm:$0x3]
        %v2456 = vld [vmem:[%s2452 + $0x18] sm:$0xff]
        %v2457 = vld [vmem:[%s2452 + $0x20] sm:$0xff]
        %v2458 = vld [vmem:[%s2452 + $0x28] sm:$0x3]
        %v2459 = vld [vmem:[%s2452 + $0x30] sm:$0xff]
        %v2460 = vld [vmem:[%s2452 + $0x38] sm:$0xff]
        %v2461 = vld [vmem:[%s2452 + $0x40] sm:$0x3]
        %v2462 = vld [vmem:[%s2452 + $0x48] sm:$0xff]
        %v2463 = vld [vmem:[%s2452 + $0x50] sm:$0xff]
        %v2464 = vld [vmem:[%s2452 + $0x58] sm:$0x3]
        %v2465 = vld [vmem:[%s2452 + $0x60] sm:$0xff]
        %v2466 = vld [vmem:[%s2452 + $0x68] sm:$0xff]
        %v2467 = vld [vmem:[%s2452 + $0x70] sm:$0x3]
        %v2468 = vld [vmem:[%s2452 + $0x78] sm:$0xff]
        %v2469 = vld [vmem:[%s2452 + $0x80] sm:$0xff]
        %v2470 = vld [vmem:[%s2452 + $0x88] sm:$0x3]
        %v2471 = vld [vmem:[%s2452 + $0x90] sm:$0xff]
        %v2472 = vld [vmem:[%s2452 + $0x98] sm:$0xff]
        %v2473 = vld [vmem:[%s2452 + $0xa0] sm:$0x3]
        %v2474 = vld [vmem:[%s2452 + $0xa8] sm:$0xff]
        %v2475 = vld [vmem:[%s2452 + $0xb0] sm:$0xff]
        %v2476 = vld [vmem:[%s2452 + $0xb8] sm:$0x3]
        %v2477 = vld [vmem:[%s961] sm:$0xff]
        %v2478 = vld [vmem:[%s961 + $0x8] sm:$0xff]
        %v2479 = vld [vmem:[%s961 + $0x10] sm:$0xff]
        %v2480 = vld [vmem:[%s961 + $0x18] sm:$0xff]
        %v2481 = vld [vmem:[%s961 + $0x20] sm:$0xff]
        %v2482 = vld [vmem:[%s961 + $0x28] sm:$0xff]
        %v2484 = vsel %vm279, %v2453, 0
        %v2487 = vsel %vm279, %v2454, 0
        %v2490 = vsel %vm279, %v2456, 0
        %v2493 = vsel %vm279, %v2457, 0
        %v2496 = vsel %vm279, %v2459, 0
        %v2499 = vsel %vm279, %v2460, 0
        %v2502 = vsel %vm279, %v2462, 0
        %v2505 = vsel %vm279, %v2463, 0
        %v2508 = vsel %vm279, %v2465, 0
        %v2511 = vsel %vm279, %v2466, 0
        %v2514 = vsel %vm279, %v2468, 0
        %v2517 = vsel %vm279, %v2469, 0
        %v2520 = vsel %vm279, %v2471, 0
        %v2523 = vsel %vm279, %v2472, 0
        %v2526 = vsel %vm279, %v2474, 0
        %v2529 = vsel %vm279, %v2475, 0
        %2531 = vmatpush.msra.mxu0 0.0
        %2532 = vmatpush.msra.mxu0 0.0
        %2533 = vmatpush.msra.mxu0 0.0
        %2534 = vmatpush.msra.mxu0 0.0
        %2535 = vmatpush.msra.mxu0 0.0
        %2536 = vmatpush.msra.mxu0 0.0
        %2537 = vmatpush.msra.mxu0 0.0
        %2538 = vmatpush.msra.mxu0 0.0
        %2539 = vmatpush.msra.mxu0 0.0
        %2540 = vmatpush.msra.mxu0 0.0
        %2541 = vmatpush.msra.mxu0 %v2482
        %2542 = vmatpush.msra.mxu0 %v2481
        %2543 = vmatpush.msra.mxu0 %v2480
        %2544 = vmatpush.msra.mxu0 %v2479
        %2545 = vmatpush.msra.mxu0 %v2478
        %2546 = vmatpush.msra.mxu0 %v2477
        %2547 = vmatmul.f32.gmra.mxu0 %v2484
        %v2548 = vpop.f32.mrf.mxu0
        %v2549 = vadd.f32 0.0, %v2548
        %2550 = vmatmul.f32.gmra.mxu0 %v2487
        %v2551 = vpop.f32.mrf.mxu0
        %v2552 = vadd.f32 0.0, %v2551
        %2553 = vmatmul.f32.gmra.mxu0 %v2490
        %v2554 = vpop.f32.mrf.mxu0
        %v2555 = vadd.f32 0.0, %v2554
        %2556 = vmatmul.f32.gmra.mxu0 %v2493
        %v2557 = vpop.f32.mrf.mxu0
        %v2558 = vadd.f32 0.0, %v2557
        %2559 = vmatmul.f32.gmra.mxu0 %v2496
        %v2560 = vpop.f32.mrf.mxu0
        %v2561 = vadd.f32 0.0, %v2560
        %2562 = vmatmul.f32.gmra.mxu0 %v2499
        %v2563 = vpop.f32.mrf.mxu0
        %v2564 = vadd.f32 0.0, %v2563
        %2565 = vmatmul.f32.gmra.mxu0 %v2502
        %v2566 = vpop.f32.mrf.mxu0
        %v2567 = vadd.f32 0.0, %v2566
        %2568 = vmatmul.f32.gmra.mxu0 %v2505
        %v2569 = vpop.f32.mrf.mxu0
        %v2570 = vadd.f32 0.0, %v2569
        %2571 = vmatmul.f32.gmra.mxu0 %v2508
        %v2572 = vpop.f32.mrf.mxu0
        %v2573 = vadd.f32 0.0, %v2572
        %2574 = vmatmul.f32.gmra.mxu0 %v2511
        %v2575 = vpop.f32.mrf.mxu0
        %v2576 = vadd.f32 0.0, %v2575
        %2577 = vmatmul.f32.gmra.mxu0 %v2514
        %v2578 = vpop.f32.mrf.mxu0
        %v2579 = vadd.f32 0.0, %v2578
        %2580 = vmatmul.f32.gmra.mxu0 %v2517
        %v2581 = vpop.f32.mrf.mxu0
        %v2582 = vadd.f32 0.0, %v2581
        %2583 = vmatmul.f32.gmra.mxu0 %v2520
        %v2584 = vpop.f32.mrf.mxu0
        %v2585 = vadd.f32 0.0, %v2584
        %2586 = vmatmul.f32.gmra.mxu0 %v2523
        %v2587 = vpop.f32.mrf.mxu0
        %v2588 = vadd.f32 0.0, %v2587
        %2589 = vmatmul.f32.gmra.mxu0 %v2526
        %v2590 = vpop.f32.mrf.mxu0
        %v2591 = vadd.f32 0.0, %v2590
        %2592 = vmatmul.f32.gmra.mxu0 %v2529
        %v2593 = vpop.f32.mrf.mxu0
        %v2594 = vadd.f32 0.0, %v2593
        %2595 = vdwg.mxu0
        %v2596 = vadd.f32 %v2436, %v2549
        %v2597 = vadd.f32 %v2437, %v2552
        %v2598 = vadd.f32 %v2438, %v2555
        %v2599 = vadd.f32 %v2439, %v2558
        %v2600 = vadd.f32 %v2440, %v2561
        %v2601 = vadd.f32 %v2441, %v2564
        %v2602 = vadd.f32 %v2442, %v2567
        %v2603 = vadd.f32 %v2443, %v2570
        %v2604 = vadd.f32 %v2444, %v2573
        %v2605 = vadd.f32 %v2445, %v2576
        %v2606 = vadd.f32 %v2446, %v2579
        %v2607 = vadd.f32 %v2447, %v2582
        %v2608 = vadd.f32 %v2448, %v2585
        %v2609 = vadd.f32 %v2449, %v2588
        %v2610 = vadd.f32 %v2450, %v2591
        %v2611 = vadd.f32 %v2451, %v2594
        %v2612 = vld [vmem:[%s1097] sm:$0xff]
        %v2613 = vld [vmem:[%s1097 + $0x8] sm:$0xff]
        %v2614 = vld [vmem:[%s1097 + $0x10] sm:$0xff]
        %v2615 = vld [vmem:[%s1097 + $0x18] sm:$0xff]
        %v2616 = vld [vmem:[%s1097 + $0x20] sm:$0xff]
        %v2617 = vld [vmem:[%s1097 + $0x28] sm:$0xff]
        %v2626 = vrot.slane %v2453, 1
        %v2627 = vrot.slane %v2454, 1
        %v2628 = vsel %vm541, %v2626, %v2627
        %v2629 = vrot.slane %v2455, 1
        %v2630 = vsel %vm541, %v2627, %v2629
        %v2631 = vrot.slane %v2456, 1
        %v2632 = vrot.slane %v2457, 1
        %v2633 = vsel %vm541, %v2631, %v2632
        %v2634 = vrot.slane %v2458, 1
        %v2635 = vsel %vm541, %v2632, %v2634
        %v2636 = vrot.slane %v2459, 1
        %v2637 = vrot.slane %v2460, 1
        %v2638 = vsel %vm541, %v2636, %v2637
        %v2639 = vrot.slane %v2461, 1
        %v2640 = vsel %vm541, %v2637, %v2639
        %v2641 = vrot.slane %v2462, 1
        %v2642 = vrot.slane %v2463, 1
        %v2643 = vsel %vm541, %v2641, %v2642
        %v2644 = vrot.slane %v2464, 1
        %v2645 = vsel %vm541, %v2642, %v2644
        %v2646 = vrot.slane %v2465, 1
        %v2647 = vrot.slane %v2466, 1
        %v2648 = vsel %vm541, %v2646, %v2647
        %v2649 = vrot.slane %v2467, 1
        %v2650 = vsel %vm541, %v2647, %v2649
        %v2651 = vrot.slane %v2468, 1
        %v2652 = vrot.slane %v2469, 1
        %v2653 = vsel %vm541, %v2651, %v2652
        %v2654 = vrot.slane %v2470, 1
        %v2655 = vsel %vm541, %v2652, %v2654
        %v2656 = vrot.slane %v2471, 1
        %v2657 = vrot.slane %v2472, 1
        %v2658 = vsel %vm541, %v2656, %v2657
        %v2659 = vrot.slane %v2473, 1
        %v2660 = vsel %vm541, %v2657, %v2659
        %v2661 = vrot.slane %v2474, 1
        %v2662 = vrot.slane %v2475, 1
        %v2663 = vsel %vm541, %v2661, %v2662
        %v2664 = vrot.slane %v2476, 1
        %v2665 = vsel %vm541, %v2662, %v2664
        %v2666 = vsel %vm279, %v2628, 0
        %v2668 = vsel %vm279, %v2630, 0
        %v2670 = vsel %vm279, %v2633, 0
        %v2672 = vsel %vm279, %v2635, 0
        %v2674 = vsel %vm279, %v2638, 0
        %v2676 = vsel %vm279, %v2640, 0
        %v2678 = vsel %vm279, %v2643, 0
        %v2680 = vsel %vm279, %v2645, 0
        %v2682 = vsel %vm279, %v2648, 0
        %v2684 = vsel %vm279, %v2650, 0
        %v2686 = vsel %vm279, %v2653, 0
        %v2688 = vsel %vm279, %v2655, 0
        %v2690 = vsel %vm279, %v2658, 0
        %v2692 = vsel %vm279, %v2660, 0
        %v2694 = vsel %vm279, %v2663, 0
        %v2696 = vsel %vm279, %v2665, 0
        %2698 = vmatpush.msra.mxu0 0.0
        %2699 = vmatpush.msra.mxu0 0.0
        %2700 = vmatpush.msra.mxu0 0.0
        %2701 = vmatpush.msra.mxu0 0.0
        %2702 = vmatpush.msra.mxu0 0.0
        %2703 = vmatpush.msra.mxu0 0.0
        %2704 = vmatpush.msra.mxu0 0.0
        %2705 = vmatpush.msra.mxu0 0.0
        %2706 = vmatpush.msra.mxu0 0.0
        %2707 = vmatpush.msra.mxu0 0.0
        %2708 = vmatpush.msra.mxu0 %v2617
        %2709 = vmatpush.msra.mxu0 %v2616
        %2710 = vmatpush.msra.mxu0 %v2615
        %2711 = vmatpush.msra.mxu0 %v2614
        %2712 = vmatpush.msra.mxu0 %v2613
        %2713 = vmatpush.msra.mxu0 %v2612
        %2714 = vmatmul.f32.gmra.mxu0 %v2666
        %v2715 = vpop.f32.mrf.mxu0
        %v2716 = vadd.f32 0.0, %v2715
        %2717 = vmatmul.f32.gmra.mxu0 %v2668
        %v2718 = vpop.f32.mrf.mxu0
        %v2719 = vadd.f32 0.0, %v2718
        %2720 = vmatmul.f32.gmra.mxu0 %v2670
        %v2721 = vpop.f32.mrf.mxu0
        %v2722 = vadd.f32 0.0, %v2721
        %2723 = vmatmul.f32.gmra.mxu0 %v2672
        %v2724 = vpop.f32.mrf.mxu0
        %v2725 = vadd.f32 0.0, %v2724
        %2726 = vmatmul.f32.gmra.mxu0 %v2674
        %v2727 = vpop.f32.mrf.mxu0
        %v2728 = vadd.f32 0.0, %v2727
        %2729 = vmatmul.f32.gmra.mxu0 %v2676
        %v2730 = vpop.f32.mrf.mxu0
        %v2731 = vadd.f32 0.0, %v2730
        %2732 = vmatmul.f32.gmra.mxu0 %v2678
        %v2733 = vpop.f32.mrf.mxu0
        %v2734 = vadd.f32 0.0, %v2733
        %2735 = vmatmul.f32.gmra.mxu0 %v2680
        %v2736 = vpop.f32.mrf.mxu0
        %v2737 = vadd.f32 0.0, %v2736
        %2738 = vmatmul.f32.gmra.mxu0 %v2682
        %v2739 = vpop.f32.mrf.mxu0
        %v2740 = vadd.f32 0.0, %v2739
        %2741 = vmatmul.f32.gmra.mxu0 %v2684
        %v2742 = vpop.f32.mrf.mxu0
        %v2743 = vadd.f32 0.0, %v2742
        %2744 = vmatmul.f32.gmra.mxu0 %v2686
        %v2745 = vpop.f32.mrf.mxu0
        %v2746 = vadd.f32 0.0, %v2745
        %2747 = vmatmul.f32.gmra.mxu0 %v2688
        %v2748 = vpop.f32.mrf.mxu0
        %v2749 = vadd.f32 0.0, %v2748
        %2750 = vmatmul.f32.gmra.mxu0 %v2690
        %v2751 = vpop.f32.mrf.mxu0
        %v2752 = vadd.f32 0.0, %v2751
        %2753 = vmatmul.f32.gmra.mxu0 %v2692
        %v2754 = vpop.f32.mrf.mxu0
        %v2755 = vadd.f32 0.0, %v2754
        %2756 = vmatmul.f32.gmra.mxu0 %v2694
        %v2757 = vpop.f32.mrf.mxu0
        %v2758 = vadd.f32 0.0, %v2757
        %2759 = vmatmul.f32.gmra.mxu0 %v2696
        %v2760 = vpop.f32.mrf.mxu0
        %v2761 = vadd.f32 0.0, %v2760
        %2762 = vdwg.mxu0
        %v2763 = vadd.f32 %v2596, %v2716
        %v2764 = vadd.f32 %v2597, %v2719
        %v2765 = vadd.f32 %v2598, %v2722
        %v2766 = vadd.f32 %v2599, %v2725
        %v2767 = vadd.f32 %v2600, %v2728
        %v2768 = vadd.f32 %v2601, %v2731
        %v2769 = vadd.f32 %v2602, %v2734
        %v2770 = vadd.f32 %v2603, %v2737
        %v2771 = vadd.f32 %v2604, %v2740
        %v2772 = vadd.f32 %v2605, %v2743
        %v2773 = vadd.f32 %v2606, %v2746
        %v2774 = vadd.f32 %v2607, %v2749
        %v2775 = vadd.f32 %v2608, %v2752
        %v2776 = vadd.f32 %v2609, %v2755
        %v2777 = vadd.f32 %v2610, %v2758
        %v2778 = vadd.f32 %v2611, %v2761
        %v2779 = vld [vmem:[%s1265] sm:$0xff]
        %v2780 = vld [vmem:[%s1265 + $0x8] sm:$0xff]
        %v2781 = vld [vmem:[%s1265 + $0x10] sm:$0xff]
        %v2782 = vld [vmem:[%s1265 + $0x18] sm:$0xff]
        %v2783 = vld [vmem:[%s1265 + $0x20] sm:$0xff]
        %v2784 = vld [vmem:[%s1265 + $0x28] sm:$0xff]
        %v2785 = vrot.slane %v2453, 2
        %v2786 = vrot.slane %v2454, 2
        %v2787 = vsel %vm783, %v2785, %v2786
        %v2788 = vrot.slane %v2455, 2
        %v2789 = vsel %vm783, %v2786, %v2788
        %v2790 = vrot.slane %v2456, 2
        %v2791 = vrot.slane %v2457, 2
        %v2792 = vsel %vm783, %v2790, %v2791
        %v2793 = vrot.slane %v2458, 2
        %v2794 = vsel %vm783, %v2791, %v2793
        %v2795 = vrot.slane %v2459, 2
        %v2796 = vrot.slane %v2460, 2
        %v2797 = vsel %vm783, %v2795, %v2796
        %v2798 = vrot.slane %v2461, 2
        %v2799 = vsel %vm783, %v2796, %v2798
        %v2800 = vrot.slane %v2462, 2
        %v2801 = vrot.slane %v2463, 2
        %v2802 = vsel %vm783, %v2800, %v2801
        %v2803 = vrot.slane %v2464, 2
        %v2804 = vsel %vm783, %v2801, %v2803
        %v2805 = vrot.slane %v2465, 2
        %v2806 = vrot.slane %v2466, 2
        %v2807 = vsel %vm783, %v2805, %v2806
        %v2808 = vrot.slane %v2467, 2
        %v2809 = vsel %vm783, %v2806, %v2808
        %v2810 = vrot.slane %v2468, 2
        %v2811 = vrot.slane %v2469, 2
        %v2812 = vsel %vm783, %v2810, %v2811
        %v2813 = vrot.slane %v2470, 2
        %v2814 = vsel %vm783, %v2811, %v2813
        %v2815 = vrot.slane %v2471, 2
        %v2816 = vrot.slane %v2472, 2
        %v2817 = vsel %vm783, %v2815, %v2816
        %v2818 = vrot.slane %v2473, 2
        %v2819 = vsel %vm783, %v2816, %v2818
        %v2820 = vrot.slane %v2474, 2
        %v2821 = vrot.slane %v2475, 2
        %v2822 = vsel %vm783, %v2820, %v2821
        %v2823 = vrot.slane %v2476, 2
        %v2824 = vsel %vm783, %v2821, %v2823
        %v2825 = vsel %vm279, %v2787, 0
        %v2827 = vsel %vm279, %v2789, 0
        %v2829 = vsel %vm279, %v2792, 0
        %v2831 = vsel %vm279, %v2794, 0
        %v2833 = vsel %vm279, %v2797, 0
        %v2835 = vsel %vm279, %v2799, 0
        %v2837 = vsel %vm279, %v2802, 0
        %v2839 = vsel %vm279, %v2804, 0
        %v2841 = vsel %vm279, %v2807, 0
        %v2843 = vsel %vm279, %v2809, 0
        %v2845 = vsel %vm279, %v2812, 0
        %v2847 = vsel %vm279, %v2814, 0
        %v2849 = vsel %vm279, %v2817, 0
        %v2851 = vsel %vm279, %v2819, 0
        %v2853 = vsel %vm279, %v2822, 0
        %v2855 = vsel %vm279, %v2824, 0
        %2857 = vmatpush.msra.mxu0 0.0
        %2858 = vmatpush.msra.mxu0 0.0
        %2859 = vmatpush.msra.mxu0 0.0
        %2860 = vmatpush.msra.mxu0 0.0
        %2861 = vmatpush.msra.mxu0 0.0
        %2862 = vmatpush.msra.mxu0 0.0
        %2863 = vmatpush.msra.mxu0 0.0
        %2864 = vmatpush.msra.mxu0 0.0
        %2865 = vmatpush.msra.mxu0 0.0
        %2866 = vmatpush.msra.mxu0 0.0
        %2867 = vmatpush.msra.mxu0 %v2784
        %2868 = vmatpush.msra.mxu0 %v2783
        %2869 = vmatpush.msra.mxu0 %v2782
        %2870 = vmatpush.msra.mxu0 %v2781
        %2871 = vmatpush.msra.mxu0 %v2780
        %2872 = vmatpush.msra.mxu0 %v2779
        %2873 = vmatmul.f32.gmra.mxu0 %v2825
        %v2874 = vpop.f32.mrf.mxu0
        %v2875 = vadd.f32 0.0, %v2874
        %2876 = vmatmul.f32.gmra.mxu0 %v2827
        %v2877 = vpop.f32.mrf.mxu0
        %v2878 = vadd.f32 0.0, %v2877
        %2879 = vmatmul.f32.gmra.mxu0 %v2829
        %v2880 = vpop.f32.mrf.mxu0
        %v2881 = vadd.f32 0.0, %v2880
        %2882 = vmatmul.f32.gmra.mxu0 %v2831
        %v2883 = vpop.f32.mrf.mxu0
        %v2884 = vadd.f32 0.0, %v2883
        %2885 = vmatmul.f32.gmra.mxu0 %v2833
        %v2886 = vpop.f32.mrf.mxu0
        %v2887 = vadd.f32 0.0, %v2886
        %2888 = vmatmul.f32.gmra.mxu0 %v2835
        %v2889 = vpop.f32.mrf.mxu0
        %v2890 = vadd.f32 0.0, %v2889
        %2891 = vmatmul.f32.gmra.mxu0 %v2837
        %v2892 = vpop.f32.mrf.mxu0
        %v2893 = vadd.f32 0.0, %v2892
        %2894 = vmatmul.f32.gmra.mxu0 %v2839
        %v2895 = vpop.f32.mrf.mxu0
        %v2896 = vadd.f32 0.0, %v2895
        %2897 = vmatmul.f32.gmra.mxu0 %v2841
        %v2898 = vpop.f32.mrf.mxu0
        %v2899 = vadd.f32 0.0, %v2898
        %2900 = vmatmul.f32.gmra.mxu0 %v2843
        %v2901 = vpop.f32.mrf.mxu0
        %v2902 = vadd.f32 0.0, %v2901
        %2903 = vmatmul.f32.gmra.mxu0 %v2845
        %v2904 = vpop.f32.mrf.mxu0
        %v2905 = vadd.f32 0.0, %v2904
        %2906 = vmatmul.f32.gmra.mxu0 %v2847
        %v2907 = vpop.f32.mrf.mxu0
        %v2908 = vadd.f32 0.0, %v2907
        %2909 = vmatmul.f32.gmra.mxu0 %v2849
        %v2910 = vpop.f32.mrf.mxu0
        %v2911 = vadd.f32 0.0, %v2910
        %2912 = vmatmul.f32.gmra.mxu0 %v2851
        %v2913 = vpop.f32.mrf.mxu0
        %v2914 = vadd.f32 0.0, %v2913
        %2915 = vmatmul.f32.gmra.mxu0 %v2853
        %v2916 = vpop.f32.mrf.mxu0
        %v2917 = vadd.f32 0.0, %v2916
        %2918 = vmatmul.f32.gmra.mxu0 %v2855
        %v2919 = vpop.f32.mrf.mxu0
        %v2920 = vadd.f32 0.0, %v2919
        %2921 = vdwg.mxu0
        %v2922 = vadd.f32 %v2763, %v2875
        %v2923 = vadd.f32 %v2764, %v2878
        %v2924 = vadd.f32 %v2765, %v2881
        %v2925 = vadd.f32 %v2766, %v2884
        %v2926 = vadd.f32 %v2767, %v2887
        %v2927 = vadd.f32 %v2768, %v2890
        %v2928 = vadd.f32 %v2769, %v2893
        %v2929 = vadd.f32 %v2770, %v2896
        %v2930 = vadd.f32 %v2771, %v2899
        %v2931 = vadd.f32 %v2772, %v2902
        %v2932 = vadd.f32 %v2773, %v2905
        %v2933 = vadd.f32 %v2774, %v2908
        %v2934 = vadd.f32 %v2775, %v2911
        %v2935 = vadd.f32 %v2776, %v2914
        %v2936 = vadd.f32 %v2777, %v2917
        %v2937 = vadd.f32 %v2778, %v2920
        %s2938 = scalar_lea.vmem [#allocation2], 240
        %v2939 = vld [vmem:[%s2938] sm:$0xff]
        %v2940 = vld [vmem:[%s2938 + $0x8] sm:$0xff]
        %v2941 = vld [vmem:[%s2938 + $0x10] sm:$0x3]
        %v2942 = vld [vmem:[%s2938 + $0x18] sm:$0xff]
        %v2943 = vld [vmem:[%s2938 + $0x20] sm:$0xff]
        %v2944 = vld [vmem:[%s2938 + $0x28] sm:$0x3]
        %v2945 = vld [vmem:[%s2938 + $0x30] sm:$0xff]
        %v2946 = vld [vmem:[%s2938 + $0x38] sm:$0xff]
        %v2947 = vld [vmem:[%s2938 + $0x40] sm:$0x3]
        %v2948 = vld [vmem:[%s2938 + $0x48] sm:$0xff]
        %v2949 = vld [vmem:[%s2938 + $0x50] sm:$0xff]
        %v2950 = vld [vmem:[%s2938 + $0x58] sm:$0x3]
        %v2951 = vld [vmem:[%s2938 + $0x60] sm:$0xff]
        %v2952 = vld [vmem:[%s2938 + $0x68] sm:$0xff]
        %v2953 = vld [vmem:[%s2938 + $0x70] sm:$0x3]
        %v2954 = vld [vmem:[%s2938 + $0x78] sm:$0xff]
        %v2955 = vld [vmem:[%s2938 + $0x80] sm:$0xff]
        %v2956 = vld [vmem:[%s2938 + $0x88] sm:$0x3]
        %v2957 = vld [vmem:[%s2938 + $0x90] sm:$0xff]
        %v2958 = vld [vmem:[%s2938 + $0x98] sm:$0xff]
        %v2959 = vld [vmem:[%s2938 + $0xa0] sm:$0x3]
        %v2960 = vld [vmem:[%s2938 + $0xa8] sm:$0xff]
        %v2961 = vld [vmem:[%s2938 + $0xb0] sm:$0xff]
        %v2962 = vld [vmem:[%s2938 + $0xb8] sm:$0x3]
        %v2963 = vld [vmem:[%s1450] sm:$0xff]
        %v2964 = vld [vmem:[%s1450 + $0x8] sm:$0xff]
        %v2965 = vld [vmem:[%s1450 + $0x10] sm:$0xff]
        %v2966 = vld [vmem:[%s1450 + $0x18] sm:$0xff]
        %v2967 = vld [vmem:[%s1450 + $0x20] sm:$0xff]
        %v2968 = vld [vmem:[%s1450 + $0x28] sm:$0xff]
        %v2970 = vsel %vm279, %v2939, 0
        %v2973 = vsel %vm279, %v2940, 0
        %v2976 = vsel %vm279, %v2942, 0
        %v2979 = vsel %vm279, %v2943, 0
        %v2982 = vsel %vm279, %v2945, 0
        %v2985 = vsel %vm279, %v2946, 0
        %v2988 = vsel %vm279, %v2948, 0
        %v2991 = vsel %vm279, %v2949, 0
        %v2994 = vsel %vm279, %v2951, 0
        %v2997 = vsel %vm279, %v2952, 0
        %v3000 = vsel %vm279, %v2954, 0
        %v3003 = vsel %vm279, %v2955, 0
        %v3006 = vsel %vm279, %v2957, 0
        %v3009 = vsel %vm279, %v2958, 0
        %v3012 = vsel %vm279, %v2960, 0
        %v3015 = vsel %vm279, %v2961, 0
        %3017 = vmatpush.msra.mxu0 0.0
        %3018 = vmatpush.msra.mxu0 0.0
        %3019 = vmatpush.msra.mxu0 0.0
        %3020 = vmatpush.msra.mxu0 0.0
        %3021 = vmatpush.msra.mxu0 0.0
        %3022 = vmatpush.msra.mxu0 0.0
        %3023 = vmatpush.msra.mxu0 0.0
        %3024 = vmatpush.msra.mxu0 0.0
        %3025 = vmatpush.msra.mxu0 0.0
        %3026 = vmatpush.msra.mxu0 0.0
        %3027 = vmatpush.msra.mxu0 %v2968
        %3028 = vmatpush.msra.mxu0 %v2967
        %3029 = vmatpush.msra.mxu0 %v2966
        %3030 = vmatpush.msra.mxu0 %v2965
        %3031 = vmatpush.msra.mxu0 %v2964
        %3032 = vmatpush.msra.mxu0 %v2963
        %3033 = vmatmul.f32.gmra.mxu0 %v2970
        %v3034 = vpop.f32.mrf.mxu0
        %v3035 = vadd.f32 0.0, %v3034
        %3036 = vmatmul.f32.gmra.mxu0 %v2973
        %v3037 = vpop.f32.mrf.mxu0
        %v3038 = vadd.f32 0.0, %v3037
        %3039 = vmatmul.f32.gmra.mxu0 %v2976
        %v3040 = vpop.f32.mrf.mxu0
        %v3041 = vadd.f32 0.0, %v3040
        %3042 = vmatmul.f32.gmra.mxu0 %v2979
        %v3043 = vpop.f32.mrf.mxu0
        %v3044 = vadd.f32 0.0, %v3043
        %3045 = vmatmul.f32.gmra.mxu0 %v2982
        %v3046 = vpop.f32.mrf.mxu0
        %v3047 = vadd.f32 0.0, %v3046
        %3048 = vmatmul.f32.gmra.mxu0 %v2985
        %v3049 = vpop.f32.mrf.mxu0
        %v3050 = vadd.f32 0.0, %v3049
        %3051 = vmatmul.f32.gmra.mxu0 %v2988
        %v3052 = vpop.f32.mrf.mxu0
        %v3053 = vadd.f32 0.0, %v3052
        %3054 = vmatmul.f32.gmra.mxu0 %v2991
        %v3055 = vpop.f32.mrf.mxu0
        %v3056 = vadd.f32 0.0, %v3055
        %3057 = vmatmul.f32.gmra.mxu0 %v2994
        %v3058 = vpop.f32.mrf.mxu0
        %v3059 = vadd.f32 0.0, %v3058
        %3060 = vmatmul.f32.gmra.mxu0 %v2997
        %v3061 = vpop.f32.mrf.mxu0
        %v3062 = vadd.f32 0.0, %v3061
        %3063 = vmatmul.f32.gmra.mxu0 %v3000
        %v3064 = vpop.f32.mrf.mxu0
        %v3065 = vadd.f32 0.0, %v3064
        %3066 = vmatmul.f32.gmra.mxu0 %v3003
        %v3067 = vpop.f32.mrf.mxu0
        %v3068 = vadd.f32 0.0, %v3067
        %3069 = vmatmul.f32.gmra.mxu0 %v3006
        %v3070 = vpop.f32.mrf.mxu0
        %v3071 = vadd.f32 0.0, %v3070
        %3072 = vmatmul.f32.gmra.mxu0 %v3009
        %v3073 = vpop.f32.mrf.mxu0
        %v3074 = vadd.f32 0.0, %v3073
        %3075 = vmatmul.f32.gmra.mxu0 %v3012
        %v3076 = vpop.f32.mrf.mxu0
        %v3077 = vadd.f32 0.0, %v3076
        %3078 = vmatmul.f32.gmra.mxu0 %v3015
        %v3079 = vpop.f32.mrf.mxu0
        %v3080 = vadd.f32 0.0, %v3079
        %3081 = vdwg.mxu0
        %v3082 = vadd.f32 %v2922, %v3035
        %v3083 = vadd.f32 %v2923, %v3038
        %v3084 = vadd.f32 %v2924, %v3041
        %v3085 = vadd.f32 %v2925, %v3044
        %v3086 = vadd.f32 %v2926, %v3047
        %v3087 = vadd.f32 %v2927, %v3050
        %v3088 = vadd.f32 %v2928, %v3053
        %v3089 = vadd.f32 %v2929, %v3056
        %v3090 = vadd.f32 %v2930, %v3059
        %v3091 = vadd.f32 %v2931, %v3062
        %v3092 = vadd.f32 %v2932, %v3065
        %v3093 = vadd.f32 %v2933, %v3068
        %v3094 = vadd.f32 %v2934, %v3071
        %v3095 = vadd.f32 %v2935, %v3074
        %v3096 = vadd.f32 %v2936, %v3077
        %v3097 = vadd.f32 %v2937, %v3080
        %v3098 = vld [vmem:[%s1586] sm:$0xff]
        %v3099 = vld [vmem:[%s1586 + $0x8] sm:$0xff]
        %v3100 = vld [vmem:[%s1586 + $0x10] sm:$0xff]
        %v3101 = vld [vmem:[%s1586 + $0x18] sm:$0xff]
        %v3102 = vld [vmem:[%s1586 + $0x20] sm:$0xff]
        %v3103 = vld [vmem:[%s1586 + $0x28] sm:$0xff]
        %v3112 = vrot.slane %v2939, 1
        %v3113 = vrot.slane %v2940, 1
        %v3114 = vsel %vm541, %v3112, %v3113
        %v3115 = vrot.slane %v2941, 1
        %v3116 = vsel %vm541, %v3113, %v3115
        %v3117 = vrot.slane %v2942, 1
        %v3118 = vrot.slane %v2943, 1
        %v3119 = vsel %vm541, %v3117, %v3118
        %v3120 = vrot.slane %v2944, 1
        %v3121 = vsel %vm541, %v3118, %v3120
        %v3122 = vrot.slane %v2945, 1
        %v3123 = vrot.slane %v2946, 1
        %v3124 = vsel %vm541, %v3122, %v3123
        %v3125 = vrot.slane %v2947, 1
        %v3126 = vsel %vm541, %v3123, %v3125
        %v3127 = vrot.slane %v2948, 1
        %v3128 = vrot.slane %v2949, 1
        %v3129 = vsel %vm541, %v3127, %v3128
        %v3130 = vrot.slane %v2950, 1
        %v3131 = vsel %vm541, %v3128, %v3130
        %v3132 = vrot.slane %v2951, 1
        %v3133 = vrot.slane %v2952, 1
        %v3134 = vsel %vm541, %v3132, %v3133
        %v3135 = vrot.slane %v2953, 1
        %v3136 = vsel %vm541, %v3133, %v3135
        %v3137 = vrot.slane %v2954, 1
        %v3138 = vrot.slane %v2955, 1
        %v3139 = vsel %vm541, %v3137, %v3138
        %v3140 = vrot.slane %v2956, 1
        %v3141 = vsel %vm541, %v3138, %v3140
        %v3142 = vrot.slane %v2957, 1
        %v3143 = vrot.slane %v2958, 1
        %v3144 = vsel %vm541, %v3142, %v3143
        %v3145 = vrot.slane %v2959, 1
        %v3146 = vsel %vm541, %v3143, %v3145
        %v3147 = vrot.slane %v2960, 1
        %v3148 = vrot.slane %v2961, 1
        %v3149 = vsel %vm541, %v3147, %v3148
        %v3150 = vrot.slane %v2962, 1
        %v3151 = vsel %vm541, %v3148, %v3150
        %v3152 = vsel %vm279, %v3114, 0
        %v3154 = vsel %vm279, %v3116, 0
        %v3156 = vsel %vm279, %v3119, 0
        %v3158 = vsel %vm279, %v3121, 0
        %v3160 = vsel %vm279, %v3124, 0
        %v3162 = vsel %vm279, %v3126, 0
        %v3164 = vsel %vm279, %v3129, 0
        %v3166 = vsel %vm279, %v3131, 0
        %v3168 = vsel %vm279, %v3134, 0
        %v3170 = vsel %vm279, %v3136, 0
        %v3172 = vsel %vm279, %v3139, 0
        %v3174 = vsel %vm279, %v3141, 0
        %v3176 = vsel %vm279, %v3144, 0
        %v3178 = vsel %vm279, %v3146, 0
        %v3180 = vsel %vm279, %v3149, 0
        %v3182 = vsel %vm279, %v3151, 0
        %3184 = vmatpush.msra.mxu0 0.0
        %3185 = vmatpush.msra.mxu0 0.0
        %3186 = vmatpush.msra.mxu0 0.0
        %3187 = vmatpush.msra.mxu0 0.0
        %3188 = vmatpush.msra.mxu0 0.0
        %3189 = vmatpush.msra.mxu0 0.0
        %3190 = vmatpush.msra.mxu0 0.0
        %3191 = vmatpush.msra.mxu0 0.0
        %3192 = vmatpush.msra.mxu0 0.0
        %3193 = vmatpush.msra.mxu0 0.0
        %3194 = vmatpush.msra.mxu0 %v3103
        %3195 = vmatpush.msra.mxu0 %v3102
        %3196 = vmatpush.msra.mxu0 %v3101
        %3197 = vmatpush.msra.mxu0 %v3100
        %3198 = vmatpush.msra.mxu0 %v3099
        %3199 = vmatpush.msra.mxu0 %v3098
        %3200 = vmatmul.f32.gmra.mxu0 %v3152
        %v3201 = vpop.f32.mrf.mxu0
        %v3202 = vadd.f32 0.0, %v3201
        %3203 = vmatmul.f32.gmra.mxu0 %v3154
        %v3204 = vpop.f32.mrf.mxu0
        %v3205 = vadd.f32 0.0, %v3204
        %3206 = vmatmul.f32.gmra.mxu0 %v3156
        %v3207 = vpop.f32.mrf.mxu0
        %v3208 = vadd.f32 0.0, %v3207
        %3209 = vmatmul.f32.gmra.mxu0 %v3158
        %v3210 = vpop.f32.mrf.mxu0
        %v3211 = vadd.f32 0.0, %v3210
        %3212 = vmatmul.f32.gmra.mxu0 %v3160
        %v3213 = vpop.f32.mrf.mxu0
        %v3214 = vadd.f32 0.0, %v3213
        %3215 = vmatmul.f32.gmra.mxu0 %v3162
        %v3216 = vpop.f32.mrf.mxu0
        %v3217 = vadd.f32 0.0, %v3216
        %3218 = vmatmul.f32.gmra.mxu0 %v3164
        %v3219 = vpop.f32.mrf.mxu0
        %v3220 = vadd.f32 0.0, %v3219
        %3221 = vmatmul.f32.gmra.mxu0 %v3166
        %v3222 = vpop.f32.mrf.mxu0
        %v3223 = vadd.f32 0.0, %v3222
        %3224 = vmatmul.f32.gmra.mxu0 %v3168
        %v3225 = vpop.f32.mrf.mxu0
        %v3226 = vadd.f32 0.0, %v3225
        %3227 = vmatmul.f32.gmra.mxu0 %v3170
        %v3228 = vpop.f32.mrf.mxu0
        %v3229 = vadd.f32 0.0, %v3228
        %3230 = vmatmul.f32.gmra.mxu0 %v3172
        %v3231 = vpop.f32.mrf.mxu0
        %v3232 = vadd.f32 0.0, %v3231
        %3233 = vmatmul.f32.gmra.mxu0 %v3174
        %v3234 = vpop.f32.mrf.mxu0
        %v3235 = vadd.f32 0.0, %v3234
        %3236 = vmatmul.f32.gmra.mxu0 %v3176
        %v3237 = vpop.f32.mrf.mxu0
        %v3238 = vadd.f32 0.0, %v3237
        %3239 = vmatmul.f32.gmra.mxu0 %v3178
        %v3240 = vpop.f32.mrf.mxu0
        %v3241 = vadd.f32 0.0, %v3240
        %3242 = vmatmul.f32.gmra.mxu0 %v3180
        %v3243 = vpop.f32.mrf.mxu0
        %v3244 = vadd.f32 0.0, %v3243
        %3245 = vmatmul.f32.gmra.mxu0 %v3182
        %v3246 = vpop.f32.mrf.mxu0
        %v3247 = vadd.f32 0.0, %v3246
        %3248 = vdwg.mxu0
        %v3249 = vadd.f32 %v3082, %v3202
        %v3250 = vadd.f32 %v3083, %v3205
        %v3251 = vadd.f32 %v3084, %v3208
        %v3252 = vadd.f32 %v3085, %v3211
        %v3253 = vadd.f32 %v3086, %v3214
        %v3254 = vadd.f32 %v3087, %v3217
        %v3255 = vadd.f32 %v3088, %v3220
        %v3256 = vadd.f32 %v3089, %v3223
        %v3257 = vadd.f32 %v3090, %v3226
        %v3258 = vadd.f32 %v3091, %v3229
        %v3259 = vadd.f32 %v3092, %v3232
        %v3260 = vadd.f32 %v3093, %v3235
        %v3261 = vadd.f32 %v3094, %v3238
        %v3262 = vadd.f32 %v3095, %v3241
        %v3263 = vadd.f32 %v3096, %v3244
        %v3264 = vadd.f32 %v3097, %v3247
        %v3265 = vld [vmem:[%s1754] sm:$0xff]
        %v3266 = vld [vmem:[%s1754 + $0x8] sm:$0xff]
        %v3267 = vld [vmem:[%s1754 + $0x10] sm:$0xff]
        %v3268 = vld [vmem:[%s1754 + $0x18] sm:$0xff]
        %v3269 = vld [vmem:[%s1754 + $0x20] sm:$0xff]
        %v3270 = vld [vmem:[%s1754 + $0x28] sm:$0xff]
        %v3271 = vrot.slane %v2939, 2
        %v3272 = vrot.slane %v2940, 2
        %v3273 = vsel %vm783, %v3271, %v3272
        %v3274 = vrot.slane %v2941, 2
        %v3275 = vsel %vm783, %v3272, %v3274
        %v3276 = vrot.slane %v2942, 2
        %v3277 = vrot.slane %v2943, 2
        %v3278 = vsel %vm783, %v3276, %v3277
        %v3279 = vrot.slane %v2944, 2
        %v3280 = vsel %vm783, %v3277, %v3279
        %v3281 = vrot.slane %v2945, 2
        %v3282 = vrot.slane %v2946, 2
        %v3283 = vsel %vm783, %v3281, %v3282
        %v3284 = vrot.slane %v2947, 2
        %v3285 = vsel %vm783, %v3282, %v3284
        %v3286 = vrot.slane %v2948, 2
        %v3287 = vrot.slane %v2949, 2
        %v3288 = vsel %vm783, %v3286, %v3287
        %v3289 = vrot.slane %v2950, 2
        %v3290 = vsel %vm783, %v3287, %v3289
        %v3291 = vrot.slane %v2951, 2
        %v3292 = vrot.slane %v2952, 2
        %v3293 = vsel %vm783, %v3291, %v3292
        %v3294 = vrot.slane %v2953, 2
        %v3295 = vsel %vm783, %v3292, %v3294
        %v3296 = vrot.slane %v2954, 2
        %v3297 = vrot.slane %v2955, 2
        %v3298 = vsel %vm783, %v3296, %v3297
        %v3299 = vrot.slane %v2956, 2
        %v3300 = vsel %vm783, %v3297, %v3299
        %v3301 = vrot.slane %v2957, 2
        %v3302 = vrot.slane %v2958, 2
        %v3303 = vsel %vm783, %v3301, %v3302
        %v3304 = vrot.slane %v2959, 2
        %v3305 = vsel %vm783, %v3302, %v3304
        %v3306 = vrot.slane %v2960, 2
        %v3307 = vrot.slane %v2961, 2
        %v3308 = vsel %vm783, %v3306, %v3307
        %v3309 = vrot.slane %v2962, 2
        %v3310 = vsel %vm783, %v3307, %v3309
        %v3311 = vsel %vm279, %v3273, 0
        %v3313 = vsel %vm279, %v3275, 0
        %v3315 = vsel %vm279, %v3278, 0
        %v3317 = vsel %vm279, %v3280, 0
        %v3319 = vsel %vm279, %v3283, 0
        %v3321 = vsel %vm279, %v3285, 0
        %v3323 = vsel %vm279, %v3288, 0
        %v3325 = vsel %vm279, %v3290, 0
        %v3327 = vsel %vm279, %v3293, 0
        %v3329 = vsel %vm279, %v3295, 0
        %v3331 = vsel %vm279, %v3298, 0
        %v3333 = vsel %vm279, %v3300, 0
        %v3335 = vsel %vm279, %v3303, 0
        %v3337 = vsel %vm279, %v3305, 0
        %v3339 = vsel %vm279, %v3308, 0
        %v3341 = vsel %vm279, %v3310, 0
        %3343 = vmatpush.msra.mxu0 0.0
        %3344 = vmatpush.msra.mxu0 0.0
        %3345 = vmatpush.msra.mxu0 0.0
        %3346 = vmatpush.msra.mxu0 0.0
        %3347 = vmatpush.msra.mxu0 0.0
        %3348 = vmatpush.msra.mxu0 0.0
        %3349 = vmatpush.msra.mxu0 0.0
        %3350 = vmatpush.msra.mxu0 0.0
        %3351 = vmatpush.msra.mxu0 0.0
        %3352 = vmatpush.msra.mxu0 0.0
        %3353 = vmatpush.msra.mxu0 %v3270
        %3354 = vmatpush.msra.mxu0 %v3269
        %3355 = vmatpush.msra.mxu0 %v3268
        %3356 = vmatpush.msra.mxu0 %v3267
        %3357 = vmatpush.msra.mxu0 %v3266
        %3358 = vmatpush.msra.mxu0 %v3265
        %3359 = vmatmul.f32.gmra.mxu0 %v3311
        %v3360 = vpop.f32.mrf.mxu0
        %v3361 = vadd.f32 0.0, %v3360
        %3362 = vmatmul.f32.gmra.mxu0 %v3313
        %v3363 = vpop.f32.mrf.mxu0
        %v3364 = vadd.f32 0.0, %v3363
        %3365 = vmatmul.f32.gmra.mxu0 %v3315
        %v3366 = vpop.f32.mrf.mxu0
        %v3367 = vadd.f32 0.0, %v3366
        %3368 = vmatmul.f32.gmra.mxu0 %v3317
        %v3369 = vpop.f32.mrf.mxu0
        %v3370 = vadd.f32 0.0, %v3369
        %3371 = vmatmul.f32.gmra.mxu0 %v3319
        %v3372 = vpop.f32.mrf.mxu0
        %v3373 = vadd.f32 0.0, %v3372
        %3374 = vmatmul.f32.gmra.mxu0 %v3321
        %v3375 = vpop.f32.mrf.mxu0
        %v3376 = vadd.f32 0.0, %v3375
        %3377 = vmatmul.f32.gmra.mxu0 %v3323
        %v3378 = vpop.f32.mrf.mxu0
        %v3379 = vadd.f32 0.0, %v3378
        %3380 = vmatmul.f32.gmra.mxu0 %v3325
        %v3381 = vpop.f32.mrf.mxu0
        %v3382 = vadd.f32 0.0, %v3381
        %3383 = vmatmul.f32.gmra.mxu0 %v3327
        %v3384 = vpop.f32.mrf.mxu0
        %v3385 = vadd.f32 0.0, %v3384
        %3386 = vmatmul.f32.gmra.mxu0 %v3329
        %v3387 = vpop.f32.mrf.mxu0
        %v3388 = vadd.f32 0.0, %v3387
        %3389 = vmatmul.f32.gmra.mxu0 %v3331
        %v3390 = vpop.f32.mrf.mxu0
        %v3391 = vadd.f32 0.0, %v3390
        %3392 = vmatmul.f32.gmra.mxu0 %v3333
        %v3393 = vpop.f32.mrf.mxu0
        %v3394 = vadd.f32 0.0, %v3393
        %3395 = vmatmul.f32.gmra.mxu0 %v3335
        %v3396 = vpop.f32.mrf.mxu0
        %v3397 = vadd.f32 0.0, %v3396
        %3398 = vmatmul.f32.gmra.mxu0 %v3337
        %v3399 = vpop.f32.mrf.mxu0
        %v3400 = vadd.f32 0.0, %v3399
        %3401 = vmatmul.f32.gmra.mxu0 %v3339
        %v3402 = vpop.f32.mrf.mxu0
        %v3403 = vadd.f32 0.0, %v3402
        %3404 = vmatmul.f32.gmra.mxu0 %v3341
        %v3405 = vpop.f32.mrf.mxu0
        %v3406 = vadd.f32 0.0, %v3405
        %3407 = vdwg.mxu0
        %v3408 = vadd.f32 %v3249, %v3361
        %v3409 = vadd.f32 %v3250, %v3364
        %v3410 = vadd.f32 %v3251, %v3367
        %v3411 = vadd.f32 %v3252, %v3370
        %v3412 = vadd.f32 %v3253, %v3373
        %v3413 = vadd.f32 %v3254, %v3376
        %v3414 = vadd.f32 %v3255, %v3379
        %v3415 = vadd.f32 %v3256, %v3382
        %v3416 = vadd.f32 %v3257, %v3385
        %v3417 = vadd.f32 %v3258, %v3388
        %v3418 = vadd.f32 %v3259, %v3391
        %v3419 = vadd.f32 %v3260, %v3394
        %v3420 = vadd.f32 %v3261, %v3397
        %v3421 = vadd.f32 %v3262, %v3400
        %v3422 = vadd.f32 %v3263, %v3403
        %v3423 = vadd.f32 %v3264, %v3406
        %v3424 = vadd.f32 %v3408, %v1915
        %v3425 = vadd.f32 %v3409, %v1915
        %v3426 = vadd.f32 %v3410, %v1915
        %v3427 = vadd.f32 %v3411, %v1915
        %v3428 = vadd.f32 %v3412, %v1915
        %v3429 = vadd.f32 %v3413, %v1915
        %v3430 = vadd.f32 %v3414, %v1915
        %v3431 = vadd.f32 %v3415, %v1915
        %v3432 = vadd.f32 %v3416, %v1915
        %v3433 = vadd.f32 %v3417, %v1915
        %v3434 = vadd.f32 %v3418, %v1915
        %v3435 = vadd.f32 %v3419, %v1915
        %v3436 = vadd.f32 %v3420, %v1915
        %v3437 = vadd.f32 %v3421, %v1915
        %v3438 = vadd.f32 %v3422, %v1915
        %v3439 = vadd.f32 %v3423, %v1915
        %vm3440 = vcmp.gt.f32.partialorder %v3424, 0.0
        %vm3441 = vcmp.gt.f32.partialorder %v3425, 0.0
        %vm3442 = vcmp.gt.f32.partialorder %v3426, 0.0
        %vm3443 = vcmp.gt.f32.partialorder %v3427, 0.0
        %vm3444 = vcmp.gt.f32.partialorder %v3428, 0.0
        %vm3445 = vcmp.gt.f32.partialorder %v3429, 0.0
        %vm3446 = vcmp.gt.f32.partialorder %v3430, 0.0
        %vm3447 = vcmp.gt.f32.partialorder %v3431, 0.0
        %vm3448 = vcmp.gt.f32.partialorder %v3432, 0.0
        %vm3449 = vcmp.gt.f32.partialorder %v3433, 0.0
        %vm3450 = vcmp.gt.f32.partialorder %v3434, 0.0
        %vm3451 = vcmp.gt.f32.partialorder %v3435, 0.0
        %vm3452 = vcmp.gt.f32.partialorder %v3436, 0.0
        %vm3453 = vcmp.gt.f32.partialorder %v3437, 0.0
        %vm3454 = vcmp.gt.f32.partialorder %v3438, 0.0
        %vm3455 = vcmp.gt.f32.partialorder %v3439, 0.0
        %v3456 = vmul.f32 %v3424, 0.01
        %v3457 = vmul.f32 %v3425, 0.01
        %v3458 = vmul.f32 %v3426, 0.01
        %v3459 = vmul.f32 %v3427, 0.01
        %v3460 = vmul.f32 %v3428, 0.01
        %v3461 = vmul.f32 %v3429, 0.01
        %v3462 = vmul.f32 %v3430, 0.01
        %v3463 = vmul.f32 %v3431, 0.01
        %v3464 = vmul.f32 %v3432, 0.01
        %v3465 = vmul.f32 %v3433, 0.01
        %v3466 = vmul.f32 %v3434, 0.01
        %v3467 = vmul.f32 %v3435, 0.01
        %v3468 = vmul.f32 %v3436, 0.01
        %v3469 = vmul.f32 %v3437, 0.01
        %v3470 = vmul.f32 %v3438, 0.01
        %v3471 = vmul.f32 %v3439, 0.01
        %v3472 = vsel %vm3440, %v3424, %v3456
        %v3473 = vsel %vm3441, %v3425, %v3457
        %v3474 = vsel %vm3442, %v3426, %v3458
        %v3475 = vsel %vm3443, %v3427, %v3459
        %v3476 = vsel %vm3444, %v3428, %v3460
        %v3477 = vsel %vm3445, %v3429, %v3461
        %v3478 = vsel %vm3446, %v3430, %v3462
        %v3479 = vsel %vm3447, %v3431, %v3463
        %v3480 = vsel %vm3448, %v3432, %v3464
        %v3481 = vsel %vm3449, %v3433, %v3465
        %v3482 = vsel %vm3450, %v3434, %v3466
        %v3483 = vsel %vm3451, %v3435, %v3467
        %v3484 = vsel %vm3452, %v3436, %v3468
        %v3485 = vsel %vm3453, %v3437, %v3469
        %v3486 = vsel %vm3454, %v3438, %v3470
        %v3487 = vsel %vm3455, %v3439, %v3471
        %s3488 = scalar_lea.vmem [#allocation3], 216
        %3489 = vst [vmem:[%s3488 + $0x1] sm:$0xff] %v3472
        %3490 = vst [vmem:[%s3488 + $0x9] sm:$0xff] %v3473
        %3491 = vst [vmem:[%s3488 + $0x19] sm:$0xff] %v3474
        %3492 = vst [vmem:[%s3488 + $0x21] sm:$0xff] %v3475
        %3493 = vst [vmem:[%s3488 + $0x31] sm:$0xff] %v3476
        %3494 = vst [vmem:[%s3488 + $0x39] sm:$0xff] %v3477
        %3495 = vst [vmem:[%s3488 + $0x49] sm:$0xff] %v3478
        %3496 = vst [vmem:[%s3488 + $0x51] sm:$0xff] %v3479
        %3497 = vst [vmem:[%s3488 + $0x61] sm:$0xff] %v3480
        %3498 = vst [vmem:[%s3488 + $0x69] sm:$0xff] %v3481
        %3499 = vst [vmem:[%s3488 + $0x79] sm:$0xff] %v3482
        %3500 = vst [vmem:[%s3488 + $0x81] sm:$0xff] %v3483
        %3501 = vst [vmem:[%s3488 + $0x91] sm:$0xff] %v3484
        %3502 = vst [vmem:[%s3488 + $0x99] sm:$0xff] %v3485
        %3503 = vst [vmem:[%s3488 + $0xa9] sm:$0xff] %v3486
        %3504 = vst [vmem:[%s3488 + $0xb1] sm:$0xff] %v3487
        %v3505 = vld [vmem:[%s4] sm:$0x1]
        %v3506 = vld [vmem:[#allocation3] sm:$0xff]
        %v3507 = vld [vmem:[#allocation3 + $0x8] sm:$0xff]
        %v3508 = vld [vmem:[#allocation3 + $0x10] sm:$0x3]
        %v3509 = vld [vmem:[#allocation3 + $0x18] sm:$0xff]
        %v3510 = vld [vmem:[#allocation3 + $0x20] sm:$0xff]
        %v3511 = vld [vmem:[#allocation3 + $0x28] sm:$0x3]
        %v3512 = vld [vmem:[#allocation3 + $0x30] sm:$0xff]
        %v3513 = vld [vmem:[#allocation3 + $0x38] sm:$0xff]
        %v3514 = vld [vmem:[#allocation3 + $0x40] sm:$0x3]
        %v3515 = vld [vmem:[#allocation3 + $0x48] sm:$0xff]
        %v3516 = vld [vmem:[#allocation3 + $0x50] sm:$0xff]
        %v3517 = vld [vmem:[#allocation3 + $0x58] sm:$0x3]
        %v3518 = vld [vmem:[#allocation3 + $0x60] sm:$0xff]
        %v3519 = vld [vmem:[#allocation3 + $0x68] sm:$0xff]
        %v3520 = vld [vmem:[#allocation3 + $0x70] sm:$0x3]
        %v3521 = vld [vmem:[#allocation3 + $0x78] sm:$0xff]
        %v3522 = vld [vmem:[#allocation3 + $0x80] sm:$0xff]
        %v3523 = vld [vmem:[#allocation3 + $0x88] sm:$0x3]
        %v3524 = vld [vmem:[#allocation3 + $0x90] sm:$0xff]
        %v3525 = vld [vmem:[#allocation3 + $0x98] sm:$0xff]
        %v3526 = vld [vmem:[#allocation3 + $0xa0] sm:$0x3]
        %v3527 = vld [vmem:[#allocation3 + $0xa8] sm:$0xff]
        %v3528 = vld [vmem:[#allocation3 + $0xb0] sm:$0xff]
        %v3529 = vld [vmem:[#allocation3 + $0xb8] sm:$0x3]
        %v3554 = vrot.slane %v3506, 1
        %v3555 = vrot.slane %v3507, 1
        %v3556 = vsel %vm541, %v3554, %v3555
        %v3557 = vrot.slane %v3508, 1
        %v3558 = vsel %vm541, %v3555, %v3557
        %v3559 = vrot.slane %v3509, 1
        %v3560 = vrot.slane %v3510, 1
        %v3561 = vsel %vm541, %v3559, %v3560
        %v3562 = vrot.slane %v3511, 1
        %v3563 = vsel %vm541, %v3560, %v3562
        %v3564 = vrot.slane %v3512, 1
        %v3565 = vrot.slane %v3513, 1
        %v3566 = vsel %vm541, %v3564, %v3565
        %v3567 = vrot.slane %v3514, 1
        %v3568 = vsel %vm541, %v3565, %v3567
        %v3569 = vrot.slane %v3515, 1
        %v3570 = vrot.slane %v3516, 1
        %v3571 = vsel %vm541, %v3569, %v3570
        %v3572 = vrot.slane %v3517, 1
        %v3573 = vsel %vm541, %v3570, %v3572
        %v3574 = vrot.slane %v3518, 1
        %v3575 = vrot.slane %v3519, 1
        %v3576 = vsel %vm541, %v3574, %v3575
        %v3577 = vrot.slane %v3520, 1
        %v3578 = vsel %vm541, %v3575, %v3577
        %v3579 = vrot.slane %v3521, 1
        %v3580 = vrot.slane %v3522, 1
        %v3581 = vsel %vm541, %v3579, %v3580
        %v3582 = vrot.slane %v3523, 1
        %v3583 = vsel %vm541, %v3580, %v3582
        %v3584 = vrot.slane %v3524, 1
        %v3585 = vrot.slane %v3525, 1
        %v3586 = vsel %vm541, %v3584, %v3585
        %v3587 = vrot.slane %v3526, 1
        %v3588 = vsel %vm541, %v3585, %v3587
        %v3589 = vrot.slane %v3527, 1
        %v3590 = vrot.slane %v3528, 1
        %v3591 = vsel %vm541, %v3589, %v3590
        %v3592 = vrot.slane %v3529, 1
        %v3593 = vsel %vm541, %v3590, %v3592
        %v3610 = vrot.slane %v3506, 2
        %v3611 = vrot.slane %v3507, 2
        %v3612 = vsel %vm783, %v3610, %v3611
        %v3613 = vrot.slane %v3508, 2
        %v3614 = vsel %vm783, %v3611, %v3613
        %v3615 = vrot.slane %v3509, 2
        %v3616 = vrot.slane %v3510, 2
        %v3617 = vsel %vm783, %v3615, %v3616
        %v3618 = vrot.slane %v3511, 2
        %v3619 = vsel %vm783, %v3616, %v3618
        %v3620 = vrot.slane %v3512, 2
        %v3621 = vrot.slane %v3513, 2
        %v3622 = vsel %vm783, %v3620, %v3621
        %v3623 = vrot.slane %v3514, 2
        %v3624 = vsel %vm783, %v3621, %v3623
        %v3625 = vrot.slane %v3515, 2
        %v3626 = vrot.slane %v3516, 2
        %v3627 = vsel %vm783, %v3625, %v3626
        %v3628 = vrot.slane %v3517, 2
        %v3629 = vsel %vm783, %v3626, %v3628
        %v3630 = vrot.slane %v3518, 2
        %v3631 = vrot.slane %v3519, 2
        %v3632 = vsel %vm783, %v3630, %v3631
        %v3633 = vrot.slane %v3520, 2
        %v3634 = vsel %vm783, %v3631, %v3633
        %v3635 = vrot.slane %v3521, 2
        %v3636 = vrot.slane %v3522, 2
        %v3637 = vsel %vm783, %v3635, %v3636
        %v3638 = vrot.slane %v3523, 2
        %v3639 = vsel %vm783, %v3636, %v3638
        %v3640 = vrot.slane %v3524, 2
        %v3641 = vrot.slane %v3525, 2
        %v3642 = vsel %vm783, %v3640, %v3641
        %v3643 = vrot.slane %v3526, 2
        %v3644 = vsel %vm783, %v3641, %v3643
        %v3645 = vrot.slane %v3527, 2
        %v3646 = vrot.slane %v3528, 2
        %v3647 = vsel %vm783, %v3645, %v3646
        %v3648 = vrot.slane %v3529, 2
        %v3649 = vsel %vm783, %v3646, %v3648
        %v3666 = vld [vmem:[%s3] sm:$0xff]
        %v3667 = vld [vmem:[%s3 + $0x8] sm:$0xff]
        %v3668 = vld [vmem:[%s3 + $0x10] sm:$0xff]
        %v3669 = vld [vmem:[%s3 + $0x18] sm:$0xff]
        %v3670 = vld [vmem:[%s3 + $0x20] sm:$0xff]
        %v3671 = vld [vmem:[%s3 + $0x28] sm:$0xff]
        %v3672 = vld [vmem:[%s3 + $0x30] sm:$0xff]
        %v3673 = vld [vmem:[%s3 + $0x38] sm:$0xff]
        %v3674 = vld [vmem:[%s3 + $0x40] sm:$0xff]
        %v3675 = vld [vmem:[%s3 + $0x48] sm:$0xff]
        %v3676 = vld [vmem:[%s3 + $0x50] sm:$0xff]
        %v3677 = vld [vmem:[%s3 + $0x58] sm:$0xff]
        %v3678 = vld [vmem:[%s3 + $0x60] sm:$0xff]
        %v3679 = vld [vmem:[%s3 + $0x68] sm:$0xff]
        %v3680 = vld [vmem:[%s3 + $0x70] sm:$0xff]
        %v3681 = vld [vmem:[%s3 + $0x78] sm:$0xff]
        %v3682 = vld [vmem:[%s3 + $0x80] sm:$0xff]
        %v3683 = vld [vmem:[%s3 + $0x88] sm:$0xff]
        %v3684 = vld [vmem:[%s3 + $0x90] sm:$0xff]
        %v3685 = vld [vmem:[%s3 + $0x98] sm:$0xff]
        %v3686 = vld [vmem:[%s3 + $0xa0] sm:$0xff]
        %v3687 = vld [vmem:[%s3 + $0xa8] sm:$0xff]
        %v3688 = vld [vmem:[%s3 + $0xb0] sm:$0xff]
        %v3689 = vld [vmem:[%s3 + $0xb8] sm:$0xff]
        %v3690 = vld [vmem:[%s3 + $0xc0] sm:$0xff]
        %v3691 = vld [vmem:[%s3 + $0xc8] sm:$0xff]
        %v3692 = vld [vmem:[%s3 + $0xd0] sm:$0xff]
        %v3693 = vld [vmem:[%s3 + $0xd8] sm:$0xff]
        %v3694 = vld [vmem:[%s3 + $0xe0] sm:$0xff]
        %v3695 = vld [vmem:[%s3 + $0xe8] sm:$0xff]
        %v3696 = vld [vmem:[%s3 + $0xf0] sm:$0xff]
        %v3697 = vld [vmem:[%s3 + $0xf8] sm:$0xff]
        %v3698 = vld [vmem:[%s3 + $0x100] sm:$0xff]
        %v3699 = vld [vmem:[%s3 + $0x108] sm:$0xff]
        %v3700 = vld [vmem:[%s3 + $0x110] sm:$0xff]
        %v3701 = vld [vmem:[%s3 + $0x118] sm:$0xff]
        %v3702 = vld [vmem:[%s3 + $0x120] sm:$0xff]
        %v3703 = vld [vmem:[%s3 + $0x128] sm:$0xff]
        %v3704 = vld [vmem:[%s3 + $0x130] sm:$0xff]
        %v3705 = vld [vmem:[%s3 + $0x138] sm:$0xff]
        %v3706 = vld [vmem:[%s3 + $0x140] sm:$0xff]
        %v3707 = vld [vmem:[%s3 + $0x148] sm:$0xff]
        %v3708 = vld [vmem:[%s3 + $0x150] sm:$0xff]
        %v3709 = vld [vmem:[%s3 + $0x158] sm:$0xff]
        %v3710 = vld [vmem:[%s3 + $0x160] sm:$0xff]
        %v3711 = vld [vmem:[%s3 + $0x168] sm:$0xff]
        %v3712 = vld [vmem:[%s3 + $0x170] sm:$0xff]
        %v3713 = vld [vmem:[%s3 + $0x178] sm:$0xff]
        %v3714 = vld [vmem:[%s1981] sm:$0xff]
        %v3715 = vld [vmem:[%s1981 + $0x8] sm:$0xff]
        %v3716 = vld [vmem:[%s1981 + $0x10] sm:$0x3]
        %v3717 = vld [vmem:[%s1981 + $0x18] sm:$0xff]
        %v3718 = vld [vmem:[%s1981 + $0x20] sm:$0xff]
        %v3719 = vld [vmem:[%s1981 + $0x28] sm:$0x3]
        %v3720 = vld [vmem:[%s1981 + $0x30] sm:$0xff]
        %v3721 = vld [vmem:[%s1981 + $0x38] sm:$0xff]
        %v3722 = vld [vmem:[%s1981 + $0x40] sm:$0x3]
        %v3723 = vld [vmem:[%s1981 + $0x48] sm:$0xff]
        %v3724 = vld [vmem:[%s1981 + $0x50] sm:$0xff]
        %v3725 = vld [vmem:[%s1981 + $0x58] sm:$0x3]
        %v3726 = vld [vmem:[%s1981 + $0x60] sm:$0xff]
        %v3727 = vld [vmem:[%s1981 + $0x68] sm:$0xff]
        %v3728 = vld [vmem:[%s1981 + $0x70] sm:$0x3]
        %v3729 = vld [vmem:[%s1981 + $0x78] sm:$0xff]
        %v3730 = vld [vmem:[%s1981 + $0x80] sm:$0xff]
        %v3731 = vld [vmem:[%s1981 + $0x88] sm:$0x3]
        %v3732 = vld [vmem:[%s1981 + $0x90] sm:$0xff]
        %v3733 = vld [vmem:[%s1981 + $0x98] sm:$0xff]
        %v3734 = vld [vmem:[%s1981 + $0xa0] sm:$0x3]
        %v3735 = vld [vmem:[%s1981 + $0xa8] sm:$0xff]
        %v3736 = vld [vmem:[%s1981 + $0xb0] sm:$0xff]
        %v3737 = vld [vmem:[%s1981 + $0xb8] sm:$0x3]
        %v3762 = vrot.slane %v3714, 1
        %v3763 = vrot.slane %v3715, 1
        %v3764 = vsel %vm541, %v3762, %v3763
        %v3765 = vrot.slane %v3716, 1
        %v3766 = vsel %vm541, %v3763, %v3765
        %v3767 = vrot.slane %v3717, 1
        %v3768 = vrot.slane %v3718, 1
        %v3769 = vsel %vm541, %v3767, %v3768
        %v3770 = vrot.slane %v3719, 1
        %v3771 = vsel %vm541, %v3768, %v3770
        %v3772 = vrot.slane %v3720, 1
        %v3773 = vrot.slane %v3721, 1
        %v3774 = vsel %vm541, %v3772, %v3773
        %v3775 = vrot.slane %v3722, 1
        %v3776 = vsel %vm541, %v3773, %v3775
        %v3777 = vrot.slane %v3723, 1
        %v3778 = vrot.slane %v3724, 1
        %v3779 = vsel %vm541, %v3777, %v3778
        %v3780 = vrot.slane %v3725, 1
        %v3781 = vsel %vm541, %v3778, %v3780
        %v3782 = vrot.slane %v3726, 1
        %v3783 = vrot.slane %v3727, 1
        %v3784 = vsel %vm541, %v3782, %v3783
        %v3785 = vrot.slane %v3728, 1
        %v3786 = vsel %vm541, %v3783, %v3785
        %v3787 = vrot.slane %v3729, 1
        %v3788 = vrot.slane %v3730, 1
        %v3789 = vsel %vm541, %v3787, %v3788
        %v3790 = vrot.slane %v3731, 1
        %v3791 = vsel %vm541, %v3788, %v3790
        %v3792 = vrot.slane %v3732, 1
        %v3793 = vrot.slane %v3733, 1
        %v3794 = vsel %vm541, %v3792, %v3793
        %v3795 = vrot.slane %v3734, 1
        %v3796 = vsel %vm541, %v3793, %v3795
        %v3797 = vrot.slane %v3735, 1
        %v3798 = vrot.slane %v3736, 1
        %v3799 = vsel %vm541, %v3797, %v3798
        %v3800 = vrot.slane %v3737, 1
        %v3801 = vsel %vm541, %v3798, %v3800
        %v3818 = vrot.slane %v3714, 2
        %v3819 = vrot.slane %v3715, 2
        %v3820 = vsel %vm783, %v3818, %v3819
        %v3821 = vrot.slane %v3716, 2
        %v3822 = vsel %vm783, %v3819, %v3821
        %v3823 = vrot.slane %v3717, 2
        %v3824 = vrot.slane %v3718, 2
        %v3825 = vsel %vm783, %v3823, %v3824
        %v3826 = vrot.slane %v3719, 2
        %v3827 = vsel %vm783, %v3824, %v3826
        %v3828 = vrot.slane %v3720, 2
        %v3829 = vrot.slane %v3721, 2
        %v3830 = vsel %vm783, %v3828, %v3829
        %v3831 = vrot.slane %v3722, 2
        %v3832 = vsel %vm783, %v3829, %v3831
        %v3833 = vrot.slane %v3723, 2
        %v3834 = vrot.slane %v3724, 2
        %v3835 = vsel %vm783, %v3833, %v3834
        %v3836 = vrot.slane %v3725, 2
        %v3837 = vsel %vm783, %v3834, %v3836
        %v3838 = vrot.slane %v3726, 2
        %v3839 = vrot.slane %v3727, 2
        %v3840 = vsel %vm783, %v3838, %v3839
        %v3841 = vrot.slane %v3728, 2
        %v3842 = vsel %vm783, %v3839, %v3841
        %v3843 = vrot.slane %v3729, 2
        %v3844 = vrot.slane %v3730, 2
        %v3845 = vsel %vm783, %v3843, %v3844
        %v3846 = vrot.slane %v3731, 2
        %v3847 = vsel %vm783, %v3844, %v3846
        %v3848 = vrot.slane %v3732, 2
        %v3849 = vrot.slane %v3733, 2
        %v3850 = vsel %vm783, %v3848, %v3849
        %v3851 = vrot.slane %v3734, 2
        %v3852 = vsel %vm783, %v3849, %v3851
        %v3853 = vrot.slane %v3735, 2
        %v3854 = vrot.slane %v3736, 2
        %v3855 = vsel %vm783, %v3853, %v3854
        %v3856 = vrot.slane %v3737, 2
        %v3857 = vsel %vm783, %v3854, %v3856
        %s3874 = scalar_lea.vmem %s3, 384
        %v3875 = vld [vmem:[%s3874] sm:$0xff]
        %v3876 = vld [vmem:[%s3874 + $0x8] sm:$0xff]
        %v3877 = vld [vmem:[%s3874 + $0x10] sm:$0xff]
        %v3878 = vld [vmem:[%s3874 + $0x18] sm:$0xff]
        %v3879 = vld [vmem:[%s3874 + $0x20] sm:$0xff]
        %v3880 = vld [vmem:[%s3874 + $0x28] sm:$0xff]
        %v3881 = vld [vmem:[%s3874 + $0x30] sm:$0xff]
        %v3882 = vld [vmem:[%s3874 + $0x38] sm:$0xff]
        %v3883 = vld [vmem:[%s3874 + $0x40] sm:$0xff]
        %v3884 = vld [vmem:[%s3874 + $0x48] sm:$0xff]
        %v3885 = vld [vmem:[%s3874 + $0x50] sm:$0xff]
        %v3886 = vld [vmem:[%s3874 + $0x58] sm:$0xff]
        %v3887 = vld [vmem:[%s3874 + $0x60] sm:$0xff]
        %v3888 = vld [vmem:[%s3874 + $0x68] sm:$0xff]
        %v3889 = vld [vmem:[%s3874 + $0x70] sm:$0xff]
        %v3890 = vld [vmem:[%s3874 + $0x78] sm:$0xff]
        %v3891 = vld [vmem:[%s3874 + $0x80] sm:$0xff]
        %v3892 = vld [vmem:[%s3874 + $0x88] sm:$0xff]
        %v3893 = vld [vmem:[%s3874 + $0x90] sm:$0xff]
        %v3894 = vld [vmem:[%s3874 + $0x98] sm:$0xff]
        %v3895 = vld [vmem:[%s3874 + $0xa0] sm:$0xff]
        %v3896 = vld [vmem:[%s3874 + $0xa8] sm:$0xff]
        %v3897 = vld [vmem:[%s3874 + $0xb0] sm:$0xff]
        %v3898 = vld [vmem:[%s3874 + $0xb8] sm:$0xff]
        %v3899 = vld [vmem:[%s3874 + $0xc0] sm:$0xff]
        %v3900 = vld [vmem:[%s3874 + $0xc8] sm:$0xff]
        %v3901 = vld [vmem:[%s3874 + $0xd0] sm:$0xff]
        %v3902 = vld [vmem:[%s3874 + $0xd8] sm:$0xff]
        %v3903 = vld [vmem:[%s3874 + $0xe0] sm:$0xff]
        %v3904 = vld [vmem:[%s3874 + $0xe8] sm:$0xff]
        %v3905 = vld [vmem:[%s3874 + $0xf0] sm:$0xff]
        %v3906 = vld [vmem:[%s3874 + $0xf8] sm:$0xff]
        %v3907 = vld [vmem:[%s3874 + $0x100] sm:$0xff]
        %v3908 = vld [vmem:[%s3874 + $0x108] sm:$0xff]
        %v3909 = vld [vmem:[%s3874 + $0x110] sm:$0xff]
        %v3910 = vld [vmem:[%s3874 + $0x118] sm:$0xff]
        %v3911 = vld [vmem:[%s3874 + $0x120] sm:$0xff]
        %v3912 = vld [vmem:[%s3874 + $0x128] sm:$0xff]
        %v3913 = vld [vmem:[%s3874 + $0x130] sm:$0xff]
        %v3914 = vld [vmem:[%s3874 + $0x138] sm:$0xff]
        %v3915 = vld [vmem:[%s3874 + $0x140] sm:$0xff]
        %v3916 = vld [vmem:[%s3874 + $0x148] sm:$0xff]
        %v3917 = vld [vmem:[%s3874 + $0x150] sm:$0xff]
        %v3918 = vld [vmem:[%s3874 + $0x158] sm:$0xff]
        %v3919 = vld [vmem:[%s3874 + $0x160] sm:$0xff]
        %v3920 = vld [vmem:[%s3874 + $0x168] sm:$0xff]
        %v3921 = vld [vmem:[%s3874 + $0x170] sm:$0xff]
        %v3922 = vld [vmem:[%s3874 + $0x178] sm:$0xff]
        %3923 = vmatpush.msra.mxu0 %v3890
        %3924 = vmatpush.msra.mxu0 %v3889
        %3925 = vmatpush.msra.mxu0 %v3888
        %3926 = vmatpush.msra.mxu0 %v3887
        %3927 = vmatpush.msra.mxu0 %v3886
        %3928 = vmatpush.msra.mxu0 %v3885
        %3929 = vmatpush.msra.mxu0 %v3884
        %3930 = vmatpush.msra.mxu0 %v3883
        %3931 = vmatpush.msra.mxu0 %v3882
        %3932 = vmatpush.msra.mxu0 %v3881
        %3933 = vmatpush.msra.mxu0 %v3880
        %3934 = vmatpush.msra.mxu0 %v3879
        %3935 = vmatpush.msra.mxu0 %v3878
        %3936 = vmatpush.msra.mxu0 %v3877
        %3937 = vmatpush.msra.mxu0 %v3876
        %3938 = vmatpush.msra.mxu0 %v3875
        %3939 = vmatmul.f32.gmra.mxu0 %v3714
        %v3940 = vpop.f32.mrf.mxu0
        %v3941 = vadd.f32 0.0, %v3940
        %3942 = vmatmul.f32.gmra.mxu0 %v3715
        %v3943 = vpop.f32.mrf.mxu0
        %v3944 = vadd.f32 0.0, %v3943
        %3945 = vmatmul.f32.gmra.mxu0 %v3717
        %v3946 = vpop.f32.mrf.mxu0
        %v3947 = vadd.f32 0.0, %v3946
        %3948 = vmatmul.f32.gmra.mxu0 %v3718
        %v3949 = vpop.f32.mrf.mxu0
        %v3950 = vadd.f32 0.0, %v3949
        %3951 = vmatmul.f32.gmra.mxu0 %v3720
        %v3952 = vpop.f32.mrf.mxu0
        %v3953 = vadd.f32 0.0, %v3952
        %3954 = vmatmul.f32.gmra.mxu0 %v3721
        %v3955 = vpop.f32.mrf.mxu0
        %v3956 = vadd.f32 0.0, %v3955
        %3957 = vmatmul.f32.gmra.mxu0 %v3723
        %v3958 = vpop.f32.mrf.mxu0
        %v3959 = vadd.f32 0.0, %v3958
        %3960 = vmatmul.f32.gmra.mxu0 %v3724
        %v3961 = vpop.f32.mrf.mxu0
        %v3962 = vadd.f32 0.0, %v3961
        %3963 = vmatmul.f32.gmra.mxu0 %v3726
        %v3964 = vpop.f32.mrf.mxu0
        %v3965 = vadd.f32 0.0, %v3964
        %3966 = vmatmul.f32.gmra.mxu0 %v3727
        %v3967 = vpop.f32.mrf.mxu0
        %v3968 = vadd.f32 0.0, %v3967
        %3969 = vmatmul.f32.gmra.mxu0 %v3729
        %v3970 = vpop.f32.mrf.mxu0
        %v3971 = vadd.f32 0.0, %v3970
        %3972 = vmatmul.f32.gmra.mxu0 %v3730
        %v3973 = vpop.f32.mrf.mxu0
        %v3974 = vadd.f32 0.0, %v3973
        %3975 = vmatmul.f32.gmra.mxu0 %v3732
        %v3976 = vpop.f32.mrf.mxu0
        %v3977 = vadd.f32 0.0, %v3976
        %3978 = vmatmul.f32.gmra.mxu0 %v3733
        %v3979 = vpop.f32.mrf.mxu0
        %v3980 = vadd.f32 0.0, %v3979
        %3981 = vmatmul.f32.gmra.mxu0 %v3735
        %v3982 = vpop.f32.mrf.mxu0
        %v3983 = vadd.f32 0.0, %v3982
        %3984 = vmatmul.f32.gmra.mxu0 %v3736
        %v3985 = vpop.f32.mrf.mxu0
        %v3986 = vadd.f32 0.0, %v3985
        %3987 = vdwg.mxu0
        %3988 = vmatpush.msra.mxu0 %v3906
        %3989 = vmatpush.msra.mxu0 %v3905
        %3990 = vmatpush.msra.mxu0 %v3904
        %3991 = vmatpush.msra.mxu0 %v3903
        %3992 = vmatpush.msra.mxu0 %v3902
        %3993 = vmatpush.msra.mxu0 %v3901
        %3994 = vmatpush.msra.mxu0 %v3900
        %3995 = vmatpush.msra.mxu0 %v3899
        %3996 = vmatpush.msra.mxu0 %v3898
        %3997 = vmatpush.msra.mxu0 %v3897
        %3998 = vmatpush.msra.mxu0 %v3896
        %3999 = vmatpush.msra.mxu0 %v3895
        %4000 = vmatpush.msra.mxu0 %v3894
        %4001 = vmatpush.msra.mxu0 %v3893
        %4002 = vmatpush.msra.mxu0 %v3892
        %4003 = vmatpush.msra.mxu0 %v3891
        %4004 = vmatmul.f32.gmra.mxu0 %v3764
        %v4005 = vpop.f32.mrf.mxu0
        %v4006 = vadd.f32 %v3941, %v4005
        %4007 = vmatmul.f32.gmra.mxu0 %v3766
        %v4008 = vpop.f32.mrf.mxu0
        %v4009 = vadd.f32 %v3944, %v4008
        %4010 = vmatmul.f32.gmra.mxu0 %v3769
        %v4011 = vpop.f32.mrf.mxu0
        %v4012 = vadd.f32 %v3947, %v4011
        %4013 = vmatmul.f32.gmra.mxu0 %v3771
        %v4014 = vpop.f32.mrf.mxu0
        %v4015 = vadd.f32 %v3950, %v4014
        %4016 = vmatmul.f32.gmra.mxu0 %v3774
        %v4017 = vpop.f32.mrf.mxu0
        %v4018 = vadd.f32 %v3953, %v4017
        %4019 = vmatmul.f32.gmra.mxu0 %v3776
        %v4020 = vpop.f32.mrf.mxu0
        %v4021 = vadd.f32 %v3956, %v4020
        %4022 = vmatmul.f32.gmra.mxu0 %v3779
        %v4023 = vpop.f32.mrf.mxu0
        %v4024 = vadd.f32 %v3959, %v4023
        %4025 = vmatmul.f32.gmra.mxu0 %v3781
        %v4026 = vpop.f32.mrf.mxu0
        %v4027 = vadd.f32 %v3962, %v4026
        %4028 = vmatmul.f32.gmra.mxu0 %v3784
        %v4029 = vpop.f32.mrf.mxu0
        %v4030 = vadd.f32 %v3965, %v4029
        %4031 = vmatmul.f32.gmra.mxu0 %v3786
        %v4032 = vpop.f32.mrf.mxu0
        %v4033 = vadd.f32 %v3968, %v4032
        %4034 = vmatmul.f32.gmra.mxu0 %v3789
        %v4035 = vpop.f32.mrf.mxu0
        %v4036 = vadd.f32 %v3971, %v4035
        %4037 = vmatmul.f32.gmra.mxu0 %v3791
        %v4038 = vpop.f32.mrf.mxu0
        %v4039 = vadd.f32 %v3974, %v4038
        %4040 = vmatmul.f32.gmra.mxu0 %v3794
        %v4041 = vpop.f32.mrf.mxu0
        %v4042 = vadd.f32 %v3977, %v4041
        %4043 = vmatmul.f32.gmra.mxu0 %v3796
        %v4044 = vpop.f32.mrf.mxu0
        %v4045 = vadd.f32 %v3980, %v4044
        %4046 = vmatmul.f32.gmra.mxu0 %v3799
        %v4047 = vpop.f32.mrf.mxu0
        %v4048 = vadd.f32 %v3983, %v4047
        %4049 = vmatmul.f32.gmra.mxu0 %v3801
        %v4050 = vpop.f32.mrf.mxu0
        %v4051 = vadd.f32 %v3986, %v4050
        %4052 = vdwg.mxu0
        %4053 = vmatpush.msra.mxu0 %v3922
        %4054 = vmatpush.msra.mxu0 %v3921
        %4055 = vmatpush.msra.mxu0 %v3920
        %4056 = vmatpush.msra.mxu0 %v3919
        %4057 = vmatpush.msra.mxu0 %v3918
        %4058 = vmatpush.msra.mxu0 %v3917
        %4059 = vmatpush.msra.mxu0 %v3916
        %4060 = vmatpush.msra.mxu0 %v3915
        %4061 = vmatpush.msra.mxu0 %v3914
        %4062 = vmatpush.msra.mxu0 %v3913
        %4063 = vmatpush.msra.mxu0 %v3912
        %4064 = vmatpush.msra.mxu0 %v3911
        %4065 = vmatpush.msra.mxu0 %v3910
        %4066 = vmatpush.msra.mxu0 %v3909
        %4067 = vmatpush.msra.mxu0 %v3908
        %4068 = vmatpush.msra.mxu0 %v3907
        %4069 = vmatmul.f32.gmra.mxu0 %v3820
        %v4070 = vpop.f32.mrf.mxu0
        %v4071 = vadd.f32 %v4006, %v4070
        %4072 = vmatmul.f32.gmra.mxu0 %v3822
        %v4073 = vpop.f32.mrf.mxu0
        %v4074 = vadd.f32 %v4009, %v4073
        %4075 = vmatmul.f32.gmra.mxu0 %v3825
        %v4076 = vpop.f32.mrf.mxu0
        %v4077 = vadd.f32 %v4012, %v4076
        %4078 = vmatmul.f32.gmra.mxu0 %v3827
        %v4079 = vpop.f32.mrf.mxu0
        %v4080 = vadd.f32 %v4015, %v4079
        %4081 = vmatmul.f32.gmra.mxu0 %v3830
        %v4082 = vpop.f32.mrf.mxu0
        %v4083 = vadd.f32 %v4018, %v4082
        %4084 = vmatmul.f32.gmra.mxu0 %v3832
        %v4085 = vpop.f32.mrf.mxu0
        %v4086 = vadd.f32 %v4021, %v4085
        %4087 = vmatmul.f32.gmra.mxu0 %v3835
        %v4088 = vpop.f32.mrf.mxu0
        %v4089 = vadd.f32 %v4024, %v4088
        %4090 = vmatmul.f32.gmra.mxu0 %v3837
        %v4091 = vpop.f32.mrf.mxu0
        %v4092 = vadd.f32 %v4027, %v4091
        %4093 = vmatmul.f32.gmra.mxu0 %v3840
        %v4094 = vpop.f32.mrf.mxu0
        %v4095 = vadd.f32 %v4030, %v4094
        %4096 = vmatmul.f32.gmra.mxu0 %v3842
        %v4097 = vpop.f32.mrf.mxu0
        %v4098 = vadd.f32 %v4033, %v4097
        %4099 = vmatmul.f32.gmra.mxu0 %v3845
        %v4100 = vpop.f32.mrf.mxu0
        %v4101 = vadd.f32 %v4036, %v4100
        %4102 = vmatmul.f32.gmra.mxu0 %v3847
        %v4103 = vpop.f32.mrf.mxu0
        %v4104 = vadd.f32 %v4039, %v4103
        %4105 = vmatmul.f32.gmra.mxu0 %v3850
        %v4106 = vpop.f32.mrf.mxu0
        %v4107 = vadd.f32 %v4042, %v4106
        %4108 = vmatmul.f32.gmra.mxu0 %v3852
        %v4109 = vpop.f32.mrf.mxu0
        %v4110 = vadd.f32 %v4045, %v4109
        %4111 = vmatmul.f32.gmra.mxu0 %v3855
        %v4112 = vpop.f32.mrf.mxu0
        %v4113 = vadd.f32 %v4048, %v4112
        %4114 = vmatmul.f32.gmra.mxu0 %v3857
        %v4115 = vpop.f32.mrf.mxu0
        %v4116 = vadd.f32 %v4051, %v4115
        %4117 = vdwg.mxu0
        %4118 = vmatpush.msra.mxu0 %v3681
        %4119 = vmatpush.msra.mxu0 %v3680
        %4120 = vmatpush.msra.mxu0 %v3679
        %4121 = vmatpush.msra.mxu0 %v3678
        %4122 = vmatpush.msra.mxu0 %v3677
        %4123 = vmatpush.msra.mxu0 %v3676
        %4124 = vmatpush.msra.mxu0 %v3675
        %4125 = vmatpush.msra.mxu0 %v3674
        %4126 = vmatpush.msra.mxu0 %v3673
        %4127 = vmatpush.msra.mxu0 %v3672
        %4128 = vmatpush.msra.mxu0 %v3671
        %4129 = vmatpush.msra.mxu0 %v3670
        %4130 = vmatpush.msra.mxu0 %v3669
        %4131 = vmatpush.msra.mxu0 %v3668
        %4132 = vmatpush.msra.mxu0 %v3667
        %4133 = vmatpush.msra.mxu0 %v3666
        %4134 = vmatmul.f32.gmra.mxu0 %v3506
        %v4135 = vpop.f32.mrf.mxu0
        %v4136 = vadd.f32 %v4071, %v4135
        %4137 = vmatmul.f32.gmra.mxu0 %v3507
        %v4138 = vpop.f32.mrf.mxu0
        %v4139 = vadd.f32 %v4074, %v4138
        %4140 = vmatmul.f32.gmra.mxu0 %v3509
        %v4141 = vpop.f32.mrf.mxu0
        %v4142 = vadd.f32 %v4077, %v4141
        %4143 = vmatmul.f32.gmra.mxu0 %v3510
        %v4144 = vpop.f32.mrf.mxu0
        %v4145 = vadd.f32 %v4080, %v4144
        %4146 = vmatmul.f32.gmra.mxu0 %v3512
        %v4147 = vpop.f32.mrf.mxu0
        %v4148 = vadd.f32 %v4083, %v4147
        %4149 = vmatmul.f32.gmra.mxu0 %v3513
        %v4150 = vpop.f32.mrf.mxu0
        %v4151 = vadd.f32 %v4086, %v4150
        %4152 = vmatmul.f32.gmra.mxu0 %v3515
        %v4153 = vpop.f32.mrf.mxu0
        %v4154 = vadd.f32 %v4089, %v4153
        %4155 = vmatmul.f32.gmra.mxu0 %v3516
        %v4156 = vpop.f32.mrf.mxu0
        %v4157 = vadd.f32 %v4092, %v4156
        %4158 = vmatmul.f32.gmra.mxu0 %v3518
        %v4159 = vpop.f32.mrf.mxu0
        %v4160 = vadd.f32 %v4095, %v4159
        %4161 = vmatmul.f32.gmra.mxu0 %v3519
        %v4162 = vpop.f32.mrf.mxu0
        %v4163 = vadd.f32 %v4098, %v4162
        %4164 = vmatmul.f32.gmra.mxu0 %v3521
        %v4165 = vpop.f32.mrf.mxu0
        %v4166 = vadd.f32 %v4101, %v4165
        %4167 = vmatmul.f32.gmra.mxu0 %v3522
        %v4168 = vpop.f32.mrf.mxu0
        %v4169 = vadd.f32 %v4104, %v4168
        %4170 = vmatmul.f32.gmra.mxu0 %v3524
        %v4171 = vpop.f32.mrf.mxu0
        %v4172 = vadd.f32 %v4107, %v4171
        %4173 = vmatmul.f32.gmra.mxu0 %v3525
        %v4174 = vpop.f32.mrf.mxu0
        %v4175 = vadd.f32 %v4110, %v4174
        %4176 = vmatmul.f32.gmra.mxu0 %v3527
        %v4177 = vpop.f32.mrf.mxu0
        %v4178 = vadd.f32 %v4113, %v4177
        %4179 = vmatmul.f32.gmra.mxu0 %v3528
        %v4180 = vpop.f32.mrf.mxu0
        %v4181 = vadd.f32 %v4116, %v4180
        %4182 = vdwg.mxu0
        %4183 = vmatpush.msra.mxu0 %v3697
        %4184 = vmatpush.msra.mxu0 %v3696
        %4185 = vmatpush.msra.mxu0 %v3695
        %4186 = vmatpush.msra.mxu0 %v3694
        %4187 = vmatpush.msra.mxu0 %v3693
        %4188 = vmatpush.msra.mxu0 %v3692
        %4189 = vmatpush.msra.mxu0 %v3691
        %4190 = vmatpush.msra.mxu0 %v3690
        %4191 = vmatpush.msra.mxu0 %v3689
        %4192 = vmatpush.msra.mxu0 %v3688
        %4193 = vmatpush.msra.mxu0 %v3687
        %4194 = vmatpush.msra.mxu0 %v3686
        %4195 = vmatpush.msra.mxu0 %v3685
        %4196 = vmatpush.msra.mxu0 %v3684
        %4197 = vmatpush.msra.mxu0 %v3683
        %4198 = vmatpush.msra.mxu0 %v3682
        %4199 = vmatmul.f32.gmra.mxu0 %v3556
        %v4200 = vpop.f32.mrf.mxu0
        %v4201 = vadd.f32 %v4136, %v4200
        %4202 = vmatmul.f32.gmra.mxu0 %v3558
        %v4203 = vpop.f32.mrf.mxu0
        %v4204 = vadd.f32 %v4139, %v4203
        %4205 = vmatmul.f32.gmra.mxu0 %v3561
        %v4206 = vpop.f32.mrf.mxu0
        %v4207 = vadd.f32 %v4142, %v4206
        %4208 = vmatmul.f32.gmra.mxu0 %v3563
        %v4209 = vpop.f32.mrf.mxu0
        %v4210 = vadd.f32 %v4145, %v4209
        %4211 = vmatmul.f32.gmra.mxu0 %v3566
        %v4212 = vpop.f32.mrf.mxu0
        %v4213 = vadd.f32 %v4148, %v4212
        %4214 = vmatmul.f32.gmra.mxu0 %v3568
        %v4215 = vpop.f32.mrf.mxu0
        %v4216 = vadd.f32 %v4151, %v4215
        %4217 = vmatmul.f32.gmra.mxu0 %v3571
        %v4218 = vpop.f32.mrf.mxu0
        %v4219 = vadd.f32 %v4154, %v4218
        %4220 = vmatmul.f32.gmra.mxu0 %v3573
        %v4221 = vpop.f32.mrf.mxu0
        %v4222 = vadd.f32 %v4157, %v4221
        %4223 = vmatmul.f32.gmra.mxu0 %v3576
        %v4224 = vpop.f32.mrf.mxu0
        %v4225 = vadd.f32 %v4160, %v4224
        %4226 = vmatmul.f32.gmra.mxu0 %v3578
        %v4227 = vpop.f32.mrf.mxu0
        %v4228 = vadd.f32 %v4163, %v4227
        %4229 = vmatmul.f32.gmra.mxu0 %v3581
        %v4230 = vpop.f32.mrf.mxu0
        %v4231 = vadd.f32 %v4166, %v4230
        %4232 = vmatmul.f32.gmra.mxu0 %v3583
        %v4233 = vpop.f32.mrf.mxu0
        %v4234 = vadd.f32 %v4169, %v4233
        %4235 = vmatmul.f32.gmra.mxu0 %v3586
        %v4236 = vpop.f32.mrf.mxu0
        %v4237 = vadd.f32 %v4172, %v4236
        %4238 = vmatmul.f32.gmra.mxu0 %v3588
        %v4239 = vpop.f32.mrf.mxu0
        %v4240 = vadd.f32 %v4175, %v4239
        %4241 = vmatmul.f32.gmra.mxu0 %v3591
        %v4242 = vpop.f32.mrf.mxu0
        %v4243 = vadd.f32 %v4178, %v4242
        %4244 = vmatmul.f32.gmra.mxu0 %v3593
        %v4245 = vpop.f32.mrf.mxu0
        %v4246 = vadd.f32 %v4181, %v4245
        %4247 = vdwg.mxu0
        %4248 = vmatpush.msra.mxu0 %v3713
        %4249 = vmatpush.msra.mxu0 %v3712
        %4250 = vmatpush.msra.mxu0 %v3711
        %4251 = vmatpush.msra.mxu0 %v3710
        %4252 = vmatpush.msra.mxu0 %v3709
        %4253 = vmatpush.msra.mxu0 %v3708
        %4254 = vmatpush.msra.mxu0 %v3707
        %4255 = vmatpush.msra.mxu0 %v3706
        %4256 = vmatpush.msra.mxu0 %v3705
        %4257 = vmatpush.msra.mxu0 %v3704
        %4258 = vmatpush.msra.mxu0 %v3703
        %4259 = vmatpush.msra.mxu0 %v3702
        %4260 = vmatpush.msra.mxu0 %v3701
        %4261 = vmatpush.msra.mxu0 %v3700
        %4262 = vmatpush.msra.mxu0 %v3699
        %4263 = vmatpush.msra.mxu0 %v3698
        %4264 = vmatmul.f32.gmra.mxu0 %v3612
        %v4265 = vpop.f32.mrf.mxu0
        %v4266 = vadd.f32 %v4201, %v4265
        %4267 = vmatmul.f32.gmra.mxu0 %v3614
        %v4268 = vpop.f32.mrf.mxu0
        %v4269 = vadd.f32 %v4204, %v4268
        %4270 = vmatmul.f32.gmra.mxu0 %v3617
        %v4271 = vpop.f32.mrf.mxu0
        %v4272 = vadd.f32 %v4207, %v4271
        %4273 = vmatmul.f32.gmra.mxu0 %v3619
        %v4274 = vpop.f32.mrf.mxu0
        %v4275 = vadd.f32 %v4210, %v4274
        %4276 = vmatmul.f32.gmra.mxu0 %v3622
        %v4277 = vpop.f32.mrf.mxu0
        %v4278 = vadd.f32 %v4213, %v4277
        %4279 = vmatmul.f32.gmra.mxu0 %v3624
        %v4280 = vpop.f32.mrf.mxu0
        %v4281 = vadd.f32 %v4216, %v4280
        %4282 = vmatmul.f32.gmra.mxu0 %v3627
        %v4283 = vpop.f32.mrf.mxu0
        %v4284 = vadd.f32 %v4219, %v4283
        %4285 = vmatmul.f32.gmra.mxu0 %v3629
        %v4286 = vpop.f32.mrf.mxu0
        %v4287 = vadd.f32 %v4222, %v4286
        %4288 = vmatmul.f32.gmra.mxu0 %v3632
        %v4289 = vpop.f32.mrf.mxu0
        %v4290 = vadd.f32 %v4225, %v4289
        %4291 = vmatmul.f32.gmra.mxu0 %v3634
        %v4292 = vpop.f32.mrf.mxu0
        %v4293 = vadd.f32 %v4228, %v4292
        %4294 = vmatmul.f32.gmra.mxu0 %v3637
        %v4295 = vpop.f32.mrf.mxu0
        %v4296 = vadd.f32 %v4231, %v4295
        %4297 = vmatmul.f32.gmra.mxu0 %v3639
        %v4298 = vpop.f32.mrf.mxu0
        %v4299 = vadd.f32 %v4234, %v4298
        %4300 = vmatmul.f32.gmra.mxu0 %v3642
        %v4301 = vpop.f32.mrf.mxu0
        %v4302 = vadd.f32 %v4237, %v4301
        %4303 = vmatmul.f32.gmra.mxu0 %v3644
        %v4304 = vpop.f32.mrf.mxu0
        %v4305 = vadd.f32 %v4240, %v4304
        %4306 = vmatmul.f32.gmra.mxu0 %v3647
        %v4307 = vpop.f32.mrf.mxu0
        %v4308 = vadd.f32 %v4243, %v4307
        %4309 = vmatmul.f32.gmra.mxu0 %v3649
        %v4310 = vpop.f32.mrf.mxu0
        %v4311 = vadd.f32 %v4246, %v4310
        %4312 = vdwg.mxu0
        %s4313 = scalar_lea.vmem [#allocation3], 48
        %v4314 = vld [vmem:[%s4313] sm:$0xff]
        %v4315 = vld [vmem:[%s4313 + $0x8] sm:$0xff]
        %v4316 = vld [vmem:[%s4313 + $0x10] sm:$0x3]
        %v4317 = vld [vmem:[%s4313 + $0x18] sm:$0xff]
        %v4318 = vld [vmem:[%s4313 + $0x20] sm:$0xff]
        %v4319 = vld [vmem:[%s4313 + $0x28] sm:$0x3]
        %v4320 = vld [vmem:[%s4313 + $0x30] sm:$0xff]
        %v4321 = vld [vmem:[%s4313 + $0x38] sm:$0xff]
        %v4322 = vld [vmem:[%s4313 + $0x40] sm:$0x3]
        %v4323 = vld [vmem:[%s4313 + $0x48] sm:$0xff]
        %v4324 = vld [vmem:[%s4313 + $0x50] sm:$0xff]
        %v4325 = vld [vmem:[%s4313 + $0x58] sm:$0x3]
        %v4326 = vld [vmem:[%s4313 + $0x60] sm:$0xff]
        %v4327 = vld [vmem:[%s4313 + $0x68] sm:$0xff]
        %v4328 = vld [vmem:[%s4313 + $0x70] sm:$0x3]
        %v4329 = vld [vmem:[%s4313 + $0x78] sm:$0xff]
        %v4330 = vld [vmem:[%s4313 + $0x80] sm:$0xff]
        %v4331 = vld [vmem:[%s4313 + $0x88] sm:$0x3]
        %v4332 = vld [vmem:[%s4313 + $0x90] sm:$0xff]
        %v4333 = vld [vmem:[%s4313 + $0x98] sm:$0xff]
        %v4334 = vld [vmem:[%s4313 + $0xa0] sm:$0x3]
        %v4335 = vld [vmem:[%s4313 + $0xa8] sm:$0xff]
        %v4336 = vld [vmem:[%s4313 + $0xb0] sm:$0xff]
        %v4337 = vld [vmem:[%s4313 + $0xb8] sm:$0x3]
        %v4362 = vrot.slane %v4314, 1
        %v4363 = vrot.slane %v4315, 1
        %v4364 = vsel %vm541, %v4362, %v4363
        %v4365 = vrot.slane %v4316, 1
        %v4366 = vsel %vm541, %v4363, %v4365
        %v4367 = vrot.slane %v4317, 1
        %v4368 = vrot.slane %v4318, 1
        %v4369 = vsel %vm541, %v4367, %v4368
        %v4370 = vrot.slane %v4319, 1
        %v4371 = vsel %vm541, %v4368, %v4370
        %v4372 = vrot.slane %v4320, 1
        %v4373 = vrot.slane %v4321, 1
        %v4374 = vsel %vm541, %v4372, %v4373
        %v4375 = vrot.slane %v4322, 1
        %v4376 = vsel %vm541, %v4373, %v4375
        %v4377 = vrot.slane %v4323, 1
        %v4378 = vrot.slane %v4324, 1
        %v4379 = vsel %vm541, %v4377, %v4378
        %v4380 = vrot.slane %v4325, 1
        %v4381 = vsel %vm541, %v4378, %v4380
        %v4382 = vrot.slane %v4326, 1
        %v4383 = vrot.slane %v4327, 1
        %v4384 = vsel %vm541, %v4382, %v4383
        %v4385 = vrot.slane %v4328, 1
        %v4386 = vsel %vm541, %v4383, %v4385
        %v4387 = vrot.slane %v4329, 1
        %v4388 = vrot.slane %v4330, 1
        %v4389 = vsel %vm541, %v4387, %v4388
        %v4390 = vrot.slane %v4331, 1
        %v4391 = vsel %vm541, %v4388, %v4390
        %v4392 = vrot.slane %v4332, 1
        %v4393 = vrot.slane %v4333, 1
        %v4394 = vsel %vm541, %v4392, %v4393
        %v4395 = vrot.slane %v4334, 1
        %v4396 = vsel %vm541, %v4393, %v4395
        %v4397 = vrot.slane %v4335, 1
        %v4398 = vrot.slane %v4336, 1
        %v4399 = vsel %vm541, %v4397, %v4398
        %v4400 = vrot.slane %v4337, 1
        %v4401 = vsel %vm541, %v4398, %v4400
        %v4418 = vrot.slane %v4314, 2
        %v4419 = vrot.slane %v4315, 2
        %v4420 = vsel %vm783, %v4418, %v4419
        %v4421 = vrot.slane %v4316, 2
        %v4422 = vsel %vm783, %v4419, %v4421
        %v4423 = vrot.slane %v4317, 2
        %v4424 = vrot.slane %v4318, 2
        %v4425 = vsel %vm783, %v4423, %v4424
        %v4426 = vrot.slane %v4319, 2
        %v4427 = vsel %vm783, %v4424, %v4426
        %v4428 = vrot.slane %v4320, 2
        %v4429 = vrot.slane %v4321, 2
        %v4430 = vsel %vm783, %v4428, %v4429
        %v4431 = vrot.slane %v4322, 2
        %v4432 = vsel %vm783, %v4429, %v4431
        %v4433 = vrot.slane %v4323, 2
        %v4434 = vrot.slane %v4324, 2
        %v4435 = vsel %vm783, %v4433, %v4434
        %v4436 = vrot.slane %v4325, 2
        %v4437 = vsel %vm783, %v4434, %v4436
        %v4438 = vrot.slane %v4326, 2
        %v4439 = vrot.slane %v4327, 2
        %v4440 = vsel %vm783, %v4438, %v4439
        %v4441 = vrot.slane %v4328, 2
        %v4442 = vsel %vm783, %v4439, %v4441
        %v4443 = vrot.slane %v4329, 2
        %v4444 = vrot.slane %v4330, 2
        %v4445 = vsel %vm783, %v4443, %v4444
        %v4446 = vrot.slane %v4331, 2
        %v4447 = vsel %vm783, %v4444, %v4446
        %v4448 = vrot.slane %v4332, 2
        %v4449 = vrot.slane %v4333, 2
        %v4450 = vsel %vm783, %v4448, %v4449
        %v4451 = vrot.slane %v4334, 2
        %v4452 = vsel %vm783, %v4449, %v4451
        %v4453 = vrot.slane %v4335, 2
        %v4454 = vrot.slane %v4336, 2
        %v4455 = vsel %vm783, %v4453, %v4454
        %v4456 = vrot.slane %v4337, 2
        %v4457 = vsel %vm783, %v4454, %v4456
        %s4474 = scalar_lea.vmem %s3, 768
        %v4475 = vld [vmem:[%s4474] sm:$0xff]
        %v4476 = vld [vmem:[%s4474 + $0x8] sm:$0xff]
        %v4477 = vld [vmem:[%s4474 + $0x10] sm:$0xff]
        %v4478 = vld [vmem:[%s4474 + $0x18] sm:$0xff]
        %v4479 = vld [vmem:[%s4474 + $0x20] sm:$0xff]
        %v4480 = vld [vmem:[%s4474 + $0x28] sm:$0xff]
        %v4481 = vld [vmem:[%s4474 + $0x30] sm:$0xff]
        %v4482 = vld [vmem:[%s4474 + $0x38] sm:$0xff]
        %v4483 = vld [vmem:[%s4474 + $0x40] sm:$0xff]
        %v4484 = vld [vmem:[%s4474 + $0x48] sm:$0xff]
        %v4485 = vld [vmem:[%s4474 + $0x50] sm:$0xff]
        %v4486 = vld [vmem:[%s4474 + $0x58] sm:$0xff]
        %v4487 = vld [vmem:[%s4474 + $0x60] sm:$0xff]
        %v4488 = vld [vmem:[%s4474 + $0x68] sm:$0xff]
        %v4489 = vld [vmem:[%s4474 + $0x70] sm:$0xff]
        %v4490 = vld [vmem:[%s4474 + $0x78] sm:$0xff]
        %v4491 = vld [vmem:[%s4474 + $0x80] sm:$0xff]
        %v4492 = vld [vmem:[%s4474 + $0x88] sm:$0xff]
        %v4493 = vld [vmem:[%s4474 + $0x90] sm:$0xff]
        %v4494 = vld [vmem:[%s4474 + $0x98] sm:$0xff]
        %v4495 = vld [vmem:[%s4474 + $0xa0] sm:$0xff]
        %v4496 = vld [vmem:[%s4474 + $0xa8] sm:$0xff]
        %v4497 = vld [vmem:[%s4474 + $0xb0] sm:$0xff]
        %v4498 = vld [vmem:[%s4474 + $0xb8] sm:$0xff]
        %v4499 = vld [vmem:[%s4474 + $0xc0] sm:$0xff]
        %v4500 = vld [vmem:[%s4474 + $0xc8] sm:$0xff]
        %v4501 = vld [vmem:[%s4474 + $0xd0] sm:$0xff]
        %v4502 = vld [vmem:[%s4474 + $0xd8] sm:$0xff]
        %v4503 = vld [vmem:[%s4474 + $0xe0] sm:$0xff]
        %v4504 = vld [vmem:[%s4474 + $0xe8] sm:$0xff]
        %v4505 = vld [vmem:[%s4474 + $0xf0] sm:$0xff]
        %v4506 = vld [vmem:[%s4474 + $0xf8] sm:$0xff]
        %v4507 = vld [vmem:[%s4474 + $0x100] sm:$0xff]
        %v4508 = vld [vmem:[%s4474 + $0x108] sm:$0xff]
        %v4509 = vld [vmem:[%s4474 + $0x110] sm:$0xff]
        %v4510 = vld [vmem:[%s4474 + $0x118] sm:$0xff]
        %v4511 = vld [vmem:[%s4474 + $0x120] sm:$0xff]
        %v4512 = vld [vmem:[%s4474 + $0x128] sm:$0xff]
        %v4513 = vld [vmem:[%s4474 + $0x130] sm:$0xff]
        %v4514 = vld [vmem:[%s4474 + $0x138] sm:$0xff]
        %v4515 = vld [vmem:[%s4474 + $0x140] sm:$0xff]
        %v4516 = vld [vmem:[%s4474 + $0x148] sm:$0xff]
        %v4517 = vld [vmem:[%s4474 + $0x150] sm:$0xff]
        %v4518 = vld [vmem:[%s4474 + $0x158] sm:$0xff]
        %v4519 = vld [vmem:[%s4474 + $0x160] sm:$0xff]
        %v4520 = vld [vmem:[%s4474 + $0x168] sm:$0xff]
        %v4521 = vld [vmem:[%s4474 + $0x170] sm:$0xff]
        %v4522 = vld [vmem:[%s4474 + $0x178] sm:$0xff]
        %4523 = vmatpush.msra.mxu0 %v4490
        %4524 = vmatpush.msra.mxu0 %v4489
        %4525 = vmatpush.msra.mxu0 %v4488
        %4526 = vmatpush.msra.mxu0 %v4487
        %4527 = vmatpush.msra.mxu0 %v4486
        %4528 = vmatpush.msra.mxu0 %v4485
        %4529 = vmatpush.msra.mxu0 %v4484
        %4530 = vmatpush.msra.mxu0 %v4483
        %4531 = vmatpush.msra.mxu0 %v4482
        %4532 = vmatpush.msra.mxu0 %v4481
        %4533 = vmatpush.msra.mxu0 %v4480
        %4534 = vmatpush.msra.mxu0 %v4479
        %4535 = vmatpush.msra.mxu0 %v4478
        %4536 = vmatpush.msra.mxu0 %v4477
        %4537 = vmatpush.msra.mxu0 %v4476
        %4538 = vmatpush.msra.mxu0 %v4475
        %4539 = vmatmul.f32.gmra.mxu0 %v4314
        %v4540 = vpop.f32.mrf.mxu0
        %v4541 = vadd.f32 0.0, %v4540
        %4542 = vmatmul.f32.gmra.mxu0 %v4315
        %v4543 = vpop.f32.mrf.mxu0
        %v4544 = vadd.f32 0.0, %v4543
        %4545 = vmatmul.f32.gmra.mxu0 %v4317
        %v4546 = vpop.f32.mrf.mxu0
        %v4547 = vadd.f32 0.0, %v4546
        %4548 = vmatmul.f32.gmra.mxu0 %v4318
        %v4549 = vpop.f32.mrf.mxu0
        %v4550 = vadd.f32 0.0, %v4549
        %4551 = vmatmul.f32.gmra.mxu0 %v4320
        %v4552 = vpop.f32.mrf.mxu0
        %v4553 = vadd.f32 0.0, %v4552
        %4554 = vmatmul.f32.gmra.mxu0 %v4321
        %v4555 = vpop.f32.mrf.mxu0
        %v4556 = vadd.f32 0.0, %v4555
        %4557 = vmatmul.f32.gmra.mxu0 %v4323
        %v4558 = vpop.f32.mrf.mxu0
        %v4559 = vadd.f32 0.0, %v4558
        %4560 = vmatmul.f32.gmra.mxu0 %v4324
        %v4561 = vpop.f32.mrf.mxu0
        %v4562 = vadd.f32 0.0, %v4561
        %4563 = vmatmul.f32.gmra.mxu0 %v4326
        %v4564 = vpop.f32.mrf.mxu0
        %v4565 = vadd.f32 0.0, %v4564
        %4566 = vmatmul.f32.gmra.mxu0 %v4327
        %v4567 = vpop.f32.mrf.mxu0
        %v4568 = vadd.f32 0.0, %v4567
        %4569 = vmatmul.f32.gmra.mxu0 %v4329
        %v4570 = vpop.f32.mrf.mxu0
        %v4571 = vadd.f32 0.0, %v4570
        %4572 = vmatmul.f32.gmra.mxu0 %v4330
        %v4573 = vpop.f32.mrf.mxu0
        %v4574 = vadd.f32 0.0, %v4573
        %4575 = vmatmul.f32.gmra.mxu0 %v4332
        %v4576 = vpop.f32.mrf.mxu0
        %v4577 = vadd.f32 0.0, %v4576
        %4578 = vmatmul.f32.gmra.mxu0 %v4333
        %v4579 = vpop.f32.mrf.mxu0
        %v4580 = vadd.f32 0.0, %v4579
        %4581 = vmatmul.f32.gmra.mxu0 %v4335
        %v4582 = vpop.f32.mrf.mxu0
        %v4583 = vadd.f32 0.0, %v4582
        %4584 = vmatmul.f32.gmra.mxu0 %v4336
        %v4585 = vpop.f32.mrf.mxu0
        %v4586 = vadd.f32 0.0, %v4585
        %4587 = vdwg.mxu0
        %4588 = vmatpush.msra.mxu0 %v4506
        %4589 = vmatpush.msra.mxu0 %v4505
        %4590 = vmatpush.msra.mxu0 %v4504
        %4591 = vmatpush.msra.mxu0 %v4503
        %4592 = vmatpush.msra.mxu0 %v4502
        %4593 = vmatpush.msra.mxu0 %v4501
        %4594 = vmatpush.msra.mxu0 %v4500
        %4595 = vmatpush.msra.mxu0 %v4499
        %4596 = vmatpush.msra.mxu0 %v4498
        %4597 = vmatpush.msra.mxu0 %v4497
        %4598 = vmatpush.msra.mxu0 %v4496
        %4599 = vmatpush.msra.mxu0 %v4495
        %4600 = vmatpush.msra.mxu0 %v4494
        %4601 = vmatpush.msra.mxu0 %v4493
        %4602 = vmatpush.msra.mxu0 %v4492
        %4603 = vmatpush.msra.mxu0 %v4491
        %4604 = vmatmul.f32.gmra.mxu0 %v4364
        %v4605 = vpop.f32.mrf.mxu0
        %v4606 = vadd.f32 %v4541, %v4605
        %4607 = vmatmul.f32.gmra.mxu0 %v4366
        %v4608 = vpop.f32.mrf.mxu0
        %v4609 = vadd.f32 %v4544, %v4608
        %4610 = vmatmul.f32.gmra.mxu0 %v4369
        %v4611 = vpop.f32.mrf.mxu0
        %v4612 = vadd.f32 %v4547, %v4611
        %4613 = vmatmul.f32.gmra.mxu0 %v4371
        %v4614 = vpop.f32.mrf.mxu0
        %v4615 = vadd.f32 %v4550, %v4614
        %4616 = vmatmul.f32.gmra.mxu0 %v4374
        %v4617 = vpop.f32.mrf.mxu0
        %v4618 = vadd.f32 %v4553, %v4617
        %4619 = vmatmul.f32.gmra.mxu0 %v4376
        %v4620 = vpop.f32.mrf.mxu0
        %v4621 = vadd.f32 %v4556, %v4620
        %4622 = vmatmul.f32.gmra.mxu0 %v4379
        %v4623 = vpop.f32.mrf.mxu0
        %v4624 = vadd.f32 %v4559, %v4623
        %4625 = vmatmul.f32.gmra.mxu0 %v4381
        %v4626 = vpop.f32.mrf.mxu0
        %v4627 = vadd.f32 %v4562, %v4626
        %4628 = vmatmul.f32.gmra.mxu0 %v4384
        %v4629 = vpop.f32.mrf.mxu0
        %v4630 = vadd.f32 %v4565, %v4629
        %4631 = vmatmul.f32.gmra.mxu0 %v4386
        %v4632 = vpop.f32.mrf.mxu0
        %v4633 = vadd.f32 %v4568, %v4632
        %4634 = vmatmul.f32.gmra.mxu0 %v4389
        %v4635 = vpop.f32.mrf.mxu0
        %v4636 = vadd.f32 %v4571, %v4635
        %4637 = vmatmul.f32.gmra.mxu0 %v4391
        %v4638 = vpop.f32.mrf.mxu0
        %v4639 = vadd.f32 %v4574, %v4638
        %4640 = vmatmul.f32.gmra.mxu0 %v4394
        %v4641 = vpop.f32.mrf.mxu0
        %v4642 = vadd.f32 %v4577, %v4641
        %4643 = vmatmul.f32.gmra.mxu0 %v4396
        %v4644 = vpop.f32.mrf.mxu0
        %v4645 = vadd.f32 %v4580, %v4644
        %4646 = vmatmul.f32.gmra.mxu0 %v4399
        %v4647 = vpop.f32.mrf.mxu0
        %v4648 = vadd.f32 %v4583, %v4647
        %4649 = vmatmul.f32.gmra.mxu0 %v4401
        %v4650 = vpop.f32.mrf.mxu0
        %v4651 = vadd.f32 %v4586, %v4650
        %4652 = vdwg.mxu0
        %4653 = vmatpush.msra.mxu0 %v4522
        %4654 = vmatpush.msra.mxu0 %v4521
        %4655 = vmatpush.msra.mxu0 %v4520
        %4656 = vmatpush.msra.mxu0 %v4519
        %4657 = vmatpush.msra.mxu0 %v4518
        %4658 = vmatpush.msra.mxu0 %v4517
        %4659 = vmatpush.msra.mxu0 %v4516
        %4660 = vmatpush.msra.mxu0 %v4515
        %4661 = vmatpush.msra.mxu0 %v4514
        %4662 = vmatpush.msra.mxu0 %v4513
        %4663 = vmatpush.msra.mxu0 %v4512
        %4664 = vmatpush.msra.mxu0 %v4511
        %4665 = vmatpush.msra.mxu0 %v4510
        %4666 = vmatpush.msra.mxu0 %v4509
        %4667 = vmatpush.msra.mxu0 %v4508
        %4668 = vmatpush.msra.mxu0 %v4507
        %4669 = vmatmul.f32.gmra.mxu0 %v4420
        %v4670 = vpop.f32.mrf.mxu0
        %v4671 = vadd.f32 %v4606, %v4670
        %4672 = vmatmul.f32.gmra.mxu0 %v4422
        %v4673 = vpop.f32.mrf.mxu0
        %v4674 = vadd.f32 %v4609, %v4673
        %4675 = vmatmul.f32.gmra.mxu0 %v4425
        %v4676 = vpop.f32.mrf.mxu0
        %v4677 = vadd.f32 %v4612, %v4676
        %4678 = vmatmul.f32.gmra.mxu0 %v4427
        %v4679 = vpop.f32.mrf.mxu0
        %v4680 = vadd.f32 %v4615, %v4679
        %4681 = vmatmul.f32.gmra.mxu0 %v4430
        %v4682 = vpop.f32.mrf.mxu0
        %v4683 = vadd.f32 %v4618, %v4682
        %4684 = vmatmul.f32.gmra.mxu0 %v4432
        %v4685 = vpop.f32.mrf.mxu0
        %v4686 = vadd.f32 %v4621, %v4685
        %4687 = vmatmul.f32.gmra.mxu0 %v4435
        %v4688 = vpop.f32.mrf.mxu0
        %v4689 = vadd.f32 %v4624, %v4688
        %4690 = vmatmul.f32.gmra.mxu0 %v4437
        %v4691 = vpop.f32.mrf.mxu0
        %v4692 = vadd.f32 %v4627, %v4691
        %4693 = vmatmul.f32.gmra.mxu0 %v4440
        %v4694 = vpop.f32.mrf.mxu0
        %v4695 = vadd.f32 %v4630, %v4694
        %4696 = vmatmul.f32.gmra.mxu0 %v4442
        %v4697 = vpop.f32.mrf.mxu0
        %v4698 = vadd.f32 %v4633, %v4697
        %4699 = vmatmul.f32.gmra.mxu0 %v4445
        %v4700 = vpop.f32.mrf.mxu0
        %v4701 = vadd.f32 %v4636, %v4700
        %4702 = vmatmul.f32.gmra.mxu0 %v4447
        %v4703 = vpop.f32.mrf.mxu0
        %v4704 = vadd.f32 %v4639, %v4703
        %4705 = vmatmul.f32.gmra.mxu0 %v4450
        %v4706 = vpop.f32.mrf.mxu0
        %v4707 = vadd.f32 %v4642, %v4706
        %4708 = vmatmul.f32.gmra.mxu0 %v4452
        %v4709 = vpop.f32.mrf.mxu0
        %v4710 = vadd.f32 %v4645, %v4709
        %4711 = vmatmul.f32.gmra.mxu0 %v4455
        %v4712 = vpop.f32.mrf.mxu0
        %v4713 = vadd.f32 %v4648, %v4712
        %4714 = vmatmul.f32.gmra.mxu0 %v4457
        %v4715 = vpop.f32.mrf.mxu0
        %v4716 = vadd.f32 %v4651, %v4715
        %4717 = vdwg.mxu0
        %v4718 = vadd.f32 %v4266, %v4671
        %v4719 = vadd.f32 %v4269, %v4674
        %v4720 = vadd.f32 %v4272, %v4677
        %v4721 = vadd.f32 %v4275, %v4680
        %v4722 = vadd.f32 %v4278, %v4683
        %v4723 = vadd.f32 %v4281, %v4686
        %v4724 = vadd.f32 %v4284, %v4689
        %v4725 = vadd.f32 %v4287, %v4692
        %v4726 = vadd.f32 %v4290, %v4695
        %v4727 = vadd.f32 %v4293, %v4698
        %v4728 = vadd.f32 %v4296, %v4701
        %v4729 = vadd.f32 %v4299, %v4704
        %v4730 = vadd.f32 %v4302, %v4707
        %v4731 = vadd.f32 %v4305, %v4710
        %v4732 = vadd.f32 %v4308, %v4713
        %v4733 = vadd.f32 %v4311, %v4716
        %v4735 = vperm.slane %v3505, 0
        %v4737 = vadd.f32 %v4718, %v4735
        %v4738 = vadd.f32 %v4719, %v4735
        %v4739 = vadd.f32 %v4720, %v4735
        %v4740 = vadd.f32 %v4721, %v4735
        %v4741 = vadd.f32 %v4722, %v4735
        %v4742 = vadd.f32 %v4723, %v4735
        %v4743 = vadd.f32 %v4724, %v4735
        %v4744 = vadd.f32 %v4725, %v4735
        %v4745 = vadd.f32 %v4726, %v4735
        %v4746 = vadd.f32 %v4727, %v4735
        %v4747 = vadd.f32 %v4728, %v4735
        %v4748 = vadd.f32 %v4729, %v4735
        %v4749 = vadd.f32 %v4730, %v4735
        %v4750 = vadd.f32 %v4731, %v4735
        %v4751 = vadd.f32 %v4732, %v4735
        %v4752 = vadd.f32 %v4733, %v4735
        %vm4753 = vcmp.gt.f32.partialorder %v4737, 0.0
        %vm4754 = vcmp.gt.f32.partialorder %v4738, 0.0
        %vm4755 = vcmp.gt.f32.partialorder %v4739, 0.0
        %vm4756 = vcmp.gt.f32.partialorder %v4740, 0.0
        %vm4757 = vcmp.gt.f32.partialorder %v4741, 0.0
        %vm4758 = vcmp.gt.f32.partialorder %v4742, 0.0
        %vm4759 = vcmp.gt.f32.partialorder %v4743, 0.0
        %vm4760 = vcmp.gt.f32.partialorder %v4744, 0.0
        %vm4761 = vcmp.gt.f32.partialorder %v4745, 0.0
        %vm4762 = vcmp.gt.f32.partialorder %v4746, 0.0
        %vm4763 = vcmp.gt.f32.partialorder %v4747, 0.0
        %vm4764 = vcmp.gt.f32.partialorder %v4748, 0.0
        %vm4765 = vcmp.gt.f32.partialorder %v4749, 0.0
        %vm4766 = vcmp.gt.f32.partialorder %v4750, 0.0
        %vm4767 = vcmp.gt.f32.partialorder %v4751, 0.0
        %vm4768 = vcmp.gt.f32.partialorder %v4752, 0.0
        %v4769 = vmul.f32 %v4737, 0.01
        %v4770 = vmul.f32 %v4738, 0.01
        %v4771 = vmul.f32 %v4739, 0.01
        %v4772 = vmul.f32 %v4740, 0.01
        %v4773 = vmul.f32 %v4741, 0.01
        %v4774 = vmul.f32 %v4742, 0.01
        %v4775 = vmul.f32 %v4743, 0.01
        %v4776 = vmul.f32 %v4744, 0.01
        %v4777 = vmul.f32 %v4745, 0.01
        %v4778 = vmul.f32 %v4746, 0.01
        %v4779 = vmul.f32 %v4747, 0.01
        %v4780 = vmul.f32 %v4748, 0.01
        %v4781 = vmul.f32 %v4749, 0.01
        %v4782 = vmul.f32 %v4750, 0.01
        %v4783 = vmul.f32 %v4751, 0.01
        %v4784 = vmul.f32 %v4752, 0.01
        %v4785 = vsel %vm4753, %v4737, %v4769
        %v4786 = vsel %vm4754, %v4738, %v4770
        %v4787 = vsel %vm4755, %v4739, %v4771
        %v4788 = vsel %vm4756, %v4740, %v4772
        %v4789 = vsel %vm4757, %v4741, %v4773
        %v4790 = vsel %vm4758, %v4742, %v4774
        %v4791 = vsel %vm4759, %v4743, %v4775
        %v4792 = vsel %vm4760, %v4744, %v4776
        %v4793 = vsel %vm4761, %v4745, %v4777
        %v4794 = vsel %vm4762, %v4746, %v4778
        %v4795 = vsel %vm4763, %v4747, %v4779
        %v4796 = vsel %vm4764, %v4748, %v4780
        %v4797 = vsel %vm4765, %v4749, %v4781
        %v4798 = vsel %vm4766, %v4750, %v4782
        %v4799 = vsel %vm4767, %v4751, %v4783
        %v4800 = vsel %vm4768, %v4752, %v4784
        %s4801 = scalar_lea.vmem [#allocation4], 24
        %4802 = vst.msk [vmem:[%s4801 + $0x1] sm:$0xff] %vm368, %v4785
        %4803 = vst.msk [vmem:[%s4801 + $0x9] sm:$0xff] %vm368, %v4786
        %4804 = vst.msk [vmem:[%s4801 + $0x19] sm:$0xff] %vm368, %v4787
        %4805 = vst.msk [vmem:[%s4801 + $0x21] sm:$0xff] %vm368, %v4788
        %4806 = vst.msk [vmem:[%s4801 + $0x31] sm:$0xff] %vm368, %v4789
        %4807 = vst.msk [vmem:[%s4801 + $0x39] sm:$0xff] %vm368, %v4790
        %4808 = vst.msk [vmem:[%s4801 + $0x49] sm:$0xff] %vm368, %v4791
        %4809 = vst.msk [vmem:[%s4801 + $0x51] sm:$0xff] %vm368, %v4792
        %4810 = vst.msk [vmem:[%s4801 + $0x61] sm:$0xff] %vm368, %v4793
        %4811 = vst.msk [vmem:[%s4801 + $0x69] sm:$0xff] %vm368, %v4794
        %4812 = vst.msk [vmem:[%s4801 + $0x79] sm:$0xff] %vm368, %v4795
        %4813 = vst.msk [vmem:[%s4801 + $0x81] sm:$0xff] %vm368, %v4796
        %4814 = vst.msk [vmem:[%s4801 + $0x91] sm:$0xff] %vm368, %v4797
        %4815 = vst.msk [vmem:[%s4801 + $0x99] sm:$0xff] %vm368, %v4798
        %4816 = vst.msk [vmem:[%s4801 + $0xa9] sm:$0xff] %vm368, %v4799
        %4817 = vst.msk [vmem:[%s4801 + $0xb1] sm:$0xff] %vm368, %v4800
        %s4818 = scalar_lea.vmem [#allocation3], 192
        %v4819 = vld [vmem:[%s4818] sm:$0xff]
        %v4820 = vld [vmem:[%s4818 + $0x8] sm:$0xff]
        %v4821 = vld [vmem:[%s4818 + $0x10] sm:$0x3]
        %v4822 = vld [vmem:[%s4818 + $0x18] sm:$0xff]
        %v4823 = vld [vmem:[%s4818 + $0x20] sm:$0xff]
        %v4824 = vld [vmem:[%s4818 + $0x28] sm:$0x3]
        %v4825 = vld [vmem:[%s4818 + $0x30] sm:$0xff]
        %v4826 = vld [vmem:[%s4818 + $0x38] sm:$0xff]
        %v4827 = vld [vmem:[%s4818 + $0x40] sm:$0x3]
        %v4828 = vld [vmem:[%s4818 + $0x48] sm:$0xff]
        %v4829 = vld [vmem:[%s4818 + $0x50] sm:$0xff]
        %v4830 = vld [vmem:[%s4818 + $0x58] sm:$0x3]
        %v4831 = vld [vmem:[%s4818 + $0x60] sm:$0xff]
        %v4832 = vld [vmem:[%s4818 + $0x68] sm:$0xff]
        %v4833 = vld [vmem:[%s4818 + $0x70] sm:$0x3]
        %v4834 = vld [vmem:[%s4818 + $0x78] sm:$0xff]
        %v4835 = vld [vmem:[%s4818 + $0x80] sm:$0xff]
        %v4836 = vld [vmem:[%s4818 + $0x88] sm:$0x3]
        %v4837 = vld [vmem:[%s4818 + $0x90] sm:$0xff]
        %v4838 = vld [vmem:[%s4818 + $0x98] sm:$0xff]
        %v4839 = vld [vmem:[%s4818 + $0xa0] sm:$0x3]
        %v4840 = vld [vmem:[%s4818 + $0xa8] sm:$0xff]
        %v4841 = vld [vmem:[%s4818 + $0xb0] sm:$0xff]
        %v4842 = vld [vmem:[%s4818 + $0xb8] sm:$0x3]
        %v4867 = vrot.slane %v4819, 1
        %v4868 = vrot.slane %v4820, 1
        %v4869 = vsel %vm541, %v4867, %v4868
        %v4870 = vrot.slane %v4821, 1
        %v4871 = vsel %vm541, %v4868, %v4870
        %v4872 = vrot.slane %v4822, 1
        %v4873 = vrot.slane %v4823, 1
        %v4874 = vsel %vm541, %v4872, %v4873
        %v4875 = vrot.slane %v4824, 1
        %v4876 = vsel %vm541, %v4873, %v4875
        %v4877 = vrot.slane %v4825, 1
        %v4878 = vrot.slane %v4826, 1
        %v4879 = vsel %vm541, %v4877, %v4878
        %v4880 = vrot.slane %v4827, 1
        %v4881 = vsel %vm541, %v4878, %v4880
        %v4882 = vrot.slane %v4828, 1
        %v4883 = vrot.slane %v4829, 1
        %v4884 = vsel %vm541, %v4882, %v4883
        %v4885 = vrot.slane %v4830, 1
        %v4886 = vsel %vm541, %v4883, %v4885
        %v4887 = vrot.slane %v4831, 1
        %v4888 = vrot.slane %v4832, 1
        %v4889 = vsel %vm541, %v4887, %v4888
        %v4890 = vrot.slane %v4833, 1
        %v4891 = vsel %vm541, %v4888, %v4890
        %v4892 = vrot.slane %v4834, 1
        %v4893 = vrot.slane %v4835, 1
        %v4894 = vsel %vm541, %v4892, %v4893
        %v4895 = vrot.slane %v4836, 1
        %v4896 = vsel %vm541, %v4893, %v4895
        %v4897 = vrot.slane %v4837, 1
        %v4898 = vrot.slane %v4838, 1
        %v4899 = vsel %vm541, %v4897, %v4898
        %v4900 = vrot.slane %v4839, 1
        %v4901 = vsel %vm541, %v4898, %v4900
        %v4902 = vrot.slane %v4840, 1
        %v4903 = vrot.slane %v4841, 1
        %v4904 = vsel %vm541, %v4902, %v4903
        %v4905 = vrot.slane %v4842, 1
        %v4906 = vsel %vm541, %v4903, %v4905
        %v4923 = vrot.slane %v4819, 2
        %v4924 = vrot.slane %v4820, 2
        %v4925 = vsel %vm783, %v4923, %v4924
        %v4926 = vrot.slane %v4821, 2
        %v4927 = vsel %vm783, %v4924, %v4926
        %v4928 = vrot.slane %v4822, 2
        %v4929 = vrot.slane %v4823, 2
        %v4930 = vsel %vm783, %v4928, %v4929
        %v4931 = vrot.slane %v4824, 2
        %v4932 = vsel %vm783, %v4929, %v4931
        %v4933 = vrot.slane %v4825, 2
        %v4934 = vrot.slane %v4826, 2
        %v4935 = vsel %vm783, %v4933, %v4934
        %v4936 = vrot.slane %v4827, 2
        %v4937 = vsel %vm783, %v4934, %v4936
        %v4938 = vrot.slane %v4828, 2
        %v4939 = vrot.slane %v4829, 2
        %v4940 = vsel %vm783, %v4938, %v4939
        %v4941 = vrot.slane %v4830, 2
        %v4942 = vsel %vm783, %v4939, %v4941
        %v4943 = vrot.slane %v4831, 2
        %v4944 = vrot.slane %v4832, 2
        %v4945 = vsel %vm783, %v4943, %v4944
        %v4946 = vrot.slane %v4833, 2
        %v4947 = vsel %vm783, %v4944, %v4946
        %v4948 = vrot.slane %v4834, 2
        %v4949 = vrot.slane %v4835, 2
        %v4950 = vsel %vm783, %v4948, %v4949
        %v4951 = vrot.slane %v4836, 2
        %v4952 = vsel %vm783, %v4949, %v4951
        %v4953 = vrot.slane %v4837, 2
        %v4954 = vrot.slane %v4838, 2
        %v4955 = vsel %vm783, %v4953, %v4954
        %v4956 = vrot.slane %v4839, 2
        %v4957 = vsel %vm783, %v4954, %v4956
        %v4958 = vrot.slane %v4840, 2
        %v4959 = vrot.slane %v4841, 2
        %v4960 = vsel %vm783, %v4958, %v4959
        %v4961 = vrot.slane %v4842, 2
        %v4962 = vsel %vm783, %v4959, %v4961
        %v4979 = vld [vmem:[%s3] sm:$0xff]
        %v4980 = vld [vmem:[%s3 + $0x8] sm:$0xff]
        %v4981 = vld [vmem:[%s3 + $0x10] sm:$0xff]
        %v4982 = vld [vmem:[%s3 + $0x18] sm:$0xff]
        %v4983 = vld [vmem:[%s3 + $0x20] sm:$0xff]
        %v4984 = vld [vmem:[%s3 + $0x28] sm:$0xff]
        %v4985 = vld [vmem:[%s3 + $0x30] sm:$0xff]
        %v4986 = vld [vmem:[%s3 + $0x38] sm:$0xff]
        %v4987 = vld [vmem:[%s3 + $0x40] sm:$0xff]
        %v4988 = vld [vmem:[%s3 + $0x48] sm:$0xff]
        %v4989 = vld [vmem:[%s3 + $0x50] sm:$0xff]
        %v4990 = vld [vmem:[%s3 + $0x58] sm:$0xff]
        %v4991 = vld [vmem:[%s3 + $0x60] sm:$0xff]
        %v4992 = vld [vmem:[%s3 + $0x68] sm:$0xff]
        %v4993 = vld [vmem:[%s3 + $0x70] sm:$0xff]
        %v4994 = vld [vmem:[%s3 + $0x78] sm:$0xff]
        %v4995 = vld [vmem:[%s3 + $0x80] sm:$0xff]
        %v4996 = vld [vmem:[%s3 + $0x88] sm:$0xff]
        %v4997 = vld [vmem:[%s3 + $0x90] sm:$0xff]
        %v4998 = vld [vmem:[%s3 + $0x98] sm:$0xff]
        %v4999 = vld [vmem:[%s3 + $0xa0] sm:$0xff]
        %v5000 = vld [vmem:[%s3 + $0xa8] sm:$0xff]
        %v5001 = vld [vmem:[%s3 + $0xb0] sm:$0xff]
        %v5002 = vld [vmem:[%s3 + $0xb8] sm:$0xff]
        %v5003 = vld [vmem:[%s3 + $0xc0] sm:$0xff]
        %v5004 = vld [vmem:[%s3 + $0xc8] sm:$0xff]
        %v5005 = vld [vmem:[%s3 + $0xd0] sm:$0xff]
        %v5006 = vld [vmem:[%s3 + $0xd8] sm:$0xff]
        %v5007 = vld [vmem:[%s3 + $0xe0] sm:$0xff]
        %v5008 = vld [vmem:[%s3 + $0xe8] sm:$0xff]
        %v5009 = vld [vmem:[%s3 + $0xf0] sm:$0xff]
        %v5010 = vld [vmem:[%s3 + $0xf8] sm:$0xff]
        %v5011 = vld [vmem:[%s3 + $0x100] sm:$0xff]
        %v5012 = vld [vmem:[%s3 + $0x108] sm:$0xff]
        %v5013 = vld [vmem:[%s3 + $0x110] sm:$0xff]
        %v5014 = vld [vmem:[%s3 + $0x118] sm:$0xff]
        %v5015 = vld [vmem:[%s3 + $0x120] sm:$0xff]
        %v5016 = vld [vmem:[%s3 + $0x128] sm:$0xff]
        %v5017 = vld [vmem:[%s3 + $0x130] sm:$0xff]
        %v5018 = vld [vmem:[%s3 + $0x138] sm:$0xff]
        %v5019 = vld [vmem:[%s3 + $0x140] sm:$0xff]
        %v5020 = vld [vmem:[%s3 + $0x148] sm:$0xff]
        %v5021 = vld [vmem:[%s3 + $0x150] sm:$0xff]
        %v5022 = vld [vmem:[%s3 + $0x158] sm:$0xff]
        %v5023 = vld [vmem:[%s3 + $0x160] sm:$0xff]
        %v5024 = vld [vmem:[%s3 + $0x168] sm:$0xff]
        %v5025 = vld [vmem:[%s3 + $0x170] sm:$0xff]
        %v5026 = vld [vmem:[%s3 + $0x178] sm:$0xff]
        %v5027 = vld [vmem:[%s3488] sm:$0xff]
        %v5028 = vld [vmem:[%s3488 + $0x8] sm:$0xff]
        %v5029 = vld [vmem:[%s3488 + $0x10] sm:$0x3]
        %v5030 = vld [vmem:[%s3488 + $0x18] sm:$0xff]
        %v5031 = vld [vmem:[%s3488 + $0x20] sm:$0xff]
        %v5032 = vld [vmem:[%s3488 + $0x28] sm:$0x3]
        %v5033 = vld [vmem:[%s3488 + $0x30] sm:$0xff]
        %v5034 = vld [vmem:[%s3488 + $0x38] sm:$0xff]
        %v5035 = vld [vmem:[%s3488 + $0x40] sm:$0x3]
        %v5036 = vld [vmem:[%s3488 + $0x48] sm:$0xff]
        %v5037 = vld [vmem:[%s3488 + $0x50] sm:$0xff]
        %v5038 = vld [vmem:[%s3488 + $0x58] sm:$0x3]
        %v5039 = vld [vmem:[%s3488 + $0x60] sm:$0xff]
        %v5040 = vld [vmem:[%s3488 + $0x68] sm:$0xff]
        %v5041 = vld [vmem:[%s3488 + $0x70] sm:$0x3]
        %v5042 = vld [vmem:[%s3488 + $0x78] sm:$0xff]
        %v5043 = vld [vmem:[%s3488 + $0x80] sm:$0xff]
        %v5044 = vld [vmem:[%s3488 + $0x88] sm:$0x3]
        %v5045 = vld [vmem:[%s3488 + $0x90] sm:$0xff]
        %v5046 = vld [vmem:[%s3488 + $0x98] sm:$0xff]
        %v5047 = vld [vmem:[%s3488 + $0xa0] sm:$0x3]
        %v5048 = vld [vmem:[%s3488 + $0xa8] sm:$0xff]
        %v5049 = vld [vmem:[%s3488 + $0xb0] sm:$0xff]
        %v5050 = vld [vmem:[%s3488 + $0xb8] sm:$0x3]
        %v5075 = vrot.slane %v5027, 1
        %v5076 = vrot.slane %v5028, 1
        %v5077 = vsel %vm541, %v5075, %v5076
        %v5078 = vrot.slane %v5029, 1
        %v5079 = vsel %vm541, %v5076, %v5078
        %v5080 = vrot.slane %v5030, 1
        %v5081 = vrot.slane %v5031, 1
        %v5082 = vsel %vm541, %v5080, %v5081
        %v5083 = vrot.slane %v5032, 1
        %v5084 = vsel %vm541, %v5081, %v5083
        %v5085 = vrot.slane %v5033, 1
        %v5086 = vrot.slane %v5034, 1
        %v5087 = vsel %vm541, %v5085, %v5086
        %v5088 = vrot.slane %v5035, 1
        %v5089 = vsel %vm541, %v5086, %v5088
        %v5090 = vrot.slane %v5036, 1
        %v5091 = vrot.slane %v5037, 1
        %v5092 = vsel %vm541, %v5090, %v5091
        %v5093 = vrot.slane %v5038, 1
        %v5094 = vsel %vm541, %v5091, %v5093
        %v5095 = vrot.slane %v5039, 1
        %v5096 = vrot.slane %v5040, 1
        %v5097 = vsel %vm541, %v5095, %v5096
        %v5098 = vrot.slane %v5041, 1
        %v5099 = vsel %vm541, %v5096, %v5098
        %v5100 = vrot.slane %v5042, 1
        %v5101 = vrot.slane %v5043, 1
        %v5102 = vsel %vm541, %v5100, %v5101
        %v5103 = vrot.slane %v5044, 1
        %v5104 = vsel %vm541, %v5101, %v5103
        %v5105 = vrot.slane %v5045, 1
        %v5106 = vrot.slane %v5046, 1
        %v5107 = vsel %vm541, %v5105, %v5106
        %v5108 = vrot.slane %v5047, 1
        %v5109 = vsel %vm541, %v5106, %v5108
        %v5110 = vrot.slane %v5048, 1
        %v5111 = vrot.slane %v5049, 1
        %v5112 = vsel %vm541, %v5110, %v5111
        %v5113 = vrot.slane %v5050, 1
        %v5114 = vsel %vm541, %v5111, %v5113
        %v5131 = vrot.slane %v5027, 2
        %v5132 = vrot.slane %v5028, 2
        %v5133 = vsel %vm783, %v5131, %v5132
        %v5134 = vrot.slane %v5029, 2
        %v5135 = vsel %vm783, %v5132, %v5134
        %v5136 = vrot.slane %v5030, 2
        %v5137 = vrot.slane %v5031, 2
        %v5138 = vsel %vm783, %v5136, %v5137
        %v5139 = vrot.slane %v5032, 2
        %v5140 = vsel %vm783, %v5137, %v5139
        %v5141 = vrot.slane %v5033, 2
        %v5142 = vrot.slane %v5034, 2
        %v5143 = vsel %vm783, %v5141, %v5142
        %v5144 = vrot.slane %v5035, 2
        %v5145 = vsel %vm783, %v5142, %v5144
        %v5146 = vrot.slane %v5036, 2
        %v5147 = vrot.slane %v5037, 2
        %v5148 = vsel %vm783, %v5146, %v5147
        %v5149 = vrot.slane %v5038, 2
        %v5150 = vsel %vm783, %v5147, %v5149
        %v5151 = vrot.slane %v5039, 2
        %v5152 = vrot.slane %v5040, 2
        %v5153 = vsel %vm783, %v5151, %v5152
        %v5154 = vrot.slane %v5041, 2
        %v5155 = vsel %vm783, %v5152, %v5154
        %v5156 = vrot.slane %v5042, 2
        %v5157 = vrot.slane %v5043, 2
        %v5158 = vsel %vm783, %v5156, %v5157
        %v5159 = vrot.slane %v5044, 2
        %v5160 = vsel %vm783, %v5157, %v5159
        %v5161 = vrot.slane %v5045, 2
        %v5162 = vrot.slane %v5046, 2
        %v5163 = vsel %vm783, %v5161, %v5162
        %v5164 = vrot.slane %v5047, 2
        %v5165 = vsel %vm783, %v5162, %v5164
        %v5166 = vrot.slane %v5048, 2
        %v5167 = vrot.slane %v5049, 2
        %v5168 = vsel %vm783, %v5166, %v5167
        %v5169 = vrot.slane %v5050, 2
        %v5170 = vsel %vm783, %v5167, %v5169
        %v5187 = vld [vmem:[%s3874] sm:$0xff]
        %v5188 = vld [vmem:[%s3874 + $0x8] sm:$0xff]
        %v5189 = vld [vmem:[%s3874 + $0x10] sm:$0xff]
        %v5190 = vld [vmem:[%s3874 + $0x18] sm:$0xff]
        %v5191 = vld [vmem:[%s3874 + $0x20] sm:$0xff]
        %v5192 = vld [vmem:[%s3874 + $0x28] sm:$0xff]
        %v5193 = vld [vmem:[%s3874 + $0x30] sm:$0xff]
        %v5194 = vld [vmem:[%s3874 + $0x38] sm:$0xff]
        %v5195 = vld [vmem:[%s3874 + $0x40] sm:$0xff]
        %v5196 = vld [vmem:[%s3874 + $0x48] sm:$0xff]
        %v5197 = vld [vmem:[%s3874 + $0x50] sm:$0xff]
        %v5198 = vld [vmem:[%s3874 + $0x58] sm:$0xff]
        %v5199 = vld [vmem:[%s3874 + $0x60] sm:$0xff]
        %v5200 = vld [vmem:[%s3874 + $0x68] sm:$0xff]
        %v5201 = vld [vmem:[%s3874 + $0x70] sm:$0xff]
        %v5202 = vld [vmem:[%s3874 + $0x78] sm:$0xff]
        %v5203 = vld [vmem:[%s3874 + $0x80] sm:$0xff]
        %v5204 = vld [vmem:[%s3874 + $0x88] sm:$0xff]
        %v5205 = vld [vmem:[%s3874 + $0x90] sm:$0xff]
        %v5206 = vld [vmem:[%s3874 + $0x98] sm:$0xff]
        %v5207 = vld [vmem:[%s3874 + $0xa0] sm:$0xff]
        %v5208 = vld [vmem:[%s3874 + $0xa8] sm:$0xff]
        %v5209 = vld [vmem:[%s3874 + $0xb0] sm:$0xff]
        %v5210 = vld [vmem:[%s3874 + $0xb8] sm:$0xff]
        %v5211 = vld [vmem:[%s3874 + $0xc0] sm:$0xff]
        %v5212 = vld [vmem:[%s3874 + $0xc8] sm:$0xff]
        %v5213 = vld [vmem:[%s3874 + $0xd0] sm:$0xff]
        %v5214 = vld [vmem:[%s3874 + $0xd8] sm:$0xff]
        %v5215 = vld [vmem:[%s3874 + $0xe0] sm:$0xff]
        %v5216 = vld [vmem:[%s3874 + $0xe8] sm:$0xff]
        %v5217 = vld [vmem:[%s3874 + $0xf0] sm:$0xff]
        %v5218 = vld [vmem:[%s3874 + $0xf8] sm:$0xff]
        %v5219 = vld [vmem:[%s3874 + $0x100] sm:$0xff]
        %v5220 = vld [vmem:[%s3874 + $0x108] sm:$0xff]
        %v5221 = vld [vmem:[%s3874 + $0x110] sm:$0xff]
        %v5222 = vld [vmem:[%s3874 + $0x118] sm:$0xff]
        %v5223 = vld [vmem:[%s3874 + $0x120] sm:$0xff]
        %v5224 = vld [vmem:[%s3874 + $0x128] sm:$0xff]
        %v5225 = vld [vmem:[%s3874 + $0x130] sm:$0xff]
        %v5226 = vld [vmem:[%s3874 + $0x138] sm:$0xff]
        %v5227 = vld [vmem:[%s3874 + $0x140] sm:$0xff]
        %v5228 = vld [vmem:[%s3874 + $0x148] sm:$0xff]
        %v5229 = vld [vmem:[%s3874 + $0x150] sm:$0xff]
        %v5230 = vld [vmem:[%s3874 + $0x158] sm:$0xff]
        %v5231 = vld [vmem:[%s3874 + $0x160] sm:$0xff]
        %v5232 = vld [vmem:[%s3874 + $0x168] sm:$0xff]
        %v5233 = vld [vmem:[%s3874 + $0x170] sm:$0xff]
        %v5234 = vld [vmem:[%s3874 + $0x178] sm:$0xff]
        %5235 = vmatpush.msra.mxu0 %v5202
        %5236 = vmatpush.msra.mxu0 %v5201
        %5237 = vmatpush.msra.mxu0 %v5200
        %5238 = vmatpush.msra.mxu0 %v5199
        %5239 = vmatpush.msra.mxu0 %v5198
        %5240 = vmatpush.msra.mxu0 %v5197
        %5241 = vmatpush.msra.mxu0 %v5196
        %5242 = vmatpush.msra.mxu0 %v5195
        %5243 = vmatpush.msra.mxu0 %v5194
        %5244 = vmatpush.msra.mxu0 %v5193
        %5245 = vmatpush.msra.mxu0 %v5192
        %5246 = vmatpush.msra.mxu0 %v5191
        %5247 = vmatpush.msra.mxu0 %v5190
        %5248 = vmatpush.msra.mxu0 %v5189
        %5249 = vmatpush.msra.mxu0 %v5188
        %5250 = vmatpush.msra.mxu0 %v5187
        %5251 = vmatmul.f32.gmra.mxu0 %v5027
        %v5252 = vpop.f32.mrf.mxu0
        %v5253 = vadd.f32 0.0, %v5252
        %5254 = vmatmul.f32.gmra.mxu0 %v5028
        %v5255 = vpop.f32.mrf.mxu0
        %v5256 = vadd.f32 0.0, %v5255
        %5257 = vmatmul.f32.gmra.mxu0 %v5030
        %v5258 = vpop.f32.mrf.mxu0
        %v5259 = vadd.f32 0.0, %v5258
        %5260 = vmatmul.f32.gmra.mxu0 %v5031
        %v5261 = vpop.f32.mrf.mxu0
        %v5262 = vadd.f32 0.0, %v5261
        %5263 = vmatmul.f32.gmra.mxu0 %v5033
        %v5264 = vpop.f32.mrf.mxu0
        %v5265 = vadd.f32 0.0, %v5264
        %5266 = vmatmul.f32.gmra.mxu0 %v5034
        %v5267 = vpop.f32.mrf.mxu0
        %v5268 = vadd.f32 0.0, %v5267
        %5269 = vmatmul.f32.gmra.mxu0 %v5036
        %v5270 = vpop.f32.mrf.mxu0
        %v5271 = vadd.f32 0.0, %v5270
        %5272 = vmatmul.f32.gmra.mxu0 %v5037
        %v5273 = vpop.f32.mrf.mxu0
        %v5274 = vadd.f32 0.0, %v5273
        %5275 = vmatmul.f32.gmra.mxu0 %v5039
        %v5276 = vpop.f32.mrf.mxu0
        %v5277 = vadd.f32 0.0, %v5276
        %5278 = vmatmul.f32.gmra.mxu0 %v5040
        %v5279 = vpop.f32.mrf.mxu0
        %v5280 = vadd.f32 0.0, %v5279
        %5281 = vmatmul.f32.gmra.mxu0 %v5042
        %v5282 = vpop.f32.mrf.mxu0
        %v5283 = vadd.f32 0.0, %v5282
        %5284 = vmatmul.f32.gmra.mxu0 %v5043
        %v5285 = vpop.f32.mrf.mxu0
        %v5286 = vadd.f32 0.0, %v5285
        %5287 = vmatmul.f32.gmra.mxu0 %v5045
        %v5288 = vpop.f32.mrf.mxu0
        %v5289 = vadd.f32 0.0, %v5288
        %5290 = vmatmul.f32.gmra.mxu0 %v5046
        %v5291 = vpop.f32.mrf.mxu0
        %v5292 = vadd.f32 0.0, %v5291
        %5293 = vmatmul.f32.gmra.mxu0 %v5048
        %v5294 = vpop.f32.mrf.mxu0
        %v5295 = vadd.f32 0.0, %v5294
        %5296 = vmatmul.f32.gmra.mxu0 %v5049
        %v5297 = vpop.f32.mrf.mxu0
        %v5298 = vadd.f32 0.0, %v5297
        %5299 = vdwg.mxu0
        %5300 = vmatpush.msra.mxu0 %v5218
        %5301 = vmatpush.msra.mxu0 %v5217
        %5302 = vmatpush.msra.mxu0 %v5216
        %5303 = vmatpush.msra.mxu0 %v5215
        %5304 = vmatpush.msra.mxu0 %v5214
        %5305 = vmatpush.msra.mxu0 %v5213
        %5306 = vmatpush.msra.mxu0 %v5212
        %5307 = vmatpush.msra.mxu0 %v5211
        %5308 = vmatpush.msra.mxu0 %v5210
        %5309 = vmatpush.msra.mxu0 %v5209
        %5310 = vmatpush.msra.mxu0 %v5208
        %5311 = vmatpush.msra.mxu0 %v5207
        %5312 = vmatpush.msra.mxu0 %v5206
        %5313 = vmatpush.msra.mxu0 %v5205
        %5314 = vmatpush.msra.mxu0 %v5204
        %5315 = vmatpush.msra.mxu0 %v5203
        %5316 = vmatmul.f32.gmra.mxu0 %v5077
        %v5317 = vpop.f32.mrf.mxu0
        %v5318 = vadd.f32 %v5253, %v5317
        %5319 = vmatmul.f32.gmra.mxu0 %v5079
        %v5320 = vpop.f32.mrf.mxu0
        %v5321 = vadd.f32 %v5256, %v5320
        %5322 = vmatmul.f32.gmra.mxu0 %v5082
        %v5323 = vpop.f32.mrf.mxu0
        %v5324 = vadd.f32 %v5259, %v5323
        %5325 = vmatmul.f32.gmra.mxu0 %v5084
        %v5326 = vpop.f32.mrf.mxu0
        %v5327 = vadd.f32 %v5262, %v5326
        %5328 = vmatmul.f32.gmra.mxu0 %v5087
        %v5329 = vpop.f32.mrf.mxu0
        %v5330 = vadd.f32 %v5265, %v5329
        %5331 = vmatmul.f32.gmra.mxu0 %v5089
        %v5332 = vpop.f32.mrf.mxu0
        %v5333 = vadd.f32 %v5268, %v5332
        %5334 = vmatmul.f32.gmra.mxu0 %v5092
        %v5335 = vpop.f32.mrf.mxu0
        %v5336 = vadd.f32 %v5271, %v5335
        %5337 = vmatmul.f32.gmra.mxu0 %v5094
        %v5338 = vpop.f32.mrf.mxu0
        %v5339 = vadd.f32 %v5274, %v5338
        %5340 = vmatmul.f32.gmra.mxu0 %v5097
        %v5341 = vpop.f32.mrf.mxu0
        %v5342 = vadd.f32 %v5277, %v5341
        %5343 = vmatmul.f32.gmra.mxu0 %v5099
        %v5344 = vpop.f32.mrf.mxu0
        %v5345 = vadd.f32 %v5280, %v5344
        %5346 = vmatmul.f32.gmra.mxu0 %v5102
        %v5347 = vpop.f32.mrf.mxu0
        %v5348 = vadd.f32 %v5283, %v5347
        %5349 = vmatmul.f32.gmra.mxu0 %v5104
        %v5350 = vpop.f32.mrf.mxu0
        %v5351 = vadd.f32 %v5286, %v5350
        %5352 = vmatmul.f32.gmra.mxu0 %v5107
        %v5353 = vpop.f32.mrf.mxu0
        %v5354 = vadd.f32 %v5289, %v5353
        %5355 = vmatmul.f32.gmra.mxu0 %v5109
        %v5356 = vpop.f32.mrf.mxu0
        %v5357 = vadd.f32 %v5292, %v5356
        %5358 = vmatmul.f32.gmra.mxu0 %v5112
        %v5359 = vpop.f32.mrf.mxu0
        %v5360 = vadd.f32 %v5295, %v5359
        %5361 = vmatmul.f32.gmra.mxu0 %v5114
        %v5362 = vpop.f32.mrf.mxu0
        %v5363 = vadd.f32 %v5298, %v5362
        %5364 = vdwg.mxu0
        %5365 = vmatpush.msra.mxu0 %v5234
        %5366 = vmatpush.msra.mxu0 %v5233
        %5367 = vmatpush.msra.mxu0 %v5232
        %5368 = vmatpush.msra.mxu0 %v5231
        %5369 = vmatpush.msra.mxu0 %v5230
        %5370 = vmatpush.msra.mxu0 %v5229
        %5371 = vmatpush.msra.mxu0 %v5228
        %5372 = vmatpush.msra.mxu0 %v5227
        %5373 = vmatpush.msra.mxu0 %v5226
        %5374 = vmatpush.msra.mxu0 %v5225
        %5375 = vmatpush.msra.mxu0 %v5224
        %5376 = vmatpush.msra.mxu0 %v5223
        %5377 = vmatpush.msra.mxu0 %v5222
        %5378 = vmatpush.msra.mxu0 %v5221
        %5379 = vmatpush.msra.mxu0 %v5220
        %5380 = vmatpush.msra.mxu0 %v5219
        %5381 = vmatmul.f32.gmra.mxu0 %v5133
        %v5382 = vpop.f32.mrf.mxu0
        %v5383 = vadd.f32 %v5318, %v5382
        %5384 = vmatmul.f32.gmra.mxu0 %v5135
        %v5385 = vpop.f32.mrf.mxu0
        %v5386 = vadd.f32 %v5321, %v5385
        %5387 = vmatmul.f32.gmra.mxu0 %v5138
        %v5388 = vpop.f32.mrf.mxu0
        %v5389 = vadd.f32 %v5324, %v5388
        %5390 = vmatmul.f32.gmra.mxu0 %v5140
        %v5391 = vpop.f32.mrf.mxu0
        %v5392 = vadd.f32 %v5327, %v5391
        %5393 = vmatmul.f32.gmra.mxu0 %v5143
        %v5394 = vpop.f32.mrf.mxu0
        %v5395 = vadd.f32 %v5330, %v5394
        %5396 = vmatmul.f32.gmra.mxu0 %v5145
        %v5397 = vpop.f32.mrf.mxu0
        %v5398 = vadd.f32 %v5333, %v5397
        %5399 = vmatmul.f32.gmra.mxu0 %v5148
        %v5400 = vpop.f32.mrf.mxu0
        %v5401 = vadd.f32 %v5336, %v5400
        %5402 = vmatmul.f32.gmra.mxu0 %v5150
        %v5403 = vpop.f32.mrf.mxu0
        %v5404 = vadd.f32 %v5339, %v5403
        %5405 = vmatmul.f32.gmra.mxu0 %v5153
        %v5406 = vpop.f32.mrf.mxu0
        %v5407 = vadd.f32 %v5342, %v5406
        %5408 = vmatmul.f32.gmra.mxu0 %v5155
        %v5409 = vpop.f32.mrf.mxu0
        %v5410 = vadd.f32 %v5345, %v5409
        %5411 = vmatmul.f32.gmra.mxu0 %v5158
        %v5412 = vpop.f32.mrf.mxu0
        %v5413 = vadd.f32 %v5348, %v5412
        %5414 = vmatmul.f32.gmra.mxu0 %v5160
        %v5415 = vpop.f32.mrf.mxu0
        %v5416 = vadd.f32 %v5351, %v5415
        %5417 = vmatmul.f32.gmra.mxu0 %v5163
        %v5418 = vpop.f32.mrf.mxu0
        %v5419 = vadd.f32 %v5354, %v5418
        %5420 = vmatmul.f32.gmra.mxu0 %v5165
        %v5421 = vpop.f32.mrf.mxu0
        %v5422 = vadd.f32 %v5357, %v5421
        %5423 = vmatmul.f32.gmra.mxu0 %v5168
        %v5424 = vpop.f32.mrf.mxu0
        %v5425 = vadd.f32 %v5360, %v5424
        %5426 = vmatmul.f32.gmra.mxu0 %v5170
        %v5427 = vpop.f32.mrf.mxu0
        %v5428 = vadd.f32 %v5363, %v5427
        %5429 = vdwg.mxu0
        %5430 = vmatpush.msra.mxu0 %v4994
        %5431 = vmatpush.msra.mxu0 %v4993
        %5432 = vmatpush.msra.mxu0 %v4992
        %5433 = vmatpush.msra.mxu0 %v4991
        %5434 = vmatpush.msra.mxu0 %v4990
        %5435 = vmatpush.msra.mxu0 %v4989
        %5436 = vmatpush.msra.mxu0 %v4988
        %5437 = vmatpush.msra.mxu0 %v4987
        %5438 = vmatpush.msra.mxu0 %v4986
        %5439 = vmatpush.msra.mxu0 %v4985
        %5440 = vmatpush.msra.mxu0 %v4984
        %5441 = vmatpush.msra.mxu0 %v4983
        %5442 = vmatpush.msra.mxu0 %v4982
        %5443 = vmatpush.msra.mxu0 %v4981
        %5444 = vmatpush.msra.mxu0 %v4980
        %5445 = vmatpush.msra.mxu0 %v4979
        %5446 = vmatmul.f32.gmra.mxu0 %v4819
        %v5447 = vpop.f32.mrf.mxu0
        %v5448 = vadd.f32 %v5383, %v5447
        %5449 = vmatmul.f32.gmra.mxu0 %v4820
        %v5450 = vpop.f32.mrf.mxu0
        %v5451 = vadd.f32 %v5386, %v5450
        %5452 = vmatmul.f32.gmra.mxu0 %v4822
        %v5453 = vpop.f32.mrf.mxu0
        %v5454 = vadd.f32 %v5389, %v5453
        %5455 = vmatmul.f32.gmra.mxu0 %v4823
        %v5456 = vpop.f32.mrf.mxu0
        %v5457 = vadd.f32 %v5392, %v5456
        %5458 = vmatmul.f32.gmra.mxu0 %v4825
        %v5459 = vpop.f32.mrf.mxu0
        %v5460 = vadd.f32 %v5395, %v5459
        %5461 = vmatmul.f32.gmra.mxu0 %v4826
        %v5462 = vpop.f32.mrf.mxu0
        %v5463 = vadd.f32 %v5398, %v5462
        %5464 = vmatmul.f32.gmra.mxu0 %v4828
        %v5465 = vpop.f32.mrf.mxu0
        %v5466 = vadd.f32 %v5401, %v5465
        %5467 = vmatmul.f32.gmra.mxu0 %v4829
        %v5468 = vpop.f32.mrf.mxu0
        %v5469 = vadd.f32 %v5404, %v5468
        %5470 = vmatmul.f32.gmra.mxu0 %v4831
        %v5471 = vpop.f32.mrf.mxu0
        %v5472 = vadd.f32 %v5407, %v5471
        %5473 = vmatmul.f32.gmra.mxu0 %v4832
        %v5474 = vpop.f32.mrf.mxu0
        %v5475 = vadd.f32 %v5410, %v5474
        %5476 = vmatmul.f32.gmra.mxu0 %v4834
        %v5477 = vpop.f32.mrf.mxu0
        %v5478 = vadd.f32 %v5413, %v5477
        %5479 = vmatmul.f32.gmra.mxu0 %v4835
        %v5480 = vpop.f32.mrf.mxu0
        %v5481 = vadd.f32 %v5416, %v5480
        %5482 = vmatmul.f32.gmra.mxu0 %v4837
        %v5483 = vpop.f32.mrf.mxu0
        %v5484 = vadd.f32 %v5419, %v5483
        %5485 = vmatmul.f32.gmra.mxu0 %v4838
        %v5486 = vpop.f32.mrf.mxu0
        %v5487 = vadd.f32 %v5422, %v5486
        %5488 = vmatmul.f32.gmra.mxu0 %v4840
        %v5489 = vpop.f32.mrf.mxu0
        %v5490 = vadd.f32 %v5425, %v5489
        %5491 = vmatmul.f32.gmra.mxu0 %v4841
        %v5492 = vpop.f32.mrf.mxu0
        %v5493 = vadd.f32 %v5428, %v5492
        %5494 = vdwg.mxu0
        %5495 = vmatpush.msra.mxu0 %v5010
        %5496 = vmatpush.msra.mxu0 %v5009
        %5497 = vmatpush.msra.mxu0 %v5008
        %5498 = vmatpush.msra.mxu0 %v5007
        %5499 = vmatpush.msra.mxu0 %v5006
        %5500 = vmatpush.msra.mxu0 %v5005
        %5501 = vmatpush.msra.mxu0 %v5004
        %5502 = vmatpush.msra.mxu0 %v5003
        %5503 = vmatpush.msra.mxu0 %v5002
        %5504 = vmatpush.msra.mxu0 %v5001
        %5505 = vmatpush.msra.mxu0 %v5000
        %5506 = vmatpush.msra.mxu0 %v4999
        %5507 = vmatpush.msra.mxu0 %v4998
        %5508 = vmatpush.msra.mxu0 %v4997
        %5509 = vmatpush.msra.mxu0 %v4996
        %5510 = vmatpush.msra.mxu0 %v4995
        %5511 = vmatmul.f32.gmra.mxu0 %v4869
        %v5512 = vpop.f32.mrf.mxu0
        %v5513 = vadd.f32 %v5448, %v5512
        %5514 = vmatmul.f32.gmra.mxu0 %v4871
        %v5515 = vpop.f32.mrf.mxu0
        %v5516 = vadd.f32 %v5451, %v5515
        %5517 = vmatmul.f32.gmra.mxu0 %v4874
        %v5518 = vpop.f32.mrf.mxu0
        %v5519 = vadd.f32 %v5454, %v5518
        %5520 = vmatmul.f32.gmra.mxu0 %v4876
        %v5521 = vpop.f32.mrf.mxu0
        %v5522 = vadd.f32 %v5457, %v5521
        %5523 = vmatmul.f32.gmra.mxu0 %v4879
        %v5524 = vpop.f32.mrf.mxu0
        %v5525 = vadd.f32 %v5460, %v5524
        %5526 = vmatmul.f32.gmra.mxu0 %v4881
        %v5527 = vpop.f32.mrf.mxu0
        %v5528 = vadd.f32 %v5463, %v5527
        %5529 = vmatmul.f32.gmra.mxu0 %v4884
        %v5530 = vpop.f32.mrf.mxu0
        %v5531 = vadd.f32 %v5466, %v5530
        %5532 = vmatmul.f32.gmra.mxu0 %v4886
        %v5533 = vpop.f32.mrf.mxu0
        %v5534 = vadd.f32 %v5469, %v5533
        %5535 = vmatmul.f32.gmra.mxu0 %v4889
        %v5536 = vpop.f32.mrf.mxu0
        %v5537 = vadd.f32 %v5472, %v5536
        %5538 = vmatmul.f32.gmra.mxu0 %v4891
        %v5539 = vpop.f32.mrf.mxu0
        %v5540 = vadd.f32 %v5475, %v5539
        %5541 = vmatmul.f32.gmra.mxu0 %v4894
        %v5542 = vpop.f32.mrf.mxu0
        %v5543 = vadd.f32 %v5478, %v5542
        %5544 = vmatmul.f32.gmra.mxu0 %v4896
        %v5545 = vpop.f32.mrf.mxu0
        %v5546 = vadd.f32 %v5481, %v5545
        %5547 = vmatmul.f32.gmra.mxu0 %v4899
        %v5548 = vpop.f32.mrf.mxu0
        %v5549 = vadd.f32 %v5484, %v5548
        %5550 = vmatmul.f32.gmra.mxu0 %v4901
        %v5551 = vpop.f32.mrf.mxu0
        %v5552 = vadd.f32 %v5487, %v5551
        %5553 = vmatmul.f32.gmra.mxu0 %v4904
        %v5554 = vpop.f32.mrf.mxu0
        %v5555 = vadd.f32 %v5490, %v5554
        %5556 = vmatmul.f32.gmra.mxu0 %v4906
        %v5557 = vpop.f32.mrf.mxu0
        %v5558 = vadd.f32 %v5493, %v5557
        %5559 = vdwg.mxu0
        %5560 = vmatpush.msra.mxu0 %v5026
        %5561 = vmatpush.msra.mxu0 %v5025
        %5562 = vmatpush.msra.mxu0 %v5024
        %5563 = vmatpush.msra.mxu0 %v5023
        %5564 = vmatpush.msra.mxu0 %v5022
        %5565 = vmatpush.msra.mxu0 %v5021
        %5566 = vmatpush.msra.mxu0 %v5020
        %5567 = vmatpush.msra.mxu0 %v5019
        %5568 = vmatpush.msra.mxu0 %v5018
        %5569 = vmatpush.msra.mxu0 %v5017
        %5570 = vmatpush.msra.mxu0 %v5016
        %5571 = vmatpush.msra.mxu0 %v5015
        %5572 = vmatpush.msra.mxu0 %v5014
        %5573 = vmatpush.msra.mxu0 %v5013
        %5574 = vmatpush.msra.mxu0 %v5012
        %5575 = vmatpush.msra.mxu0 %v5011
        %5576 = vmatmul.f32.gmra.mxu0 %v4925
        %v5577 = vpop.f32.mrf.mxu0
        %v5578 = vadd.f32 %v5513, %v5577
        %5579 = vmatmul.f32.gmra.mxu0 %v4927
        %v5580 = vpop.f32.mrf.mxu0
        %v5581 = vadd.f32 %v5516, %v5580
        %5582 = vmatmul.f32.gmra.mxu0 %v4930
        %v5583 = vpop.f32.mrf.mxu0
        %v5584 = vadd.f32 %v5519, %v5583
        %5585 = vmatmul.f32.gmra.mxu0 %v4932
        %v5586 = vpop.f32.mrf.mxu0
        %v5587 = vadd.f32 %v5522, %v5586
        %5588 = vmatmul.f32.gmra.mxu0 %v4935
        %v5589 = vpop.f32.mrf.mxu0
        %v5590 = vadd.f32 %v5525, %v5589
        %5591 = vmatmul.f32.gmra.mxu0 %v4937
        %v5592 = vpop.f32.mrf.mxu0
        %v5593 = vadd.f32 %v5528, %v5592
        %5594 = vmatmul.f32.gmra.mxu0 %v4940
        %v5595 = vpop.f32.mrf.mxu0
        %v5596 = vadd.f32 %v5531, %v5595
        %5597 = vmatmul.f32.gmra.mxu0 %v4942
        %v5598 = vpop.f32.mrf.mxu0
        %v5599 = vadd.f32 %v5534, %v5598
        %5600 = vmatmul.f32.gmra.mxu0 %v4945
        %v5601 = vpop.f32.mrf.mxu0
        %v5602 = vadd.f32 %v5537, %v5601
        %5603 = vmatmul.f32.gmra.mxu0 %v4947
        %v5604 = vpop.f32.mrf.mxu0
        %v5605 = vadd.f32 %v5540, %v5604
        %5606 = vmatmul.f32.gmra.mxu0 %v4950
        %v5607 = vpop.f32.mrf.mxu0
        %v5608 = vadd.f32 %v5543, %v5607
        %5609 = vmatmul.f32.gmra.mxu0 %v4952
        %v5610 = vpop.f32.mrf.mxu0
        %v5611 = vadd.f32 %v5546, %v5610
        %5612 = vmatmul.f32.gmra.mxu0 %v4955
        %v5613 = vpop.f32.mrf.mxu0
        %v5614 = vadd.f32 %v5549, %v5613
        %5615 = vmatmul.f32.gmra.mxu0 %v4957
        %v5616 = vpop.f32.mrf.mxu0
        %v5617 = vadd.f32 %v5552, %v5616
        %5618 = vmatmul.f32.gmra.mxu0 %v4960
        %v5619 = vpop.f32.mrf.mxu0
        %v5620 = vadd.f32 %v5555, %v5619
        %5621 = vmatmul.f32.gmra.mxu0 %v4962
        %v5622 = vpop.f32.mrf.mxu0
        %v5623 = vadd.f32 %v5558, %v5622
        %5624 = vdwg.mxu0
        %s5625 = scalar_lea.vmem [#allocation3], 240
        %v5626 = vld [vmem:[%s5625] sm:$0xff]
        %v5627 = vld [vmem:[%s5625 + $0x8] sm:$0xff]
        %v5628 = vld [vmem:[%s5625 + $0x10] sm:$0x3]
        %v5629 = vld [vmem:[%s5625 + $0x18] sm:$0xff]
        %v5630 = vld [vmem:[%s5625 + $0x20] sm:$0xff]
        %v5631 = vld [vmem:[%s5625 + $0x28] sm:$0x3]
        %v5632 = vld [vmem:[%s5625 + $0x30] sm:$0xff]
        %v5633 = vld [vmem:[%s5625 + $0x38] sm:$0xff]
        %v5634 = vld [vmem:[%s5625 + $0x40] sm:$0x3]
        %v5635 = vld [vmem:[%s5625 + $0x48] sm:$0xff]
        %v5636 = vld [vmem:[%s5625 + $0x50] sm:$0xff]
        %v5637 = vld [vmem:[%s5625 + $0x58] sm:$0x3]
        %v5638 = vld [vmem:[%s5625 + $0x60] sm:$0xff]
        %v5639 = vld [vmem:[%s5625 + $0x68] sm:$0xff]
        %v5640 = vld [vmem:[%s5625 + $0x70] sm:$0x3]
        %v5641 = vld [vmem:[%s5625 + $0x78] sm:$0xff]
        %v5642 = vld [vmem:[%s5625 + $0x80] sm:$0xff]
        %v5643 = vld [vmem:[%s5625 + $0x88] sm:$0x3]
        %v5644 = vld [vmem:[%s5625 + $0x90] sm:$0xff]
        %v5645 = vld [vmem:[%s5625 + $0x98] sm:$0xff]
        %v5646 = vld [vmem:[%s5625 + $0xa0] sm:$0x3]
        %v5647 = vld [vmem:[%s5625 + $0xa8] sm:$0xff]
        %v5648 = vld [vmem:[%s5625 + $0xb0] sm:$0xff]
        %v5649 = vld [vmem:[%s5625 + $0xb8] sm:$0x3]
        %v5674 = vrot.slane %v5626, 1
        %v5675 = vrot.slane %v5627, 1
        %v5676 = vsel %vm541, %v5674, %v5675
        %v5677 = vrot.slane %v5628, 1
        %v5678 = vsel %vm541, %v5675, %v5677
        %v5679 = vrot.slane %v5629, 1
        %v5680 = vrot.slane %v5630, 1
        %v5681 = vsel %vm541, %v5679, %v5680
        %v5682 = vrot.slane %v5631, 1
        %v5683 = vsel %vm541, %v5680, %v5682
        %v5684 = vrot.slane %v5632, 1
        %v5685 = vrot.slane %v5633, 1
        %v5686 = vsel %vm541, %v5684, %v5685
        %v5687 = vrot.slane %v5634, 1
        %v5688 = vsel %vm541, %v5685, %v5687
        %v5689 = vrot.slane %v5635, 1
        %v5690 = vrot.slane %v5636, 1
        %v5691 = vsel %vm541, %v5689, %v5690
        %v5692 = vrot.slane %v5637, 1
        %v5693 = vsel %vm541, %v5690, %v5692
        %v5694 = vrot.slane %v5638, 1
        %v5695 = vrot.slane %v5639, 1
        %v5696 = vsel %vm541, %v5694, %v5695
        %v5697 = vrot.slane %v5640, 1
        %v5698 = vsel %vm541, %v5695, %v5697
        %v5699 = vrot.slane %v5641, 1
        %v5700 = vrot.slane %v5642, 1
        %v5701 = vsel %vm541, %v5699, %v5700
        %v5702 = vrot.slane %v5643, 1
        %v5703 = vsel %vm541, %v5700, %v5702
        %v5704 = vrot.slane %v5644, 1
        %v5705 = vrot.slane %v5645, 1
        %v5706 = vsel %vm541, %v5704, %v5705
        %v5707 = vrot.slane %v5646, 1
        %v5708 = vsel %vm541, %v5705, %v5707
        %v5709 = vrot.slane %v5647, 1
        %v5710 = vrot.slane %v5648, 1
        %v5711 = vsel %vm541, %v5709, %v5710
        %v5712 = vrot.slane %v5649, 1
        %v5713 = vsel %vm541, %v5710, %v5712
        %v5730 = vrot.slane %v5626, 2
        %v5731 = vrot.slane %v5627, 2
        %v5732 = vsel %vm783, %v5730, %v5731
        %v5733 = vrot.slane %v5628, 2
        %v5734 = vsel %vm783, %v5731, %v5733
        %v5735 = vrot.slane %v5629, 2
        %v5736 = vrot.slane %v5630, 2
        %v5737 = vsel %vm783, %v5735, %v5736
        %v5738 = vrot.slane %v5631, 2
        %v5739 = vsel %vm783, %v5736, %v5738
        %v5740 = vrot.slane %v5632, 2
        %v5741 = vrot.slane %v5633, 2
        %v5742 = vsel %vm783, %v5740, %v5741
        %v5743 = vrot.slane %v5634, 2
        %v5744 = vsel %vm783, %v5741, %v5743
        %v5745 = vrot.slane %v5635, 2
        %v5746 = vrot.slane %v5636, 2
        %v5747 = vsel %vm783, %v5745, %v5746
        %v5748 = vrot.slane %v5637, 2
        %v5749 = vsel %vm783, %v5746, %v5748
        %v5750 = vrot.slane %v5638, 2
        %v5751 = vrot.slane %v5639, 2
        %v5752 = vsel %vm783, %v5750, %v5751
        %v5753 = vrot.slane %v5640, 2
        %v5754 = vsel %vm783, %v5751, %v5753
        %v5755 = vrot.slane %v5641, 2
        %v5756 = vrot.slane %v5642, 2
        %v5757 = vsel %vm783, %v5755, %v5756
        %v5758 = vrot.slane %v5643, 2
        %v5759 = vsel %vm783, %v5756, %v5758
        %v5760 = vrot.slane %v5644, 2
        %v5761 = vrot.slane %v5645, 2
        %v5762 = vsel %vm783, %v5760, %v5761
        %v5763 = vrot.slane %v5646, 2
        %v5764 = vsel %vm783, %v5761, %v5763
        %v5765 = vrot.slane %v5647, 2
        %v5766 = vrot.slane %v5648, 2
        %v5767 = vsel %vm783, %v5765, %v5766
        %v5768 = vrot.slane %v5649, 2
        %v5769 = vsel %vm783, %v5766, %v5768
        %v5786 = vld [vmem:[%s4474] sm:$0xff]
        %v5787 = vld [vmem:[%s4474 + $0x8] sm:$0xff]
        %v5788 = vld [vmem:[%s4474 + $0x10] sm:$0xff]
        %v5789 = vld [vmem:[%s4474 + $0x18] sm:$0xff]
        %v5790 = vld [vmem:[%s4474 + $0x20] sm:$0xff]
        %v5791 = vld [vmem:[%s4474 + $0x28] sm:$0xff]
        %v5792 = vld [vmem:[%s4474 + $0x30] sm:$0xff]
        %v5793 = vld [vmem:[%s4474 + $0x38] sm:$0xff]
        %v5794 = vld [vmem:[%s4474 + $0x40] sm:$0xff]
        %v5795 = vld [vmem:[%s4474 + $0x48] sm:$0xff]
        %v5796 = vld [vmem:[%s4474 + $0x50] sm:$0xff]
        %v5797 = vld [vmem:[%s4474 + $0x58] sm:$0xff]
        %v5798 = vld [vmem:[%s4474 + $0x60] sm:$0xff]
        %v5799 = vld [vmem:[%s4474 + $0x68] sm:$0xff]
        %v5800 = vld [vmem:[%s4474 + $0x70] sm:$0xff]
        %v5801 = vld [vmem:[%s4474 + $0x78] sm:$0xff]
        %v5802 = vld [vmem:[%s4474 + $0x80] sm:$0xff]
        %v5803 = vld [vmem:[%s4474 + $0x88] sm:$0xff]
        %v5804 = vld [vmem:[%s4474 + $0x90] sm:$0xff]
        %v5805 = vld [vmem:[%s4474 + $0x98] sm:$0xff]
        %v5806 = vld [vmem:[%s4474 + $0xa0] sm:$0xff]
        %v5807 = vld [vmem:[%s4474 + $0xa8] sm:$0xff]
        %v5808 = vld [vmem:[%s4474 + $0xb0] sm:$0xff]
        %v5809 = vld [vmem:[%s4474 + $0xb8] sm:$0xff]
        %v5810 = vld [vmem:[%s4474 + $0xc0] sm:$0xff]
        %v5811 = vld [vmem:[%s4474 + $0xc8] sm:$0xff]
        %v5812 = vld [vmem:[%s4474 + $0xd0] sm:$0xff]
        %v5813 = vld [vmem:[%s4474 + $0xd8] sm:$0xff]
        %v5814 = vld [vmem:[%s4474 + $0xe0] sm:$0xff]
        %v5815 = vld [vmem:[%s4474 + $0xe8] sm:$0xff]
        %v5816 = vld [vmem:[%s4474 + $0xf0] sm:$0xff]
        %v5817 = vld [vmem:[%s4474 + $0xf8] sm:$0xff]
        %v5818 = vld [vmem:[%s4474 + $0x100] sm:$0xff]
        %v5819 = vld [vmem:[%s4474 + $0x108] sm:$0xff]
        %v5820 = vld [vmem:[%s4474 + $0x110] sm:$0xff]
        %v5821 = vld [vmem:[%s4474 + $0x118] sm:$0xff]
        %v5822 = vld [vmem:[%s4474 + $0x120] sm:$0xff]
        %v5823 = vld [vmem:[%s4474 + $0x128] sm:$0xff]
        %v5824 = vld [vmem:[%s4474 + $0x130] sm:$0xff]
        %v5825 = vld [vmem:[%s4474 + $0x138] sm:$0xff]
        %v5826 = vld [vmem:[%s4474 + $0x140] sm:$0xff]
        %v5827 = vld [vmem:[%s4474 + $0x148] sm:$0xff]
        %v5828 = vld [vmem:[%s4474 + $0x150] sm:$0xff]
        %v5829 = vld [vmem:[%s4474 + $0x158] sm:$0xff]
        %v5830 = vld [vmem:[%s4474 + $0x160] sm:$0xff]
        %v5831 = vld [vmem:[%s4474 + $0x168] sm:$0xff]
        %v5832 = vld [vmem:[%s4474 + $0x170] sm:$0xff]
        %v5833 = vld [vmem:[%s4474 + $0x178] sm:$0xff]
        %5834 = vmatpush.msra.mxu0 %v5801
        %5835 = vmatpush.msra.mxu0 %v5800
        %5836 = vmatpush.msra.mxu0 %v5799
        %5837 = vmatpush.msra.mxu0 %v5798
        %5838 = vmatpush.msra.mxu0 %v5797
        %5839 = vmatpush.msra.mxu0 %v5796
        %5840 = vmatpush.msra.mxu0 %v5795
        %5841 = vmatpush.msra.mxu0 %v5794
        %5842 = vmatpush.msra.mxu0 %v5793
        %5843 = vmatpush.msra.mxu0 %v5792
        %5844 = vmatpush.msra.mxu0 %v5791
        %5845 = vmatpush.msra.mxu0 %v5790
        %5846 = vmatpush.msra.mxu0 %v5789
        %5847 = vmatpush.msra.mxu0 %v5788
        %5848 = vmatpush.msra.mxu0 %v5787
        %5849 = vmatpush.msra.mxu0 %v5786
        %5850 = vmatmul.f32.gmra.mxu0 %v5626
        %v5851 = vpop.f32.mrf.mxu0
        %v5852 = vadd.f32 0.0, %v5851
        %5853 = vmatmul.f32.gmra.mxu0 %v5627
        %v5854 = vpop.f32.mrf.mxu0
        %v5855 = vadd.f32 0.0, %v5854
        %5856 = vmatmul.f32.gmra.mxu0 %v5629
        %v5857 = vpop.f32.mrf.mxu0
        %v5858 = vadd.f32 0.0, %v5857
        %5859 = vmatmul.f32.gmra.mxu0 %v5630
        %v5860 = vpop.f32.mrf.mxu0
        %v5861 = vadd.f32 0.0, %v5860
        %5862 = vmatmul.f32.gmra.mxu0 %v5632
        %v5863 = vpop.f32.mrf.mxu0
        %v5864 = vadd.f32 0.0, %v5863
        %5865 = vmatmul.f32.gmra.mxu0 %v5633
        %v5866 = vpop.f32.mrf.mxu0
        %v5867 = vadd.f32 0.0, %v5866
        %5868 = vmatmul.f32.gmra.mxu0 %v5635
        %v5869 = vpop.f32.mrf.mxu0
        %v5870 = vadd.f32 0.0, %v5869
        %5871 = vmatmul.f32.gmra.mxu0 %v5636
        %v5872 = vpop.f32.mrf.mxu0
        %v5873 = vadd.f32 0.0, %v5872
        %5874 = vmatmul.f32.gmra.mxu0 %v5638
        %v5875 = vpop.f32.mrf.mxu0
        %v5876 = vadd.f32 0.0, %v5875
        %5877 = vmatmul.f32.gmra.mxu0 %v5639
        %v5878 = vpop.f32.mrf.mxu0
        %v5879 = vadd.f32 0.0, %v5878
        %5880 = vmatmul.f32.gmra.mxu0 %v5641
        %v5881 = vpop.f32.mrf.mxu0
        %v5882 = vadd.f32 0.0, %v5881
        %5883 = vmatmul.f32.gmra.mxu0 %v5642
        %v5884 = vpop.f32.mrf.mxu0
        %v5885 = vadd.f32 0.0, %v5884
        %5886 = vmatmul.f32.gmra.mxu0 %v5644
        %v5887 = vpop.f32.mrf.mxu0
        %v5888 = vadd.f32 0.0, %v5887
        %5889 = vmatmul.f32.gmra.mxu0 %v5645
        %v5890 = vpop.f32.mrf.mxu0
        %v5891 = vadd.f32 0.0, %v5890
        %5892 = vmatmul.f32.gmra.mxu0 %v5647
        %v5893 = vpop.f32.mrf.mxu0
        %v5894 = vadd.f32 0.0, %v5893
        %5895 = vmatmul.f32.gmra.mxu0 %v5648
        %v5896 = vpop.f32.mrf.mxu0
        %v5897 = vadd.f32 0.0, %v5896
        %5898 = vdwg.mxu0
        %5899 = vmatpush.msra.mxu0 %v5817
        %5900 = vmatpush.msra.mxu0 %v5816
        %5901 = vmatpush.msra.mxu0 %v5815
        %5902 = vmatpush.msra.mxu0 %v5814
        %5903 = vmatpush.msra.mxu0 %v5813
        %5904 = vmatpush.msra.mxu0 %v5812
        %5905 = vmatpush.msra.mxu0 %v5811
        %5906 = vmatpush.msra.mxu0 %v5810
        %5907 = vmatpush.msra.mxu0 %v5809
        %5908 = vmatpush.msra.mxu0 %v5808
        %5909 = vmatpush.msra.mxu0 %v5807
        %5910 = vmatpush.msra.mxu0 %v5806
        %5911 = vmatpush.msra.mxu0 %v5805
        %5912 = vmatpush.msra.mxu0 %v5804
        %5913 = vmatpush.msra.mxu0 %v5803
        %5914 = vmatpush.msra.mxu0 %v5802
        %5915 = vmatmul.f32.gmra.mxu0 %v5676
        %v5916 = vpop.f32.mrf.mxu0
        %v5917 = vadd.f32 %v5852, %v5916
        %5918 = vmatmul.f32.gmra.mxu0 %v5678
        %v5919 = vpop.f32.mrf.mxu0
        %v5920 = vadd.f32 %v5855, %v5919
        %5921 = vmatmul.f32.gmra.mxu0 %v5681
        %v5922 = vpop.f32.mrf.mxu0
        %v5923 = vadd.f32 %v5858, %v5922
        %5924 = vmatmul.f32.gmra.mxu0 %v5683
        %v5925 = vpop.f32.mrf.mxu0
        %v5926 = vadd.f32 %v5861, %v5925
        %5927 = vmatmul.f32.gmra.mxu0 %v5686
        %v5928 = vpop.f32.mrf.mxu0
        %v5929 = vadd.f32 %v5864, %v5928
        %5930 = vmatmul.f32.gmra.mxu0 %v5688
        %v5931 = vpop.f32.mrf.mxu0
        %v5932 = vadd.f32 %v5867, %v5931
        %5933 = vmatmul.f32.gmra.mxu0 %v5691
        %v5934 = vpop.f32.mrf.mxu0
        %v5935 = vadd.f32 %v5870, %v5934
        %5936 = vmatmul.f32.gmra.mxu0 %v5693
        %v5937 = vpop.f32.mrf.mxu0
        %v5938 = vadd.f32 %v5873, %v5937
        %5939 = vmatmul.f32.gmra.mxu0 %v5696
        %v5940 = vpop.f32.mrf.mxu0
        %v5941 = vadd.f32 %v5876, %v5940
        %5942 = vmatmul.f32.gmra.mxu0 %v5698
        %v5943 = vpop.f32.mrf.mxu0
        %v5944 = vadd.f32 %v5879, %v5943
        %5945 = vmatmul.f32.gmra.mxu0 %v5701
        %v5946 = vpop.f32.mrf.mxu0
        %v5947 = vadd.f32 %v5882, %v5946
        %5948 = vmatmul.f32.gmra.mxu0 %v5703
        %v5949 = vpop.f32.mrf.mxu0
        %v5950 = vadd.f32 %v5885, %v5949
        %5951 = vmatmul.f32.gmra.mxu0 %v5706
        %v5952 = vpop.f32.mrf.mxu0
        %v5953 = vadd.f32 %v5888, %v5952
        %5954 = vmatmul.f32.gmra.mxu0 %v5708
        %v5955 = vpop.f32.mrf.mxu0
        %v5956 = vadd.f32 %v5891, %v5955
        %5957 = vmatmul.f32.gmra.mxu0 %v5711
        %v5958 = vpop.f32.mrf.mxu0
        %v5959 = vadd.f32 %v5894, %v5958
        %5960 = vmatmul.f32.gmra.mxu0 %v5713
        %v5961 = vpop.f32.mrf.mxu0
        %v5962 = vadd.f32 %v5897, %v5961
        %5963 = vdwg.mxu0
        %5964 = vmatpush.msra.mxu0 %v5833
        %5965 = vmatpush.msra.mxu0 %v5832
        %5966 = vmatpush.msra.mxu0 %v5831
        %5967 = vmatpush.msra.mxu0 %v5830
        %5968 = vmatpush.msra.mxu0 %v5829
        %5969 = vmatpush.msra.mxu0 %v5828
        %5970 = vmatpush.msra.mxu0 %v5827
        %5971 = vmatpush.msra.mxu0 %v5826
        %5972 = vmatpush.msra.mxu0 %v5825
        %5973 = vmatpush.msra.mxu0 %v5824
        %5974 = vmatpush.msra.mxu0 %v5823
        %5975 = vmatpush.msra.mxu0 %v5822
        %5976 = vmatpush.msra.mxu0 %v5821
        %5977 = vmatpush.msra.mxu0 %v5820
        %5978 = vmatpush.msra.mxu0 %v5819
        %5979 = vmatpush.msra.mxu0 %v5818
        %5980 = vmatmul.f32.gmra.mxu0 %v5732
        %v5981 = vpop.f32.mrf.mxu0
        %v5982 = vadd.f32 %v5917, %v5981
        %5983 = vmatmul.f32.gmra.mxu0 %v5734
        %v5984 = vpop.f32.mrf.mxu0
        %v5985 = vadd.f32 %v5920, %v5984
        %5986 = vmatmul.f32.gmra.mxu0 %v5737
        %v5987 = vpop.f32.mrf.mxu0
        %v5988 = vadd.f32 %v5923, %v5987
        %5989 = vmatmul.f32.gmra.mxu0 %v5739
        %v5990 = vpop.f32.mrf.mxu0
        %v5991 = vadd.f32 %v5926, %v5990
        %5992 = vmatmul.f32.gmra.mxu0 %v5742
        %v5993 = vpop.f32.mrf.mxu0
        %v5994 = vadd.f32 %v5929, %v5993
        %5995 = vmatmul.f32.gmra.mxu0 %v5744
        %v5996 = vpop.f32.mrf.mxu0
        %v5997 = vadd.f32 %v5932, %v5996
        %5998 = vmatmul.f32.gmra.mxu0 %v5747
        %v5999 = vpop.f32.mrf.mxu0
        %v6000 = vadd.f32 %v5935, %v5999
        %6001 = vmatmul.f32.gmra.mxu0 %v5749
        %v6002 = vpop.f32.mrf.mxu0
        %v6003 = vadd.f32 %v5938, %v6002
        %6004 = vmatmul.f32.gmra.mxu0 %v5752
        %v6005 = vpop.f32.mrf.mxu0
        %v6006 = vadd.f32 %v5941, %v6005
        %6007 = vmatmul.f32.gmra.mxu0 %v5754
        %v6008 = vpop.f32.mrf.mxu0
        %v6009 = vadd.f32 %v5944, %v6008
        %6010 = vmatmul.f32.gmra.mxu0 %v5757
        %v6011 = vpop.f32.mrf.mxu0
        %v6012 = vadd.f32 %v5947, %v6011
        %6013 = vmatmul.f32.gmra.mxu0 %v5759
        %v6014 = vpop.f32.mrf.mxu0
        %v6015 = vadd.f32 %v5950, %v6014
        %6016 = vmatmul.f32.gmra.mxu0 %v5762
        %v6017 = vpop.f32.mrf.mxu0
        %v6018 = vadd.f32 %v5953, %v6017
        %6019 = vmatmul.f32.gmra.mxu0 %v5764
        %v6020 = vpop.f32.mrf.mxu0
        %v6021 = vadd.f32 %v5956, %v6020
        %6022 = vmatmul.f32.gmra.mxu0 %v5767
        %v6023 = vpop.f32.mrf.mxu0
        %v6024 = vadd.f32 %v5959, %v6023
        %6025 = vmatmul.f32.gmra.mxu0 %v5769
        %v6026 = vpop.f32.mrf.mxu0
        %v6027 = vadd.f32 %v5962, %v6026
        %6028 = vdwg.mxu0
        %v6029 = vadd.f32 %v5578, %v5982
        %v6030 = vadd.f32 %v5581, %v5985
        %v6031 = vadd.f32 %v5584, %v5988
        %v6032 = vadd.f32 %v5587, %v5991
        %v6033 = vadd.f32 %v5590, %v5994
        %v6034 = vadd.f32 %v5593, %v5997
        %v6035 = vadd.f32 %v5596, %v6000
        %v6036 = vadd.f32 %v5599, %v6003
        %v6037 = vadd.f32 %v5602, %v6006
        %v6038 = vadd.f32 %v5605, %v6009
        %v6039 = vadd.f32 %v5608, %v6012
        %v6040 = vadd.f32 %v5611, %v6015
        %v6041 = vadd.f32 %v5614, %v6018
        %v6042 = vadd.f32 %v5617, %v6021
        %v6043 = vadd.f32 %v5620, %v6024
        %v6044 = vadd.f32 %v5623, %v6027
        %v6045 = vadd.f32 %v6029, %v4735
        %v6046 = vadd.f32 %v6030, %v4735
        %v6047 = vadd.f32 %v6031, %v4735
        %v6048 = vadd.f32 %v6032, %v4735
        %v6049 = vadd.f32 %v6033, %v4735
        %v6050 = vadd.f32 %v6034, %v4735
        %v6051 = vadd.f32 %v6035, %v4735
        %v6052 = vadd.f32 %v6036, %v4735
        %v6053 = vadd.f32 %v6037, %v4735
        %v6054 = vadd.f32 %v6038, %v4735
        %v6055 = vadd.f32 %v6039, %v4735
        %v6056 = vadd.f32 %v6040, %v4735
        %v6057 = vadd.f32 %v6041, %v4735
        %v6058 = vadd.f32 %v6042, %v4735
        %v6059 = vadd.f32 %v6043, %v4735
        %v6060 = vadd.f32 %v6044, %v4735
        %vm6061 = vcmp.gt.f32.partialorder %v6045, 0.0
        %vm6062 = vcmp.gt.f32.partialorder %v6046, 0.0
        %vm6063 = vcmp.gt.f32.partialorder %v6047, 0.0
        %vm6064 = vcmp.gt.f32.partialorder %v6048, 0.0
        %vm6065 = vcmp.gt.f32.partialorder %v6049, 0.0
        %vm6066 = vcmp.gt.f32.partialorder %v6050, 0.0
        %vm6067 = vcmp.gt.f32.partialorder %v6051, 0.0
        %vm6068 = vcmp.gt.f32.partialorder %v6052, 0.0
        %vm6069 = vcmp.gt.f32.partialorder %v6053, 0.0
        %vm6070 = vcmp.gt.f32.partialorder %v6054, 0.0
        %vm6071 = vcmp.gt.f32.partialorder %v6055, 0.0
        %vm6072 = vcmp.gt.f32.partialorder %v6056, 0.0
        %vm6073 = vcmp.gt.f32.partialorder %v6057, 0.0
        %vm6074 = vcmp.gt.f32.partialorder %v6058, 0.0
        %vm6075 = vcmp.gt.f32.partialorder %v6059, 0.0
        %vm6076 = vcmp.gt.f32.partialorder %v6060, 0.0
        %v6077 = vmul.f32 %v6045, 0.01
        %v6078 = vmul.f32 %v6046, 0.01
        %v6079 = vmul.f32 %v6047, 0.01
        %v6080 = vmul.f32 %v6048, 0.01
        %v6081 = vmul.f32 %v6049, 0.01
        %v6082 = vmul.f32 %v6050, 0.01
        %v6083 = vmul.f32 %v6051, 0.01
        %v6084 = vmul.f32 %v6052, 0.01
        %v6085 = vmul.f32 %v6053, 0.01
        %v6086 = vmul.f32 %v6054, 0.01
        %v6087 = vmul.f32 %v6055, 0.01
        %v6088 = vmul.f32 %v6056, 0.01
        %v6089 = vmul.f32 %v6057, 0.01
        %v6090 = vmul.f32 %v6058, 0.01
        %v6091 = vmul.f32 %v6059, 0.01
        %v6092 = vmul.f32 %v6060, 0.01
        %v6093 = vsel %vm6061, %v6045, %v6077
        %v6094 = vsel %vm6062, %v6046, %v6078
        %v6095 = vsel %vm6063, %v6047, %v6079
        %v6096 = vsel %vm6064, %v6048, %v6080
        %v6097 = vsel %vm6065, %v6049, %v6081
        %v6098 = vsel %vm6066, %v6050, %v6082
        %v6099 = vsel %vm6067, %v6051, %v6083
        %v6100 = vsel %vm6068, %v6052, %v6084
        %v6101 = vsel %vm6069, %v6053, %v6085
        %v6102 = vsel %vm6070, %v6054, %v6086
        %v6103 = vsel %vm6071, %v6055, %v6087
        %v6104 = vsel %vm6072, %v6056, %v6088
        %v6105 = vsel %vm6073, %v6057, %v6089
        %v6106 = vsel %vm6074, %v6058, %v6090
        %v6107 = vsel %vm6075, %v6059, %v6091
        %v6108 = vsel %vm6076, %v6060, %v6092
        %s6109 = scalar_lea.vmem [#allocation4], 216
        %6110 = vst.msk [vmem:[%s6109 + $0x1] sm:$0xff] %vm368, %v6093
        %6111 = vst.msk [vmem:[%s6109 + $0x9] sm:$0xff] %vm368, %v6094
        %6112 = vst.msk [vmem:[%s6109 + $0x19] sm:$0xff] %vm368, %v6095
        %6113 = vst.msk [vmem:[%s6109 + $0x21] sm:$0xff] %vm368, %v6096
        %6114 = vst.msk [vmem:[%s6109 + $0x31] sm:$0xff] %vm368, %v6097
        %6115 = vst.msk [vmem:[%s6109 + $0x39] sm:$0xff] %vm368, %v6098
        %6116 = vst.msk [vmem:[%s6109 + $0x49] sm:$0xff] %vm368, %v6099
        %6117 = vst.msk [vmem:[%s6109 + $0x51] sm:$0xff] %vm368, %v6100
        %6118 = vst.msk [vmem:[%s6109 + $0x61] sm:$0xff] %vm368, %v6101
        %6119 = vst.msk [vmem:[%s6109 + $0x69] sm:$0xff] %vm368, %v6102
        %6120 = vst.msk [vmem:[%s6109 + $0x79] sm:$0xff] %vm368, %v6103
        %6121 = vst.msk [vmem:[%s6109 + $0x81] sm:$0xff] %vm368, %v6104
        %6122 = vst.msk [vmem:[%s6109 + $0x91] sm:$0xff] %vm368, %v6105
        %6123 = vst.msk [vmem:[%s6109 + $0x99] sm:$0xff] %vm368, %v6106
        %6124 = vst.msk [vmem:[%s6109 + $0xa9] sm:$0xff] %vm368, %v6107
        %6125 = vst.msk [vmem:[%s6109 + $0xb1] sm:$0xff] %vm368, %v6108
        %v6126 = vld [vmem:[#allocation4] sm:$0xff]
        %v6127 = vld [vmem:[#allocation4 + $0x8] sm:$0xff]
        %v6128 = vld [vmem:[#allocation4 + $0x10] sm:$0x3]
        %v6129 = vld [vmem:[#allocation4 + $0x18] sm:$0xff]
        %v6130 = vld [vmem:[#allocation4 + $0x20] sm:$0xff]
        %v6131 = vld [vmem:[#allocation4 + $0x28] sm:$0x3]
        %v6132 = vld [vmem:[#allocation4 + $0x30] sm:$0xff]
        %v6133 = vld [vmem:[#allocation4 + $0x38] sm:$0xff]
        %v6134 = vld [vmem:[#allocation4 + $0x40] sm:$0x3]
        %v6135 = vld [vmem:[#allocation4 + $0x48] sm:$0xff]
        %v6136 = vld [vmem:[#allocation4 + $0x50] sm:$0xff]
        %v6137 = vld [vmem:[#allocation4 + $0x58] sm:$0x3]
        %v6138 = vld [vmem:[#allocation4 + $0x60] sm:$0xff]
        %v6139 = vld [vmem:[#allocation4 + $0x68] sm:$0xff]
        %v6140 = vld [vmem:[#allocation4 + $0x70] sm:$0x3]
        %v6141 = vld [vmem:[#allocation4 + $0x78] sm:$0xff]
        %v6142 = vld [vmem:[#allocation4 + $0x80] sm:$0xff]
        %v6143 = vld [vmem:[#allocation4 + $0x88] sm:$0x3]
        %v6144 = vld [vmem:[#allocation4 + $0x90] sm:$0xff]
        %v6145 = vld [vmem:[#allocation4 + $0x98] sm:$0xff]
        %v6146 = vld [vmem:[#allocation4 + $0xa0] sm:$0x3]
        %v6147 = vld [vmem:[#allocation4 + $0xa8] sm:$0xff]
        %v6148 = vld [vmem:[#allocation4 + $0xb0] sm:$0xff]
        %v6149 = vld [vmem:[#allocation4 + $0xb8] sm:$0x3]
        %v6150 = vld [vmem:[%s5] sm:$0x1]
        %v6151 = vperm.slane %v6150, 0
        %v6152 = vmul.f32 %v6126, %v6151
        %v6153 = vmul.f32 %v6127, %v6151
        %v6154 = vmul.f32 %v6129, %v6151
        %v6155 = vmul.f32 %v6130, %v6151
        %v6156 = vmul.f32 %v6132, %v6151
        %v6157 = vmul.f32 %v6133, %v6151
        %v6158 = vmul.f32 %v6135, %v6151
        %v6159 = vmul.f32 %v6136, %v6151
        %v6160 = vmul.f32 %v6138, %v6151
        %v6161 = vmul.f32 %v6139, %v6151
        %v6162 = vmul.f32 %v6141, %v6151
        %v6163 = vmul.f32 %v6142, %v6151
        %v6164 = vmul.f32 %v6144, %v6151
        %v6165 = vmul.f32 %v6145, %v6151
        %v6166 = vmul.f32 %v6147, %v6151
        %v6167 = vmul.f32 %v6148, %v6151
        %v6168 = vsel %vm368, %v6152, 0.0
        %6169 = vadd.xlane.f32.xlu0 %v6168
        %v6170 = vpop.xlane.xlu0 %6169
        %v6171 = vsel %vm368, %v6153, 0.0
        %6172 = vadd.xlane.f32.xlu0 %v6171
        %v6173 = vpop.xlane.xlu0 %6172
        %v6174 = vsel %vm368, %v6154, 0.0
        %6175 = vadd.xlane.f32.xlu0 %v6174
        %v6176 = vpop.xlane.xlu0 %6175
        %v6177 = vsel %vm368, %v6155, 0.0
        %6178 = vadd.xlane.f32.xlu0 %v6177
        %v6179 = vpop.xlane.xlu0 %6178
        %v6180 = vsel %vm368, %v6156, 0.0
        %6181 = vadd.xlane.f32.xlu0 %v6180
        %v6182 = vpop.xlane.xlu0 %6181
        %v6183 = vsel %vm368, %v6157, 0.0
        %6184 = vadd.xlane.f32.xlu0 %v6183
        %v6185 = vpop.xlane.xlu0 %6184
        %v6186 = vsel %vm368, %v6158, 0.0
        %6187 = vadd.xlane.f32.xlu0 %v6186
        %v6188 = vpop.xlane.xlu0 %6187
        %v6189 = vsel %vm368, %v6159, 0.0
        %6190 = vadd.xlane.f32.xlu0 %v6189
        %v6191 = vpop.xlane.xlu0 %6190
        %v6192 = vsel %vm368, %v6160, 0.0
        %6193 = vadd.xlane.f32.xlu0 %v6192
        %v6194 = vpop.xlane.xlu0 %6193
        %v6195 = vsel %vm368, %v6161, 0.0
        %6196 = vadd.xlane.f32.xlu0 %v6195
        %v6197 = vpop.xlane.xlu0 %6196
        %v6198 = vsel %vm368, %v6162, 0.0
        %6199 = vadd.xlane.f32.xlu0 %v6198
        %v6200 = vpop.xlane.xlu0 %6199
        %v6201 = vsel %vm368, %v6163, 0.0
        %6202 = vadd.xlane.f32.xlu0 %v6201
        %v6203 = vpop.xlane.xlu0 %6202
        %v6204 = vsel %vm368, %v6164, 0.0
        %6205 = vadd.xlane.f32.xlu0 %v6204
        %v6206 = vpop.xlane.xlu0 %6205
        %v6207 = vsel %vm368, %v6165, 0.0
        %6208 = vadd.xlane.f32.xlu0 %v6207
        %v6209 = vpop.xlane.xlu0 %6208
        %v6210 = vsel %vm368, %v6166, 0.0
        %6211 = vadd.xlane.f32.xlu0 %v6210
        %v6212 = vpop.xlane.xlu0 %6211
        %v6213 = vsel %vm368, %v6167, 0.0
        %6214 = vadd.xlane.f32.xlu0 %v6213
        %v6215 = vpop.xlane.xlu0 %6214
        %v6216 = vadd.f32 %v6170, 0.0
        %v6217 = vadd.f32 %v6173, 0.0
        %v6218 = vadd.f32 %v6176, 0.0
        %v6219 = vadd.f32 %v6179, 0.0
        %v6220 = vadd.f32 %v6182, 0.0
        %v6221 = vadd.f32 %v6185, 0.0
        %v6222 = vadd.f32 %v6188, 0.0
        %v6223 = vadd.f32 %v6191, 0.0
        %v6224 = vadd.f32 %v6194, 0.0
        %v6225 = vadd.f32 %v6197, 0.0
        %v6226 = vadd.f32 %v6200, 0.0
        %v6227 = vadd.f32 %v6203, 0.0
        %v6228 = vadd.f32 %v6206, 0.0
        %v6229 = vadd.f32 %v6209, 0.0
        %v6230 = vadd.f32 %v6212, 0.0
        %v6231 = vadd.f32 %v6215, 0.0
        %v6232 = vld [vmem:[%s5 + $0x1] sm:$0x1]
        %v6233 = vperm.slane %v6232, 0
        %v6234 = vmul.f32 %v6126, %v6233
        %v6235 = vmul.f32 %v6127, %v6233
        %v6236 = vmul.f32 %v6128, %v6233
        %v6237 = vmul.f32 %v6129, %v6233
        %v6238 = vmul.f32 %v6130, %v6233
        %v6239 = vmul.f32 %v6131, %v6233
        %v6240 = vmul.f32 %v6132, %v6233
        %v6241 = vmul.f32 %v6133, %v6233
        %v6242 = vmul.f32 %v6134, %v6233
        %v6243 = vmul.f32 %v6135, %v6233
        %v6244 = vmul.f32 %v6136, %v6233
        %v6245 = vmul.f32 %v6137, %v6233
        %v6246 = vmul.f32 %v6138, %v6233
        %v6247 = vmul.f32 %v6139, %v6233
        %v6248 = vmul.f32 %v6140, %v6233
        %v6249 = vmul.f32 %v6141, %v6233
        %v6250 = vmul.f32 %v6142, %v6233
        %v6251 = vmul.f32 %v6143, %v6233
        %v6252 = vmul.f32 %v6144, %v6233
        %v6253 = vmul.f32 %v6145, %v6233
        %v6254 = vmul.f32 %v6146, %v6233
        %v6255 = vmul.f32 %v6147, %v6233
        %v6256 = vmul.f32 %v6148, %v6233
        %v6257 = vmul.f32 %v6149, %v6233
        %vm6258 = vcmask 523265
        %v6259 = vsel %vm6258, %v6234, 0.0
        %6260 = vadd.xlane.f32.xlu0 %v6259
        %v6261 = vpop.xlane.xlu0 %6260
        %v6262 = vsel %vm368, %v6235, 0.0
        %6263 = vadd.xlane.f32.xlu0 %v6262
        %v6264 = vpop.xlane.xlu0 %6263
        %v6265 = vsel %vm377, %v6236, 0.0
        %6266 = vadd.xlane.f32.xlu0 %v6265
        %v6267 = vpop.xlane.xlu0 %6266
        %v6268 = vsel %vm6258, %v6237, 0.0
        %6269 = vadd.xlane.f32.xlu0 %v6268
        %v6270 = vpop.xlane.xlu0 %6269
        %v6271 = vsel %vm368, %v6238, 0.0
        %6272 = vadd.xlane.f32.xlu0 %v6271
        %v6273 = vpop.xlane.xlu0 %6272
        %v6274 = vsel %vm377, %v6239, 0.0
        %6275 = vadd.xlane.f32.xlu0 %v6274
        %v6276 = vpop.xlane.xlu0 %6275
        %v6277 = vsel %vm6258, %v6240, 0.0
        %6278 = vadd.xlane.f32.xlu0 %v6277
        %v6279 = vpop.xlane.xlu0 %6278
        %v6280 = vsel %vm368, %v6241, 0.0
        %6281 = vadd.xlane.f32.xlu0 %v6280
        %v6282 = vpop.xlane.xlu0 %6281
        %v6283 = vsel %vm377, %v6242, 0.0
        %6284 = vadd.xlane.f32.xlu0 %v6283
        %v6285 = vpop.xlane.xlu0 %6284
        %v6286 = vsel %vm6258, %v6243, 0.0
        %6287 = vadd.xlane.f32.xlu0 %v6286
        %v6288 = vpop.xlane.xlu0 %6287
        %v6289 = vsel %vm368, %v6244, 0.0
        %6290 = vadd.xlane.f32.xlu0 %v6289
        %v6291 = vpop.xlane.xlu0 %6290
        %v6292 = vsel %vm377, %v6245, 0.0
        %6293 = vadd.xlane.f32.xlu0 %v6292
        %v6294 = vpop.xlane.xlu0 %6293
        %v6295 = vsel %vm6258, %v6246, 0.0
        %6296 = vadd.xlane.f32.xlu0 %v6295
        %v6297 = vpop.xlane.xlu0 %6296
        %v6298 = vsel %vm368, %v6247, 0.0
        %6299 = vadd.xlane.f32.xlu0 %v6298
        %v6300 = vpop.xlane.xlu0 %6299
        %v6301 = vsel %vm377, %v6248, 0.0
        %6302 = vadd.xlane.f32.xlu0 %v6301
        %v6303 = vpop.xlane.xlu0 %6302
        %v6304 = vsel %vm6258, %v6249, 0.0
        %6305 = vadd.xlane.f32.xlu0 %v6304
        %v6306 = vpop.xlane.xlu0 %6305
        %v6307 = vsel %vm368, %v6250, 0.0
        %6308 = vadd.xlane.f32.xlu0 %v6307
        %v6309 = vpop.xlane.xlu0 %6308
        %v6310 = vsel %vm377, %v6251, 0.0
        %6311 = vadd.xlane.f32.xlu0 %v6310
        %v6312 = vpop.xlane.xlu0 %6311
        %v6313 = vsel %vm6258, %v6252, 0.0
        %6314 = vadd.xlane.f32.xlu0 %v6313
        %v6315 = vpop.xlane.xlu0 %6314
        %v6316 = vsel %vm368, %v6253, 0.0
        %6317 = vadd.xlane.f32.xlu0 %v6316
        %v6318 = vpop.xlane.xlu0 %6317
        %v6319 = vsel %vm377, %v6254, 0.0
        %6320 = vadd.xlane.f32.xlu0 %v6319
        %v6321 = vpop.xlane.xlu0 %6320
        %v6322 = vsel %vm6258, %v6255, 0.0
        %6323 = vadd.xlane.f32.xlu0 %v6322
        %v6324 = vpop.xlane.xlu0 %6323
        %v6325 = vsel %vm368, %v6256, 0.0
        %6326 = vadd.xlane.f32.xlu0 %v6325
        %v6327 = vpop.xlane.xlu0 %6326
        %v6328 = vsel %vm377, %v6257, 0.0
        %6329 = vadd.xlane.f32.xlu0 %v6328
        %v6330 = vpop.xlane.xlu0 %6329
        %v6355 = vrot.slane %v6261, 1
        %v6356 = vrot.slane %v6264, 1
        %v6357 = vsel %vm541, %v6355, %v6356
        %v6358 = vrot.slane %v6267, 1
        %v6359 = vsel %vm541, %v6356, %v6358
        %v6360 = vrot.slane %v6270, 1
        %v6361 = vrot.slane %v6273, 1
        %v6362 = vsel %vm541, %v6360, %v6361
        %v6363 = vrot.slane %v6276, 1
        %v6364 = vsel %vm541, %v6361, %v6363
        %v6365 = vrot.slane %v6279, 1
        %v6366 = vrot.slane %v6282, 1
        %v6367 = vsel %vm541, %v6365, %v6366
        %v6368 = vrot.slane %v6285, 1
        %v6369 = vsel %vm541, %v6366, %v6368
        %v6370 = vrot.slane %v6288, 1
        %v6371 = vrot.slane %v6291, 1
        %v6372 = vsel %vm541, %v6370, %v6371
        %v6373 = vrot.slane %v6294, 1
        %v6374 = vsel %vm541, %v6371, %v6373
        %v6375 = vrot.slane %v6297, 1
        %v6376 = vrot.slane %v6300, 1
        %v6377 = vsel %vm541, %v6375, %v6376
        %v6378 = vrot.slane %v6303, 1
        %v6379 = vsel %vm541, %v6376, %v6378
        %v6380 = vrot.slane %v6306, 1
        %v6381 = vrot.slane %v6309, 1
        %v6382 = vsel %vm541, %v6380, %v6381
        %v6383 = vrot.slane %v6312, 1
        %v6384 = vsel %vm541, %v6381, %v6383
        %v6385 = vrot.slane %v6315, 1
        %v6386 = vrot.slane %v6318, 1
        %v6387 = vsel %vm541, %v6385, %v6386
        %v6388 = vrot.slane %v6321, 1
        %v6389 = vsel %vm541, %v6386, %v6388
        %v6390 = vrot.slane %v6324, 1
        %v6391 = vrot.slane %v6327, 1
        %v6392 = vsel %vm541, %v6390, %v6391
        %v6393 = vrot.slane %v6330, 1
        %v6394 = vsel %vm541, %v6391, %v6393
        %v6411 = vadd.f32 %v6216, %v6357
        %v6412 = vadd.f32 %v6217, %v6359
        %v6413 = vadd.f32 %v6218, %v6362
        %v6414 = vadd.f32 %v6219, %v6364
        %v6415 = vadd.f32 %v6220, %v6367
        %v6416 = vadd.f32 %v6221, %v6369
        %v6417 = vadd.f32 %v6222, %v6372
        %v6418 = vadd.f32 %v6223, %v6374
        %v6419 = vadd.f32 %v6224, %v6377
        %v6420 = vadd.f32 %v6225, %v6379
        %v6421 = vadd.f32 %v6226, %v6382
        %v6422 = vadd.f32 %v6227, %v6384
        %v6423 = vadd.f32 %v6228, %v6387
        %v6424 = vadd.f32 %v6229, %v6389
        %v6425 = vadd.f32 %v6230, %v6392
        %v6426 = vadd.f32 %v6231, %v6394
        %v6427 = vld [vmem:[%s5 + $0x2] sm:$0x1]
        %v6428 = vperm.slane %v6427, 0
        %v6429 = vmul.f32 %v6126, %v6428
        %v6430 = vmul.f32 %v6127, %v6428
        %v6431 = vmul.f32 %v6128, %v6428
        %v6432 = vmul.f32 %v6129, %v6428
        %v6433 = vmul.f32 %v6130, %v6428
        %v6434 = vmul.f32 %v6131, %v6428
        %v6435 = vmul.f32 %v6132, %v6428
        %v6436 = vmul.f32 %v6133, %v6428
        %v6437 = vmul.f32 %v6134, %v6428
        %v6438 = vmul.f32 %v6135, %v6428
        %v6439 = vmul.f32 %v6136, %v6428
        %v6440 = vmul.f32 %v6137, %v6428
        %v6441 = vmul.f32 %v6138, %v6428
        %v6442 = vmul.f32 %v6139, %v6428
        %v6443 = vmul.f32 %v6140, %v6428
        %v6444 = vmul.f32 %v6141, %v6428
        %v6445 = vmul.f32 %v6142, %v6428
        %v6446 = vmul.f32 %v6143, %v6428
        %v6447 = vmul.f32 %v6144, %v6428
        %v6448 = vmul.f32 %v6145, %v6428
        %v6449 = vmul.f32 %v6146, %v6428
        %v6450 = vmul.f32 %v6147, %v6428
        %v6451 = vmul.f32 %v6148, %v6428
        %v6452 = vmul.f32 %v6149, %v6428
        %vm6453 = vcmask 523266
        %v6454 = vsel %vm6453, %v6429, 0.0
        %6455 = vadd.xlane.f32.xlu0 %v6454
        %v6456 = vpop.xlane.xlu0 %6455
        %v6457 = vsel %vm368, %v6430, 0.0
        %6458 = vadd.xlane.f32.xlu0 %v6457
        %v6459 = vpop.xlane.xlu0 %6458
        %v6460 = vsel %vm371, %v6431, 0.0
        %6461 = vadd.xlane.f32.xlu0 %v6460
        %v6462 = vpop.xlane.xlu0 %6461
        %v6463 = vsel %vm6453, %v6432, 0.0
        %6464 = vadd.xlane.f32.xlu0 %v6463
        %v6465 = vpop.xlane.xlu0 %6464
        %v6466 = vsel %vm368, %v6433, 0.0
        %6467 = vadd.xlane.f32.xlu0 %v6466
        %v6468 = vpop.xlane.xlu0 %6467
        %v6469 = vsel %vm371, %v6434, 0.0
        %6470 = vadd.xlane.f32.xlu0 %v6469
        %v6471 = vpop.xlane.xlu0 %6470
        %v6472 = vsel %vm6453, %v6435, 0.0
        %6473 = vadd.xlane.f32.xlu0 %v6472
        %v6474 = vpop.xlane.xlu0 %6473
        %v6475 = vsel %vm368, %v6436, 0.0
        %6476 = vadd.xlane.f32.xlu0 %v6475
        %v6477 = vpop.xlane.xlu0 %6476
        %v6478 = vsel %vm371, %v6437, 0.0
        %6479 = vadd.xlane.f32.xlu0 %v6478
        %v6480 = vpop.xlane.xlu0 %6479
        %v6481 = vsel %vm6453, %v6438, 0.0
        %6482 = vadd.xlane.f32.xlu0 %v6481
        %v6483 = vpop.xlane.xlu0 %6482
        %v6484 = vsel %vm368, %v6439, 0.0
        %6485 = vadd.xlane.f32.xlu0 %v6484
        %v6486 = vpop.xlane.xlu0 %6485
        %v6487 = vsel %vm371, %v6440, 0.0
        %6488 = vadd.xlane.f32.xlu0 %v6487
        %v6489 = vpop.xlane.xlu0 %6488
        %v6490 = vsel %vm6453, %v6441, 0.0
        %6491 = vadd.xlane.f32.xlu0 %v6490
        %v6492 = vpop.xlane.xlu0 %6491
        %v6493 = vsel %vm368, %v6442, 0.0
        %6494 = vadd.xlane.f32.xlu0 %v6493
        %v6495 = vpop.xlane.xlu0 %6494
        %v6496 = vsel %vm371, %v6443, 0.0
        %6497 = vadd.xlane.f32.xlu0 %v6496
        %v6498 = vpop.xlane.xlu0 %6497
        %v6499 = vsel %vm6453, %v6444, 0.0
        %6500 = vadd.xlane.f32.xlu0 %v6499
        %v6501 = vpop.xlane.xlu0 %6500
        %v6502 = vsel %vm368, %v6445, 0.0
        %6503 = vadd.xlane.f32.xlu0 %v6502
        %v6504 = vpop.xlane.xlu0 %6503
        %v6505 = vsel %vm371, %v6446, 0.0
        %6506 = vadd.xlane.f32.xlu0 %v6505
        %v6507 = vpop.xlane.xlu0 %6506
        %v6508 = vsel %vm6453, %v6447, 0.0
        %6509 = vadd.xlane.f32.xlu0 %v6508
        %v6510 = vpop.xlane.xlu0 %6509
        %v6511 = vsel %vm368, %v6448, 0.0
        %6512 = vadd.xlane.f32.xlu0 %v6511
        %v6513 = vpop.xlane.xlu0 %6512
        %v6514 = vsel %vm371, %v6449, 0.0
        %6515 = vadd.xlane.f32.xlu0 %v6514
        %v6516 = vpop.xlane.xlu0 %6515
        %v6517 = vsel %vm6453, %v6450, 0.0
        %6518 = vadd.xlane.f32.xlu0 %v6517
        %v6519 = vpop.xlane.xlu0 %6518
        %v6520 = vsel %vm368, %v6451, 0.0
        %6521 = vadd.xlane.f32.xlu0 %v6520
        %v6522 = vpop.xlane.xlu0 %6521
        %v6523 = vsel %vm371, %v6452, 0.0
        %6524 = vadd.xlane.f32.xlu0 %v6523
        %v6525 = vpop.xlane.xlu0 %6524
        %v6550 = vrot.slane %v6456, 2
        %v6551 = vrot.slane %v6459, 2
        %v6552 = vsel %vm783, %v6550, %v6551
        %v6553 = vrot.slane %v6462, 2
        %v6554 = vsel %vm783, %v6551, %v6553
        %v6555 = vrot.slane %v6465, 2
        %v6556 = vrot.slane %v6468, 2
        %v6557 = vsel %vm783, %v6555, %v6556
        %v6558 = vrot.slane %v6471, 2
        %v6559 = vsel %vm783, %v6556, %v6558
        %v6560 = vrot.slane %v6474, 2
        %v6561 = vrot.slane %v6477, 2
        %v6562 = vsel %vm783, %v6560, %v6561
        %v6563 = vrot.slane %v6480, 2
        %v6564 = vsel %vm783, %v6561, %v6563
        %v6565 = vrot.slane %v6483, 2
        %v6566 = vrot.slane %v6486, 2
        %v6567 = vsel %vm783, %v6565, %v6566
        %v6568 = vrot.slane %v6489, 2
        %v6569 = vsel %vm783, %v6566, %v6568
        %v6570 = vrot.slane %v6492, 2
        %v6571 = vrot.slane %v6495, 2
        %v6572 = vsel %vm783, %v6570, %v6571
        %v6573 = vrot.slane %v6498, 2
        %v6574 = vsel %vm783, %v6571, %v6573
        %v6575 = vrot.slane %v6501, 2
        %v6576 = vrot.slane %v6504, 2
        %v6577 = vsel %vm783, %v6575, %v6576
        %v6578 = vrot.slane %v6507, 2
        %v6579 = vsel %vm783, %v6576, %v6578
        %v6580 = vrot.slane %v6510, 2
        %v6581 = vrot.slane %v6513, 2
        %v6582 = vsel %vm783, %v6580, %v6581
        %v6583 = vrot.slane %v6516, 2
        %v6584 = vsel %vm783, %v6581, %v6583
        %v6585 = vrot.slane %v6519, 2
        %v6586 = vrot.slane %v6522, 2
        %v6587 = vsel %vm783, %v6585, %v6586
        %v6588 = vrot.slane %v6525, 2
        %v6589 = vsel %vm783, %v6586, %v6588
        %v6606 = vadd.f32 %v6411, %v6552
        %v6607 = vadd.f32 %v6412, %v6554
        %v6608 = vadd.f32 %v6413, %v6557
        %v6609 = vadd.f32 %v6414, %v6559
        %v6610 = vadd.f32 %v6415, %v6562
        %v6611 = vadd.f32 %v6416, %v6564
        %v6612 = vadd.f32 %v6417, %v6567
        %v6613 = vadd.f32 %v6418, %v6569
        %v6614 = vadd.f32 %v6419, %v6572
        %v6615 = vadd.f32 %v6420, %v6574
        %v6616 = vadd.f32 %v6421, %v6577
        %v6617 = vadd.f32 %v6422, %v6579
        %v6618 = vadd.f32 %v6423, %v6582
        %v6619 = vadd.f32 %v6424, %v6584
        %v6620 = vadd.f32 %v6425, %v6587
        %v6621 = vadd.f32 %v6426, %v6589
        %v6622 = vld [vmem:[%s4801] sm:$0xff]
        %v6623 = vld [vmem:[%s4801 + $0x8] sm:$0xff]
        %v6624 = vld [vmem:[%s4801 + $0x10] sm:$0x3]
        %v6625 = vld [vmem:[%s4801 + $0x18] sm:$0xff]
        %v6626 = vld [vmem:[%s4801 + $0x20] sm:$0xff]
        %v6627 = vld [vmem:[%s4801 + $0x28] sm:$0x3]
        %v6628 = vld [vmem:[%s4801 + $0x30] sm:$0xff]
        %v6629 = vld [vmem:[%s4801 + $0x38] sm:$0xff]
        %v6630 = vld [vmem:[%s4801 + $0x40] sm:$0x3]
        %v6631 = vld [vmem:[%s4801 + $0x48] sm:$0xff]
        %v6632 = vld [vmem:[%s4801 + $0x50] sm:$0xff]
        %v6633 = vld [vmem:[%s4801 + $0x58] sm:$0x3]
        %v6634 = vld [vmem:[%s4801 + $0x60] sm:$0xff]
        %v6635 = vld [vmem:[%s4801 + $0x68] sm:$0xff]
        %v6636 = vld [vmem:[%s4801 + $0x70] sm:$0x3]
        %v6637 = vld [vmem:[%s4801 + $0x78] sm:$0xff]
        %v6638 = vld [vmem:[%s4801 + $0x80] sm:$0xff]
        %v6639 = vld [vmem:[%s4801 + $0x88] sm:$0x3]
        %v6640 = vld [vmem:[%s4801 + $0x90] sm:$0xff]
        %v6641 = vld [vmem:[%s4801 + $0x98] sm:$0xff]
        %v6642 = vld [vmem:[%s4801 + $0xa0] sm:$0x3]
        %v6643 = vld [vmem:[%s4801 + $0xa8] sm:$0xff]
        %v6644 = vld [vmem:[%s4801 + $0xb0] sm:$0xff]
        %v6645 = vld [vmem:[%s4801 + $0xb8] sm:$0x3]
        %s6646 = scalar_lea.vmem %s5, 4
        %v6647 = vld [vmem:[%s6646] sm:$0x1]
        %v6648 = vperm.slane %v6647, 0
        %v6649 = vmul.f32 %v6622, %v6648
        %v6650 = vmul.f32 %v6623, %v6648
        %v6651 = vmul.f32 %v6625, %v6648
        %v6652 = vmul.f32 %v6626, %v6648
        %v6653 = vmul.f32 %v6628, %v6648
        %v6654 = vmul.f32 %v6629, %v6648
        %v6655 = vmul.f32 %v6631, %v6648
        %v6656 = vmul.f32 %v6632, %v6648
        %v6657 = vmul.f32 %v6634, %v6648
        %v6658 = vmul.f32 %v6635, %v6648
        %v6659 = vmul.f32 %v6637, %v6648
        %v6660 = vmul.f32 %v6638, %v6648
        %v6661 = vmul.f32 %v6640, %v6648
        %v6662 = vmul.f32 %v6641, %v6648
        %v6663 = vmul.f32 %v6643, %v6648
        %v6664 = vmul.f32 %v6644, %v6648
        %v6665 = vsel %vm368, %v6649, 0.0
        %6666 = vadd.xlane.f32.xlu0 %v6665
        %v6667 = vpop.xlane.xlu0 %6666
        %v6668 = vsel %vm368, %v6650, 0.0
        %6669 = vadd.xlane.f32.xlu0 %v6668
        %v6670 = vpop.xlane.xlu0 %6669
        %v6671 = vsel %vm368, %v6651, 0.0
        %6672 = vadd.xlane.f32.xlu0 %v6671
        %v6673 = vpop.xlane.xlu0 %6672
        %v6674 = vsel %vm368, %v6652, 0.0
        %6675 = vadd.xlane.f32.xlu0 %v6674
        %v6676 = vpop.xlane.xlu0 %6675
        %v6677 = vsel %vm368, %v6653, 0.0
        %6678 = vadd.xlane.f32.xlu0 %v6677
        %v6679 = vpop.xlane.xlu0 %6678
        %v6680 = vsel %vm368, %v6654, 0.0
        %6681 = vadd.xlane.f32.xlu0 %v6680
        %v6682 = vpop.xlane.xlu0 %6681
        %v6683 = vsel %vm368, %v6655, 0.0
        %6684 = vadd.xlane.f32.xlu0 %v6683
        %v6685 = vpop.xlane.xlu0 %6684
        %v6686 = vsel %vm368, %v6656, 0.0
        %6687 = vadd.xlane.f32.xlu0 %v6686
        %v6688 = vpop.xlane.xlu0 %6687
        %v6689 = vsel %vm368, %v6657, 0.0
        %6690 = vadd.xlane.f32.xlu0 %v6689
        %v6691 = vpop.xlane.xlu0 %6690
        %v6692 = vsel %vm368, %v6658, 0.0
        %6693 = vadd.xlane.f32.xlu0 %v6692
        %v6694 = vpop.xlane.xlu0 %6693
        %v6695 = vsel %vm368, %v6659, 0.0
        %6696 = vadd.xlane.f32.xlu0 %v6695
        %v6697 = vpop.xlane.xlu0 %6696
        %v6698 = vsel %vm368, %v6660, 0.0
        %6699 = vadd.xlane.f32.xlu0 %v6698
        %v6700 = vpop.xlane.xlu0 %6699
        %v6701 = vsel %vm368, %v6661, 0.0
        %6702 = vadd.xlane.f32.xlu0 %v6701
        %v6703 = vpop.xlane.xlu0 %6702
        %v6704 = vsel %vm368, %v6662, 0.0
        %6705 = vadd.xlane.f32.xlu0 %v6704
        %v6706 = vpop.xlane.xlu0 %6705
        %v6707 = vsel %vm368, %v6663, 0.0
        %6708 = vadd.xlane.f32.xlu0 %v6707
        %v6709 = vpop.xlane.xlu0 %6708
        %v6710 = vsel %vm368, %v6664, 0.0
        %6711 = vadd.xlane.f32.xlu0 %v6710
        %v6712 = vpop.xlane.xlu0 %6711
        %v6713 = vadd.f32 %v6606, %v6667
        %v6714 = vadd.f32 %v6607, %v6670
        %v6715 = vadd.f32 %v6608, %v6673
        %v6716 = vadd.f32 %v6609, %v6676
        %v6717 = vadd.f32 %v6610, %v6679
        %v6718 = vadd.f32 %v6611, %v6682
        %v6719 = vadd.f32 %v6612, %v6685
        %v6720 = vadd.f32 %v6613, %v6688
        %v6721 = vadd.f32 %v6614, %v6691
        %v6722 = vadd.f32 %v6615, %v6694
        %v6723 = vadd.f32 %v6616, %v6697
        %v6724 = vadd.f32 %v6617, %v6700
        %v6725 = vadd.f32 %v6618, %v6703
        %v6726 = vadd.f32 %v6619, %v6706
        %v6727 = vadd.f32 %v6620, %v6709
        %v6728 = vadd.f32 %v6621, %v6712
        %v6729 = vld [vmem:[%s6646 + $0x1] sm:$0x1]
        %v6730 = vperm.slane %v6729, 0
        %v6731 = vmul.f32 %v6622, %v6730
        %v6732 = vmul.f32 %v6623, %v6730
        %v6733 = vmul.f32 %v6624, %v6730
        %v6734 = vmul.f32 %v6625, %v6730
        %v6735 = vmul.f32 %v6626, %v6730
        %v6736 = vmul.f32 %v6627, %v6730
        %v6737 = vmul.f32 %v6628, %v6730
        %v6738 = vmul.f32 %v6629, %v6730
        %v6739 = vmul.f32 %v6630, %v6730
        %v6740 = vmul.f32 %v6631, %v6730
        %v6741 = vmul.f32 %v6632, %v6730
        %v6742 = vmul.f32 %v6633, %v6730
        %v6743 = vmul.f32 %v6634, %v6730
        %v6744 = vmul.f32 %v6635, %v6730
        %v6745 = vmul.f32 %v6636, %v6730
        %v6746 = vmul.f32 %v6637, %v6730
        %v6747 = vmul.f32 %v6638, %v6730
        %v6748 = vmul.f32 %v6639, %v6730
        %v6749 = vmul.f32 %v6640, %v6730
        %v6750 = vmul.f32 %v6641, %v6730
        %v6751 = vmul.f32 %v6642, %v6730
        %v6752 = vmul.f32 %v6643, %v6730
        %v6753 = vmul.f32 %v6644, %v6730
        %v6754 = vmul.f32 %v6645, %v6730
        %v6755 = vsel %vm6258, %v6731, 0.0
        %6756 = vadd.xlane.f32.xlu0 %v6755
        %v6757 = vpop.xlane.xlu0 %6756
        %v6758 = vsel %vm368, %v6732, 0.0
        %6759 = vadd.xlane.f32.xlu0 %v6758
        %v6760 = vpop.xlane.xlu0 %6759
        %v6761 = vsel %vm377, %v6733, 0.0
        %6762 = vadd.xlane.f32.xlu0 %v6761
        %v6763 = vpop.xlane.xlu0 %6762
        %v6764 = vsel %vm6258, %v6734, 0.0
        %6765 = vadd.xlane.f32.xlu0 %v6764
        %v6766 = vpop.xlane.xlu0 %6765
        %v6767 = vsel %vm368, %v6735, 0.0
        %6768 = vadd.xlane.f32.xlu0 %v6767
        %v6769 = vpop.xlane.xlu0 %6768
        %v6770 = vsel %vm377, %v6736, 0.0
        %6771 = vadd.xlane.f32.xlu0 %v6770
        %v6772 = vpop.xlane.xlu0 %6771
        %v6773 = vsel %vm6258, %v6737, 0.0
        %6774 = vadd.xlane.f32.xlu0 %v6773
        %v6775 = vpop.xlane.xlu0 %6774
        %v6776 = vsel %vm368, %v6738, 0.0
        %6777 = vadd.xlane.f32.xlu0 %v6776
        %v6778 = vpop.xlane.xlu0 %6777
        %v6779 = vsel %vm377, %v6739, 0.0
        %6780 = vadd.xlane.f32.xlu0 %v6779
        %v6781 = vpop.xlane.xlu0 %6780
        %v6782 = vsel %vm6258, %v6740, 0.0
        %6783 = vadd.xlane.f32.xlu0 %v6782
        %v6784 = vpop.xlane.xlu0 %6783
        %v6785 = vsel %vm368, %v6741, 0.0
        %6786 = vadd.xlane.f32.xlu0 %v6785
        %v6787 = vpop.xlane.xlu0 %6786
        %v6788 = vsel %vm377, %v6742, 0.0
        %6789 = vadd.xlane.f32.xlu0 %v6788
        %v6790 = vpop.xlane.xlu0 %6789
        %v6791 = vsel %vm6258, %v6743, 0.0
        %6792 = vadd.xlane.f32.xlu0 %v6791
        %v6793 = vpop.xlane.xlu0 %6792
        %v6794 = vsel %vm368, %v6744, 0.0
        %6795 = vadd.xlane.f32.xlu0 %v6794
        %v6796 = vpop.xlane.xlu0 %6795
        %v6797 = vsel %vm377, %v6745, 0.0
        %6798 = vadd.xlane.f32.xlu0 %v6797
        %v6799 = vpop.xlane.xlu0 %6798
        %v6800 = vsel %vm6258, %v6746, 0.0
        %6801 = vadd.xlane.f32.xlu0 %v6800
        %v6802 = vpop.xlane.xlu0 %6801
        %v6803 = vsel %vm368, %v6747, 0.0
        %6804 = vadd.xlane.f32.xlu0 %v6803
        %v6805 = vpop.xlane.xlu0 %6804
        %v6806 = vsel %vm377, %v6748, 0.0
        %6807 = vadd.xlane.f32.xlu0 %v6806
        %v6808 = vpop.xlane.xlu0 %6807
        %v6809 = vsel %vm6258, %v6749, 0.0
        %6810 = vadd.xlane.f32.xlu0 %v6809
        %v6811 = vpop.xlane.xlu0 %6810
        %v6812 = vsel %vm368, %v6750, 0.0
        %6813 = vadd.xlane.f32.xlu0 %v6812
        %v6814 = vpop.xlane.xlu0 %6813
        %v6815 = vsel %vm377, %v6751, 0.0
        %6816 = vadd.xlane.f32.xlu0 %v6815
        %v6817 = vpop.xlane.xlu0 %6816
        %v6818 = vsel %vm6258, %v6752, 0.0
        %6819 = vadd.xlane.f32.xlu0 %v6818
        %v6820 = vpop.xlane.xlu0 %6819
        %v6821 = vsel %vm368, %v6753, 0.0
        %6822 = vadd.xlane.f32.xlu0 %v6821
        %v6823 = vpop.xlane.xlu0 %6822
        %v6824 = vsel %vm377, %v6754, 0.0
        %6825 = vadd.xlane.f32.xlu0 %v6824
        %v6826 = vpop.xlane.xlu0 %6825
        %v6851 = vrot.slane %v6757, 1
        %v6852 = vrot.slane %v6760, 1
        %v6853 = vsel %vm541, %v6851, %v6852
        %v6854 = vrot.slane %v6763, 1
        %v6855 = vsel %vm541, %v6852, %v6854
        %v6856 = vrot.slane %v6766, 1
        %v6857 = vrot.slane %v6769, 1
        %v6858 = vsel %vm541, %v6856, %v6857
        %v6859 = vrot.slane %v6772, 1
        %v6860 = vsel %vm541, %v6857, %v6859
        %v6861 = vrot.slane %v6775, 1
        %v6862 = vrot.slane %v6778, 1
        %v6863 = vsel %vm541, %v6861, %v6862
        %v6864 = vrot.slane %v6781, 1
        %v6865 = vsel %vm541, %v6862, %v6864
        %v6866 = vrot.slane %v6784, 1
        %v6867 = vrot.slane %v6787, 1
        %v6868 = vsel %vm541, %v6866, %v6867
        %v6869 = vrot.slane %v6790, 1
        %v6870 = vsel %vm541, %v6867, %v6869
        %v6871 = vrot.slane %v6793, 1
        %v6872 = vrot.slane %v6796, 1
        %v6873 = vsel %vm541, %v6871, %v6872
        %v6874 = vrot.slane %v6799, 1
        %v6875 = vsel %vm541, %v6872, %v6874
        %v6876 = vrot.slane %v6802, 1
        %v6877 = vrot.slane %v6805, 1
        %v6878 = vsel %vm541, %v6876, %v6877
        %v6879 = vrot.slane %v6808, 1
        %v6880 = vsel %vm541, %v6877, %v6879
        %v6881 = vrot.slane %v6811, 1
        %v6882 = vrot.slane %v6814, 1
        %v6883 = vsel %vm541, %v6881, %v6882
        %v6884 = vrot.slane %v6817, 1
        %v6885 = vsel %vm541, %v6882, %v6884
        %v6886 = vrot.slane %v6820, 1
        %v6887 = vrot.slane %v6823, 1
        %v6888 = vsel %vm541, %v6886, %v6887
        %v6889 = vrot.slane %v6826, 1
        %v6890 = vsel %vm541, %v6887, %v6889
        %v6907 = vadd.f32 %v6713, %v6853
        %v6908 = vadd.f32 %v6714, %v6855
        %v6909 = vadd.f32 %v6715, %v6858
        %v6910 = vadd.f32 %v6716, %v6860
        %v6911 = vadd.f32 %v6717, %v6863
        %v6912 = vadd.f32 %v6718, %v6865
        %v6913 = vadd.f32 %v6719, %v6868
        %v6914 = vadd.f32 %v6720, %v6870
        %v6915 = vadd.f32 %v6721, %v6873
        %v6916 = vadd.f32 %v6722, %v6875
        %v6917 = vadd.f32 %v6723, %v6878
        %v6918 = vadd.f32 %v6724, %v6880
        %v6919 = vadd.f32 %v6725, %v6883
        %v6920 = vadd.f32 %v6726, %v6885
        %v6921 = vadd.f32 %v6727, %v6888
        %v6922 = vadd.f32 %v6728, %v6890
        %v6923 = vld [vmem:[%s6646 + $0x2] sm:$0x1]
        %v6924 = vperm.slane %v6923, 0
        %v6925 = vmul.f32 %v6622, %v6924
        %v6926 = vmul.f32 %v6623, %v6924
        %v6927 = vmul.f32 %v6624, %v6924
        %v6928 = vmul.f32 %v6625, %v6924
        %v6929 = vmul.f32 %v6626, %v6924
        %v6930 = vmul.f32 %v6627, %v6924
        %v6931 = vmul.f32 %v6628, %v6924
        %v6932 = vmul.f32 %v6629, %v6924
        %v6933 = vmul.f32 %v6630, %v6924
        %v6934 = vmul.f32 %v6631, %v6924
        %v6935 = vmul.f32 %v6632, %v6924
        %v6936 = vmul.f32 %v6633, %v6924
        %v6937 = vmul.f32 %v6634, %v6924
        %v6938 = vmul.f32 %v6635, %v6924
        %v6939 = vmul.f32 %v6636, %v6924
        %v6940 = vmul.f32 %v6637, %v6924
        %v6941 = vmul.f32 %v6638, %v6924
        %v6942 = vmul.f32 %v6639, %v6924
        %v6943 = vmul.f32 %v6640, %v6924
        %v6944 = vmul.f32 %v6641, %v6924
        %v6945 = vmul.f32 %v6642, %v6924
        %v6946 = vmul.f32 %v6643, %v6924
        %v6947 = vmul.f32 %v6644, %v6924
        %v6948 = vmul.f32 %v6645, %v6924
        %v6949 = vsel %vm6453, %v6925, 0.0
        %6950 = vadd.xlane.f32.xlu0 %v6949
        %v6951 = vpop.xlane.xlu0 %6950
        %v6952 = vsel %vm368, %v6926, 0.0
        %6953 = vadd.xlane.f32.xlu0 %v6952
        %v6954 = vpop.xlane.xlu0 %6953
        %v6955 = vsel %vm371, %v6927, 0.0
        %6956 = vadd.xlane.f32.xlu0 %v6955
        %v6957 = vpop.xlane.xlu0 %6956
        %v6958 = vsel %vm6453, %v6928, 0.0
        %6959 = vadd.xlane.f32.xlu0 %v6958
        %v6960 = vpop.xlane.xlu0 %6959
        %v6961 = vsel %vm368, %v6929, 0.0
        %6962 = vadd.xlane.f32.xlu0 %v6961
        %v6963 = vpop.xlane.xlu0 %6962
        %v6964 = vsel %vm371, %v6930, 0.0
        %6965 = vadd.xlane.f32.xlu0 %v6964
        %v6966 = vpop.xlane.xlu0 %6965
        %v6967 = vsel %vm6453, %v6931, 0.0
        %6968 = vadd.xlane.f32.xlu0 %v6967
        %v6969 = vpop.xlane.xlu0 %6968
        %v6970 = vsel %vm368, %v6932, 0.0
        %6971 = vadd.xlane.f32.xlu0 %v6970
        %v6972 = vpop.xlane.xlu0 %6971
        %v6973 = vsel %vm371, %v6933, 0.0
        %6974 = vadd.xlane.f32.xlu0 %v6973
        %v6975 = vpop.xlane.xlu0 %6974
        %v6976 = vsel %vm6453, %v6934, 0.0
        %6977 = vadd.xlane.f32.xlu0 %v6976
        %v6978 = vpop.xlane.xlu0 %6977
        %v6979 = vsel %vm368, %v6935, 0.0
        %6980 = vadd.xlane.f32.xlu0 %v6979
        %v6981 = vpop.xlane.xlu0 %6980
        %v6982 = vsel %vm371, %v6936, 0.0
        %6983 = vadd.xlane.f32.xlu0 %v6982
        %v6984 = vpop.xlane.xlu0 %6983
        %v6985 = vsel %vm6453, %v6937, 0.0
        %6986 = vadd.xlane.f32.xlu0 %v6985
        %v6987 = vpop.xlane.xlu0 %6986
        %v6988 = vsel %vm368, %v6938, 0.0
        %6989 = vadd.xlane.f32.xlu0 %v6988
        %v6990 = vpop.xlane.xlu0 %6989
        %v6991 = vsel %vm371, %v6939, 0.0
        %6992 = vadd.xlane.f32.xlu0 %v6991
        %v6993 = vpop.xlane.xlu0 %6992
        %v6994 = vsel %vm6453, %v6940, 0.0
        %6995 = vadd.xlane.f32.xlu0 %v6994
        %v6996 = vpop.xlane.xlu0 %6995
        %v6997 = vsel %vm368, %v6941, 0.0
        %6998 = vadd.xlane.f32.xlu0 %v6997
        %v6999 = vpop.xlane.xlu0 %6998
        %v7000 = vsel %vm371, %v6942, 0.0
        %7001 = vadd.xlane.f32.xlu0 %v7000
        %v7002 = vpop.xlane.xlu0 %7001
        %v7003 = vsel %vm6453, %v6943, 0.0
        %7004 = vadd.xlane.f32.xlu0 %v7003
        %v7005 = vpop.xlane.xlu0 %7004
        %v7006 = vsel %vm368, %v6944, 0.0
        %7007 = vadd.xlane.f32.xlu0 %v7006
        %v7008 = vpop.xlane.xlu0 %7007
        %v7009 = vsel %vm371, %v6945, 0.0
        %7010 = vadd.xlane.f32.xlu0 %v7009
        %v7011 = vpop.xlane.xlu0 %7010
        %v7012 = vsel %vm6453, %v6946, 0.0
        %7013 = vadd.xlane.f32.xlu0 %v7012
        %v7014 = vpop.xlane.xlu0 %7013
        %v7015 = vsel %vm368, %v6947, 0.0
        %7016 = vadd.xlane.f32.xlu0 %v7015
        %v7017 = vpop.xlane.xlu0 %7016
        %v7018 = vsel %vm371, %v6948, 0.0
        %7019 = vadd.xlane.f32.xlu0 %v7018
        %v7020 = vpop.xlane.xlu0 %7019
        %v7045 = vrot.slane %v6951, 2
        %v7046 = vrot.slane %v6954, 2
        %v7047 = vsel %vm783, %v7045, %v7046
        %v7048 = vrot.slane %v6957, 2
        %v7049 = vsel %vm783, %v7046, %v7048
        %v7050 = vrot.slane %v6960, 2
        %v7051 = vrot.slane %v6963, 2
        %v7052 = vsel %vm783, %v7050, %v7051
        %v7053 = vrot.slane %v6966, 2
        %v7054 = vsel %vm783, %v7051, %v7053
        %v7055 = vrot.slane %v6969, 2
        %v7056 = vrot.slane %v6972, 2
        %v7057 = vsel %vm783, %v7055, %v7056
        %v7058 = vrot.slane %v6975, 2
        %v7059 = vsel %vm783, %v7056, %v7058
        %v7060 = vrot.slane %v6978, 2
        %v7061 = vrot.slane %v6981, 2
        %v7062 = vsel %vm783, %v7060, %v7061
        %v7063 = vrot.slane %v6984, 2
        %v7064 = vsel %vm783, %v7061, %v7063
        %v7065 = vrot.slane %v6987, 2
        %v7066 = vrot.slane %v6990, 2
        %v7067 = vsel %vm783, %v7065, %v7066
        %v7068 = vrot.slane %v6993, 2
        %v7069 = vsel %vm783, %v7066, %v7068
        %v7070 = vrot.slane %v6996, 2
        %v7071 = vrot.slane %v6999, 2
        %v7072 = vsel %vm783, %v7070, %v7071
        %v7073 = vrot.slane %v7002, 2
        %v7074 = vsel %vm783, %v7071, %v7073
        %v7075 = vrot.slane %v7005, 2
        %v7076 = vrot.slane %v7008, 2
        %v7077 = vsel %vm783, %v7075, %v7076
        %v7078 = vrot.slane %v7011, 2
        %v7079 = vsel %vm783, %v7076, %v7078
        %v7080 = vrot.slane %v7014, 2
        %v7081 = vrot.slane %v7017, 2
        %v7082 = vsel %vm783, %v7080, %v7081
        %v7083 = vrot.slane %v7020, 2
        %v7084 = vsel %vm783, %v7081, %v7083
        %v7101 = vadd.f32 %v6907, %v7047
        %v7102 = vadd.f32 %v6908, %v7049
        %v7103 = vadd.f32 %v6909, %v7052
        %v7104 = vadd.f32 %v6910, %v7054
        %v7105 = vadd.f32 %v6911, %v7057
        %v7106 = vadd.f32 %v6912, %v7059
        %v7107 = vadd.f32 %v6913, %v7062
        %v7108 = vadd.f32 %v6914, %v7064
        %v7109 = vadd.f32 %v6915, %v7067
        %v7110 = vadd.f32 %v6916, %v7069
        %v7111 = vadd.f32 %v6917, %v7072
        %v7112 = vadd.f32 %v6918, %v7074
        %v7113 = vadd.f32 %v6919, %v7077
        %v7114 = vadd.f32 %v6920, %v7079
        %v7115 = vadd.f32 %v6921, %v7082
        %v7116 = vadd.f32 %v6922, %v7084
        %s7117 = scalar_lea.vmem [#allocation4], 48
        %v7118 = vld [vmem:[%s7117] sm:$0xff]
        %v7119 = vld [vmem:[%s7117 + $0x8] sm:$0xff]
        %v7120 = vld [vmem:[%s7117 + $0x10] sm:$0x3]
        %v7121 = vld [vmem:[%s7117 + $0x18] sm:$0xff]
        %v7122 = vld [vmem:[%s7117 + $0x20] sm:$0xff]
        %v7123 = vld [vmem:[%s7117 + $0x28] sm:$0x3]
        %v7124 = vld [vmem:[%s7117 + $0x30] sm:$0xff]
        %v7125 = vld [vmem:[%s7117 + $0x38] sm:$0xff]
        %v7126 = vld [vmem:[%s7117 + $0x40] sm:$0x3]
        %v7127 = vld [vmem:[%s7117 + $0x48] sm:$0xff]
        %v7128 = vld [vmem:[%s7117 + $0x50] sm:$0xff]
        %v7129 = vld [vmem:[%s7117 + $0x58] sm:$0x3]
        %v7130 = vld [vmem:[%s7117 + $0x60] sm:$0xff]
        %v7131 = vld [vmem:[%s7117 + $0x68] sm:$0xff]
        %v7132 = vld [vmem:[%s7117 + $0x70] sm:$0x3]
        %v7133 = vld [vmem:[%s7117 + $0x78] sm:$0xff]
        %v7134 = vld [vmem:[%s7117 + $0x80] sm:$0xff]
        %v7135 = vld [vmem:[%s7117 + $0x88] sm:$0x3]
        %v7136 = vld [vmem:[%s7117 + $0x90] sm:$0xff]
        %v7137 = vld [vmem:[%s7117 + $0x98] sm:$0xff]
        %v7138 = vld [vmem:[%s7117 + $0xa0] sm:$0x3]
        %v7139 = vld [vmem:[%s7117 + $0xa8] sm:$0xff]
        %v7140 = vld [vmem:[%s7117 + $0xb0] sm:$0xff]
        %v7141 = vld [vmem:[%s7117 + $0xb8] sm:$0x3]
        %s7142 = scalar_lea.vmem %s5, 8
        %v7143 = vld [vmem:[%s7142] sm:$0x1]
        %v7144 = vperm.slane %v7143, 0
        %v7145 = vmul.f32 %v7118, %v7144
        %v7146 = vmul.f32 %v7119, %v7144
        %v7147 = vmul.f32 %v7121, %v7144
        %v7148 = vmul.f32 %v7122, %v7144
        %v7149 = vmul.f32 %v7124, %v7144
        %v7150 = vmul.f32 %v7125, %v7144
        %v7151 = vmul.f32 %v7127, %v7144
        %v7152 = vmul.f32 %v7128, %v7144
        %v7153 = vmul.f32 %v7130, %v7144
        %v7154 = vmul.f32 %v7131, %v7144
        %v7155 = vmul.f32 %v7133, %v7144
        %v7156 = vmul.f32 %v7134, %v7144
        %v7157 = vmul.f32 %v7136, %v7144
        %v7158 = vmul.f32 %v7137, %v7144
        %v7159 = vmul.f32 %v7139, %v7144
        %v7160 = vmul.f32 %v7140, %v7144
        %v7161 = vsel %vm368, %v7145, 0.0
        %7162 = vadd.xlane.f32.xlu0 %v7161
        %v7163 = vpop.xlane.xlu0 %7162
        %v7164 = vsel %vm368, %v7146, 0.0
        %7165 = vadd.xlane.f32.xlu0 %v7164
        %v7166 = vpop.xlane.xlu0 %7165
        %v7167 = vsel %vm368, %v7147, 0.0
        %7168 = vadd.xlane.f32.xlu0 %v7167
        %v7169 = vpop.xlane.xlu0 %7168
        %v7170 = vsel %vm368, %v7148, 0.0
        %7171 = vadd.xlane.f32.xlu0 %v7170
        %v7172 = vpop.xlane.xlu0 %7171
        %v7173 = vsel %vm368, %v7149, 0.0
        %7174 = vadd.xlane.f32.xlu0 %v7173
        %v7175 = vpop.xlane.xlu0 %7174
        %v7176 = vsel %vm368, %v7150, 0.0
        %7177 = vadd.xlane.f32.xlu0 %v7176
        %v7178 = vpop.xlane.xlu0 %7177
        %v7179 = vsel %vm368, %v7151, 0.0
        %7180 = vadd.xlane.f32.xlu0 %v7179
        %v7181 = vpop.xlane.xlu0 %7180
        %v7182 = vsel %vm368, %v7152, 0.0
        %7183 = vadd.xlane.f32.xlu0 %v7182
        %v7184 = vpop.xlane.xlu0 %7183
        %v7185 = vsel %vm368, %v7153, 0.0
        %7186 = vadd.xlane.f32.xlu0 %v7185
        %v7187 = vpop.xlane.xlu0 %7186
        %v7188 = vsel %vm368, %v7154, 0.0
        %7189 = vadd.xlane.f32.xlu0 %v7188
        %v7190 = vpop.xlane.xlu0 %7189
        %v7191 = vsel %vm368, %v7155, 0.0
        %7192 = vadd.xlane.f32.xlu0 %v7191
        %v7193 = vpop.xlane.xlu0 %7192
        %v7194 = vsel %vm368, %v7156, 0.0
        %7195 = vadd.xlane.f32.xlu0 %v7194
        %v7196 = vpop.xlane.xlu0 %7195
        %v7197 = vsel %vm368, %v7157, 0.0
        %7198 = vadd.xlane.f32.xlu0 %v7197
        %v7199 = vpop.xlane.xlu0 %7198
        %v7200 = vsel %vm368, %v7158, 0.0
        %7201 = vadd.xlane.f32.xlu0 %v7200
        %v7202 = vpop.xlane.xlu0 %7201
        %v7203 = vsel %vm368, %v7159, 0.0
        %7204 = vadd.xlane.f32.xlu0 %v7203
        %v7205 = vpop.xlane.xlu0 %7204
        %v7206 = vsel %vm368, %v7160, 0.0
        %7207 = vadd.xlane.f32.xlu0 %v7206
        %v7208 = vpop.xlane.xlu0 %7207
        %v7209 = vadd.f32 %v7101, %v7163
        %v7210 = vadd.f32 %v7102, %v7166
        %v7211 = vadd.f32 %v7103, %v7169
        %v7212 = vadd.f32 %v7104, %v7172
        %v7213 = vadd.f32 %v7105, %v7175
        %v7214 = vadd.f32 %v7106, %v7178
        %v7215 = vadd.f32 %v7107, %v7181
        %v7216 = vadd.f32 %v7108, %v7184
        %v7217 = vadd.f32 %v7109, %v7187
        %v7218 = vadd.f32 %v7110, %v7190
        %v7219 = vadd.f32 %v7111, %v7193
        %v7220 = vadd.f32 %v7112, %v7196
        %v7221 = vadd.f32 %v7113, %v7199
        %v7222 = vadd.f32 %v7114, %v7202
        %v7223 = vadd.f32 %v7115, %v7205
        %v7224 = vadd.f32 %v7116, %v7208
        %v7225 = vld [vmem:[%s7142 + $0x1] sm:$0x1]
        %v7226 = vperm.slane %v7225, 0
        %v7227 = vmul.f32 %v7118, %v7226
        %v7228 = vmul.f32 %v7119, %v7226
        %v7229 = vmul.f32 %v7120, %v7226
        %v7230 = vmul.f32 %v7121, %v7226
        %v7231 = vmul.f32 %v7122, %v7226
        %v7232 = vmul.f32 %v7123, %v7226
        %v7233 = vmul.f32 %v7124, %v7226
        %v7234 = vmul.f32 %v7125, %v7226
        %v7235 = vmul.f32 %v7126, %v7226
        %v7236 = vmul.f32 %v7127, %v7226
        %v7237 = vmul.f32 %v7128, %v7226
        %v7238 = vmul.f32 %v7129, %v7226
        %v7239 = vmul.f32 %v7130, %v7226
        %v7240 = vmul.f32 %v7131, %v7226
        %v7241 = vmul.f32 %v7132, %v7226
        %v7242 = vmul.f32 %v7133, %v7226
        %v7243 = vmul.f32 %v7134, %v7226
        %v7244 = vmul.f32 %v7135, %v7226
        %v7245 = vmul.f32 %v7136, %v7226
        %v7246 = vmul.f32 %v7137, %v7226
        %v7247 = vmul.f32 %v7138, %v7226
        %v7248 = vmul.f32 %v7139, %v7226
        %v7249 = vmul.f32 %v7140, %v7226
        %v7250 = vmul.f32 %v7141, %v7226
        %v7251 = vsel %vm6258, %v7227, 0.0
        %7252 = vadd.xlane.f32.xlu0 %v7251
        %v7253 = vpop.xlane.xlu0 %7252
        %v7254 = vsel %vm368, %v7228, 0.0
        %7255 = vadd.xlane.f32.xlu0 %v7254
        %v7256 = vpop.xlane.xlu0 %7255
        %v7257 = vsel %vm377, %v7229, 0.0
        %7258 = vadd.xlane.f32.xlu0 %v7257
        %v7259 = vpop.xlane.xlu0 %7258
        %v7260 = vsel %vm6258, %v7230, 0.0
        %7261 = vadd.xlane.f32.xlu0 %v7260
        %v7262 = vpop.xlane.xlu0 %7261
        %v7263 = vsel %vm368, %v7231, 0.0
        %7264 = vadd.xlane.f32.xlu0 %v7263
        %v7265 = vpop.xlane.xlu0 %7264
        %v7266 = vsel %vm377, %v7232, 0.0
        %7267 = vadd.xlane.f32.xlu0 %v7266
        %v7268 = vpop.xlane.xlu0 %7267
        %v7269 = vsel %vm6258, %v7233, 0.0
        %7270 = vadd.xlane.f32.xlu0 %v7269
        %v7271 = vpop.xlane.xlu0 %7270
        %v7272 = vsel %vm368, %v7234, 0.0
        %7273 = vadd.xlane.f32.xlu0 %v7272
        %v7274 = vpop.xlane.xlu0 %7273
        %v7275 = vsel %vm377, %v7235, 0.0
        %7276 = vadd.xlane.f32.xlu0 %v7275
        %v7277 = vpop.xlane.xlu0 %7276
        %v7278 = vsel %vm6258, %v7236, 0.0
        %7279 = vadd.xlane.f32.xlu0 %v7278
        %v7280 = vpop.xlane.xlu0 %7279
        %v7281 = vsel %vm368, %v7237, 0.0
        %7282 = vadd.xlane.f32.xlu0 %v7281
        %v7283 = vpop.xlane.xlu0 %7282
        %v7284 = vsel %vm377, %v7238, 0.0
        %7285 = vadd.xlane.f32.xlu0 %v7284
        %v7286 = vpop.xlane.xlu0 %7285
        %v7287 = vsel %vm6258, %v7239, 0.0
        %7288 = vadd.xlane.f32.xlu0 %v7287
        %v7289 = vpop.xlane.xlu0 %7288
        %v7290 = vsel %vm368, %v7240, 0.0
        %7291 = vadd.xlane.f32.xlu0 %v7290
        %v7292 = vpop.xlane.xlu0 %7291
        %v7293 = vsel %vm377, %v7241, 0.0
        %7294 = vadd.xlane.f32.xlu0 %v7293
        %v7295 = vpop.xlane.xlu0 %7294
        %v7296 = vsel %vm6258, %v7242, 0.0
        %7297 = vadd.xlane.f32.xlu0 %v7296
        %v7298 = vpop.xlane.xlu0 %7297
        %v7299 = vsel %vm368, %v7243, 0.0
        %7300 = vadd.xlane.f32.xlu0 %v7299
        %v7301 = vpop.xlane.xlu0 %7300
        %v7302 = vsel %vm377, %v7244, 0.0
        %7303 = vadd.xlane.f32.xlu0 %v7302
        %v7304 = vpop.xlane.xlu0 %7303
        %v7305 = vsel %vm6258, %v7245, 0.0
        %7306 = vadd.xlane.f32.xlu0 %v7305
        %v7307 = vpop.xlane.xlu0 %7306
        %v7308 = vsel %vm368, %v7246, 0.0
        %7309 = vadd.xlane.f32.xlu0 %v7308
        %v7310 = vpop.xlane.xlu0 %7309
        %v7311 = vsel %vm377, %v7247, 0.0
        %7312 = vadd.xlane.f32.xlu0 %v7311
        %v7313 = vpop.xlane.xlu0 %7312
        %v7314 = vsel %vm6258, %v7248, 0.0
        %7315 = vadd.xlane.f32.xlu0 %v7314
        %v7316 = vpop.xlane.xlu0 %7315
        %v7317 = vsel %vm368, %v7249, 0.0
        %7318 = vadd.xlane.f32.xlu0 %v7317
        %v7319 = vpop.xlane.xlu0 %7318
        %v7320 = vsel %vm377, %v7250, 0.0
        %7321 = vadd.xlane.f32.xlu0 %v7320
        %v7322 = vpop.xlane.xlu0 %7321
        %v7347 = vrot.slane %v7253, 1
        %v7348 = vrot.slane %v7256, 1
        %v7349 = vsel %vm541, %v7347, %v7348
        %v7350 = vrot.slane %v7259, 1
        %v7351 = vsel %vm541, %v7348, %v7350
        %v7352 = vrot.slane %v7262, 1
        %v7353 = vrot.slane %v7265, 1
        %v7354 = vsel %vm541, %v7352, %v7353
        %v7355 = vrot.slane %v7268, 1
        %v7356 = vsel %vm541, %v7353, %v7355
        %v7357 = vrot.slane %v7271, 1
        %v7358 = vrot.slane %v7274, 1
        %v7359 = vsel %vm541, %v7357, %v7358
        %v7360 = vrot.slane %v7277, 1
        %v7361 = vsel %vm541, %v7358, %v7360
        %v7362 = vrot.slane %v7280, 1
        %v7363 = vrot.slane %v7283, 1
        %v7364 = vsel %vm541, %v7362, %v7363
        %v7365 = vrot.slane %v7286, 1
        %v7366 = vsel %vm541, %v7363, %v7365
        %v7367 = vrot.slane %v7289, 1
        %v7368 = vrot.slane %v7292, 1
        %v7369 = vsel %vm541, %v7367, %v7368
        %v7370 = vrot.slane %v7295, 1
        %v7371 = vsel %vm541, %v7368, %v7370
        %v7372 = vrot.slane %v7298, 1
        %v7373 = vrot.slane %v7301, 1
        %v7374 = vsel %vm541, %v7372, %v7373
        %v7375 = vrot.slane %v7304, 1
        %v7376 = vsel %vm541, %v7373, %v7375
        %v7377 = vrot.slane %v7307, 1
        %v7378 = vrot.slane %v7310, 1
        %v7379 = vsel %vm541, %v7377, %v7378
        %v7380 = vrot.slane %v7313, 1
        %v7381 = vsel %vm541, %v7378, %v7380
        %v7382 = vrot.slane %v7316, 1
        %v7383 = vrot.slane %v7319, 1
        %v7384 = vsel %vm541, %v7382, %v7383
        %v7385 = vrot.slane %v7322, 1
        %v7386 = vsel %vm541, %v7383, %v7385
        %v7403 = vadd.f32 %v7209, %v7349
        %v7404 = vadd.f32 %v7210, %v7351
        %v7405 = vadd.f32 %v7211, %v7354
        %v7406 = vadd.f32 %v7212, %v7356
        %v7407 = vadd.f32 %v7213, %v7359
        %v7408 = vadd.f32 %v7214, %v7361
        %v7409 = vadd.f32 %v7215, %v7364
        %v7410 = vadd.f32 %v7216, %v7366
        %v7411 = vadd.f32 %v7217, %v7369
        %v7412 = vadd.f32 %v7218, %v7371
        %v7413 = vadd.f32 %v7219, %v7374
        %v7414 = vadd.f32 %v7220, %v7376
        %v7415 = vadd.f32 %v7221, %v7379
        %v7416 = vadd.f32 %v7222, %v7381
        %v7417 = vadd.f32 %v7223, %v7384
        %v7418 = vadd.f32 %v7224, %v7386
        %v7419 = vld [vmem:[%s7142 + $0x2] sm:$0x1]
        %v7420 = vperm.slane %v7419, 0
        %v7421 = vmul.f32 %v7118, %v7420
        %v7422 = vmul.f32 %v7119, %v7420
        %v7423 = vmul.f32 %v7120, %v7420
        %v7424 = vmul.f32 %v7121, %v7420
        %v7425 = vmul.f32 %v7122, %v7420
        %v7426 = vmul.f32 %v7123, %v7420
        %v7427 = vmul.f32 %v7124, %v7420
        %v7428 = vmul.f32 %v7125, %v7420
        %v7429 = vmul.f32 %v7126, %v7420
        %v7430 = vmul.f32 %v7127, %v7420
        %v7431 = vmul.f32 %v7128, %v7420
        %v7432 = vmul.f32 %v7129, %v7420
        %v7433 = vmul.f32 %v7130, %v7420
        %v7434 = vmul.f32 %v7131, %v7420
        %v7435 = vmul.f32 %v7132, %v7420
        %v7436 = vmul.f32 %v7133, %v7420
        %v7437 = vmul.f32 %v7134, %v7420
        %v7438 = vmul.f32 %v7135, %v7420
        %v7439 = vmul.f32 %v7136, %v7420
        %v7440 = vmul.f32 %v7137, %v7420
        %v7441 = vmul.f32 %v7138, %v7420
        %v7442 = vmul.f32 %v7139, %v7420
        %v7443 = vmul.f32 %v7140, %v7420
        %v7444 = vmul.f32 %v7141, %v7420
        %v7445 = vsel %vm6453, %v7421, 0.0
        %7446 = vadd.xlane.f32.xlu0 %v7445
        %v7447 = vpop.xlane.xlu0 %7446
        %v7448 = vsel %vm368, %v7422, 0.0
        %7449 = vadd.xlane.f32.xlu0 %v7448
        %v7450 = vpop.xlane.xlu0 %7449
        %v7451 = vsel %vm371, %v7423, 0.0
        %7452 = vadd.xlane.f32.xlu0 %v7451
        %v7453 = vpop.xlane.xlu0 %7452
        %v7454 = vsel %vm6453, %v7424, 0.0
        %7455 = vadd.xlane.f32.xlu0 %v7454
        %v7456 = vpop.xlane.xlu0 %7455
        %v7457 = vsel %vm368, %v7425, 0.0
        %7458 = vadd.xlane.f32.xlu0 %v7457
        %v7459 = vpop.xlane.xlu0 %7458
        %v7460 = vsel %vm371, %v7426, 0.0
        %7461 = vadd.xlane.f32.xlu0 %v7460
        %v7462 = vpop.xlane.xlu0 %7461
        %v7463 = vsel %vm6453, %v7427, 0.0
        %7464 = vadd.xlane.f32.xlu0 %v7463
        %v7465 = vpop.xlane.xlu0 %7464
        %v7466 = vsel %vm368, %v7428, 0.0
        %7467 = vadd.xlane.f32.xlu0 %v7466
        %v7468 = vpop.xlane.xlu0 %7467
        %v7469 = vsel %vm371, %v7429, 0.0
        %7470 = vadd.xlane.f32.xlu0 %v7469
        %v7471 = vpop.xlane.xlu0 %7470
        %v7472 = vsel %vm6453, %v7430, 0.0
        %7473 = vadd.xlane.f32.xlu0 %v7472
        %v7474 = vpop.xlane.xlu0 %7473
        %v7475 = vsel %vm368, %v7431, 0.0
        %7476 = vadd.xlane.f32.xlu0 %v7475
        %v7477 = vpop.xlane.xlu0 %7476
        %v7478 = vsel %vm371, %v7432, 0.0
        %7479 = vadd.xlane.f32.xlu0 %v7478
        %v7480 = vpop.xlane.xlu0 %7479
        %v7481 = vsel %vm6453, %v7433, 0.0
        %7482 = vadd.xlane.f32.xlu0 %v7481
        %v7483 = vpop.xlane.xlu0 %7482
        %v7484 = vsel %vm368, %v7434, 0.0
        %7485 = vadd.xlane.f32.xlu0 %v7484
        %v7486 = vpop.xlane.xlu0 %7485
        %v7487 = vsel %vm371, %v7435, 0.0
        %7488 = vadd.xlane.f32.xlu0 %v7487
        %v7489 = vpop.xlane.xlu0 %7488
        %v7490 = vsel %vm6453, %v7436, 0.0
        %7491 = vadd.xlane.f32.xlu0 %v7490
        %v7492 = vpop.xlane.xlu0 %7491
        %v7493 = vsel %vm368, %v7437, 0.0
        %7494 = vadd.xlane.f32.xlu0 %v7493
        %v7495 = vpop.xlane.xlu0 %7494
        %v7496 = vsel %vm371, %v7438, 0.0
        %7497 = vadd.xlane.f32.xlu0 %v7496
        %v7498 = vpop.xlane.xlu0 %7497
        %v7499 = vsel %vm6453, %v7439, 0.0
        %7500 = vadd.xlane.f32.xlu0 %v7499
        %v7501 = vpop.xlane.xlu0 %7500
        %v7502 = vsel %vm368, %v7440, 0.0
        %7503 = vadd.xlane.f32.xlu0 %v7502
        %v7504 = vpop.xlane.xlu0 %7503
        %v7505 = vsel %vm371, %v7441, 0.0
        %7506 = vadd.xlane.f32.xlu0 %v7505
        %v7507 = vpop.xlane.xlu0 %7506
        %v7508 = vsel %vm6453, %v7442, 0.0
        %7509 = vadd.xlane.f32.xlu0 %v7508
        %v7510 = vpop.xlane.xlu0 %7509
        %v7511 = vsel %vm368, %v7443, 0.0
        %7512 = vadd.xlane.f32.xlu0 %v7511
        %v7513 = vpop.xlane.xlu0 %7512
        %v7514 = vsel %vm371, %v7444, 0.0
        %7515 = vadd.xlane.f32.xlu0 %v7514
        %v7516 = vpop.xlane.xlu0 %7515
        %v7541 = vrot.slane %v7447, 2
        %v7542 = vrot.slane %v7450, 2
        %v7543 = vsel %vm783, %v7541, %v7542
        %v7544 = vrot.slane %v7453, 2
        %v7545 = vsel %vm783, %v7542, %v7544
        %v7546 = vrot.slane %v7456, 2
        %v7547 = vrot.slane %v7459, 2
        %v7548 = vsel %vm783, %v7546, %v7547
        %v7549 = vrot.slane %v7462, 2
        %v7550 = vsel %vm783, %v7547, %v7549
        %v7551 = vrot.slane %v7465, 2
        %v7552 = vrot.slane %v7468, 2
        %v7553 = vsel %vm783, %v7551, %v7552
        %v7554 = vrot.slane %v7471, 2
        %v7555 = vsel %vm783, %v7552, %v7554
        %v7556 = vrot.slane %v7474, 2
        %v7557 = vrot.slane %v7477, 2
        %v7558 = vsel %vm783, %v7556, %v7557
        %v7559 = vrot.slane %v7480, 2
        %v7560 = vsel %vm783, %v7557, %v7559
        %v7561 = vrot.slane %v7483, 2
        %v7562 = vrot.slane %v7486, 2
        %v7563 = vsel %vm783, %v7561, %v7562
        %v7564 = vrot.slane %v7489, 2
        %v7565 = vsel %vm783, %v7562, %v7564
        %v7566 = vrot.slane %v7492, 2
        %v7567 = vrot.slane %v7495, 2
        %v7568 = vsel %vm783, %v7566, %v7567
        %v7569 = vrot.slane %v7498, 2
        %v7570 = vsel %vm783, %v7567, %v7569
        %v7571 = vrot.slane %v7501, 2
        %v7572 = vrot.slane %v7504, 2
        %v7573 = vsel %vm783, %v7571, %v7572
        %v7574 = vrot.slane %v7507, 2
        %v7575 = vsel %vm783, %v7572, %v7574
        %v7576 = vrot.slane %v7510, 2
        %v7577 = vrot.slane %v7513, 2
        %v7578 = vsel %vm783, %v7576, %v7577
        %v7579 = vrot.slane %v7516, 2
        %v7580 = vsel %vm783, %v7577, %v7579
        %v7597 = vadd.f32 %v7403, %v7543
        %v7598 = vadd.f32 %v7404, %v7545
        %v7599 = vadd.f32 %v7405, %v7548
        %v7600 = vadd.f32 %v7406, %v7550
        %v7601 = vadd.f32 %v7407, %v7553
        %v7602 = vadd.f32 %v7408, %v7555
        %v7603 = vadd.f32 %v7409, %v7558
        %v7604 = vadd.f32 %v7410, %v7560
        %v7605 = vadd.f32 %v7411, %v7563
        %v7606 = vadd.f32 %v7412, %v7565
        %v7607 = vadd.f32 %v7413, %v7568
        %v7608 = vadd.f32 %v7414, %v7570
        %v7609 = vadd.f32 %v7415, %v7573
        %v7610 = vadd.f32 %v7416, %v7575
        %v7611 = vadd.f32 %v7417, %v7578
        %v7612 = vadd.f32 %v7418, %v7580
        %v7613 = vld [vmem:[#allocation5] sm:$0x1]
        %v7615 = vperm.slane %v7613, 0
        %7616 = vset.pattern.permute.xlu0 0
        %7617 = vperm.xlu0 %7616, %v7615
        %v7618 = vpop.permute.xlu0 %7617
        %v7620 = vadd.f32 %v7597, %v7618
        %v7621 = vadd.f32 %v7598, %v7618
        %v7622 = vadd.f32 %v7599, %v7618
        %v7623 = vadd.f32 %v7600, %v7618
        %v7624 = vadd.f32 %v7601, %v7618
        %v7625 = vadd.f32 %v7602, %v7618
        %v7626 = vadd.f32 %v7603, %v7618
        %v7627 = vadd.f32 %v7604, %v7618
        %v7628 = vadd.f32 %v7605, %v7618
        %v7629 = vadd.f32 %v7606, %v7618
        %v7630 = vadd.f32 %v7607, %v7618
        %v7631 = vadd.f32 %v7608, %v7618
        %v7632 = vadd.f32 %v7609, %v7618
        %v7633 = vadd.f32 %v7610, %v7618
        %v7634 = vadd.f32 %v7611, %v7618
        %v7635 = vadd.f32 %v7612, %v7618
        %vm7636 = vcmp.gt.f32.partialorder %v7620, 0.0
        %vm7637 = vcmp.gt.f32.partialorder %v7621, 0.0
        %vm7638 = vcmp.gt.f32.partialorder %v7622, 0.0
        %vm7639 = vcmp.gt.f32.partialorder %v7623, 0.0
        %vm7640 = vcmp.gt.f32.partialorder %v7624, 0.0
        %vm7641 = vcmp.gt.f32.partialorder %v7625, 0.0
        %vm7642 = vcmp.gt.f32.partialorder %v7626, 0.0
        %vm7643 = vcmp.gt.f32.partialorder %v7627, 0.0
        %vm7644 = vcmp.gt.f32.partialorder %v7628, 0.0
        %vm7645 = vcmp.gt.f32.partialorder %v7629, 0.0
        %vm7646 = vcmp.gt.f32.partialorder %v7630, 0.0
        %vm7647 = vcmp.gt.f32.partialorder %v7631, 0.0
        %vm7648 = vcmp.gt.f32.partialorder %v7632, 0.0
        %vm7649 = vcmp.gt.f32.partialorder %v7633, 0.0
        %vm7650 = vcmp.gt.f32.partialorder %v7634, 0.0
        %vm7651 = vcmp.gt.f32.partialorder %v7635, 0.0
        %v7652 = vmul.f32 %v7620, 0.01
        %v7653 = vmul.f32 %v7621, 0.01
        %v7654 = vmul.f32 %v7622, 0.01
        %v7655 = vmul.f32 %v7623, 0.01
        %v7656 = vmul.f32 %v7624, 0.01
        %v7657 = vmul.f32 %v7625, 0.01
        %v7658 = vmul.f32 %v7626, 0.01
        %v7659 = vmul.f32 %v7627, 0.01
        %v7660 = vmul.f32 %v7628, 0.01
        %v7661 = vmul.f32 %v7629, 0.01
        %v7662 = vmul.f32 %v7630, 0.01
        %v7663 = vmul.f32 %v7631, 0.01
        %v7664 = vmul.f32 %v7632, 0.01
        %v7665 = vmul.f32 %v7633, 0.01
        %v7666 = vmul.f32 %v7634, 0.01
        %v7667 = vmul.f32 %v7635, 0.01
        %v7668 = vsel %vm7636, %v7620, %v7652
        %v7669 = vsel %vm7637, %v7621, %v7653
        %v7670 = vsel %vm7638, %v7622, %v7654
        %v7671 = vsel %vm7639, %v7623, %v7655
        %v7672 = vsel %vm7640, %v7624, %v7656
        %v7673 = vsel %vm7641, %v7625, %v7657
        %v7674 = vsel %vm7642, %v7626, %v7658
        %v7675 = vsel %vm7643, %v7627, %v7659
        %v7676 = vsel %vm7644, %v7628, %v7660
        %v7677 = vsel %vm7645, %v7629, %v7661
        %v7678 = vsel %vm7646, %v7630, %v7662
        %v7679 = vsel %vm7647, %v7631, %v7663
        %v7680 = vsel %vm7648, %v7632, %v7664
        %v7681 = vsel %vm7649, %v7633, %v7665
        %v7682 = vsel %vm7650, %v7634, %v7666
        %v7683 = vsel %vm7651, %v7635, %v7667
        %7700 = vset.pattern.permute.xlu0 0
        %7701 = vperm.xlu0 %7700, %v7668
        %v7702 = vpop.permute.xlu0 %7701
        %7703 = vset.pattern.permute.xlu0 0
        %7704 = vperm.xlu0 %7703, %v7669
        %v7705 = vpop.permute.xlu0 %7704
        %7706 = vset.pattern.permute.xlu0 0
        %7707 = vperm.xlu0 %7706, %v7670
        %v7708 = vpop.permute.xlu0 %7707
        %7709 = vset.pattern.permute.xlu0 0
        %7710 = vperm.xlu0 %7709, %v7671
        %v7711 = vpop.permute.xlu0 %7710
        %7712 = vset.pattern.permute.xlu0 0
        %7713 = vperm.xlu0 %7712, %v7672
        %v7714 = vpop.permute.xlu0 %7713
        %7715 = vset.pattern.permute.xlu0 0
        %7716 = vperm.xlu0 %7715, %v7673
        %v7717 = vpop.permute.xlu0 %7716
        %7718 = vset.pattern.permute.xlu0 0
        %7719 = vperm.xlu0 %7718, %v7674
        %v7720 = vpop.permute.xlu0 %7719
        %7721 = vset.pattern.permute.xlu0 0
        %7722 = vperm.xlu0 %7721, %v7675
        %v7723 = vpop.permute.xlu0 %7722
        %7724 = vset.pattern.permute.xlu0 0
        %7725 = vperm.xlu0 %7724, %v7676
        %v7726 = vpop.permute.xlu0 %7725
        %7727 = vset.pattern.permute.xlu0 0
        %7728 = vperm.xlu0 %7727, %v7677
        %v7729 = vpop.permute.xlu0 %7728
        %7730 = vset.pattern.permute.xlu0 0
        %7731 = vperm.xlu0 %7730, %v7678
        %v7732 = vpop.permute.xlu0 %7731
        %7733 = vset.pattern.permute.xlu0 0
        %7734 = vperm.xlu0 %7733, %v7679
        %v7735 = vpop.permute.xlu0 %7734
        %7736 = vset.pattern.permute.xlu0 0
        %7737 = vperm.xlu0 %7736, %v7680
        %v7738 = vpop.permute.xlu0 %7737
        %7739 = vset.pattern.permute.xlu0 0
        %7740 = vperm.xlu0 %7739, %v7681
        %v7741 = vpop.permute.xlu0 %7740
        %7742 = vset.pattern.permute.xlu0 0
        %7743 = vperm.xlu0 %7742, %v7682
        %v7744 = vpop.permute.xlu0 %7743
        %7745 = vset.pattern.permute.xlu0 0
        %7746 = vperm.xlu0 %7745, %v7683
        %v7747 = vpop.permute.xlu0 %7746
        %v7748 = vlaneseq
        %v7749 = vand.u32 %v7748, 127
        %v7750 = vperm.slane %v7702, %v7749
        %v7751 = vadd.s32 %v7749, 4294967288
        %v7752 = vperm.slane %v7705, %v7751
        %vm7753 = vcmask 130112
        %v7754 = vsel %vm7753, %v7752, %v7750
        %v7755 = vperm.slane %v7708, %v7749
        %v7756 = vperm.slane %v7711, %v7751
        %v7757 = vsel %vm7753, %v7756, %v7755
        %v7758 = vperm.slane %v7714, %v7749
        %v7759 = vperm.slane %v7717, %v7751
        %v7760 = vsel %vm7753, %v7759, %v7758
        %v7761 = vperm.slane %v7720, %v7749
        %v7762 = vperm.slane %v7723, %v7751
        %v7763 = vsel %vm7753, %v7762, %v7761
        %v7764 = vperm.slane %v7726, %v7749
        %v7765 = vperm.slane %v7729, %v7751
        %v7766 = vsel %vm7753, %v7765, %v7764
        %v7767 = vperm.slane %v7732, %v7749
        %v7768 = vperm.slane %v7735, %v7751
        %v7769 = vsel %vm7753, %v7768, %v7767
        %v7770 = vperm.slane %v7738, %v7749
        %v7771 = vperm.slane %v7741, %v7751
        %v7772 = vsel %vm7753, %v7771, %v7770
        %v7773 = vperm.slane %v7744, %v7749
        %v7774 = vperm.slane %v7747, %v7751
        %v7775 = vsel %vm7753, %v7774, %v7773
        %vm7776 = vcmask 1041409
        %v7777 = vsel %vm7776, %v7757, %v7754
        %vm7778 = vcmask 1042434
        %v7779 = vsel %vm7778, %v7760, %v7777
        %vm7780 = vcmask 1043459
        %v7781 = vsel %vm7780, %v7763, %v7779
        %vm7782 = vcmask 1044484
        %v7783 = vsel %vm7782, %v7766, %v7781
        %vm7784 = vcmask 1045509
        %v7785 = vsel %vm7784, %v7769, %v7783
        %vm7786 = vcmask 1046534
        %v7787 = vsel %vm7786, %v7772, %v7785
        %vm7788 = vcmask 1047559
        %v7789 = vsel %vm7788, %v7775, %v7787
        %vm7791 = vcmask 130048
        %7792 = vst.msk [vmem:[%s273] sm:$0xff] %vm7791, %v7789
        %s7793 = scalar_lea.vmem [#allocation4], 192
        %v7794 = vld [vmem:[%s7793] sm:$0xff]
        %v7795 = vld [vmem:[%s7793 + $0x8] sm:$0xff]
        %v7796 = vld [vmem:[%s7793 + $0x10] sm:$0x3]
        %v7797 = vld [vmem:[%s7793 + $0x18] sm:$0xff]
        %v7798 = vld [vmem:[%s7793 + $0x20] sm:$0xff]
        %v7799 = vld [vmem:[%s7793 + $0x28] sm:$0x3]
        %v7800 = vld [vmem:[%s7793 + $0x30] sm:$0xff]
        %v7801 = vld [vmem:[%s7793 + $0x38] sm:$0xff]
        %v7802 = vld [vmem:[%s7793 + $0x40] sm:$0x3]
        %v7803 = vld [vmem:[%s7793 + $0x48] sm:$0xff]
        %v7804 = vld [vmem:[%s7793 + $0x50] sm:$0xff]
        %v7805 = vld [vmem:[%s7793 + $0x58] sm:$0x3]
        %v7806 = vld [vmem:[%s7793 + $0x60] sm:$0xff]
        %v7807 = vld [vmem:[%s7793 + $0x68] sm:$0xff]
        %v7808 = vld [vmem:[%s7793 + $0x70] sm:$0x3]
        %v7809 = vld [vmem:[%s7793 + $0x78] sm:$0xff]
        %v7810 = vld [vmem:[%s7793 + $0x80] sm:$0xff]
        %v7811 = vld [vmem:[%s7793 + $0x88] sm:$0x3]
        %v7812 = vld [vmem:[%s7793 + $0x90] sm:$0xff]
        %v7813 = vld [vmem:[%s7793 + $0x98] sm:$0xff]
        %v7814 = vld [vmem:[%s7793 + $0xa0] sm:$0x3]
        %v7815 = vld [vmem:[%s7793 + $0xa8] sm:$0xff]
        %v7816 = vld [vmem:[%s7793 + $0xb0] sm:$0xff]
        %v7817 = vld [vmem:[%s7793 + $0xb8] sm:$0x3]
        %v7818 = vld [vmem:[%s5] sm:$0x1]
        %v7819 = vperm.slane %v7818, 0
        %v7820 = vmul.f32 %v7794, %v7819
        %v7821 = vmul.f32 %v7795, %v7819
        %v7822 = vmul.f32 %v7797, %v7819
        %v7823 = vmul.f32 %v7798, %v7819
        %v7824 = vmul.f32 %v7800, %v7819
        %v7825 = vmul.f32 %v7801, %v7819
        %v7826 = vmul.f32 %v7803, %v7819
        %v7827 = vmul.f32 %v7804, %v7819
        %v7828 = vmul.f32 %v7806, %v7819
        %v7829 = vmul.f32 %v7807, %v7819
        %v7830 = vmul.f32 %v7809, %v7819
        %v7831 = vmul.f32 %v7810, %v7819
        %v7832 = vmul.f32 %v7812, %v7819
        %v7833 = vmul.f32 %v7813, %v7819
        %v7834 = vmul.f32 %v7815, %v7819
        %v7835 = vmul.f32 %v7816, %v7819
        %v7836 = vsel %vm368, %v7820, 0.0
        %7837 = vadd.xlane.f32.xlu0 %v7836
        %v7838 = vpop.xlane.xlu0 %7837
        %v7839 = vsel %vm368, %v7821, 0.0
        %7840 = vadd.xlane.f32.xlu0 %v7839
        %v7841 = vpop.xlane.xlu0 %7840
        %v7842 = vsel %vm368, %v7822, 0.0
        %7843 = vadd.xlane.f32.xlu0 %v7842
        %v7844 = vpop.xlane.xlu0 %7843
        %v7845 = vsel %vm368, %v7823, 0.0
        %7846 = vadd.xlane.f32.xlu0 %v7845
        %v7847 = vpop.xlane.xlu0 %7846
        %v7848 = vsel %vm368, %v7824, 0.0
        %7849 = vadd.xlane.f32.xlu0 %v7848
        %v7850 = vpop.xlane.xlu0 %7849
        %v7851 = vsel %vm368, %v7825, 0.0
        %7852 = vadd.xlane.f32.xlu0 %v7851
        %v7853 = vpop.xlane.xlu0 %7852
        %v7854 = vsel %vm368, %v7826, 0.0
        %7855 = vadd.xlane.f32.xlu0 %v7854
        %v7856 = vpop.xlane.xlu0 %7855
        %v7857 = vsel %vm368, %v7827, 0.0
        %7858 = vadd.xlane.f32.xlu0 %v7857
        %v7859 = vpop.xlane.xlu0 %7858
        %v7860 = vsel %vm368, %v7828, 0.0
        %7861 = vadd.xlane.f32.xlu0 %v7860
        %v7862 = vpop.xlane.xlu0 %7861
        %v7863 = vsel %vm368, %v7829, 0.0
        %7864 = vadd.xlane.f32.xlu0 %v7863
        %v7865 = vpop.xlane.xlu0 %7864
        %v7866 = vsel %vm368, %v7830, 0.0
        %7867 = vadd.xlane.f32.xlu0 %v7866
        %v7868 = vpop.xlane.xlu0 %7867
        %v7869 = vsel %vm368, %v7831, 0.0
        %7870 = vadd.xlane.f32.xlu0 %v7869
        %v7871 = vpop.xlane.xlu0 %7870
        %v7872 = vsel %vm368, %v7832, 0.0
        %7873 = vadd.xlane.f32.xlu0 %v7872
        %v7874 = vpop.xlane.xlu0 %7873
        %v7875 = vsel %vm368, %v7833, 0.0
        %7876 = vadd.xlane.f32.xlu0 %v7875
        %v7877 = vpop.xlane.xlu0 %7876
        %v7878 = vsel %vm368, %v7834, 0.0
        %7879 = vadd.xlane.f32.xlu0 %v7878
        %v7880 = vpop.xlane.xlu0 %7879
        %v7881 = vsel %vm368, %v7835, 0.0
        %7882 = vadd.xlane.f32.xlu0 %v7881
        %v7883 = vpop.xlane.xlu0 %7882
        %v7884 = vadd.f32 %v7838, 0.0
        %v7885 = vadd.f32 %v7841, 0.0
        %v7886 = vadd.f32 %v7844, 0.0
        %v7887 = vadd.f32 %v7847, 0.0
        %v7888 = vadd.f32 %v7850, 0.0
        %v7889 = vadd.f32 %v7853, 0.0
        %v7890 = vadd.f32 %v7856, 0.0
        %v7891 = vadd.f32 %v7859, 0.0
        %v7892 = vadd.f32 %v7862, 0.0
        %v7893 = vadd.f32 %v7865, 0.0
        %v7894 = vadd.f32 %v7868, 0.0
        %v7895 = vadd.f32 %v7871, 0.0
        %v7896 = vadd.f32 %v7874, 0.0
        %v7897 = vadd.f32 %v7877, 0.0
        %v7898 = vadd.f32 %v7880, 0.0
        %v7899 = vadd.f32 %v7883, 0.0
        %v7900 = vld [vmem:[%s5 + $0x1] sm:$0x1]
        %v7901 = vperm.slane %v7900, 0
        %v7902 = vmul.f32 %v7794, %v7901
        %v7903 = vmul.f32 %v7795, %v7901
        %v7904 = vmul.f32 %v7796, %v7901
        %v7905 = vmul.f32 %v7797, %v7901
        %v7906 = vmul.f32 %v7798, %v7901
        %v7907 = vmul.f32 %v7799, %v7901
        %v7908 = vmul.f32 %v7800, %v7901
        %v7909 = vmul.f32 %v7801, %v7901
        %v7910 = vmul.f32 %v7802, %v7901
        %v7911 = vmul.f32 %v7803, %v7901
        %v7912 = vmul.f32 %v7804, %v7901
        %v7913 = vmul.f32 %v7805, %v7901
        %v7914 = vmul.f32 %v7806, %v7901
        %v7915 = vmul.f32 %v7807, %v7901
        %v7916 = vmul.f32 %v7808, %v7901
        %v7917 = vmul.f32 %v7809, %v7901
        %v7918 = vmul.f32 %v7810, %v7901
        %v7919 = vmul.f32 %v7811, %v7901
        %v7920 = vmul.f32 %v7812, %v7901
        %v7921 = vmul.f32 %v7813, %v7901
        %v7922 = vmul.f32 %v7814, %v7901
        %v7923 = vmul.f32 %v7815, %v7901
        %v7924 = vmul.f32 %v7816, %v7901
        %v7925 = vmul.f32 %v7817, %v7901
        %v7926 = vsel %vm6258, %v7902, 0.0
        %7927 = vadd.xlane.f32.xlu0 %v7926
        %v7928 = vpop.xlane.xlu0 %7927
        %v7929 = vsel %vm368, %v7903, 0.0
        %7930 = vadd.xlane.f32.xlu0 %v7929
        %v7931 = vpop.xlane.xlu0 %7930
        %v7932 = vsel %vm377, %v7904, 0.0
        %7933 = vadd.xlane.f32.xlu0 %v7932
        %v7934 = vpop.xlane.xlu0 %7933
        %v7935 = vsel %vm6258, %v7905, 0.0
        %7936 = vadd.xlane.f32.xlu0 %v7935
        %v7937 = vpop.xlane.xlu0 %7936
        %v7938 = vsel %vm368, %v7906, 0.0
        %7939 = vadd.xlane.f32.xlu0 %v7938
        %v7940 = vpop.xlane.xlu0 %7939
        %v7941 = vsel %vm377, %v7907, 0.0
        %7942 = vadd.xlane.f32.xlu0 %v7941
        %v7943 = vpop.xlane.xlu0 %7942
        %v7944 = vsel %vm6258, %v7908, 0.0
        %7945 = vadd.xlane.f32.xlu0 %v7944
        %v7946 = vpop.xlane.xlu0 %7945
        %v7947 = vsel %vm368, %v7909, 0.0
        %7948 = vadd.xlane.f32.xlu0 %v7947
        %v7949 = vpop.xlane.xlu0 %7948
        %v7950 = vsel %vm377, %v7910, 0.0
        %7951 = vadd.xlane.f32.xlu0 %v7950
        %v7952 = vpop.xlane.xlu0 %7951
        %v7953 = vsel %vm6258, %v7911, 0.0
        %7954 = vadd.xlane.f32.xlu0 %v7953
        %v7955 = vpop.xlane.xlu0 %7954
        %v7956 = vsel %vm368, %v7912, 0.0
        %7957 = vadd.xlane.f32.xlu0 %v7956
        %v7958 = vpop.xlane.xlu0 %7957
        %v7959 = vsel %vm377, %v7913, 0.0
        %7960 = vadd.xlane.f32.xlu0 %v7959
        %v7961 = vpop.xlane.xlu0 %7960
        %v7962 = vsel %vm6258, %v7914, 0.0
        %7963 = vadd.xlane.f32.xlu0 %v7962
        %v7964 = vpop.xlane.xlu0 %7963
        %v7965 = vsel %vm368, %v7915, 0.0
        %7966 = vadd.xlane.f32.xlu0 %v7965
        %v7967 = vpop.xlane.xlu0 %7966
        %v7968 = vsel %vm377, %v7916, 0.0
        %7969 = vadd.xlane.f32.xlu0 %v7968
        %v7970 = vpop.xlane.xlu0 %7969
        %v7971 = vsel %vm6258, %v7917, 0.0
        %7972 = vadd.xlane.f32.xlu0 %v7971
        %v7973 = vpop.xlane.xlu0 %7972
        %v7974 = vsel %vm368, %v7918, 0.0
        %7975 = vadd.xlane.f32.xlu0 %v7974
        %v7976 = vpop.xlane.xlu0 %7975
        %v7977 = vsel %vm377, %v7919, 0.0
        %7978 = vadd.xlane.f32.xlu0 %v7977
        %v7979 = vpop.xlane.xlu0 %7978
        %v7980 = vsel %vm6258, %v7920, 0.0
        %7981 = vadd.xlane.f32.xlu0 %v7980
        %v7982 = vpop.xlane.xlu0 %7981
        %v7983 = vsel %vm368, %v7921, 0.0
        %7984 = vadd.xlane.f32.xlu0 %v7983
        %v7985 = vpop.xlane.xlu0 %7984
        %v7986 = vsel %vm377, %v7922, 0.0
        %7987 = vadd.xlane.f32.xlu0 %v7986
        %v7988 = vpop.xlane.xlu0 %7987
        %v7989 = vsel %vm6258, %v7923, 0.0
        %7990 = vadd.xlane.f32.xlu0 %v7989
        %v7991 = vpop.xlane.xlu0 %7990
        %v7992 = vsel %vm368, %v7924, 0.0
        %7993 = vadd.xlane.f32.xlu0 %v7992
        %v7994 = vpop.xlane.xlu0 %7993
        %v7995 = vsel %vm377, %v7925, 0.0
        %7996 = vadd.xlane.f32.xlu0 %v7995
        %v7997 = vpop.xlane.xlu0 %7996
        %v8022 = vrot.slane %v7928, 1
        %v8023 = vrot.slane %v7931, 1
        %v8024 = vsel %vm541, %v8022, %v8023
        %v8025 = vrot.slane %v7934, 1
        %v8026 = vsel %vm541, %v8023, %v8025
        %v8027 = vrot.slane %v7937, 1
        %v8028 = vrot.slane %v7940, 1
        %v8029 = vsel %vm541, %v8027, %v8028
        %v8030 = vrot.slane %v7943, 1
        %v8031 = vsel %vm541, %v8028, %v8030
        %v8032 = vrot.slane %v7946, 1
        %v8033 = vrot.slane %v7949, 1
        %v8034 = vsel %vm541, %v8032, %v8033
        %v8035 = vrot.slane %v7952, 1
        %v8036 = vsel %vm541, %v8033, %v8035
        %v8037 = vrot.slane %v7955, 1
        %v8038 = vrot.slane %v7958, 1
        %v8039 = vsel %vm541, %v8037, %v8038
        %v8040 = vrot.slane %v7961, 1
        %v8041 = vsel %vm541, %v8038, %v8040
        %v8042 = vrot.slane %v7964, 1
        %v8043 = vrot.slane %v7967, 1
        %v8044 = vsel %vm541, %v8042, %v8043
        %v8045 = vrot.slane %v7970, 1
        %v8046 = vsel %vm541, %v8043, %v8045
        %v8047 = vrot.slane %v7973, 1
        %v8048 = vrot.slane %v7976, 1
        %v8049 = vsel %vm541, %v8047, %v8048
        %v8050 = vrot.slane %v7979, 1
        %v8051 = vsel %vm541, %v8048, %v8050
        %v8052 = vrot.slane %v7982, 1
        %v8053 = vrot.slane %v7985, 1
        %v8054 = vsel %vm541, %v8052, %v8053
        %v8055 = vrot.slane %v7988, 1
        %v8056 = vsel %vm541, %v8053, %v8055
        %v8057 = vrot.slane %v7991, 1
        %v8058 = vrot.slane %v7994, 1
        %v8059 = vsel %vm541, %v8057, %v8058
        %v8060 = vrot.slane %v7997, 1
        %v8061 = vsel %vm541, %v8058, %v8060
        %v8078 = vadd.f32 %v7884, %v8024
        %v8079 = vadd.f32 %v7885, %v8026
        %v8080 = vadd.f32 %v7886, %v8029
        %v8081 = vadd.f32 %v7887, %v8031
        %v8082 = vadd.f32 %v7888, %v8034
        %v8083 = vadd.f32 %v7889, %v8036
        %v8084 = vadd.f32 %v7890, %v8039
        %v8085 = vadd.f32 %v7891, %v8041
        %v8086 = vadd.f32 %v7892, %v8044
        %v8087 = vadd.f32 %v7893, %v8046
        %v8088 = vadd.f32 %v7894, %v8049
        %v8089 = vadd.f32 %v7895, %v8051
        %v8090 = vadd.f32 %v7896, %v8054
        %v8091 = vadd.f32 %v7897, %v8056
        %v8092 = vadd.f32 %v7898, %v8059
        %v8093 = vadd.f32 %v7899, %v8061
        %v8094 = vld [vmem:[%s5 + $0x2] sm:$0x1]
        %v8095 = vperm.slane %v8094, 0
        %v8096 = vmul.f32 %v7794, %v8095
        %v8097 = vmul.f32 %v7795, %v8095
        %v8098 = vmul.f32 %v7796, %v8095
        %v8099 = vmul.f32 %v7797, %v8095
        %v8100 = vmul.f32 %v7798, %v8095
        %v8101 = vmul.f32 %v7799, %v8095
        %v8102 = vmul.f32 %v7800, %v8095
        %v8103 = vmul.f32 %v7801, %v8095
        %v8104 = vmul.f32 %v7802, %v8095
        %v8105 = vmul.f32 %v7803, %v8095
        %v8106 = vmul.f32 %v7804, %v8095
        %v8107 = vmul.f32 %v7805, %v8095
        %v8108 = vmul.f32 %v7806, %v8095
        %v8109 = vmul.f32 %v7807, %v8095
        %v8110 = vmul.f32 %v7808, %v8095
        %v8111 = vmul.f32 %v7809, %v8095
        %v8112 = vmul.f32 %v7810, %v8095
        %v8113 = vmul.f32 %v7811, %v8095
        %v8114 = vmul.f32 %v7812, %v8095
        %v8115 = vmul.f32 %v7813, %v8095
        %v8116 = vmul.f32 %v7814, %v8095
        %v8117 = vmul.f32 %v7815, %v8095
        %v8118 = vmul.f32 %v7816, %v8095
        %v8119 = vmul.f32 %v7817, %v8095
        %v8120 = vsel %vm6453, %v8096, 0.0
        %8121 = vadd.xlane.f32.xlu0 %v8120
        %v8122 = vpop.xlane.xlu0 %8121
        %v8123 = vsel %vm368, %v8097, 0.0
        %8124 = vadd.xlane.f32.xlu0 %v8123
        %v8125 = vpop.xlane.xlu0 %8124
        %v8126 = vsel %vm371, %v8098, 0.0
        %8127 = vadd.xlane.f32.xlu0 %v8126
        %v8128 = vpop.xlane.xlu0 %8127
        %v8129 = vsel %vm6453, %v8099, 0.0
        %8130 = vadd.xlane.f32.xlu0 %v8129
        %v8131 = vpop.xlane.xlu0 %8130
        %v8132 = vsel %vm368, %v8100, 0.0
        %8133 = vadd.xlane.f32.xlu0 %v8132
        %v8134 = vpop.xlane.xlu0 %8133
        %v8135 = vsel %vm371, %v8101, 0.0
        %8136 = vadd.xlane.f32.xlu0 %v8135
        %v8137 = vpop.xlane.xlu0 %8136
        %v8138 = vsel %vm6453, %v8102, 0.0
        %8139 = vadd.xlane.f32.xlu0 %v8138
        %v8140 = vpop.xlane.xlu0 %8139
        %v8141 = vsel %vm368, %v8103, 0.0
        %8142 = vadd.xlane.f32.xlu0 %v8141
        %v8143 = vpop.xlane.xlu0 %8142
        %v8144 = vsel %vm371, %v8104, 0.0
        %8145 = vadd.xlane.f32.xlu0 %v8144
        %v8146 = vpop.xlane.xlu0 %8145
        %v8147 = vsel %vm6453, %v8105, 0.0
        %8148 = vadd.xlane.f32.xlu0 %v8147
        %v8149 = vpop.xlane.xlu0 %8148
        %v8150 = vsel %vm368, %v8106, 0.0
        %8151 = vadd.xlane.f32.xlu0 %v8150
        %v8152 = vpop.xlane.xlu0 %8151
        %v8153 = vsel %vm371, %v8107, 0.0
        %8154 = vadd.xlane.f32.xlu0 %v8153
        %v8155 = vpop.xlane.xlu0 %8154
        %v8156 = vsel %vm6453, %v8108, 0.0
        %8157 = vadd.xlane.f32.xlu0 %v8156
        %v8158 = vpop.xlane.xlu0 %8157
        %v8159 = vsel %vm368, %v8109, 0.0
        %8160 = vadd.xlane.f32.xlu0 %v8159
        %v8161 = vpop.xlane.xlu0 %8160
        %v8162 = vsel %vm371, %v8110, 0.0
        %8163 = vadd.xlane.f32.xlu0 %v8162
        %v8164 = vpop.xlane.xlu0 %8163
        %v8165 = vsel %vm6453, %v8111, 0.0
        %8166 = vadd.xlane.f32.xlu0 %v8165
        %v8167 = vpop.xlane.xlu0 %8166
        %v8168 = vsel %vm368, %v8112, 0.0
        %8169 = vadd.xlane.f32.xlu0 %v8168
        %v8170 = vpop.xlane.xlu0 %8169
        %v8171 = vsel %vm371, %v8113, 0.0
        %8172 = vadd.xlane.f32.xlu0 %v8171
        %v8173 = vpop.xlane.xlu0 %8172
        %v8174 = vsel %vm6453, %v8114, 0.0
        %8175 = vadd.xlane.f32.xlu0 %v8174
        %v8176 = vpop.xlane.xlu0 %8175
        %v8177 = vsel %vm368, %v8115, 0.0
        %8178 = vadd.xlane.f32.xlu0 %v8177
        %v8179 = vpop.xlane.xlu0 %8178
        %v8180 = vsel %vm371, %v8116, 0.0
        %8181 = vadd.xlane.f32.xlu0 %v8180
        %v8182 = vpop.xlane.xlu0 %8181
        %v8183 = vsel %vm6453, %v8117, 0.0
        %8184 = vadd.xlane.f32.xlu0 %v8183
        %v8185 = vpop.xlane.xlu0 %8184
        %v8186 = vsel %vm368, %v8118, 0.0
        %8187 = vadd.xlane.f32.xlu0 %v8186
        %v8188 = vpop.xlane.xlu0 %8187
        %v8189 = vsel %vm371, %v8119, 0.0
        %8190 = vadd.xlane.f32.xlu0 %v8189
        %v8191 = vpop.xlane.xlu0 %8190
        %v8216 = vrot.slane %v8122, 2
        %v8217 = vrot.slane %v8125, 2
        %v8218 = vsel %vm783, %v8216, %v8217
        %v8219 = vrot.slane %v8128, 2
        %v8220 = vsel %vm783, %v8217, %v8219
        %v8221 = vrot.slane %v8131, 2
        %v8222 = vrot.slane %v8134, 2
        %v8223 = vsel %vm783, %v8221, %v8222
        %v8224 = vrot.slane %v8137, 2
        %v8225 = vsel %vm783, %v8222, %v8224
        %v8226 = vrot.slane %v8140, 2
        %v8227 = vrot.slane %v8143, 2
        %v8228 = vsel %vm783, %v8226, %v8227
        %v8229 = vrot.slane %v8146, 2
        %v8230 = vsel %vm783, %v8227, %v8229
        %v8231 = vrot.slane %v8149, 2
        %v8232 = vrot.slane %v8152, 2
        %v8233 = vsel %vm783, %v8231, %v8232
        %v8234 = vrot.slane %v8155, 2
        %v8235 = vsel %vm783, %v8232, %v8234
        %v8236 = vrot.slane %v8158, 2
        %v8237 = vrot.slane %v8161, 2
        %v8238 = vsel %vm783, %v8236, %v8237
        %v8239 = vrot.slane %v8164, 2
        %v8240 = vsel %vm783, %v8237, %v8239
        %v8241 = vrot.slane %v8167, 2
        %v8242 = vrot.slane %v8170, 2
        %v8243 = vsel %vm783, %v8241, %v8242
        %v8244 = vrot.slane %v8173, 2
        %v8245 = vsel %vm783, %v8242, %v8244
        %v8246 = vrot.slane %v8176, 2
        %v8247 = vrot.slane %v8179, 2
        %v8248 = vsel %vm783, %v8246, %v8247
        %v8249 = vrot.slane %v8182, 2
        %v8250 = vsel %vm783, %v8247, %v8249
        %v8251 = vrot.slane %v8185, 2
        %v8252 = vrot.slane %v8188, 2
        %v8253 = vsel %vm783, %v8251, %v8252
        %v8254 = vrot.slane %v8191, 2
        %v8255 = vsel %vm783, %v8252, %v8254
        %v8272 = vadd.f32 %v8078, %v8218
        %v8273 = vadd.f32 %v8079, %v8220
        %v8274 = vadd.f32 %v8080, %v8223
        %v8275 = vadd.f32 %v8081, %v8225
        %v8276 = vadd.f32 %v8082, %v8228
        %v8277 = vadd.f32 %v8083, %v8230
        %v8278 = vadd.f32 %v8084, %v8233
        %v8279 = vadd.f32 %v8085, %v8235
        %v8280 = vadd.f32 %v8086, %v8238
        %v8281 = vadd.f32 %v8087, %v8240
        %v8282 = vadd.f32 %v8088, %v8243
        %v8283 = vadd.f32 %v8089, %v8245
        %v8284 = vadd.f32 %v8090, %v8248
        %v8285 = vadd.f32 %v8091, %v8250
        %v8286 = vadd.f32 %v8092, %v8253
        %v8287 = vadd.f32 %v8093, %v8255
        %v8288 = vld [vmem:[%s6109] sm:$0xff]
        %v8289 = vld [vmem:[%s6109 + $0x8] sm:$0xff]
        %v8290 = vld [vmem:[%s6109 + $0x10] sm:$0x3]
        %v8291 = vld [vmem:[%s6109 + $0x18] sm:$0xff]
        %v8292 = vld [vmem:[%s6109 + $0x20] sm:$0xff]
        %v8293 = vld [vmem:[%s6109 + $0x28] sm:$0x3]
        %v8294 = vld [vmem:[%s6109 + $0x30] sm:$0xff]
        %v8295 = vld [vmem:[%s6109 + $0x38] sm:$0xff]
        %v8296 = vld [vmem:[%s6109 + $0x40] sm:$0x3]
        %v8297 = vld [vmem:[%s6109 + $0x48] sm:$0xff]
        %v8298 = vld [vmem:[%s6109 + $0x50] sm:$0xff]
        %v8299 = vld [vmem:[%s6109 + $0x58] sm:$0x3]
        %v8300 = vld [vmem:[%s6109 + $0x60] sm:$0xff]
        %v8301 = vld [vmem:[%s6109 + $0x68] sm:$0xff]
        %v8302 = vld [vmem:[%s6109 + $0x70] sm:$0x3]
        %v8303 = vld [vmem:[%s6109 + $0x78] sm:$0xff]
        %v8304 = vld [vmem:[%s6109 + $0x80] sm:$0xff]
        %v8305 = vld [vmem:[%s6109 + $0x88] sm:$0x3]
        %v8306 = vld [vmem:[%s6109 + $0x90] sm:$0xff]
        %v8307 = vld [vmem:[%s6109 + $0x98] sm:$0xff]
        %v8308 = vld [vmem:[%s6109 + $0xa0] sm:$0x3]
        %v8309 = vld [vmem:[%s6109 + $0xa8] sm:$0xff]
        %v8310 = vld [vmem:[%s6109 + $0xb0] sm:$0xff]
        %v8311 = vld [vmem:[%s6109 + $0xb8] sm:$0x3]
        %v8312 = vld [vmem:[%s6646] sm:$0x1]
        %v8313 = vperm.slane %v8312, 0
        %v8314 = vmul.f32 %v8288, %v8313
        %v8315 = vmul.f32 %v8289, %v8313
        %v8316 = vmul.f32 %v8291, %v8313
        %v8317 = vmul.f32 %v8292, %v8313
        %v8318 = vmul.f32 %v8294, %v8313
        %v8319 = vmul.f32 %v8295, %v8313
        %v8320 = vmul.f32 %v8297, %v8313
        %v8321 = vmul.f32 %v8298, %v8313
        %v8322 = vmul.f32 %v8300, %v8313
        %v8323 = vmul.f32 %v8301, %v8313
        %v8324 = vmul.f32 %v8303, %v8313
        %v8325 = vmul.f32 %v8304, %v8313
        %v8326 = vmul.f32 %v8306, %v8313
        %v8327 = vmul.f32 %v8307, %v8313
        %v8328 = vmul.f32 %v8309, %v8313
        %v8329 = vmul.f32 %v8310, %v8313
        %v8330 = vsel %vm368, %v8314, 0.0
        %8331 = vadd.xlane.f32.xlu0 %v8330
        %v8332 = vpop.xlane.xlu0 %8331
        %v8333 = vsel %vm368, %v8315, 0.0
        %8334 = vadd.xlane.f32.xlu0 %v8333
        %v8335 = vpop.xlane.xlu0 %8334
        %v8336 = vsel %vm368, %v8316, 0.0
        %8337 = vadd.xlane.f32.xlu0 %v8336
        %v8338 = vpop.xlane.xlu0 %8337
        %v8339 = vsel %vm368, %v8317, 0.0
        %8340 = vadd.xlane.f32.xlu0 %v8339
        %v8341 = vpop.xlane.xlu0 %8340
        %v8342 = vsel %vm368, %v8318, 0.0
        %8343 = vadd.xlane.f32.xlu0 %v8342
        %v8344 = vpop.xlane.xlu0 %8343
        %v8345 = vsel %vm368, %v8319, 0.0
        %8346 = vadd.xlane.f32.xlu0 %v8345
        %v8347 = vpop.xlane.xlu0 %8346
        %v8348 = vsel %vm368, %v8320, 0.0
        %8349 = vadd.xlane.f32.xlu0 %v8348
        %v8350 = vpop.xlane.xlu0 %8349
        %v8351 = vsel %vm368, %v8321, 0.0
        %8352 = vadd.xlane.f32.xlu0 %v8351
        %v8353 = vpop.xlane.xlu0 %8352
        %v8354 = vsel %vm368, %v8322, 0.0
        %8355 = vadd.xlane.f32.xlu0 %v8354
        %v8356 = vpop.xlane.xlu0 %8355
        %v8357 = vsel %vm368, %v8323, 0.0
        %8358 = vadd.xlane.f32.xlu0 %v8357
        %v8359 = vpop.xlane.xlu0 %8358
        %v8360 = vsel %vm368, %v8324, 0.0
        %8361 = vadd.xlane.f32.xlu0 %v8360
        %v8362 = vpop.xlane.xlu0 %8361
        %v8363 = vsel %vm368, %v8325, 0.0
        %8364 = vadd.xlane.f32.xlu0 %v8363
        %v8365 = vpop.xlane.xlu0 %8364
        %v8366 = vsel %vm368, %v8326, 0.0
        %8367 = vadd.xlane.f32.xlu0 %v8366
        %v8368 = vpop.xlane.xlu0 %8367
        %v8369 = vsel %vm368, %v8327, 0.0
        %8370 = vadd.xlane.f32.xlu0 %v8369
        %v8371 = vpop.xlane.xlu0 %8370
        %v8372 = vsel %vm368, %v8328, 0.0
        %8373 = vadd.xlane.f32.xlu0 %v8372
        %v8374 = vpop.xlane.xlu0 %8373
        %v8375 = vsel %vm368, %v8329, 0.0
        %8376 = vadd.xlane.f32.xlu0 %v8375
        %v8377 = vpop.xlane.xlu0 %8376
        %v8378 = vadd.f32 %v8272, %v8332
        %v8379 = vadd.f32 %v8273, %v8335
        %v8380 = vadd.f32 %v8274, %v8338
        %v8381 = vadd.f32 %v8275, %v8341
        %v8382 = vadd.f32 %v8276, %v8344
        %v8383 = vadd.f32 %v8277, %v8347
        %v8384 = vadd.f32 %v8278, %v8350
        %v8385 = vadd.f32 %v8279, %v8353
        %v8386 = vadd.f32 %v8280, %v8356
        %v8387 = vadd.f32 %v8281, %v8359
        %v8388 = vadd.f32 %v8282, %v8362
        %v8389 = vadd.f32 %v8283, %v8365
        %v8390 = vadd.f32 %v8284, %v8368
        %v8391 = vadd.f32 %v8285, %v8371
        %v8392 = vadd.f32 %v8286, %v8374
        %v8393 = vadd.f32 %v8287, %v8377
        %v8394 = vld [vmem:[%s6646 + $0x1] sm:$0x1]
        %v8395 = vperm.slane %v8394, 0
        %v8396 = vmul.f32 %v8288, %v8395
        %v8397 = vmul.f32 %v8289, %v8395
        %v8398 = vmul.f32 %v8290, %v8395
        %v8399 = vmul.f32 %v8291, %v8395
        %v8400 = vmul.f32 %v8292, %v8395
        %v8401 = vmul.f32 %v8293, %v8395
        %v8402 = vmul.f32 %v8294, %v8395
        %v8403 = vmul.f32 %v8295, %v8395
        %v8404 = vmul.f32 %v8296, %v8395
        %v8405 = vmul.f32 %v8297, %v8395
        %v8406 = vmul.f32 %v8298, %v8395
        %v8407 = vmul.f32 %v8299, %v8395
        %v8408 = vmul.f32 %v8300, %v8395
        %v8409 = vmul.f32 %v8301, %v8395
        %v8410 = vmul.f32 %v8302, %v8395
        %v8411 = vmul.f32 %v8303, %v8395
        %v8412 = vmul.f32 %v8304, %v8395
        %v8413 = vmul.f32 %v8305, %v8395
        %v8414 = vmul.f32 %v8306, %v8395
        %v8415 = vmul.f32 %v8307, %v8395
        %v8416 = vmul.f32 %v8308, %v8395
        %v8417 = vmul.f32 %v8309, %v8395
        %v8418 = vmul.f32 %v8310, %v8395
        %v8419 = vmul.f32 %v8311, %v8395
        %v8420 = vsel %vm6258, %v8396, 0.0
        %8421 = vadd.xlane.f32.xlu0 %v8420
        %v8422 = vpop.xlane.xlu0 %8421
        %v8423 = vsel %vm368, %v8397, 0.0
        %8424 = vadd.xlane.f32.xlu0 %v8423
        %v8425 = vpop.xlane.xlu0 %8424
        %v8426 = vsel %vm377, %v8398, 0.0
        %8427 = vadd.xlane.f32.xlu0 %v8426
        %v8428 = vpop.xlane.xlu0 %8427
        %v8429 = vsel %vm6258, %v8399, 0.0
        %8430 = vadd.xlane.f32.xlu0 %v8429
        %v8431 = vpop.xlane.xlu0 %8430
        %v8432 = vsel %vm368, %v8400, 0.0
        %8433 = vadd.xlane.f32.xlu0 %v8432
        %v8434 = vpop.xlane.xlu0 %8433
        %v8435 = vsel %vm377, %v8401, 0.0
        %8436 = vadd.xlane.f32.xlu0 %v8435
        %v8437 = vpop.xlane.xlu0 %8436
        %v8438 = vsel %vm6258, %v8402, 0.0
        %8439 = vadd.xlane.f32.xlu0 %v8438
        %v8440 = vpop.xlane.xlu0 %8439
        %v8441 = vsel %vm368, %v8403, 0.0
        %8442 = vadd.xlane.f32.xlu0 %v8441
        %v8443 = vpop.xlane.xlu0 %8442
        %v8444 = vsel %vm377, %v8404, 0.0
        %8445 = vadd.xlane.f32.xlu0 %v8444
        %v8446 = vpop.xlane.xlu0 %8445
        %v8447 = vsel %vm6258, %v8405, 0.0
        %8448 = vadd.xlane.f32.xlu0 %v8447
        %v8449 = vpop.xlane.xlu0 %8448
        %v8450 = vsel %vm368, %v8406, 0.0
        %8451 = vadd.xlane.f32.xlu0 %v8450
        %v8452 = vpop.xlane.xlu0 %8451
        %v8453 = vsel %vm377, %v8407, 0.0
        %8454 = vadd.xlane.f32.xlu0 %v8453
        %v8455 = vpop.xlane.xlu0 %8454
        %v8456 = vsel %vm6258, %v8408, 0.0
        %8457 = vadd.xlane.f32.xlu0 %v8456
        %v8458 = vpop.xlane.xlu0 %8457
        %v8459 = vsel %vm368, %v8409, 0.0
        %8460 = vadd.xlane.f32.xlu0 %v8459
        %v8461 = vpop.xlane.xlu0 %8460
        %v8462 = vsel %vm377, %v8410, 0.0
        %8463 = vadd.xlane.f32.xlu0 %v8462
        %v8464 = vpop.xlane.xlu0 %8463
        %v8465 = vsel %vm6258, %v8411, 0.0
        %8466 = vadd.xlane.f32.xlu0 %v8465
        %v8467 = vpop.xlane.xlu0 %8466
        %v8468 = vsel %vm368, %v8412, 0.0
        %8469 = vadd.xlane.f32.xlu0 %v8468
        %v8470 = vpop.xlane.xlu0 %8469
        %v8471 = vsel %vm377, %v8413, 0.0
        %8472 = vadd.xlane.f32.xlu0 %v8471
        %v8473 = vpop.xlane.xlu0 %8472
        %v8474 = vsel %vm6258, %v8414, 0.0
        %8475 = vadd.xlane.f32.xlu0 %v8474
        %v8476 = vpop.xlane.xlu0 %8475
        %v8477 = vsel %vm368, %v8415, 0.0
        %8478 = vadd.xlane.f32.xlu0 %v8477
        %v8479 = vpop.xlane.xlu0 %8478
        %v8480 = vsel %vm377, %v8416, 0.0
        %8481 = vadd.xlane.f32.xlu0 %v8480
        %v8482 = vpop.xlane.xlu0 %8481
        %v8483 = vsel %vm6258, %v8417, 0.0
        %8484 = vadd.xlane.f32.xlu0 %v8483
        %v8485 = vpop.xlane.xlu0 %8484
        %v8486 = vsel %vm368, %v8418, 0.0
        %8487 = vadd.xlane.f32.xlu0 %v8486
        %v8488 = vpop.xlane.xlu0 %8487
        %v8489 = vsel %vm377, %v8419, 0.0
        %8490 = vadd.xlane.f32.xlu0 %v8489
        %v8491 = vpop.xlane.xlu0 %8490
        %v8516 = vrot.slane %v8422, 1
        %v8517 = vrot.slane %v8425, 1
        %v8518 = vsel %vm541, %v8516, %v8517
        %v8519 = vrot.slane %v8428, 1
        %v8520 = vsel %vm541, %v8517, %v8519
        %v8521 = vrot.slane %v8431, 1
        %v8522 = vrot.slane %v8434, 1
        %v8523 = vsel %vm541, %v8521, %v8522
        %v8524 = vrot.slane %v8437, 1
        %v8525 = vsel %vm541, %v8522, %v8524
        %v8526 = vrot.slane %v8440, 1
        %v8527 = vrot.slane %v8443, 1
        %v8528 = vsel %vm541, %v8526, %v8527
        %v8529 = vrot.slane %v8446, 1
        %v8530 = vsel %vm541, %v8527, %v8529
        %v8531 = vrot.slane %v8449, 1
        %v8532 = vrot.slane %v8452, 1
        %v8533 = vsel %vm541, %v8531, %v8532
        %v8534 = vrot.slane %v8455, 1
        %v8535 = vsel %vm541, %v8532, %v8534
        %v8536 = vrot.slane %v8458, 1
        %v8537 = vrot.slane %v8461, 1
        %v8538 = vsel %vm541, %v8536, %v8537
        %v8539 = vrot.slane %v8464, 1
        %v8540 = vsel %vm541, %v8537, %v8539
        %v8541 = vrot.slane %v8467, 1
        %v8542 = vrot.slane %v8470, 1
        %v8543 = vsel %vm541, %v8541, %v8542
        %v8544 = vrot.slane %v8473, 1
        %v8545 = vsel %vm541, %v8542, %v8544
        %v8546 = vrot.slane %v8476, 1
        %v8547 = vrot.slane %v8479, 1
        %v8548 = vsel %vm541, %v8546, %v8547
        %v8549 = vrot.slane %v8482, 1
        %v8550 = vsel %vm541, %v8547, %v8549
        %v8551 = vrot.slane %v8485, 1
        %v8552 = vrot.slane %v8488, 1
        %v8553 = vsel %vm541, %v8551, %v8552
        %v8554 = vrot.slane %v8491, 1
        %v8555 = vsel %vm541, %v8552, %v8554
        %v8572 = vadd.f32 %v8378, %v8518
        %v8573 = vadd.f32 %v8379, %v8520
        %v8574 = vadd.f32 %v8380, %v8523
        %v8575 = vadd.f32 %v8381, %v8525
        %v8576 = vadd.f32 %v8382, %v8528
        %v8577 = vadd.f32 %v8383, %v8530
        %v8578 = vadd.f32 %v8384, %v8533
        %v8579 = vadd.f32 %v8385, %v8535
        %v8580 = vadd.f32 %v8386, %v8538
        %v8581 = vadd.f32 %v8387, %v8540
        %v8582 = vadd.f32 %v8388, %v8543
        %v8583 = vadd.f32 %v8389, %v8545
        %v8584 = vadd.f32 %v8390, %v8548
        %v8585 = vadd.f32 %v8391, %v8550
        %v8586 = vadd.f32 %v8392, %v8553
        %v8587 = vadd.f32 %v8393, %v8555
        %v8588 = vld [vmem:[%s6646 + $0x2] sm:$0x1]
        %v8589 = vperm.slane %v8588, 0
        %v8590 = vmul.f32 %v8288, %v8589
        %v8591 = vmul.f32 %v8289, %v8589
        %v8592 = vmul.f32 %v8290, %v8589
        %v8593 = vmul.f32 %v8291, %v8589
        %v8594 = vmul.f32 %v8292, %v8589
        %v8595 = vmul.f32 %v8293, %v8589
        %v8596 = vmul.f32 %v8294, %v8589
        %v8597 = vmul.f32 %v8295, %v8589
        %v8598 = vmul.f32 %v8296, %v8589
        %v8599 = vmul.f32 %v8297, %v8589
        %v8600 = vmul.f32 %v8298, %v8589
        %v8601 = vmul.f32 %v8299, %v8589
        %v8602 = vmul.f32 %v8300, %v8589
        %v8603 = vmul.f32 %v8301, %v8589
        %v8604 = vmul.f32 %v8302, %v8589
        %v8605 = vmul.f32 %v8303, %v8589
        %v8606 = vmul.f32 %v8304, %v8589
        %v8607 = vmul.f32 %v8305, %v8589
        %v8608 = vmul.f32 %v8306, %v8589
        %v8609 = vmul.f32 %v8307, %v8589
        %v8610 = vmul.f32 %v8308, %v8589
        %v8611 = vmul.f32 %v8309, %v8589
        %v8612 = vmul.f32 %v8310, %v8589
        %v8613 = vmul.f32 %v8311, %v8589
        %v8614 = vsel %vm6453, %v8590, 0.0
        %8615 = vadd.xlane.f32.xlu0 %v8614
        %v8616 = vpop.xlane.xlu0 %8615
        %v8617 = vsel %vm368, %v8591, 0.0
        %8618 = vadd.xlane.f32.xlu0 %v8617
        %v8619 = vpop.xlane.xlu0 %8618
        %v8620 = vsel %vm371, %v8592, 0.0
        %8621 = vadd.xlane.f32.xlu0 %v8620
        %v8622 = vpop.xlane.xlu0 %8621
        %v8623 = vsel %vm6453, %v8593, 0.0
        %8624 = vadd.xlane.f32.xlu0 %v8623
        %v8625 = vpop.xlane.xlu0 %8624
        %v8626 = vsel %vm368, %v8594, 0.0
        %8627 = vadd.xlane.f32.xlu0 %v8626
        %v8628 = vpop.xlane.xlu0 %8627
        %v8629 = vsel %vm371, %v8595, 0.0
        %8630 = vadd.xlane.f32.xlu0 %v8629
        %v8631 = vpop.xlane.xlu0 %8630
        %v8632 = vsel %vm6453, %v8596, 0.0
        %8633 = vadd.xlane.f32.xlu0 %v8632
        %v8634 = vpop.xlane.xlu0 %8633
        %v8635 = vsel %vm368, %v8597, 0.0
        %8636 = vadd.xlane.f32.xlu0 %v8635
        %v8637 = vpop.xlane.xlu0 %8636
        %v8638 = vsel %vm371, %v8598, 0.0
        %8639 = vadd.xlane.f32.xlu0 %v8638
        %v8640 = vpop.xlane.xlu0 %8639
        %v8641 = vsel %vm6453, %v8599, 0.0
        %8642 = vadd.xlane.f32.xlu0 %v8641
        %v8643 = vpop.xlane.xlu0 %8642
        %v8644 = vsel %vm368, %v8600, 0.0
        %8645 = vadd.xlane.f32.xlu0 %v8644
        %v8646 = vpop.xlane.xlu0 %8645
        %v8647 = vsel %vm371, %v8601, 0.0
        %8648 = vadd.xlane.f32.xlu0 %v8647
        %v8649 = vpop.xlane.xlu0 %8648
        %v8650 = vsel %vm6453, %v8602, 0.0
        %8651 = vadd.xlane.f32.xlu0 %v8650
        %v8652 = vpop.xlane.xlu0 %8651
        %v8653 = vsel %vm368, %v8603, 0.0
        %8654 = vadd.xlane.f32.xlu0 %v8653
        %v8655 = vpop.xlane.xlu0 %8654
        %v8656 = vsel %vm371, %v8604, 0.0
        %8657 = vadd.xlane.f32.xlu0 %v8656
        %v8658 = vpop.xlane.xlu0 %8657
        %v8659 = vsel %vm6453, %v8605, 0.0
        %8660 = vadd.xlane.f32.xlu0 %v8659
        %v8661 = vpop.xlane.xlu0 %8660
        %v8662 = vsel %vm368, %v8606, 0.0
        %8663 = vadd.xlane.f32.xlu0 %v8662
        %v8664 = vpop.xlane.xlu0 %8663
        %v8665 = vsel %vm371, %v8607, 0.0
        %8666 = vadd.xlane.f32.xlu0 %v8665
        %v8667 = vpop.xlane.xlu0 %8666
        %v8668 = vsel %vm6453, %v8608, 0.0
        %8669 = vadd.xlane.f32.xlu0 %v8668
        %v8670 = vpop.xlane.xlu0 %8669
        %v8671 = vsel %vm368, %v8609, 0.0
        %8672 = vadd.xlane.f32.xlu0 %v8671
        %v8673 = vpop.xlane.xlu0 %8672
        %v8674 = vsel %vm371, %v8610, 0.0
        %8675 = vadd.xlane.f32.xlu0 %v8674
        %v8676 = vpop.xlane.xlu0 %8675
        %v8677 = vsel %vm6453, %v8611, 0.0
        %8678 = vadd.xlane.f32.xlu0 %v8677
        %v8679 = vpop.xlane.xlu0 %8678
        %v8680 = vsel %vm368, %v8612, 0.0
        %8681 = vadd.xlane.f32.xlu0 %v8680
        %v8682 = vpop.xlane.xlu0 %8681
        %v8683 = vsel %vm371, %v8613, 0.0
        %8684 = vadd.xlane.f32.xlu0 %v8683
        %v8685 = vpop.xlane.xlu0 %8684
        %v8710 = vrot.slane %v8616, 2
        %v8711 = vrot.slane %v8619, 2
        %v8712 = vsel %vm783, %v8710, %v8711
        %v8713 = vrot.slane %v8622, 2
        %v8714 = vsel %vm783, %v8711, %v8713
        %v8715 = vrot.slane %v8625, 2
        %v8716 = vrot.slane %v8628, 2
        %v8717 = vsel %vm783, %v8715, %v8716
        %v8718 = vrot.slane %v8631, 2
        %v8719 = vsel %vm783, %v8716, %v8718
        %v8720 = vrot.slane %v8634, 2
        %v8721 = vrot.slane %v8637, 2
        %v8722 = vsel %vm783, %v8720, %v8721
        %v8723 = vrot.slane %v8640, 2
        %v8724 = vsel %vm783, %v8721, %v8723
        %v8725 = vrot.slane %v8643, 2
        %v8726 = vrot.slane %v8646, 2
        %v8727 = vsel %vm783, %v8725, %v8726
        %v8728 = vrot.slane %v8649, 2
        %v8729 = vsel %vm783, %v8726, %v8728
        %v8730 = vrot.slane %v8652, 2
        %v8731 = vrot.slane %v8655, 2
        %v8732 = vsel %vm783, %v8730, %v8731
        %v8733 = vrot.slane %v8658, 2
        %v8734 = vsel %vm783, %v8731, %v8733
        %v8735 = vrot.slane %v8661, 2
        %v8736 = vrot.slane %v8664, 2
        %v8737 = vsel %vm783, %v8735, %v8736
        %v8738 = vrot.slane %v8667, 2
        %v8739 = vsel %vm783, %v8736, %v8738
        %v8740 = vrot.slane %v8670, 2
        %v8741 = vrot.slane %v8673, 2
        %v8742 = vsel %vm783, %v8740, %v8741
        %v8743 = vrot.slane %v8676, 2
        %v8744 = vsel %vm783, %v8741, %v8743
        %v8745 = vrot.slane %v8679, 2
        %v8746 = vrot.slane %v8682, 2
        %v8747 = vsel %vm783, %v8745, %v8746
        %v8748 = vrot.slane %v8685, 2
        %v8749 = vsel %vm783, %v8746, %v8748
        %v8766 = vadd.f32 %v8572, %v8712
        %v8767 = vadd.f32 %v8573, %v8714
        %v8768 = vadd.f32 %v8574, %v8717
        %v8769 = vadd.f32 %v8575, %v8719
        %v8770 = vadd.f32 %v8576, %v8722
        %v8771 = vadd.f32 %v8577, %v8724
        %v8772 = vadd.f32 %v8578, %v8727
        %v8773 = vadd.f32 %v8579, %v8729
        %v8774 = vadd.f32 %v8580, %v8732
        %v8775 = vadd.f32 %v8581, %v8734
        %v8776 = vadd.f32 %v8582, %v8737
        %v8777 = vadd.f32 %v8583, %v8739
        %v8778 = vadd.f32 %v8584, %v8742
        %v8779 = vadd.f32 %v8585, %v8744
        %v8780 = vadd.f32 %v8586, %v8747
        %v8781 = vadd.f32 %v8587, %v8749
        %s8782 = scalar_lea.vmem [#allocation4], 240
        %v8783 = vld [vmem:[%s8782] sm:$0xff]
        %v8784 = vld [vmem:[%s8782 + $0x8] sm:$0xff]
        %v8785 = vld [vmem:[%s8782 + $0x10] sm:$0x3]
        %v8786 = vld [vmem:[%s8782 + $0x18] sm:$0xff]
        %v8787 = vld [vmem:[%s8782 + $0x20] sm:$0xff]
        %v8788 = vld [vmem:[%s8782 + $0x28] sm:$0x3]
        %v8789 = vld [vmem:[%s8782 + $0x30] sm:$0xff]
        %v8790 = vld [vmem:[%s8782 + $0x38] sm:$0xff]
        %v8791 = vld [vmem:[%s8782 + $0x40] sm:$0x3]
        %v8792 = vld [vmem:[%s8782 + $0x48] sm:$0xff]
        %v8793 = vld [vmem:[%s8782 + $0x50] sm:$0xff]
        %v8794 = vld [vmem:[%s8782 + $0x58] sm:$0x3]
        %v8795 = vld [vmem:[%s8782 + $0x60] sm:$0xff]
        %v8796 = vld [vmem:[%s8782 + $0x68] sm:$0xff]
        %v8797 = vld [vmem:[%s8782 + $0x70] sm:$0x3]
        %v8798 = vld [vmem:[%s8782 + $0x78] sm:$0xff]
        %v8799 = vld [vmem:[%s8782 + $0x80] sm:$0xff]
        %v8800 = vld [vmem:[%s8782 + $0x88] sm:$0x3]
        %v8801 = vld [vmem:[%s8782 + $0x90] sm:$0xff]
        %v8802 = vld [vmem:[%s8782 + $0x98] sm:$0xff]
        %v8803 = vld [vmem:[%s8782 + $0xa0] sm:$0x3]
        %v8804 = vld [vmem:[%s8782 + $0xa8] sm:$0xff]
        %v8805 = vld [vmem:[%s8782 + $0xb0] sm:$0xff]
        %v8806 = vld [vmem:[%s8782 + $0xb8] sm:$0x3]
        %v8807 = vld [vmem:[%s7142] sm:$0x1]
        %v8808 = vperm.slane %v8807, 0
        %v8809 = vmul.f32 %v8783, %v8808
        %v8810 = vmul.f32 %v8784, %v8808
        %v8811 = vmul.f32 %v8786, %v8808
        %v8812 = vmul.f32 %v8787, %v8808
        %v8813 = vmul.f32 %v8789, %v8808
        %v8814 = vmul.f32 %v8790, %v8808
        %v8815 = vmul.f32 %v8792, %v8808
        %v8816 = vmul.f32 %v8793, %v8808
        %v8817 = vmul.f32 %v8795, %v8808
        %v8818 = vmul.f32 %v8796, %v8808
        %v8819 = vmul.f32 %v8798, %v8808
        %v8820 = vmul.f32 %v8799, %v8808
        %v8821 = vmul.f32 %v8801, %v8808
        %v8822 = vmul.f32 %v8802, %v8808
        %v8823 = vmul.f32 %v8804, %v8808
        %v8824 = vmul.f32 %v8805, %v8808
        %v8825 = vsel %vm368, %v8809, 0.0
        %8826 = vadd.xlane.f32.xlu0 %v8825
        %v8827 = vpop.xlane.xlu0 %8826
        %v8828 = vsel %vm368, %v8810, 0.0
        %8829 = vadd.xlane.f32.xlu0 %v8828
        %v8830 = vpop.xlane.xlu0 %8829
        %v8831 = vsel %vm368, %v8811, 0.0
        %8832 = vadd.xlane.f32.xlu0 %v8831
        %v8833 = vpop.xlane.xlu0 %8832
        %v8834 = vsel %vm368, %v8812, 0.0
        %8835 = vadd.xlane.f32.xlu0 %v8834
        %v8836 = vpop.xlane.xlu0 %8835
        %v8837 = vsel %vm368, %v8813, 0.0
        %8838 = vadd.xlane.f32.xlu0 %v8837
        %v8839 = vpop.xlane.xlu0 %8838
        %v8840 = vsel %vm368, %v8814, 0.0
        %8841 = vadd.xlane.f32.xlu0 %v8840
        %v8842 = vpop.xlane.xlu0 %8841
        %v8843 = vsel %vm368, %v8815, 0.0
        %8844 = vadd.xlane.f32.xlu0 %v8843
        %v8845 = vpop.xlane.xlu0 %8844
        %v8846 = vsel %vm368, %v8816, 0.0
        %8847 = vadd.xlane.f32.xlu0 %v8846
        %v8848 = vpop.xlane.xlu0 %8847
        %v8849 = vsel %vm368, %v8817, 0.0
        %8850 = vadd.xlane.f32.xlu0 %v8849
        %v8851 = vpop.xlane.xlu0 %8850
        %v8852 = vsel %vm368, %v8818, 0.0
        %8853 = vadd.xlane.f32.xlu0 %v8852
        %v8854 = vpop.xlane.xlu0 %8853
        %v8855 = vsel %vm368, %v8819, 0.0
        %8856 = vadd.xlane.f32.xlu0 %v8855
        %v8857 = vpop.xlane.xlu0 %8856
        %v8858 = vsel %vm368, %v8820, 0.0
        %8859 = vadd.xlane.f32.xlu0 %v8858
        %v8860 = vpop.xlane.xlu0 %8859
        %v8861 = vsel %vm368, %v8821, 0.0
        %8862 = vadd.xlane.f32.xlu0 %v8861
        %v8863 = vpop.xlane.xlu0 %8862
        %v8864 = vsel %vm368, %v8822, 0.0
        %8865 = vadd.xlane.f32.xlu0 %v8864
        %v8866 = vpop.xlane.xlu0 %8865
        %v8867 = vsel %vm368, %v8823, 0.0
        %8868 = vadd.xlane.f32.xlu0 %v8867
        %v8869 = vpop.xlane.xlu0 %8868
        %v8870 = vsel %vm368, %v8824, 0.0
        %8871 = vadd.xlane.f32.xlu0 %v8870
        %v8872 = vpop.xlane.xlu0 %8871
        %v8873 = vadd.f32 %v8766, %v8827
        %v8874 = vadd.f32 %v8767, %v8830
        %v8875 = vadd.f32 %v8768, %v8833
        %v8876 = vadd.f32 %v8769, %v8836
        %v8877 = vadd.f32 %v8770, %v8839
        %v8878 = vadd.f32 %v8771, %v8842
        %v8879 = vadd.f32 %v8772, %v8845
        %v8880 = vadd.f32 %v8773, %v8848
        %v8881 = vadd.f32 %v8774, %v8851
        %v8882 = vadd.f32 %v8775, %v8854
        %v8883 = vadd.f32 %v8776, %v8857
        %v8884 = vadd.f32 %v8777, %v8860
        %v8885 = vadd.f32 %v8778, %v8863
        %v8886 = vadd.f32 %v8779, %v8866
        %v8887 = vadd.f32 %v8780, %v8869
        %v8888 = vadd.f32 %v8781, %v8872
        %v8889 = vld [vmem:[%s7142 + $0x1] sm:$0x1]
        %v8890 = vperm.slane %v8889, 0
        %v8891 = vmul.f32 %v8783, %v8890
        %v8892 = vmul.f32 %v8784, %v8890
        %v8893 = vmul.f32 %v8785, %v8890
        %v8894 = vmul.f32 %v8786, %v8890
        %v8895 = vmul.f32 %v8787, %v8890
        %v8896 = vmul.f32 %v8788, %v8890
        %v8897 = vmul.f32 %v8789, %v8890
        %v8898 = vmul.f32 %v8790, %v8890
        %v8899 = vmul.f32 %v8791, %v8890
        %v8900 = vmul.f32 %v8792, %v8890
        %v8901 = vmul.f32 %v8793, %v8890
        %v8902 = vmul.f32 %v8794, %v8890
        %v8903 = vmul.f32 %v8795, %v8890
        %v8904 = vmul.f32 %v8796, %v8890
        %v8905 = vmul.f32 %v8797, %v8890
        %v8906 = vmul.f32 %v8798, %v8890
        %v8907 = vmul.f32 %v8799, %v8890
        %v8908 = vmul.f32 %v8800, %v8890
        %v8909 = vmul.f32 %v8801, %v8890
        %v8910 = vmul.f32 %v8802, %v8890
        %v8911 = vmul.f32 %v8803, %v8890
        %v8912 = vmul.f32 %v8804, %v8890
        %v8913 = vmul.f32 %v8805, %v8890
        %v8914 = vmul.f32 %v8806, %v8890
        %v8915 = vsel %vm6258, %v8891, 0.0
        %8916 = vadd.xlane.f32.xlu0 %v8915
        %v8917 = vpop.xlane.xlu0 %8916
        %v8918 = vsel %vm368, %v8892, 0.0
        %8919 = vadd.xlane.f32.xlu0 %v8918
        %v8920 = vpop.xlane.xlu0 %8919
        %v8921 = vsel %vm377, %v8893, 0.0
        %8922 = vadd.xlane.f32.xlu0 %v8921
        %v8923 = vpop.xlane.xlu0 %8922
        %v8924 = vsel %vm6258, %v8894, 0.0
        %8925 = vadd.xlane.f32.xlu0 %v8924
        %v8926 = vpop.xlane.xlu0 %8925
        %v8927 = vsel %vm368, %v8895, 0.0
        %8928 = vadd.xlane.f32.xlu0 %v8927
        %v8929 = vpop.xlane.xlu0 %8928
        %v8930 = vsel %vm377, %v8896, 0.0
        %8931 = vadd.xlane.f32.xlu0 %v8930
        %v8932 = vpop.xlane.xlu0 %8931
        %v8933 = vsel %vm6258, %v8897, 0.0
        %8934 = vadd.xlane.f32.xlu0 %v8933
        %v8935 = vpop.xlane.xlu0 %8934
        %v8936 = vsel %vm368, %v8898, 0.0
        %8937 = vadd.xlane.f32.xlu0 %v8936
        %v8938 = vpop.xlane.xlu0 %8937
        %v8939 = vsel %vm377, %v8899, 0.0
        %8940 = vadd.xlane.f32.xlu0 %v8939
        %v8941 = vpop.xlane.xlu0 %8940
        %v8942 = vsel %vm6258, %v8900, 0.0
        %8943 = vadd.xlane.f32.xlu0 %v8942
        %v8944 = vpop.xlane.xlu0 %8943
        %v8945 = vsel %vm368, %v8901, 0.0
        %8946 = vadd.xlane.f32.xlu0 %v8945
        %v8947 = vpop.xlane.xlu0 %8946
        %v8948 = vsel %vm377, %v8902, 0.0
        %8949 = vadd.xlane.f32.xlu0 %v8948
        %v8950 = vpop.xlane.xlu0 %8949
        %v8951 = vsel %vm6258, %v8903, 0.0
        %8952 = vadd.xlane.f32.xlu0 %v8951
        %v8953 = vpop.xlane.xlu0 %8952
        %v8954 = vsel %vm368, %v8904, 0.0
        %8955 = vadd.xlane.f32.xlu0 %v8954
        %v8956 = vpop.xlane.xlu0 %8955
        %v8957 = vsel %vm377, %v8905, 0.0
        %8958 = vadd.xlane.f32.xlu0 %v8957
        %v8959 = vpop.xlane.xlu0 %8958
        %v8960 = vsel %vm6258, %v8906, 0.0
        %8961 = vadd.xlane.f32.xlu0 %v8960
        %v8962 = vpop.xlane.xlu0 %8961
        %v8963 = vsel %vm368, %v8907, 0.0
        %8964 = vadd.xlane.f32.xlu0 %v8963
        %v8965 = vpop.xlane.xlu0 %8964
        %v8966 = vsel %vm377, %v8908, 0.0
        %8967 = vadd.xlane.f32.xlu0 %v8966
        %v8968 = vpop.xlane.xlu0 %8967
        %v8969 = vsel %vm6258, %v8909, 0.0
        %8970 = vadd.xlane.f32.xlu0 %v8969
        %v8971 = vpop.xlane.xlu0 %8970
        %v8972 = vsel %vm368, %v8910, 0.0
        %8973 = vadd.xlane.f32.xlu0 %v8972
        %v8974 = vpop.xlane.xlu0 %8973
        %v8975 = vsel %vm377, %v8911, 0.0
        %8976 = vadd.xlane.f32.xlu0 %v8975
        %v8977 = vpop.xlane.xlu0 %8976
        %v8978 = vsel %vm6258, %v8912, 0.0
        %8979 = vadd.xlane.f32.xlu0 %v8978
        %v8980 = vpop.xlane.xlu0 %8979
        %v8981 = vsel %vm368, %v8913, 0.0
        %8982 = vadd.xlane.f32.xlu0 %v8981
        %v8983 = vpop.xlane.xlu0 %8982
        %v8984 = vsel %vm377, %v8914, 0.0
        %8985 = vadd.xlane.f32.xlu0 %v8984
        %v8986 = vpop.xlane.xlu0 %8985
        %v9011 = vrot.slane %v8917, 1
        %v9012 = vrot.slane %v8920, 1
        %v9013 = vsel %vm541, %v9011, %v9012
        %v9014 = vrot.slane %v8923, 1
        %v9015 = vsel %vm541, %v9012, %v9014
        %v9016 = vrot.slane %v8926, 1
        %v9017 = vrot.slane %v8929, 1
        %v9018 = vsel %vm541, %v9016, %v9017
        %v9019 = vrot.slane %v8932, 1
        %v9020 = vsel %vm541, %v9017, %v9019
        %v9021 = vrot.slane %v8935, 1
        %v9022 = vrot.slane %v8938, 1
        %v9023 = vsel %vm541, %v9021, %v9022
        %v9024 = vrot.slane %v8941, 1
        %v9025 = vsel %vm541, %v9022, %v9024
        %v9026 = vrot.slane %v8944, 1
        %v9027 = vrot.slane %v8947, 1
        %v9028 = vsel %vm541, %v9026, %v9027
        %v9029 = vrot.slane %v8950, 1
        %v9030 = vsel %vm541, %v9027, %v9029
        %v9031 = vrot.slane %v8953, 1
        %v9032 = vrot.slane %v8956, 1
        %v9033 = vsel %vm541, %v9031, %v9032
        %v9034 = vrot.slane %v8959, 1
        %v9035 = vsel %vm541, %v9032, %v9034
        %v9036 = vrot.slane %v8962, 1
        %v9037 = vrot.slane %v8965, 1
        %v9038 = vsel %vm541, %v9036, %v9037
        %v9039 = vrot.slane %v8968, 1
        %v9040 = vsel %vm541, %v9037, %v9039
        %v9041 = vrot.slane %v8971, 1
        %v9042 = vrot.slane %v8974, 1
        %v9043 = vsel %vm541, %v9041, %v9042
        %v9044 = vrot.slane %v8977, 1
        %v9045 = vsel %vm541, %v9042, %v9044
        %v9046 = vrot.slane %v8980, 1
        %v9047 = vrot.slane %v8983, 1
        %v9048 = vsel %vm541, %v9046, %v9047
        %v9049 = vrot.slane %v8986, 1
        %v9050 = vsel %vm541, %v9047, %v9049
        %v9067 = vadd.f32 %v8873, %v9013
        %v9068 = vadd.f32 %v8874, %v9015
        %v9069 = vadd.f32 %v8875, %v9018
        %v9070 = vadd.f32 %v8876, %v9020
        %v9071 = vadd.f32 %v8877, %v9023
        %v9072 = vadd.f32 %v8878, %v9025
        %v9073 = vadd.f32 %v8879, %v9028
        %v9074 = vadd.f32 %v8880, %v9030
        %v9075 = vadd.f32 %v8881, %v9033
        %v9076 = vadd.f32 %v8882, %v9035
        %v9077 = vadd.f32 %v8883, %v9038
        %v9078 = vadd.f32 %v8884, %v9040
        %v9079 = vadd.f32 %v8885, %v9043
        %v9080 = vadd.f32 %v8886, %v9045
        %v9081 = vadd.f32 %v8887, %v9048
        %v9082 = vadd.f32 %v8888, %v9050
        %v9083 = vld [vmem:[%s7142 + $0x2] sm:$0x1]
        %v9084 = vperm.slane %v9083, 0
        %v9085 = vmul.f32 %v8783, %v9084
        %v9086 = vmul.f32 %v8784, %v9084
        %v9087 = vmul.f32 %v8785, %v9084
        %v9088 = vmul.f32 %v8786, %v9084
        %v9089 = vmul.f32 %v8787, %v9084
        %v9090 = vmul.f32 %v8788, %v9084
        %v9091 = vmul.f32 %v8789, %v9084
        %v9092 = vmul.f32 %v8790, %v9084
        %v9093 = vmul.f32 %v8791, %v9084
        %v9094 = vmul.f32 %v8792, %v9084
        %v9095 = vmul.f32 %v8793, %v9084
        %v9096 = vmul.f32 %v8794, %v9084
        %v9097 = vmul.f32 %v8795, %v9084
        %v9098 = vmul.f32 %v8796, %v9084
        %v9099 = vmul.f32 %v8797, %v9084
        %v9100 = vmul.f32 %v8798, %v9084
        %v9101 = vmul.f32 %v8799, %v9084
        %v9102 = vmul.f32 %v8800, %v9084
        %v9103 = vmul.f32 %v8801, %v9084
        %v9104 = vmul.f32 %v8802, %v9084
        %v9105 = vmul.f32 %v8803, %v9084
        %v9106 = vmul.f32 %v8804, %v9084
        %v9107 = vmul.f32 %v8805, %v9084
        %v9108 = vmul.f32 %v8806, %v9084
        %v9109 = vsel %vm6453, %v9085, 0.0
        %9110 = vadd.xlane.f32.xlu0 %v9109
        %v9111 = vpop.xlane.xlu0 %9110
        %v9112 = vsel %vm368, %v9086, 0.0
        %9113 = vadd.xlane.f32.xlu0 %v9112
        %v9114 = vpop.xlane.xlu0 %9113
        %v9115 = vsel %vm371, %v9087, 0.0
        %9116 = vadd.xlane.f32.xlu0 %v9115
        %v9117 = vpop.xlane.xlu0 %9116
        %v9118 = vsel %vm6453, %v9088, 0.0
        %9119 = vadd.xlane.f32.xlu0 %v9118
        %v9120 = vpop.xlane.xlu0 %9119
        %v9121 = vsel %vm368, %v9089, 0.0
        %9122 = vadd.xlane.f32.xlu0 %v9121
        %v9123 = vpop.xlane.xlu0 %9122
        %v9124 = vsel %vm371, %v9090, 0.0
        %9125 = vadd.xlane.f32.xlu0 %v9124
        %v9126 = vpop.xlane.xlu0 %9125
        %v9127 = vsel %vm6453, %v9091, 0.0
        %9128 = vadd.xlane.f32.xlu0 %v9127
        %v9129 = vpop.xlane.xlu0 %9128
        %v9130 = vsel %vm368, %v9092, 0.0
        %9131 = vadd.xlane.f32.xlu0 %v9130
        %v9132 = vpop.xlane.xlu0 %9131
        %v9133 = vsel %vm371, %v9093, 0.0
        %9134 = vadd.xlane.f32.xlu0 %v9133
        %v9135 = vpop.xlane.xlu0 %9134
        %v9136 = vsel %vm6453, %v9094, 0.0
        %9137 = vadd.xlane.f32.xlu0 %v9136
        %v9138 = vpop.xlane.xlu0 %9137
        %v9139 = vsel %vm368, %v9095, 0.0
        %9140 = vadd.xlane.f32.xlu0 %v9139
        %v9141 = vpop.xlane.xlu0 %9140
        %v9142 = vsel %vm371, %v9096, 0.0
        %9143 = vadd.xlane.f32.xlu0 %v9142
        %v9144 = vpop.xlane.xlu0 %9143
        %v9145 = vsel %vm6453, %v9097, 0.0
        %9146 = vadd.xlane.f32.xlu0 %v9145
        %v9147 = vpop.xlane.xlu0 %9146
        %v9148 = vsel %vm368, %v9098, 0.0
        %9149 = vadd.xlane.f32.xlu0 %v9148
        %v9150 = vpop.xlane.xlu0 %9149
        %v9151 = vsel %vm371, %v9099, 0.0
        %9152 = vadd.xlane.f32.xlu0 %v9151
        %v9153 = vpop.xlane.xlu0 %9152
        %v9154 = vsel %vm6453, %v9100, 0.0
        %9155 = vadd.xlane.f32.xlu0 %v9154
        %v9156 = vpop.xlane.xlu0 %9155
        %v9157 = vsel %vm368, %v9101, 0.0
        %9158 = vadd.xlane.f32.xlu0 %v9157
        %v9159 = vpop.xlane.xlu0 %9158
        %v9160 = vsel %vm371, %v9102, 0.0
        %9161 = vadd.xlane.f32.xlu0 %v9160
        %v9162 = vpop.xlane.xlu0 %9161
        %v9163 = vsel %vm6453, %v9103, 0.0
        %9164 = vadd.xlane.f32.xlu0 %v9163
        %v9165 = vpop.xlane.xlu0 %9164
        %v9166 = vsel %vm368, %v9104, 0.0
        %9167 = vadd.xlane.f32.xlu0 %v9166
        %v9168 = vpop.xlane.xlu0 %9167
        %v9169 = vsel %vm371, %v9105, 0.0
        %9170 = vadd.xlane.f32.xlu0 %v9169
        %v9171 = vpop.xlane.xlu0 %9170
        %v9172 = vsel %vm6453, %v9106, 0.0
        %9173 = vadd.xlane.f32.xlu0 %v9172
        %v9174 = vpop.xlane.xlu0 %9173
        %v9175 = vsel %vm368, %v9107, 0.0
        %9176 = vadd.xlane.f32.xlu0 %v9175
        %v9177 = vpop.xlane.xlu0 %9176
        %v9178 = vsel %vm371, %v9108, 0.0
        %9179 = vadd.xlane.f32.xlu0 %v9178
        %v9180 = vpop.xlane.xlu0 %9179
        %v9205 = vrot.slane %v9111, 2
        %v9206 = vrot.slane %v9114, 2
        %v9207 = vsel %vm783, %v9205, %v9206
        %v9208 = vrot.slane %v9117, 2
        %v9209 = vsel %vm783, %v9206, %v9208
        %v9210 = vrot.slane %v9120, 2
        %v9211 = vrot.slane %v9123, 2
        %v9212 = vsel %vm783, %v9210, %v9211
        %v9213 = vrot.slane %v9126, 2
        %v9214 = vsel %vm783, %v9211, %v9213
        %v9215 = vrot.slane %v9129, 2
        %v9216 = vrot.slane %v9132, 2
        %v9217 = vsel %vm783, %v9215, %v9216
        %v9218 = vrot.slane %v9135, 2
        %v9219 = vsel %vm783, %v9216, %v9218
        %v9220 = vrot.slane %v9138, 2
        %v9221 = vrot.slane %v9141, 2
        %v9222 = vsel %vm783, %v9220, %v9221
        %v9223 = vrot.slane %v9144, 2
        %v9224 = vsel %vm783, %v9221, %v9223
        %v9225 = vrot.slane %v9147, 2
        %v9226 = vrot.slane %v9150, 2
        %v9227 = vsel %vm783, %v9225, %v9226
        %v9228 = vrot.slane %v9153, 2
        %v9229 = vsel %vm783, %v9226, %v9228
        %v9230 = vrot.slane %v9156, 2
        %v9231 = vrot.slane %v9159, 2
        %v9232 = vsel %vm783, %v9230, %v9231
        %v9233 = vrot.slane %v9162, 2
        %v9234 = vsel %vm783, %v9231, %v9233
        %v9235 = vrot.slane %v9165, 2
        %v9236 = vrot.slane %v9168, 2
        %v9237 = vsel %vm783, %v9235, %v9236
        %v9238 = vrot.slane %v9171, 2
        %v9239 = vsel %vm783, %v9236, %v9238
        %v9240 = vrot.slane %v9174, 2
        %v9241 = vrot.slane %v9177, 2
        %v9242 = vsel %vm783, %v9240, %v9241
        %v9243 = vrot.slane %v9180, 2
        %v9244 = vsel %vm783, %v9241, %v9243
        %v9261 = vadd.f32 %v9067, %v9207
        %v9262 = vadd.f32 %v9068, %v9209
        %v9263 = vadd.f32 %v9069, %v9212
        %v9264 = vadd.f32 %v9070, %v9214
        %v9265 = vadd.f32 %v9071, %v9217
        %v9266 = vadd.f32 %v9072, %v9219
        %v9267 = vadd.f32 %v9073, %v9222
        %v9268 = vadd.f32 %v9074, %v9224
        %v9269 = vadd.f32 %v9075, %v9227
        %v9270 = vadd.f32 %v9076, %v9229
        %v9271 = vadd.f32 %v9077, %v9232
        %v9272 = vadd.f32 %v9078, %v9234
        %v9273 = vadd.f32 %v9079, %v9237
        %v9274 = vadd.f32 %v9080, %v9239
        %v9275 = vadd.f32 %v9081, %v9242
        %v9276 = vadd.f32 %v9082, %v9244
        %v9277 = vld [vmem:[#allocation5] sm:$0x1]
        %v9279 = vperm.slane %v9277, 0
        %9280 = vset.pattern.permute.xlu0 0
        %9281 = vperm.xlu0 %9280, %v9279
        %v9282 = vpop.permute.xlu0 %9281
        %v9284 = vadd.f32 %v9261, %v9282
        %v9285 = vadd.f32 %v9262, %v9282
        %v9286 = vadd.f32 %v9263, %v9282
        %v9287 = vadd.f32 %v9264, %v9282
        %v9288 = vadd.f32 %v9265, %v9282
        %v9289 = vadd.f32 %v9266, %v9282
        %v9290 = vadd.f32 %v9267, %v9282
        %v9291 = vadd.f32 %v9268, %v9282
        %v9292 = vadd.f32 %v9269, %v9282
        %v9293 = vadd.f32 %v9270, %v9282
        %v9294 = vadd.f32 %v9271, %v9282
        %v9295 = vadd.f32 %v9272, %v9282
        %v9296 = vadd.f32 %v9273, %v9282
        %v9297 = vadd.f32 %v9274, %v9282
        %v9298 = vadd.f32 %v9275, %v9282
        %v9299 = vadd.f32 %v9276, %v9282
        %vm9300 = vcmp.gt.f32.partialorder %v9284, 0.0
        %vm9301 = vcmp.gt.f32.partialorder %v9285, 0.0
        %vm9302 = vcmp.gt.f32.partialorder %v9286, 0.0
        %vm9303 = vcmp.gt.f32.partialorder %v9287, 0.0
        %vm9304 = vcmp.gt.f32.partialorder %v9288, 0.0
        %vm9305 = vcmp.gt.f32.partialorder %v9289, 0.0
        %vm9306 = vcmp.gt.f32.partialorder %v9290, 0.0
        %vm9307 = vcmp.gt.f32.partialorder %v9291, 0.0
        %vm9308 = vcmp.gt.f32.partialorder %v9292, 0.0
        %vm9309 = vcmp.gt.f32.partialorder %v9293, 0.0
        %vm9310 = vcmp.gt.f32.partialorder %v9294, 0.0
        %vm9311 = vcmp.gt.f32.partialorder %v9295, 0.0
        %vm9312 = vcmp.gt.f32.partialorder %v9296, 0.0
        %vm9313 = vcmp.gt.f32.partialorder %v9297, 0.0
        %vm9314 = vcmp.gt.f32.partialorder %v9298, 0.0
        %vm9315 = vcmp.gt.f32.partialorder %v9299, 0.0
        %v9316 = vmul.f32 %v9284, 0.01
        %v9317 = vmul.f32 %v9285, 0.01
        %v9318 = vmul.f32 %v9286, 0.01
        %v9319 = vmul.f32 %v9287, 0.01
        %v9320 = vmul.f32 %v9288, 0.01
        %v9321 = vmul.f32 %v9289, 0.01
        %v9322 = vmul.f32 %v9290, 0.01
        %v9323 = vmul.f32 %v9291, 0.01
        %v9324 = vmul.f32 %v9292, 0.01
        %v9325 = vmul.f32 %v9293, 0.01
        %v9326 = vmul.f32 %v9294, 0.01
        %v9327 = vmul.f32 %v9295, 0.01
        %v9328 = vmul.f32 %v9296, 0.01
        %v9329 = vmul.f32 %v9297, 0.01
        %v9330 = vmul.f32 %v9298, 0.01
        %v9331 = vmul.f32 %v9299, 0.01
        %v9332 = vsel %vm9300, %v9284, %v9316
        %v9333 = vsel %vm9301, %v9285, %v9317
        %v9334 = vsel %vm9302, %v9286, %v9318
        %v9335 = vsel %vm9303, %v9287, %v9319
        %v9336 = vsel %vm9304, %v9288, %v9320
        %v9337 = vsel %vm9305, %v9289, %v9321
        %v9338 = vsel %vm9306, %v9290, %v9322
        %v9339 = vsel %vm9307, %v9291, %v9323
        %v9340 = vsel %vm9308, %v9292, %v9324
        %v9341 = vsel %vm9309, %v9293, %v9325
        %v9342 = vsel %vm9310, %v9294, %v9326
        %v9343 = vsel %vm9311, %v9295, %v9327
        %v9344 = vsel %vm9312, %v9296, %v9328
        %v9345 = vsel %vm9313, %v9297, %v9329
        %v9346 = vsel %vm9314, %v9298, %v9330
        %v9347 = vsel %vm9315, %v9299, %v9331
        %9364 = vset.pattern.permute.xlu0 0
        %9365 = vperm.xlu0 %9364, %v9332
        %v9366 = vpop.permute.xlu0 %9365
        %9367 = vset.pattern.permute.xlu0 0
        %9368 = vperm.xlu0 %9367, %v9333
        %v9369 = vpop.permute.xlu0 %9368
        %9370 = vset.pattern.permute.xlu0 0
        %9371 = vperm.xlu0 %9370, %v9334
        %v9372 = vpop.permute.xlu0 %9371
        %9373 = vset.pattern.permute.xlu0 0
        %9374 = vperm.xlu0 %9373, %v9335
        %v9375 = vpop.permute.xlu0 %9374
        %9376 = vset.pattern.permute.xlu0 0
        %9377 = vperm.xlu0 %9376, %v9336
        %v9378 = vpop.permute.xlu0 %9377
        %9379 = vset.pattern.permute.xlu0 0
        %9380 = vperm.xlu0 %9379, %v9337
        %v9381 = vpop.permute.xlu0 %9380
        %9382 = vset.pattern.permute.xlu0 0
        %9383 = vperm.xlu0 %9382, %v9338
        %v9384 = vpop.permute.xlu0 %9383
        %9385 = vset.pattern.permute.xlu0 0
        %9386 = vperm.xlu0 %9385, %v9339
        %v9387 = vpop.permute.xlu0 %9386
        %9388 = vset.pattern.permute.xlu0 0
        %9389 = vperm.xlu0 %9388, %v9340
        %v9390 = vpop.permute.xlu0 %9389
        %9391 = vset.pattern.permute.xlu0 0
        %9392 = vperm.xlu0 %9391, %v9341
        %v9393 = vpop.permute.xlu0 %9392
        %9394 = vset.pattern.permute.xlu0 0
        %9395 = vperm.xlu0 %9394, %v9342
        %v9396 = vpop.permute.xlu0 %9395
        %9397 = vset.pattern.permute.xlu0 0
        %9398 = vperm.xlu0 %9397, %v9343
        %v9399 = vpop.permute.xlu0 %9398
        %9400 = vset.pattern.permute.xlu0 0
        %9401 = vperm.xlu0 %9400, %v9344
        %v9402 = vpop.permute.xlu0 %9401
        %9403 = vset.pattern.permute.xlu0 0
        %9404 = vperm.xlu0 %9403, %v9345
        %v9405 = vpop.permute.xlu0 %9404
        %9406 = vset.pattern.permute.xlu0 0
        %9407 = vperm.xlu0 %9406, %v9346
        %v9408 = vpop.permute.xlu0 %9407
        %9409 = vset.pattern.permute.xlu0 0
        %9410 = vperm.xlu0 %9409, %v9347
        %v9411 = vpop.permute.xlu0 %9410
        %v9412 = vperm.slane %v9366, %v7749
        %v9413 = vperm.slane %v9369, %v7751
        %v9414 = vsel %vm7753, %v9413, %v9412
        %v9415 = vperm.slane %v9372, %v7749
        %v9416 = vperm.slane %v9375, %v7751
        %v9417 = vsel %vm7753, %v9416, %v9415
        %v9418 = vperm.slane %v9378, %v7749
        %v9419 = vperm.slane %v9381, %v7751
        %v9420 = vsel %vm7753, %v9419, %v9418
        %v9421 = vperm.slane %v9384, %v7749
        %v9422 = vperm.slane %v9387, %v7751
        %v9423 = vsel %vm7753, %v9422, %v9421
        %v9424 = vperm.slane %v9390, %v7749
        %v9425 = vperm.slane %v9393, %v7751
        %v9426 = vsel %vm7753, %v9425, %v9424
        %v9427 = vperm.slane %v9396, %v7749
        %v9428 = vperm.slane %v9399, %v7751
        %v9429 = vsel %vm7753, %v9428, %v9427
        %v9430 = vperm.slane %v9402, %v7749
        %v9431 = vperm.slane %v9405, %v7751
        %v9432 = vsel %vm7753, %v9431, %v9430
        %v9433 = vperm.slane %v9408, %v7749
        %v9434 = vperm.slane %v9411, %v7751
        %v9435 = vsel %vm7753, %v9434, %v9433
        %v9436 = vsel %vm7776, %v9417, %v9414
        %v9437 = vsel %vm7778, %v9420, %v9436
        %v9438 = vsel %vm7780, %v9423, %v9437
        %v9439 = vsel %vm7782, %v9426, %v9438
        %v9440 = vsel %vm7784, %v9429, %v9439
        %v9441 = vsel %vm7786, %v9432, %v9440
        %v9442 = vsel %vm7788, %v9435, %v9441
        %9444 = vst.msk [vmem:[%s273 + $0x8] sm:$0xff] %vm7791, %v9442
        %s9445 = sand.u32 %s183, 1
        %s9446 = scalar_lea.sflag [#allocation7], %s9445
        %s9447 = sand.u32 %s183, 1
        %s9448 = smul.addr %s9447, 16
        %s9449 = scalar_lea.vmem [#allocation6], %s9448
        // Predicated region
        $region49: #{ft_generator_forward_nchw.1} parent=47 // pred_check
          %p9450 = pneg %p193
        $region50: #{ft_generator_forward_nchw.1} parent=47 // pred_check_branch
          %9452 = sbr.rel (%p9450) target = $region52
        $region51: #{ft_generator_forward_nchw.1} parent=47 // pred_region
          %9454 = vsyncadd %s9446, 0
          %s9455 = smul.addr %s23, 2
          %s9456 = smul.addr %s9455, 8
          %s9457 = scalar_lea.hbm %s7, %s9456
          %s9458 = sshll.u32 %s9449, 4
          %s9459 = int_to_ptr.vmem [resolvable:$true] %s9458
          %s9460 = sshll.u32 %s9457, 4
          %s9461 = int_to_ptr.hbm [resolvable:$true] %s9460
          %9466 = dma.vmem_to_hbm [thread:$0]  %s9459, 256, %s9461, %s9446, 128, 128, 8
        $region52: #{ft_generator_forward_nchw.1} parent=47 // pred_fallthru
          _
      $region48: #{ft_generator_forward_nchw.1} parent=5 // pred_fallthru
        _
      %p9467 = scmp.le.s32.totalorder 2, %s18
      // Predicated region
      $region53: #{ft_generator_forward_nchw.1} parent=5 // pred_check
        %p9468 = pneg %p9467
      $region54: #{ft_generator_forward_nchw.1} parent=5 // pred_check_branch
        %9470 = sbr.rel (%p9468) target = $region56
      $region55: #{ft_generator_forward_nchw.1} parent=5 // pred_region
        %s9471 = ssub.s32 %s18, 2
        // Predicated region
        $region57: #{ft_generator_forward_nchw.1} parent=55 // pred_check
          %p9472 = pneg %p199
        $region58: #{ft_generator_forward_nchw.1} parent=55 // pred_check_branch
          %9474 = sbr.rel (%p9472) target = $region60
        $region59: #{ft_generator_forward_nchw.1} parent=55 // pred_region
          %s9475 = sand.u32 %s184, 1
          %s9476 = scalar_lea.sflag [#allocation7], %s9475
          %s9477 = sand.u32 %s184, 1
          %s9478 = smul.addr %s9477, 16
          %s9479 = scalar_lea.vmem [#allocation6], %s9478
          %9481 = dma.done %s9476, 256
        $region60: #{ft_generator_forward_nchw.1} parent=55 // pred_fallthru
          _
      $region56: #{ft_generator_forward_nchw.1} parent=5 // pred_fallthru
        _
    $region6: #{ft_generator_forward_nchw.1} parent=1 // loop_footer
      %s22 = sadd.s32 1, %s18
    $region7: #{ft_generator_forward_nchw.1} parent=1 // loop_footer_branch
      %17 = sbr.rel target = $region3
    $region8: #{ft_generator_forward_nchw.1} parent=1 // loop_exit
      _
    %9482 = vsyncpa [#allocation7], 1
    %s9483 = scalar_lea.sflag [#allocation7], 1
    %9484 = vsyncpa %s9483, 1

</llo_original>
